<compile_context>
chip_gen: v7x
topology: tpu7x:2x2x1
jax: 0.10.0
libtpu: 0.0.40
codegen_flags: <defaults>
</compile_context>

<pallas_src>
import numpy as np
import jax
import jax.numpy as jnp
from jax.experimental import pallas as pl
from jax.experimental.pallas import tpu as pltpu

# ----------------------------- model hyper-params -----------------------------
C, H, W = 2, 6, 7            # real_shape_view  (32*(H-4)*(W-4) must be 192)
H1, W1 = H - 2, W - 2        # conv1 output spatial (4, 5)
H2, W2 = H1 - 2, W1 - 2      # conv2 output spatial (2, 3)
P1, P2 = H1 * W1, H2 * W2    # 20, 6
OC = 32                      # conv channels
CONV_FLAT = OC * P2          # 192 (fc1 input)
VIEW = C * H * W             # input_shape_view = 84
FEAT = 8                     # input_shape_feature
HID = 32                     # args.rnn_hidden_dim
ID_DIM = 4                   # args.id_dim
ACT_DIM = 5                  # args.act_dim
N_AGENTS = 3                 # args.n_agents
NACT = 5                     # args.n_actions
IDACT = 1 + ACT_DIM          # input_len_idact = 6
NA_DIM = N_AGENTS * IDACT    # neighbor_actions_view = 18
OBS_DIM = VIEW + FEAT + NA_DIM   # 110
LANES = 128                  # lane-dense width of the MLP slab / output
OBS_PAD = 3 * LANES          # lane-aligned packed obs width (view|feature|idact)

assert OC * P2 == 192 and HID <= LANES and NACT <= LANES and FEAT <= LANES
assert VIEW <= LANES and N_AGENTS * 8 <= LANES

ALIGN = 16                   # bf16 sublane-tile row alignment


def _pad8(n):
    return ((n + 7) // 8) * 8


def _align(n):
    return ((n + ALIGN - 1) // ALIGN) * ALIGN


# ----------------------------- slab row offsets --------------------------------
# slab A (width 640 = P1*OC): conv1 as dense matmul (K padded to 128) + bias row
A_COLS = P1 * OC                       # 640
A_M1 = 0
A_K = LANES                            # 128 (84 real rows + zero pad)
A_B1 = A_M1 + A_K                      # 128
A_ROWS = _align(A_B1 + 1)              # 144
# slab B (width 192 = CONV_FLAT): conv2 as dense matmul + bias row
B_COLS = CONV_FLAT                     # 192
B_M2 = 0
B_K = P1 * OC                          # 640
B_B2 = B_M2 + B_K                      # 640
B_ROWS = _align(B_B2 + 1)              # 656
# slab C (width 128): fc1 / fc2 (split per input group) / fc3, all zero-padded
C_FC1W = 0                             # 192 rows
C_FC1B = _align(C_FC1W + CONV_FLAT)    # 192
C_WX = _align(C_FC1B + 1)              # 208  (fc2 rows for x, padded to 128)
C_WF = _align(C_WX + LANES)            # 336  (fc2 rows for feature, padded to 128)
C_WID = _align(C_WF + LANES)           # 464  (fc2 rows for id one-hot)
C_WACT = _align(C_WID + ID_DIM)        # 480  (fc2 rows for action)
C_FC2B = _align(C_WACT + ACT_DIM)      # 496
C_FC3W = _align(C_FC2B + 1)            # 512  (fc3, padded to 128 rows)
C_FC3B = _align(C_FC3W + LANES)        # 640
C_ROWS = _align(C_FC3B + 1)            # 656


# ----------------------------- kernel ------------------------------------------
def _kernel(obs_ref, a_ref, b_ref, c_ref, q_ref):
    f32 = jnp.float32
    bf16 = jnp.bfloat16

    obs = obs_ref[...]                                  # [TB, 384] bf16
    view = obs[:, 0:LANES]                              # lanes >= VIEW are zero
    feat = obs[:, LANES:2 * LANES]                      # lanes >= FEAT are zero
    na = obs[:, 2 * LANES:3 * LANES].astype(f32)        # agent ag: id @ lane 8*ag

    # conv1 + relu (conv lowered to a dense matmul by the wrapper)
    m1 = a_ref[A_M1:A_M1 + A_K, :]                      # [128, 640] bf16
    b1 = a_ref[A_B1:A_B1 + 1, :].astype(f32)            # [1, 640]
    a1 = jnp.maximum(jnp.dot(view, m1, preferred_element_type=f32) + b1, 0.0)

    # conv2 + relu + flatten (PyTorch (c, y, x) flatten order baked into M2)
    m2 = b_ref[B_M2:B_M2 + B_K, :]                      # [640, 192] bf16
    b2 = b_ref[B_B2:B_B2 + 1, :].astype(f32)
    a2 = jnp.maximum(
        jnp.dot(a1.astype(bf16), m2, preferred_element_type=f32) + b2, 0.0)

    # fc1 + relu (output padded to 128 lanes; lanes >= HID stay exactly 0)
    w1 = c_ref[C_FC1W:C_FC1W + CONV_FLAT, :]            # [192, 128] bf16
    bf1 = c_ref[C_FC1B:C_FC1B + 1, :].astype(f32)
    x = jnp.maximum(
        jnp.dot(a2.astype(bf16), w1, preferred_element_type=f32) + bf1, 0.0)

    # fc2 weights split per input group: [x | feature | id-onehot | action]
    w_x = c_ref[C_WX:C_WX + LANES, :]                   # [128, 128] bf16
    w_f = c_ref[C_WF:C_WF + LANES, :]                   # [128, 128] bf16
    w_id = c_ref[C_WID:C_WID + ID_DIM, :].astype(f32)   # [4, 128]  (VPU use)
    w_act = c_ref[C_WACT:C_WACT + ACT_DIM, :].astype(f32)  # [5, 128] (VPU use)
    bf2 = c_ref[C_FC2B:C_FC2B + 1, :].astype(f32)
    w3 = c_ref[C_FC3W:C_FC3W + LANES, :]                # [128, 128] bf16
    bf3 = c_ref[C_FC3B:C_FC3B + 1, :].astype(f32)

    # Shared part of every candidate row: x @ Wx + feature @ Wf + b
    base = (jnp.dot(x.astype(bf16), w_x, preferred_element_type=f32)
            + jnp.dot(feat, w_f, preferred_element_type=f32)
            + bf2)                                      # [TB, 128] f32

    def _tree(terms):
        terms = list(terms)
        while len(terms) > 1:
            nxt = [terms[i] + terms[i + 1] for i in range(0, len(terms) - 1, 2)]
            if len(terms) % 2:
                nxt.append(terms[-1])
            terms = nxt
        return terms[0]

    # Masked candidate enumeration; fc3 is linear so accumulate in hidden space.
    h_parts, m_parts = [], []
    for ag in range(N_AGENTS):
        col = ag * 8
        id_col = na[:, col:col + 1]                     # [TB, 1]
        act = na[:, col + 1:col + 1 + ACT_DIM]          # [TB, ACT_DIM]
        idr = jnp.floor(id_col + 0.5)                   # robust integer id

        # VPU: one-hot(id) @ W_id as a 4-way masked sum of W_id rows
        id_contrib = _tree([jnp.where(idr == float(d), 1.0, 0.0) * w_id[d:d + 1, :]
                            for d in range(ID_DIM)])
        # VPU: act @ W_act as broadcast multiply-accumulate
        act_contrib = _tree([act[:, k:k + 1] * w_act[k:k + 1, :]
                             for k in range(ACT_DIM)])
        abs_sum = _tree([jnp.abs(act[:, k:k + 1]) for k in range(ACT_DIM)])
        act_any = abs_sum > 0.0                         # any(temp_act)

        is_self = idr == -1.0
        is_real = idr >= 0.0
        m_dir = jnp.logical_or(is_self, jnp.logical_and(is_real, act_any))
        m_srch = jnp.logical_and(is_real, jnp.logical_not(act_any))

        base_ag = base + id_contrib
        # (a) direct candidate: self agent, or visible agent with a known action
        cands = [jnp.where(m_dir, jnp.maximum(base_ag + act_contrib, 0.0), 0.0)]
        # (b) search candidates: visible agent with no action -> enumerate actions
        cands += [jnp.where(m_srch, jnp.maximum(base_ag + w_act[k:k + 1, :], 0.0), 0.0)
                  for k in range(ACT_DIM)]
        h_parts.append(_tree(cands))
        m_parts.append(m_dir.astype(f32) + float(ACT_DIM) * m_srch.astype(f32))

    h_sum = _tree(h_parts)                              # [TB, 128]
    m_sum = _tree(m_parts)                              # [TB, 1]

    # q = sum_rows (relu(fc2(row)) @ Wfc3 + bfc3), lane-dense [TB, 128] store
    q_ref[...] = (jnp.dot(h_sum.astype(bf16), w3, preferred_element_type=f32)
                  + m_sum * bf3).astype(q_ref.dtype)


# ----------------------------- wrapper ------------------------------------------
def convnet_mlp_ja_forward(obs, slabs, *, block_b=128):
    """obs: [batch, OBS_DIM] float32 in the original layout -> [batch, NACT]."""
    slab_a, slab_b, slab_c = slabs
    bsz = obs.shape[0]
    assert obs.shape[1] == OBS_DIM

    tb = int(min(block_b, _pad8(bsz)))
    n_blocks = int(pl.cdiv(bsz, tb))
    padded = n_blocks * tb

    obs = jnp.asarray(obs, jnp.float32)
    if padded != bsz:
        obs = jnp.pad(obs, ((0, padded - bsz), (0, 0)))

    view = obs[:, :VIEW]
    feat = obs[:, VIEW:VIEW + FEAT]
    na = obs[:, VIEW + FEAT:OBS_DIM].reshape(padded, N_AGENTS, IDACT)
    na8 = jnp.pad(na, ((0, 0), (0, 0), (0, 8 - IDACT))).reshape(padded, N_AGENTS * 8)

    # Lane-aligned packing: view @ lane 0, feature @ lane 128, idact @ lane 256.
    obs_pad = jnp.concatenate(
        [jnp.pad(view, ((0, 0), (0, LANES - VIEW))),
         jnp.pad(feat, ((0, 0), (0, LANES - FEAT))),
         jnp.pad(na8, ((0, 0), (0, LANES - N_AGENTS * 8)))],
        axis=1).astype(jnp.bfloat16)                     # [padded, 384]

    flops = 2 * padded * (A_K * A_COLS + B_K * B_COLS + CONV_FLAT * LANES
                          + 3 * LANES * LANES)
    bytes_accessed = (obs_pad.size * 2 + slab_a.size * 2 + slab_b.size * 2
                      + slab_c.size * 2 + padded * LANES * 4)

    q_pad = pl.pallas_call(
        _kernel,
        out_shape=jax.ShapeDtypeStruct((padded, LANES), jnp.float32),
        grid_spec=pltpu.PrefetchScalarGridSpec(
            num_scalar_prefetch=0,
            grid=(n_blocks,),
            in_specs=[
                pl.BlockSpec((tb, OBS_PAD), lambda i: (i, 0)),
                # weight slabs: constant index_map -> DMA'd once, VMEM-resident
                pl.BlockSpec((A_ROWS, A_COLS), lambda i: (0, 0)),
                pl.BlockSpec((B_ROWS, B_COLS), lambda i: (0, 0)),
                pl.BlockSpec((C_ROWS, LANES), lambda i: (0, 0)),
            ],
            out_specs=pl.BlockSpec((tb, LANES), lambda i: (i, 0)),
        ),
        compiler_params=pltpu.CompilerParams(
            dimension_semantics=("parallel",)),
        cost_estimate=pl.CostEstimate(flops=int(flops), transcendentals=0,
                                      bytes_accessed=int(bytes_accessed)),
    )(obs_pad, slab_a, slab_b, slab_c)
    return q_pad[:bsz, :NACT]


# ----------------------- weight repacking (wrapper, once) ------------------------
def _conv1_as_matmul(w, b):
    """Conv2d(C,OC,3,valid) as dense [VIEW, P1*OC]; in layout (c,y,x), out (p, o)."""
    w = np.asarray(w, np.float32)
    b = np.asarray(b, np.float32)
    m = np.zeros((VIEW, P1 * OC), np.float32)
    for c in range(C):
        for ky in range(3):
            for kx in range(3):
                for y in range(H1):
                    for xx in range(W1):
                        fin = c * H * W + (y + ky) * W + (xx + kx)
                        p = y * W1 + xx
                        m[fin, p * OC:(p + 1) * OC] += w[:, c, ky, kx]
    return m, np.tile(b, P1)


def _conv2_as_matmul(w, b):
    """Conv2d(OC,OC,3,valid) on the (p1, o_in) layout, producing the PyTorch
    flatten order (o_out, y2, x2) directly (so .reshape(-1, 192) is built in)."""
    w = np.asarray(w, np.float32)
    b = np.asarray(b, np.float32)
    m = np.zeros((P1 * OC, CONV_FLAT), np.float32)
    for ky in range(3):
        for kx in range(3):
            for y2 in range(H2):
                for x2 in range(W2):
                    p1 = (y2 + ky) * W1 + (x2 + kx)
                    q = y2 * W2 + x2
                    m[p1 * OC:(p1 + 1) * OC, q::P2] += w[:, :, ky, kx].T
    return m, np.repeat(b, P2)


def pack_params(p, dtype=jnp.bfloat16):
    m1, b1e = _conv1_as_matmul(p["conv1_w"], p["conv1_b"])
    m2, b2e = _conv2_as_matmul(p["conv2_w"], p["conv2_b"])

    slab_a = np.zeros((A_ROWS, A_COLS), np.float32)
    slab_a[A_M1:A_M1 + VIEW] = m1          # rows VIEW..127 stay zero (K pad)
    slab_a[A_B1] = b1e

    slab_b = np.zeros((B_ROWS, B_COLS), np.float32)
    slab_b[B_M2:B_M2 + P1 * OC] = m2
    slab_b[B_B2] = b2e

    slab_c = np.zeros((C_ROWS, LANES), np.float32)

    def put(off, w):
        w = np.asarray(w, np.float32)
        if w.ndim == 1:
            w = w[None, :]
        slab_c[off:off + w.shape[0], :w.shape[1]] = w

    fc2_w = np.asarray(p["fc2_w"], np.float32)
    put(C_FC1W, p["fc1_w"])
    put(C_FC1B, p["fc1_b"])
    put(C_WX, fc2_w[:HID])
    put(C_WF, fc2_w[HID:HID + FEAT])
    put(C_WID, fc2_w[HID + FEAT:HID + FEAT + ID_DIM])
    put(C_WACT, fc2_w[HID + FEAT + ID_DIM:])
    put(C_FC2B, p["fc2_b"])
    put(C_FC3W, p["fc3_w"])
    put(C_FC3B, p["fc3_b"])
    return (jnp.asarray(slab_a, dtype), jnp.asarray(slab_b, dtype),
            jnp.asarray(slab_c, dtype))


def init_params(key):
    ks = jax.random.split(key, 10)

    def unif(k, shape, fan_in):
        bound = 1.0 / float(np.sqrt(fan_in))
        return jax.random.uniform(k, shape, jnp.float32, -bound, bound)

    fc2_in = HID + FEAT + ID_DIM + ACT_DIM
    return dict(
        conv1_w=unif(ks[0], (OC, C, 3, 3), C * 9),
        conv1_b=unif(ks[1], (OC,), C * 9),
        conv2_w=unif(ks[2], (OC, OC, 3, 3), OC * 9),
        conv2_b=unif(ks[3], (OC,), OC * 9),
        fc1_w=unif(ks[4], (CONV_FLAT, HID), CONV_FLAT),   # stored [in, out]
        fc1_b=unif(ks[5], (HID,), CONV_FLAT),
        fc2_w=unif(ks[6], (fc2_in, HID), fc2_in),
        fc2_b=unif(ks[7], (HID,), fc2_in),
        fc3_w=unif(ks[8], (HID, NACT), HID),
        fc3_b=unif(ks[9], (NACT,), HID),
    )


# ----------------------------- reference (numpy, faithful to torch) --------------
def _conv2d_valid_ref(x, w, b):
    bn, cin, hh, ww = x.shape
    ho, wo = hh - 2, ww - 2
    out = np.zeros((bn, w.shape[0], ho, wo), np.float32)
    for ky in range(3):
        for kx in range(3):
            patch = x[:, :, ky:ky + ho, kx:kx + wo]
            out += np.einsum("bchw,oc->bohw", patch, w[:, :, ky, kx])
    return out + b[None, :, None, None]


def reference_forward(obs_np, p):
    relu = lambda v: np.maximum(v, 0.0)
    obs = np.asarray(obs_np, np.float32)
    bn = obs.shape[0]
    view = obs[:, :VIEW].reshape(bn, C, H, W)
    feature = obs[:, VIEW:VIEW + FEAT]
    neighbor = obs[:, -NA_DIM:]

    out = relu(_conv2d_valid_ref(view, np.asarray(p["conv1_w"]), np.asarray(p["conv1_b"])))
    out = relu(_conv2d_valid_ref(out, np.asarray(p["conv2_w"]), np.asarray(p["conv2_b"])))
    out = out.reshape(bn, -1)
    x = relu(out @ np.asarray(p["fc1_w"]) + np.asarray(p["fc1_b"]))

    fc2_w, fc2_b = np.asarray(p["fc2_w"]), np.asarray(p["fc2_b"])
    fc3_w, fc3_b = np.asarray(p["fc3_w"]), np.asarray(p["fc3_b"])
    self_id = np.zeros(ID_DIM, np.float32)
    search_act = np.eye(ACT_DIM, dtype=np.float32)
    all_id = np.eye(ID_DIM, dtype=np.float32)

    qs = []
    for i in range(bn):
        rows = []
        for a in range(N_AGENTS):
            idact = neighbor[i, a * IDACT:(a + 1) * IDACT]
            tid, tact = idact[0], idact[-ACT_DIM:]
            if tid >= -1:
                if tid == -1:
                    rows.append(np.concatenate([x[i], feature[i], self_id, tact]))
                elif not np.any(tact):
                    for k in range(ACT_DIM):
                        rows.append(np.concatenate([x[i], feature[i],
                                                    all_id[int(tid)], search_act[k]]))
                else:
                    rows.append(np.concatenate([x[i], feature[i], all_id[int(tid)], tact]))
        xr = np.stack(rows)
        hh = relu(xr @ fc2_w + fc2_b)
        q = hh @ fc3_w + fc3_b
        qs.append(q.sum(axis=0))
    return np.stack(qs)


# ----------------------------- main ------------------------------------------
if __name__ == "__main__":
    key = jax.random.PRNGKey(0)
    ks = jax.random.split(key, 6)
    BATCH = 200   # not a multiple of the 128-row block -> exercises grid + padding

    view = jax.random.normal(ks[0], (BATCH, VIEW), jnp.float32)
    feature = jax.random.normal(ks[1], (BATCH, FEAT), jnp.float32)

    ids = jax.random.randint(ks[2], (BATCH, N_AGENTS), -2, ID_DIM).astype(jnp.float32)
    act_idx = jax.random.randint(ks[3], (BATCH, N_AGENTS), 0, ACT_DIM)
    acts = jax.nn.one_hot(act_idx, ACT_DIM, dtype=jnp.float32)
    zero_mask = jax.random.bernoulli(ks[4], 0.4, (BATCH, N_AGENTS)).astype(jnp.float32)
    acts = acts * (1.0 - zero_mask)[..., None]
    # Guarantee every branch of the original forward is exercised:
    ids = ids.at[:, 0].set(-1.0)                         # self agent
    ids = ids.at[0, 1].set(0.0)                          # visible, zero action -> search
    acts = acts.at[0, 1].set(0.0)
    ids = ids.at[0, 2].set(-2.0)                         # invisible -> skipped
    ids = ids.at[1, 1].set(1.0)                          # visible with known action
    acts = acts.at[1, 1].set(jax.nn.one_hot(2, ACT_DIM, dtype=jnp.float32))

    neighbor = jnp.concatenate([ids[..., None], acts], axis=-1).reshape(BATCH, NA_DIM)
    obs = jnp.concatenate([view, feature, neighbor], axis=1)
    assert obs.shape == (BATCH, OBS_DIM)

    params = init_params(ks[5])
    slabs = pack_params(params)

    q = convnet_mlp_ja_forward(obs, slabs)
    q = jax.block_until_ready(q)
    assert q.shape == (BATCH, NACT)

    q_ref = reference_forward(np.asarray(obs), params)
    err = float(np.max(np.abs(np.asarray(q, np.float32) - q_ref)))
    scale = 1.0 + float(np.max(np.abs(q_ref)))
    # bf16 MXU operands (f32 accumulation) vs the f32 numpy reference:
    # scale-aware tolerance.
    assert np.isfinite(err) and err <= 5e-2 * scale, (err, scale)
    print("KERNEL_OK")
</pallas_src>

<mosaic_0001>
module attributes {stable_mosaic.version = 11 : i64} {
  func.func @_kernel(%arg0: i32, %arg1: memref<128x384xbf16, #tpu.memory_space<vmem>>, %arg2: memref<144x640xbf16, #tpu.memory_space<vmem>>, %arg3: memref<656x192xbf16, #tpu.memory_space<vmem>>, %arg4: memref<656x128xbf16, #tpu.memory_space<vmem>>, %arg5: memref<128x128xf32, #tpu.memory_space<vmem>>) attributes {dimension_semantics = [#tpu.dimension_semantics<parallel>], iteration_bounds = array<i64: 2>, scalar_prefetch = 0 : i64, scratch_operands = 0 : i64, tpu.core_type = #tpu.core_type<tc>, window_params = [{transform_indices = @transform_0, window_bounds = array<i64: 128, 384>}, {pipeline_mode = #tpu.pipeline_mode<synchronous>, transform_indices = @transform_1, window_bounds = array<i64: 144, 640>}, {pipeline_mode = #tpu.pipeline_mode<synchronous>, transform_indices = @transform_2, window_bounds = array<i64: 656, 192>}, {pipeline_mode = #tpu.pipeline_mode<synchronous>, transform_indices = @transform_3, window_bounds = array<i64: 656, 128>}, {transform_indices = @transform_4, window_bounds = array<i64: 128, 128>}]} {
    %c0 = arith.constant 0 : index
    %c0_0 = arith.constant 0 : index
    %0 = vector.load %arg1[%c0, %c0_0] : memref<128x384xbf16, #tpu.memory_space<vmem>>, vector<128x384xbf16>
    %1 = vector.extract_strided_slice %0 {offsets = [0, 0], sizes = [128, 128], strides = [1, 1]} : vector<128x384xbf16> to vector<128x128xbf16>
    %2 = vector.extract_strided_slice %0 {offsets = [0, 128], sizes = [128, 128], strides = [1, 1]} : vector<128x384xbf16> to vector<128x128xbf16>
    %3 = vector.extract_strided_slice %0 {offsets = [0, 256], sizes = [128, 128], strides = [1, 1]} : vector<128x384xbf16> to vector<128x128xbf16>
    %4 = arith.extf %3 : vector<128x128xbf16> to vector<128x128xf32>
    %c0_1 = arith.constant 0 : index
    %c0_2 = arith.constant 0 : index
    %5 = vector.load %arg2[%c0_1, %c0_2] : memref<144x640xbf16, #tpu.memory_space<vmem>>, vector<128x640xbf16>
    %c128 = arith.constant 128 : index
    %c0_3 = arith.constant 0 : index
    %6 = vector.load %arg2[%c128, %c0_3] : memref<144x640xbf16, #tpu.memory_space<vmem>>, vector<1x640xbf16>
    %7 = arith.extf %6 : vector<1x640xbf16> to vector<1x640xf32>
    %cst = arith.constant dense<0.000000e+00> : vector<128x640xf32>
    %8 = tpu.matmul %1, %5, %cst {dimension_numbers = #tpu.dot_dimension_numbers<[1], [0], [0], [1], [0, 0, 1, 1], [], []>} : vector<128x128xbf16>, vector<128x640xbf16>, vector<128x640xf32> -> vector<128x640xf32>
    %9 = vector.broadcast %7 : vector<1x640xf32> to vector<128x640xf32>
    %10 = arith.addf %8, %9 : vector<128x640xf32>
    %cst_4 = arith.constant 0.000000e+00 : f32
    %11 = vector.broadcast %cst_4 : f32 to vector<128x640xf32>
    %12 = arith.maximumf %10, %11 : vector<128x640xf32>
    %c0_5 = arith.constant 0 : index
    %c0_6 = arith.constant 0 : index
    %13 = vector.load %arg3[%c0_5, %c0_6] : memref<656x192xbf16, #tpu.memory_space<vmem>>, vector<640x192xbf16>
    %c640 = arith.constant 640 : index
    %c0_7 = arith.constant 0 : index
    %14 = vector.load %arg3[%c640, %c0_7] : memref<656x192xbf16, #tpu.memory_space<vmem>>, vector<1x192xbf16>
    %15 = arith.extf %14 : vector<1x192xbf16> to vector<1x192xf32>
    %16 = arith.truncf %12 : vector<128x640xf32> to vector<128x640xbf16>
    %cst_8 = arith.constant dense<0.000000e+00> : vector<128x192xf32>
    %17 = tpu.matmul %16, %13, %cst_8 {dimension_numbers = #tpu.dot_dimension_numbers<[1], [0], [0], [1], [0, 0, 1, 1], [], []>} : vector<128x640xbf16>, vector<640x192xbf16>, vector<128x192xf32> -> vector<128x192xf32>
    %18 = vector.broadcast %15 : vector<1x192xf32> to vector<128x192xf32>
    %19 = arith.addf %17, %18 : vector<128x192xf32>
    %cst_9 = arith.constant 0.000000e+00 : f32
    %20 = vector.broadcast %cst_9 : f32 to vector<128x192xf32>
    %21 = arith.maximumf %19, %20 : vector<128x192xf32>
    %c0_10 = arith.constant 0 : index
    %c0_11 = arith.constant 0 : index
    %22 = vector.load %arg4[%c0_10, %c0_11] : memref<656x128xbf16, #tpu.memory_space<vmem>>, vector<192x128xbf16>
    %c192 = arith.constant 192 : index
    %c0_12 = arith.constant 0 : index
    %23 = vector.load %arg4[%c192, %c0_12] : memref<656x128xbf16, #tpu.memory_space<vmem>>, vector<1x128xbf16>
    %24 = arith.extf %23 : vector<1x128xbf16> to vector<1x128xf32>
    %25 = arith.truncf %21 : vector<128x192xf32> to vector<128x192xbf16>
    %cst_13 = arith.constant dense<0.000000e+00> : vector<128x128xf32>
    %26 = tpu.matmul %25, %22, %cst_13 {dimension_numbers = #tpu.dot_dimension_numbers<[1], [0], [0], [1], [0, 0, 1, 1], [], []>} : vector<128x192xbf16>, vector<192x128xbf16>, vector<128x128xf32> -> vector<128x128xf32>
    %27 = vector.broadcast %24 : vector<1x128xf32> to vector<128x128xf32>
    %28 = arith.addf %26, %27 : vector<128x128xf32>
    %cst_14 = arith.constant 0.000000e+00 : f32
    %29 = vector.broadcast %cst_14 : f32 to vector<128x128xf32>
    %30 = arith.maximumf %28, %29 : vector<128x128xf32>
    %c208 = arith.constant 208 : index
    %c0_15 = arith.constant 0 : index
    %31 = vector.load %arg4[%c208, %c0_15] : memref<656x128xbf16, #tpu.memory_space<vmem>>, vector<128x128xbf16>
    %c336 = arith.constant 336 : index
    %c0_16 = arith.constant 0 : index
    %32 = vector.load %arg4[%c336, %c0_16] : memref<656x128xbf16, #tpu.memory_space<vmem>>, vector<128x128xbf16>
    %c464 = arith.constant 464 : index
    %c0_17 = arith.constant 0 : index
    %33 = vector.load %arg4[%c464, %c0_17] : memref<656x128xbf16, #tpu.memory_space<vmem>>, vector<4x128xbf16>
    %34 = arith.extf %33 : vector<4x128xbf16> to vector<4x128xf32>
    %c480 = arith.constant 480 : index
    %c0_18 = arith.constant 0 : index
    %35 = vector.load %arg4[%c480, %c0_18] : memref<656x128xbf16, #tpu.memory_space<vmem>>, vector<5x128xbf16>
    %36 = arith.extf %35 : vector<5x128xbf16> to vector<5x128xf32>
    %c496 = arith.constant 496 : index
    %c0_19 = arith.constant 0 : index
    %37 = vector.load %arg4[%c496, %c0_19] : memref<656x128xbf16, #tpu.memory_space<vmem>>, vector<1x128xbf16>
    %38 = arith.extf %37 : vector<1x128xbf16> to vector<1x128xf32>
    %c512 = arith.constant 512 : index
    %c0_20 = arith.constant 0 : index
    %39 = vector.load %arg4[%c512, %c0_20] : memref<656x128xbf16, #tpu.memory_space<vmem>>, vector<128x128xbf16>
    %c640_21 = arith.constant 640 : index
    %c0_22 = arith.constant 0 : index
    %40 = vector.load %arg4[%c640_21, %c0_22] : memref<656x128xbf16, #tpu.memory_space<vmem>>, vector<1x128xbf16>
    %41 = arith.extf %40 : vector<1x128xbf16> to vector<1x128xf32>
    %42 = arith.truncf %30 : vector<128x128xf32> to vector<128x128xbf16>
    %cst_23 = arith.constant dense<0.000000e+00> : vector<128x128xf32>
    %43 = tpu.matmul %42, %31, %cst_23 {dimension_numbers = #tpu.dot_dimension_numbers<[1], [0], [0], [1], [0, 0, 1, 1], [], []>} : vector<128x128xbf16>, vector<128x128xbf16>, vector<128x128xf32> -> vector<128x128xf32>
    %cst_24 = arith.constant dense<0.000000e+00> : vector<128x128xf32>
    %44 = tpu.matmul %2, %32, %cst_24 {dimension_numbers = #tpu.dot_dimension_numbers<[1], [0], [0], [1], [0, 0, 1, 1], [], []>} : vector<128x128xbf16>, vector<128x128xbf16>, vector<128x128xf32> -> vector<128x128xf32>
    %45 = arith.addf %43, %44 : vector<128x128xf32>
    %46 = vector.broadcast %38 : vector<1x128xf32> to vector<128x128xf32>
    %47 = arith.addf %45, %46 : vector<128x128xf32>
    %48 = vector.extract_strided_slice %4 {offsets = [0, 0], sizes = [128, 1], strides = [1, 1]} : vector<128x128xf32> to vector<128x1xf32>
    %49 = vector.extract_strided_slice %4 {offsets = [0, 1], sizes = [128, 5], strides = [1, 1]} : vector<128x128xf32> to vector<128x5xf32>
    %cst_25 = arith.constant 5.000000e-01 : f32
    %50 = vector.broadcast %cst_25 : f32 to vector<128x1xf32>
    %51 = arith.addf %48, %50 : vector<128x1xf32>
    %52 = math.floor %51 : vector<128x1xf32>
    %cst_26 = arith.constant 0.000000e+00 : f32
    %53 = vector.broadcast %cst_26 : f32 to vector<128x1xf32>
    %54 = arith.cmpf oeq, %52, %53 : vector<128x1xf32>
    %cst_27 = arith.constant 1.000000e+00 : f32
    %cst_28 = arith.constant 0.000000e+00 : f32
    %55 = vector.broadcast %cst_27 : f32 to vector<128x1xf32>
    %56 = vector.broadcast %cst_28 : f32 to vector<128x1xf32>
    %57 = arith.select %54, %55, %56 : vector<128x1xi1>, vector<128x1xf32>
    %58 = vector.extract_strided_slice %34 {offsets = [0, 0], sizes = [1, 128], strides = [1, 1]} : vector<4x128xf32> to vector<1x128xf32>
    %59 = vector.broadcast %57 : vector<128x1xf32> to vector<128x128xf32>
    %60 = vector.broadcast %58 : vector<1x128xf32> to vector<128x128xf32>
    %61 = arith.mulf %59, %60 : vector<128x128xf32>
    %cst_29 = arith.constant 1.000000e+00 : f32
    %62 = vector.broadcast %cst_29 : f32 to vector<128x1xf32>
    %63 = arith.cmpf oeq, %52, %62 : vector<128x1xf32>
    %cst_30 = arith.constant 1.000000e+00 : f32
    %cst_31 = arith.constant 0.000000e+00 : f32
    %64 = vector.broadcast %cst_30 : f32 to vector<128x1xf32>
    %65 = vector.broadcast %cst_31 : f32 to vector<128x1xf32>
    %66 = arith.select %63, %64, %65 : vector<128x1xi1>, vector<128x1xf32>
    %67 = vector.extract_strided_slice %34 {offsets = [1, 0], sizes = [1, 128], strides = [1, 1]} : vector<4x128xf32> to vector<1x128xf32>
    %68 = vector.broadcast %66 : vector<128x1xf32> to vector<128x128xf32>
    %69 = vector.broadcast %67 : vector<1x128xf32> to vector<128x128xf32>
    %70 = arith.mulf %68, %69 : vector<128x128xf32>
    %cst_32 = arith.constant 2.000000e+00 : f32
    %71 = vector.broadcast %cst_32 : f32 to vector<128x1xf32>
    %72 = arith.cmpf oeq, %52, %71 : vector<128x1xf32>
    %cst_33 = arith.constant 1.000000e+00 : f32
    %cst_34 = arith.constant 0.000000e+00 : f32
    %73 = vector.broadcast %cst_33 : f32 to vector<128x1xf32>
    %74 = vector.broadcast %cst_34 : f32 to vector<128x1xf32>
    %75 = arith.select %72, %73, %74 : vector<128x1xi1>, vector<128x1xf32>
    %76 = vector.extract_strided_slice %34 {offsets = [2, 0], sizes = [1, 128], strides = [1, 1]} : vector<4x128xf32> to vector<1x128xf32>
    %77 = vector.broadcast %75 : vector<128x1xf32> to vector<128x128xf32>
    %78 = vector.broadcast %76 : vector<1x128xf32> to vector<128x128xf32>
    %79 = arith.mulf %77, %78 : vector<128x128xf32>
    %cst_35 = arith.constant 3.000000e+00 : f32
    %80 = vector.broadcast %cst_35 : f32 to vector<128x1xf32>
    %81 = arith.cmpf oeq, %52, %80 : vector<128x1xf32>
    %cst_36 = arith.constant 1.000000e+00 : f32
    %cst_37 = arith.constant 0.000000e+00 : f32
    %82 = vector.broadcast %cst_36 : f32 to vector<128x1xf32>
    %83 = vector.broadcast %cst_37 : f32 to vector<128x1xf32>
    %84 = arith.select %81, %82, %83 : vector<128x1xi1>, vector<128x1xf32>
    %85 = vector.extract_strided_slice %34 {offsets = [3, 0], sizes = [1, 128], strides = [1, 1]} : vector<4x128xf32> to vector<1x128xf32>
    %86 = vector.broadcast %84 : vector<128x1xf32> to vector<128x128xf32>
    %87 = vector.broadcast %85 : vector<1x128xf32> to vector<128x128xf32>
    %88 = arith.mulf %86, %87 : vector<128x128xf32>
    %89 = arith.addf %61, %70 : vector<128x128xf32>
    %90 = arith.addf %79, %88 : vector<128x128xf32>
    %91 = arith.addf %89, %90 : vector<128x128xf32>
    %92 = vector.extract_strided_slice %49 {offsets = [0, 0], sizes = [128, 1], strides = [1, 1]} : vector<128x5xf32> to vector<128x1xf32>
    %93 = vector.extract_strided_slice %36 {offsets = [0, 0], sizes = [1, 128], strides = [1, 1]} : vector<5x128xf32> to vector<1x128xf32>
    %94 = vector.broadcast %92 : vector<128x1xf32> to vector<128x128xf32>
    %95 = vector.broadcast %93 : vector<1x128xf32> to vector<128x128xf32>
    %96 = arith.mulf %94, %95 : vector<128x128xf32>
    %97 = vector.extract_strided_slice %49 {offsets = [0, 1], sizes = [128, 1], strides = [1, 1]} : vector<128x5xf32> to vector<128x1xf32>
    %98 = vector.extract_strided_slice %36 {offsets = [1, 0], sizes = [1, 128], strides = [1, 1]} : vector<5x128xf32> to vector<1x128xf32>
    %99 = vector.broadcast %97 : vector<128x1xf32> to vector<128x128xf32>
    %100 = vector.broadcast %98 : vector<1x128xf32> to vector<128x128xf32>
    %101 = arith.mulf %99, %100 : vector<128x128xf32>
    %102 = vector.extract_strided_slice %49 {offsets = [0, 2], sizes = [128, 1], strides = [1, 1]} : vector<128x5xf32> to vector<128x1xf32>
    %103 = vector.extract_strided_slice %36 {offsets = [2, 0], sizes = [1, 128], strides = [1, 1]} : vector<5x128xf32> to vector<1x128xf32>
    %104 = vector.broadcast %102 : vector<128x1xf32> to vector<128x128xf32>
    %105 = vector.broadcast %103 : vector<1x128xf32> to vector<128x128xf32>
    %106 = arith.mulf %104, %105 : vector<128x128xf32>
    %107 = vector.extract_strided_slice %49 {offsets = [0, 3], sizes = [128, 1], strides = [1, 1]} : vector<128x5xf32> to vector<128x1xf32>
    %108 = vector.extract_strided_slice %36 {offsets = [3, 0], sizes = [1, 128], strides = [1, 1]} : vector<5x128xf32> to vector<1x128xf32>
    %109 = vector.broadcast %107 : vector<128x1xf32> to vector<128x128xf32>
    %110 = vector.broadcast %108 : vector<1x128xf32> to vector<128x128xf32>
    %111 = arith.mulf %109, %110 : vector<128x128xf32>
    %112 = vector.extract_strided_slice %49 {offsets = [0, 4], sizes = [128, 1], strides = [1, 1]} : vector<128x5xf32> to vector<128x1xf32>
    %113 = vector.extract_strided_slice %36 {offsets = [4, 0], sizes = [1, 128], strides = [1, 1]} : vector<5x128xf32> to vector<1x128xf32>
    %114 = vector.broadcast %112 : vector<128x1xf32> to vector<128x128xf32>
    %115 = vector.broadcast %113 : vector<1x128xf32> to vector<128x128xf32>
    %116 = arith.mulf %114, %115 : vector<128x128xf32>
    %117 = arith.addf %96, %101 : vector<128x128xf32>
    %118 = arith.addf %106, %111 : vector<128x128xf32>
    %119 = arith.addf %117, %118 : vector<128x128xf32>
    %120 = arith.addf %119, %116 : vector<128x128xf32>
    %121 = vector.extract_strided_slice %49 {offsets = [0, 0], sizes = [128, 1], strides = [1, 1]} : vector<128x5xf32> to vector<128x1xf32>
    %122 = math.absf %121 : vector<128x1xf32>
    %123 = vector.extract_strided_slice %49 {offsets = [0, 1], sizes = [128, 1], strides = [1, 1]} : vector<128x5xf32> to vector<128x1xf32>
    %124 = math.absf %123 : vector<128x1xf32>
    %125 = vector.extract_strided_slice %49 {offsets = [0, 2], sizes = [128, 1], strides = [1, 1]} : vector<128x5xf32> to vector<128x1xf32>
    %126 = math.absf %125 : vector<128x1xf32>
    %127 = vector.extract_strided_slice %49 {offsets = [0, 3], sizes = [128, 1], strides = [1, 1]} : vector<128x5xf32> to vector<128x1xf32>
    %128 = math.absf %127 : vector<128x1xf32>
    %129 = vector.extract_strided_slice %49 {offsets = [0, 4], sizes = [128, 1], strides = [1, 1]} : vector<128x5xf32> to vector<128x1xf32>
    %130 = math.absf %129 : vector<128x1xf32>
    %131 = arith.addf %122, %124 : vector<128x1xf32>
    %132 = arith.addf %126, %128 : vector<128x1xf32>
    %133 = arith.addf %131, %132 : vector<128x1xf32>
    %134 = arith.addf %133, %130 : vector<128x1xf32>
    %cst_38 = arith.constant 0.000000e+00 : f32
    %135 = vector.broadcast %cst_38 : f32 to vector<128x1xf32>
    %136 = arith.cmpf ogt, %134, %135 : vector<128x1xf32>
    %cst_39 = arith.constant -1.000000e+00 : f32
    %137 = vector.broadcast %cst_39 : f32 to vector<128x1xf32>
    %138 = arith.cmpf oeq, %52, %137 : vector<128x1xf32>
    %cst_40 = arith.constant 0.000000e+00 : f32
    %139 = vector.broadcast %cst_40 : f32 to vector<128x1xf32>
    %140 = arith.cmpf oge, %52, %139 : vector<128x1xf32>
    %141 = arith.andi %140, %136 : vector<128x1xi1>
    %142 = arith.ori %138, %141 : vector<128x1xi1>
    %cst_41 = arith.constant dense<true> : vector<128x1xi1>
    %143 = arith.xori %136, %cst_41 : vector<128x1xi1>
    %144 = arith.andi %140, %143 : vector<128x1xi1>
    %145 = arith.addf %47, %91 : vector<128x128xf32>
    %146 = arith.addf %145, %120 : vector<128x128xf32>
    %cst_42 = arith.constant 0.000000e+00 : f32
    %147 = vector.broadcast %cst_42 : f32 to vector<128x128xf32>
    %148 = arith.maximumf %146, %147 : vector<128x128xf32>
    %cst_43 = arith.constant 0.000000e+00 : f32
    %149 = vector.shape_cast %142 : vector<128x1xi1> to vector<128x1xi1>
    %150 = vector.broadcast %149 : vector<128x1xi1> to vector<128x128xi1>
    %151 = vector.broadcast %cst_43 : f32 to vector<128x128xf32>
    %152 = arith.select %150, %148, %151 : vector<128x128xi1>, vector<128x128xf32>
    %153 = vector.extract_strided_slice %36 {offsets = [0, 0], sizes = [1, 128], strides = [1, 1]} : vector<5x128xf32> to vector<1x128xf32>
    %154 = vector.broadcast %153 : vector<1x128xf32> to vector<128x128xf32>
    %155 = arith.addf %145, %154 : vector<128x128xf32>
    %cst_44 = arith.constant 0.000000e+00 : f32
    %156 = vector.broadcast %cst_44 : f32 to vector<128x128xf32>
    %157 = arith.maximumf %155, %156 : vector<128x128xf32>
    %cst_45 = arith.constant 0.000000e+00 : f32
    %158 = vector.shape_cast %144 : vector<128x1xi1> to vector<128x1xi1>
    %159 = vector.broadcast %158 : vector<128x1xi1> to vector<128x128xi1>
    %160 = vector.broadcast %cst_45 : f32 to vector<128x128xf32>
    %161 = arith.select %159, %157, %160 : vector<128x128xi1>, vector<128x128xf32>
    %162 = vector.extract_strided_slice %36 {offsets = [1, 0], sizes = [1, 128], strides = [1, 1]} : vector<5x128xf32> to vector<1x128xf32>
    %163 = vector.broadcast %162 : vector<1x128xf32> to vector<128x128xf32>
    %164 = arith.addf %145, %163 : vector<128x128xf32>
    %cst_46 = arith.constant 0.000000e+00 : f32
    %165 = vector.broadcast %cst_46 : f32 to vector<128x128xf32>
    %166 = arith.maximumf %164, %165 : vector<128x128xf32>
    %cst_47 = arith.constant 0.000000e+00 : f32
    %167 = vector.shape_cast %144 : vector<128x1xi1> to vector<128x1xi1>
    %168 = vector.broadcast %167 : vector<128x1xi1> to vector<128x128xi1>
    %169 = vector.broadcast %cst_47 : f32 to vector<128x128xf32>
    %170 = arith.select %168, %166, %169 : vector<128x128xi1>, vector<128x128xf32>
    %171 = vector.extract_strided_slice %36 {offsets = [2, 0], sizes = [1, 128], strides = [1, 1]} : vector<5x128xf32> to vector<1x128xf32>
    %172 = vector.broadcast %171 : vector<1x128xf32> to vector<128x128xf32>
    %173 = arith.addf %145, %172 : vector<128x128xf32>
    %cst_48 = arith.constant 0.000000e+00 : f32
    %174 = vector.broadcast %cst_48 : f32 to vector<128x128xf32>
    %175 = arith.maximumf %173, %174 : vector<128x128xf32>
    %cst_49 = arith.constant 0.000000e+00 : f32
    %176 = vector.shape_cast %144 : vector<128x1xi1> to vector<128x1xi1>
    %177 = vector.broadcast %176 : vector<128x1xi1> to vector<128x128xi1>
    %178 = vector.broadcast %cst_49 : f32 to vector<128x128xf32>
    %179 = arith.select %177, %175, %178 : vector<128x128xi1>, vector<128x128xf32>
    %180 = vector.extract_strided_slice %36 {offsets = [3, 0], sizes = [1, 128], strides = [1, 1]} : vector<5x128xf32> to vector<1x128xf32>
    %181 = vector.broadcast %180 : vector<1x128xf32> to vector<128x128xf32>
    %182 = arith.addf %145, %181 : vector<128x128xf32>
    %cst_50 = arith.constant 0.000000e+00 : f32
    %183 = vector.broadcast %cst_50 : f32 to vector<128x128xf32>
    %184 = arith.maximumf %182, %183 : vector<128x128xf32>
    %cst_51 = arith.constant 0.000000e+00 : f32
    %185 = vector.shape_cast %144 : vector<128x1xi1> to vector<128x1xi1>
    %186 = vector.broadcast %185 : vector<128x1xi1> to vector<128x128xi1>
    %187 = vector.broadcast %cst_51 : f32 to vector<128x128xf32>
    %188 = arith.select %186, %184, %187 : vector<128x128xi1>, vector<128x128xf32>
    %189 = vector.extract_strided_slice %36 {offsets = [4, 0], sizes = [1, 128], strides = [1, 1]} : vector<5x128xf32> to vector<1x128xf32>
    %190 = vector.broadcast %189 : vector<1x128xf32> to vector<128x128xf32>
    %191 = arith.addf %145, %190 : vector<128x128xf32>
    %cst_52 = arith.constant 0.000000e+00 : f32
    %192 = vector.broadcast %cst_52 : f32 to vector<128x128xf32>
    %193 = arith.maximumf %191, %192 : vector<128x128xf32>
    %cst_53 = arith.constant 0.000000e+00 : f32
    %194 = vector.shape_cast %144 : vector<128x1xi1> to vector<128x1xi1>
    %195 = vector.broadcast %194 : vector<128x1xi1> to vector<128x128xi1>
    %196 = vector.broadcast %cst_53 : f32 to vector<128x128xf32>
    %197 = arith.select %195, %193, %196 : vector<128x128xi1>, vector<128x128xf32>
    %198 = arith.addf %152, %161 : vector<128x128xf32>
    %199 = arith.addf %170, %179 : vector<128x128xf32>
    %200 = arith.addf %188, %197 : vector<128x128xf32>
    %201 = arith.addf %198, %199 : vector<128x128xf32>
    %202 = arith.addf %201, %200 : vector<128x128xf32>
    %203 = arith.extui %142 : vector<128x1xi1> to vector<128x1xi32>
    %204 = arith.sitofp %203 : vector<128x1xi32> to vector<128x1xf32>
    %205 = arith.extui %144 : vector<128x1xi1> to vector<128x1xi32>
    %206 = arith.sitofp %205 : vector<128x1xi32> to vector<128x1xf32>
    %cst_54 = arith.constant 5.000000e+00 : f32
    %207 = vector.broadcast %cst_54 : f32 to vector<128x1xf32>
    %208 = arith.mulf %207, %206 : vector<128x1xf32>
    %209 = arith.addf %204, %208 : vector<128x1xf32>
    %210 = vector.extract_strided_slice %4 {offsets = [0, 8], sizes = [128, 1], strides = [1, 1]} : vector<128x128xf32> to vector<128x1xf32>
    %211 = vector.extract_strided_slice %4 {offsets = [0, 9], sizes = [128, 5], strides = [1, 1]} : vector<128x128xf32> to vector<128x5xf32>
    %cst_55 = arith.constant 5.000000e-01 : f32
    %212 = vector.broadcast %cst_55 : f32 to vector<128x1xf32>
    %213 = arith.addf %210, %212 : vector<128x1xf32>
    %214 = math.floor %213 : vector<128x1xf32>
    %cst_56 = arith.constant 0.000000e+00 : f32
    %215 = vector.broadcast %cst_56 : f32 to vector<128x1xf32>
    %216 = arith.cmpf oeq, %214, %215 : vector<128x1xf32>
    %cst_57 = arith.constant 1.000000e+00 : f32
    %cst_58 = arith.constant 0.000000e+00 : f32
    %217 = vector.broadcast %cst_57 : f32 to vector<128x1xf32>
    %218 = vector.broadcast %cst_58 : f32 to vector<128x1xf32>
    %219 = arith.select %216, %217, %218 : vector<128x1xi1>, vector<128x1xf32>
    %220 = vector.extract_strided_slice %34 {offsets = [0, 0], sizes = [1, 128], strides = [1, 1]} : vector<4x128xf32> to vector<1x128xf32>
    %221 = vector.broadcast %219 : vector<128x1xf32> to vector<128x128xf32>
    %222 = vector.broadcast %220 : vector<1x128xf32> to vector<128x128xf32>
    %223 = arith.mulf %221, %222 : vector<128x128xf32>
    %cst_59 = arith.constant 1.000000e+00 : f32
    %224 = vector.broadcast %cst_59 : f32 to vector<128x1xf32>
    %225 = arith.cmpf oeq, %214, %224 : vector<128x1xf32>
    %cst_60 = arith.constant 1.000000e+00 : f32
    %cst_61 = arith.constant 0.000000e+00 : f32
    %226 = vector.broadcast %cst_60 : f32 to vector<128x1xf32>
    %227 = vector.broadcast %cst_61 : f32 to vector<128x1xf32>
    %228 = arith.select %225, %226, %227 : vector<128x1xi1>, vector<128x1xf32>
    %229 = vector.extract_strided_slice %34 {offsets = [1, 0], sizes = [1, 128], strides = [1, 1]} : vector<4x128xf32> to vector<1x128xf32>
    %230 = vector.broadcast %228 : vector<128x1xf32> to vector<128x128xf32>
    %231 = vector.broadcast %229 : vector<1x128xf32> to vector<128x128xf32>
    %232 = arith.mulf %230, %231 : vector<128x128xf32>
    %cst_62 = arith.constant 2.000000e+00 : f32
    %233 = vector.broadcast %cst_62 : f32 to vector<128x1xf32>
    %234 = arith.cmpf oeq, %214, %233 : vector<128x1xf32>
    %cst_63 = arith.constant 1.000000e+00 : f32
    %cst_64 = arith.constant 0.000000e+00 : f32
    %235 = vector.broadcast %cst_63 : f32 to vector<128x1xf32>
    %236 = vector.broadcast %cst_64 : f32 to vector<128x1xf32>
    %237 = arith.select %234, %235, %236 : vector<128x1xi1>, vector<128x1xf32>
    %238 = vector.extract_strided_slice %34 {offsets = [2, 0], sizes = [1, 128], strides = [1, 1]} : vector<4x128xf32> to vector<1x128xf32>
    %239 = vector.broadcast %237 : vector<128x1xf32> to vector<128x128xf32>
    %240 = vector.broadcast %238 : vector<1x128xf32> to vector<128x128xf32>
    %241 = arith.mulf %239, %240 : vector<128x128xf32>
    %cst_65 = arith.constant 3.000000e+00 : f32
    %242 = vector.broadcast %cst_65 : f32 to vector<128x1xf32>
    %243 = arith.cmpf oeq, %214, %242 : vector<128x1xf32>
    %cst_66 = arith.constant 1.000000e+00 : f32
    %cst_67 = arith.constant 0.000000e+00 : f32
    %244 = vector.broadcast %cst_66 : f32 to vector<128x1xf32>
    %245 = vector.broadcast %cst_67 : f32 to vector<128x1xf32>
    %246 = arith.select %243, %244, %245 : vector<128x1xi1>, vector<128x1xf32>
    %247 = vector.extract_strided_slice %34 {offsets = [3, 0], sizes = [1, 128], strides = [1, 1]} : vector<4x128xf32> to vector<1x128xf32>
    %248 = vector.broadcast %246 : vector<128x1xf32> to vector<128x128xf32>
    %249 = vector.broadcast %247 : vector<1x128xf32> to vector<128x128xf32>
    %250 = arith.mulf %248, %249 : vector<128x128xf32>
    %251 = arith.addf %223, %232 : vector<128x128xf32>
    %252 = arith.addf %241, %250 : vector<128x128xf32>
    %253 = arith.addf %251, %252 : vector<128x128xf32>
    %254 = vector.extract_strided_slice %211 {offsets = [0, 0], sizes = [128, 1], strides = [1, 1]} : vector<128x5xf32> to vector<128x1xf32>
    %255 = vector.extract_strided_slice %36 {offsets = [0, 0], sizes = [1, 128], strides = [1, 1]} : vector<5x128xf32> to vector<1x128xf32>
    %256 = vector.broadcast %254 : vector<128x1xf32> to vector<128x128xf32>
    %257 = vector.broadcast %255 : vector<1x128xf32> to vector<128x128xf32>
    %258 = arith.mulf %256, %257 : vector<128x128xf32>
    %259 = vector.extract_strided_slice %211 {offsets = [0, 1], sizes = [128, 1], strides = [1, 1]} : vector<128x5xf32> to vector<128x1xf32>
    %260 = vector.extract_strided_slice %36 {offsets = [1, 0], sizes = [1, 128], strides = [1, 1]} : vector<5x128xf32> to vector<1x128xf32>
    %261 = vector.broadcast %259 : vector<128x1xf32> to vector<128x128xf32>
    %262 = vector.broadcast %260 : vector<1x128xf32> to vector<128x128xf32>
    %263 = arith.mulf %261, %262 : vector<128x128xf32>
    %264 = vector.extract_strided_slice %211 {offsets = [0, 2], sizes = [128, 1], strides = [1, 1]} : vector<128x5xf32> to vector<128x1xf32>
    %265 = vector.extract_strided_slice %36 {offsets = [2, 0], sizes = [1, 128], strides = [1, 1]} : vector<5x128xf32> to vector<1x128xf32>
    %266 = vector.broadcast %264 : vector<128x1xf32> to vector<128x128xf32>
    %267 = vector.broadcast %265 : vector<1x128xf32> to vector<128x128xf32>
    %268 = arith.mulf %266, %267 : vector<128x128xf32>
    %269 = vector.extract_strided_slice %211 {offsets = [0, 3], sizes = [128, 1], strides = [1, 1]} : vector<128x5xf32> to vector<128x1xf32>
    %270 = vector.extract_strided_slice %36 {offsets = [3, 0], sizes = [1, 128], strides = [1, 1]} : vector<5x128xf32> to vector<1x128xf32>
    %271 = vector.broadcast %269 : vector<128x1xf32> to vector<128x128xf32>
    %272 = vector.broadcast %270 : vector<1x128xf32> to vector<128x128xf32>
    %273 = arith.mulf %271, %272 : vector<128x128xf32>
    %274 = vector.extract_strided_slice %211 {offsets = [0, 4], sizes = [128, 1], strides = [1, 1]} : vector<128x5xf32> to vector<128x1xf32>
    %275 = vector.extract_strided_slice %36 {offsets = [4, 0], sizes = [1, 128], strides = [1, 1]} : vector<5x128xf32> to vector<1x128xf32>
    %276 = vector.broadcast %274 : vector<128x1xf32> to vector<128x128xf32>
    %277 = vector.broadcast %275 : vector<1x128xf32> to vector<128x128xf32>
    %278 = arith.mulf %276, %277 : vector<128x128xf32>
    %279 = arith.addf %258, %263 : vector<128x128xf32>
    %280 = arith.addf %268, %273 : vector<128x128xf32>
    %281 = arith.addf %279, %280 : vector<128x128xf32>
    %282 = arith.addf %281, %278 : vector<128x128xf32>
    %283 = vector.extract_strided_slice %211 {offsets = [0, 0], sizes = [128, 1], strides = [1, 1]} : vector<128x5xf32> to vector<128x1xf32>
    %284 = math.absf %283 : vector<128x1xf32>
    %285 = vector.extract_strided_slice %211 {offsets = [0, 1], sizes = [128, 1], strides = [1, 1]} : vector<128x5xf32> to vector<128x1xf32>
    %286 = math.absf %285 : vector<128x1xf32>
    %287 = vector.extract_strided_slice %211 {offsets = [0, 2], sizes = [128, 1], strides = [1, 1]} : vector<128x5xf32> to vector<128x1xf32>
    %288 = math.absf %287 : vector<128x1xf32>
    %289 = vector.extract_strided_slice %211 {offsets = [0, 3], sizes = [128, 1], strides = [1, 1]} : vector<128x5xf32> to vector<128x1xf32>
    %290 = math.absf %289 : vector<128x1xf32>
    %291 = vector.extract_strided_slice %211 {offsets = [0, 4], sizes = [128, 1], strides = [1, 1]} : vector<128x5xf32> to vector<128x1xf32>
    %292 = math.absf %291 : vector<128x1xf32>
    %293 = arith.addf %284, %286 : vector<128x1xf32>
    %294 = arith.addf %288, %290 : vector<128x1xf32>
    %295 = arith.addf %293, %294 : vector<128x1xf32>
    %296 = arith.addf %295, %292 : vector<128x1xf32>
    %cst_68 = arith.constant 0.000000e+00 : f32
    %297 = vector.broadcast %cst_68 : f32 to vector<128x1xf32>
    %298 = arith.cmpf ogt, %296, %297 : vector<128x1xf32>
    %cst_69 = arith.constant -1.000000e+00 : f32
    %299 = vector.broadcast %cst_69 : f32 to vector<128x1xf32>
    %300 = arith.cmpf oeq, %214, %299 : vector<128x1xf32>
    %cst_70 = arith.constant 0.000000e+00 : f32
    %301 = vector.broadcast %cst_70 : f32 to vector<128x1xf32>
    %302 = arith.cmpf oge, %214, %301 : vector<128x1xf32>
    %303 = arith.andi %302, %298 : vector<128x1xi1>
    %304 = arith.ori %300, %303 : vector<128x1xi1>
    %cst_71 = arith.constant dense<true> : vector<128x1xi1>
    %305 = arith.xori %298, %cst_71 : vector<128x1xi1>
    %306 = arith.andi %302, %305 : vector<128x1xi1>
    %307 = arith.addf %47, %253 : vector<128x128xf32>
    %308 = arith.addf %307, %282 : vector<128x128xf32>
    %cst_72 = arith.constant 0.000000e+00 : f32
    %309 = vector.broadcast %cst_72 : f32 to vector<128x128xf32>
    %310 = arith.maximumf %308, %309 : vector<128x128xf32>
    %cst_73 = arith.constant 0.000000e+00 : f32
    %311 = vector.shape_cast %304 : vector<128x1xi1> to vector<128x1xi1>
    %312 = vector.broadcast %311 : vector<128x1xi1> to vector<128x128xi1>
    %313 = vector.broadcast %cst_73 : f32 to vector<128x128xf32>
    %314 = arith.select %312, %310, %313 : vector<128x128xi1>, vector<128x128xf32>
    %315 = vector.extract_strided_slice %36 {offsets = [0, 0], sizes = [1, 128], strides = [1, 1]} : vector<5x128xf32> to vector<1x128xf32>
    %316 = vector.broadcast %315 : vector<1x128xf32> to vector<128x128xf32>
    %317 = arith.addf %307, %316 : vector<128x128xf32>
    %cst_74 = arith.constant 0.000000e+00 : f32
    %318 = vector.broadcast %cst_74 : f32 to vector<128x128xf32>
    %319 = arith.maximumf %317, %318 : vector<128x128xf32>
    %cst_75 = arith.constant 0.000000e+00 : f32
    %320 = vector.shape_cast %306 : vector<128x1xi1> to vector<128x1xi1>
    %321 = vector.broadcast %320 : vector<128x1xi1> to vector<128x128xi1>
    %322 = vector.broadcast %cst_75 : f32 to vector<128x128xf32>
    %323 = arith.select %321, %319, %322 : vector<128x128xi1>, vector<128x128xf32>
    %324 = vector.extract_strided_slice %36 {offsets = [1, 0], sizes = [1, 128], strides = [1, 1]} : vector<5x128xf32> to vector<1x128xf32>
    %325 = vector.broadcast %324 : vector<1x128xf32> to vector<128x128xf32>
    %326 = arith.addf %307, %325 : vector<128x128xf32>
    %cst_76 = arith.constant 0.000000e+00 : f32
    %327 = vector.broadcast %cst_76 : f32 to vector<128x128xf32>
    %328 = arith.maximumf %326, %327 : vector<128x128xf32>
    %cst_77 = arith.constant 0.000000e+00 : f32
    %329 = vector.shape_cast %306 : vector<128x1xi1> to vector<128x1xi1>
    %330 = vector.broadcast %329 : vector<128x1xi1> to vector<128x128xi1>
    %331 = vector.broadcast %cst_77 : f32 to vector<128x128xf32>
    %332 = arith.select %330, %328, %331 : vector<128x128xi1>, vector<128x128xf32>
    %333 = vector.extract_strided_slice %36 {offsets = [2, 0], sizes = [1, 128], strides = [1, 1]} : vector<5x128xf32> to vector<1x128xf32>
    %334 = vector.broadcast %333 : vector<1x128xf32> to vector<128x128xf32>
    %335 = arith.addf %307, %334 : vector<128x128xf32>
    %cst_78 = arith.constant 0.000000e+00 : f32
    %336 = vector.broadcast %cst_78 : f32 to vector<128x128xf32>
    %337 = arith.maximumf %335, %336 : vector<128x128xf32>
    %cst_79 = arith.constant 0.000000e+00 : f32
    %338 = vector.shape_cast %306 : vector<128x1xi1> to vector<128x1xi1>
    %339 = vector.broadcast %338 : vector<128x1xi1> to vector<128x128xi1>
    %340 = vector.broadcast %cst_79 : f32 to vector<128x128xf32>
    %341 = arith.select %339, %337, %340 : vector<128x128xi1>, vector<128x128xf32>
    %342 = vector.extract_strided_slice %36 {offsets = [3, 0], sizes = [1, 128], strides = [1, 1]} : vector<5x128xf32> to vector<1x128xf32>
    %343 = vector.broadcast %342 : vector<1x128xf32> to vector<128x128xf32>
    %344 = arith.addf %307, %343 : vector<128x128xf32>
    %cst_80 = arith.constant 0.000000e+00 : f32
    %345 = vector.broadcast %cst_80 : f32 to vector<128x128xf32>
    %346 = arith.maximumf %344, %345 : vector<128x128xf32>
    %cst_81 = arith.constant 0.000000e+00 : f32
    %347 = vector.shape_cast %306 : vector<128x1xi1> to vector<128x1xi1>
    %348 = vector.broadcast %347 : vector<128x1xi1> to vector<128x128xi1>
    %349 = vector.broadcast %cst_81 : f32 to vector<128x128xf32>
    %350 = arith.select %348, %346, %349 : vector<128x128xi1>, vector<128x128xf32>
    %351 = vector.extract_strided_slice %36 {offsets = [4, 0], sizes = [1, 128], strides = [1, 1]} : vector<5x128xf32> to vector<1x128xf32>
    %352 = vector.broadcast %351 : vector<1x128xf32> to vector<128x128xf32>
    %353 = arith.addf %307, %352 : vector<128x128xf32>
    %cst_82 = arith.constant 0.000000e+00 : f32
    %354 = vector.broadcast %cst_82 : f32 to vector<128x128xf32>
    %355 = arith.maximumf %353, %354 : vector<128x128xf32>
    %cst_83 = arith.constant 0.000000e+00 : f32
    %356 = vector.shape_cast %306 : vector<128x1xi1> to vector<128x1xi1>
    %357 = vector.broadcast %356 : vector<128x1xi1> to vector<128x128xi1>
    %358 = vector.broadcast %cst_83 : f32 to vector<128x128xf32>
    %359 = arith.select %357, %355, %358 : vector<128x128xi1>, vector<128x128xf32>
    %360 = arith.addf %314, %323 : vector<128x128xf32>
    %361 = arith.addf %332, %341 : vector<128x128xf32>
    %362 = arith.addf %350, %359 : vector<128x128xf32>
    %363 = arith.addf %360, %361 : vector<128x128xf32>
    %364 = arith.addf %363, %362 : vector<128x128xf32>
    %365 = arith.extui %304 : vector<128x1xi1> to vector<128x1xi32>
    %366 = arith.sitofp %365 : vector<128x1xi32> to vector<128x1xf32>
    %367 = arith.extui %306 : vector<128x1xi1> to vector<128x1xi32>
    %368 = arith.sitofp %367 : vector<128x1xi32> to vector<128x1xf32>
    %cst_84 = arith.constant 5.000000e+00 : f32
    %369 = vector.broadcast %cst_84 : f32 to vector<128x1xf32>
    %370 = arith.mulf %369, %368 : vector<128x1xf32>
    %371 = arith.addf %366, %370 : vector<128x1xf32>
    %372 = vector.extract_strided_slice %4 {offsets = [0, 16], sizes = [128, 1], strides = [1, 1]} : vector<128x128xf32> to vector<128x1xf32>
    %373 = vector.extract_strided_slice %4 {offsets = [0, 17], sizes = [128, 5], strides = [1, 1]} : vector<128x128xf32> to vector<128x5xf32>
    %cst_85 = arith.constant 5.000000e-01 : f32
    %374 = vector.broadcast %cst_85 : f32 to vector<128x1xf32>
    %375 = arith.addf %372, %374 : vector<128x1xf32>
    %376 = math.floor %375 : vector<128x1xf32>
    %cst_86 = arith.constant 0.000000e+00 : f32
    %377 = vector.broadcast %cst_86 : f32 to vector<128x1xf32>
    %378 = arith.cmpf oeq, %376, %377 : vector<128x1xf32>
    %cst_87 = arith.constant 1.000000e+00 : f32
    %cst_88 = arith.constant 0.000000e+00 : f32
    %379 = vector.broadcast %cst_87 : f32 to vector<128x1xf32>
    %380 = vector.broadcast %cst_88 : f32 to vector<128x1xf32>
    %381 = arith.select %378, %379, %380 : vector<128x1xi1>, vector<128x1xf32>
    %382 = vector.extract_strided_slice %34 {offsets = [0, 0], sizes = [1, 128], strides = [1, 1]} : vector<4x128xf32> to vector<1x128xf32>
    %383 = vector.broadcast %381 : vector<128x1xf32> to vector<128x128xf32>
    %384 = vector.broadcast %382 : vector<1x128xf32> to vector<128x128xf32>
    %385 = arith.mulf %383, %384 : vector<128x128xf32>
    %cst_89 = arith.constant 1.000000e+00 : f32
    %386 = vector.broadcast %cst_89 : f32 to vector<128x1xf32>
    %387 = arith.cmpf oeq, %376, %386 : vector<128x1xf32>
    %cst_90 = arith.constant 1.000000e+00 : f32
    %cst_91 = arith.constant 0.000000e+00 : f32
    %388 = vector.broadcast %cst_90 : f32 to vector<128x1xf32>
    %389 = vector.broadcast %cst_91 : f32 to vector<128x1xf32>
    %390 = arith.select %387, %388, %389 : vector<128x1xi1>, vector<128x1xf32>
    %391 = vector.extract_strided_slice %34 {offsets = [1, 0], sizes = [1, 128], strides = [1, 1]} : vector<4x128xf32> to vector<1x128xf32>
    %392 = vector.broadcast %390 : vector<128x1xf32> to vector<128x128xf32>
    %393 = vector.broadcast %391 : vector<1x128xf32> to vector<128x128xf32>
    %394 = arith.mulf %392, %393 : vector<128x128xf32>
    %cst_92 = arith.constant 2.000000e+00 : f32
    %395 = vector.broadcast %cst_92 : f32 to vector<128x1xf32>
    %396 = arith.cmpf oeq, %376, %395 : vector<128x1xf32>
    %cst_93 = arith.constant 1.000000e+00 : f32
    %cst_94 = arith.constant 0.000000e+00 : f32
    %397 = vector.broadcast %cst_93 : f32 to vector<128x1xf32>
    %398 = vector.broadcast %cst_94 : f32 to vector<128x1xf32>
    %399 = arith.select %396, %397, %398 : vector<128x1xi1>, vector<128x1xf32>
    %400 = vector.extract_strided_slice %34 {offsets = [2, 0], sizes = [1, 128], strides = [1, 1]} : vector<4x128xf32> to vector<1x128xf32>
    %401 = vector.broadcast %399 : vector<128x1xf32> to vector<128x128xf32>
    %402 = vector.broadcast %400 : vector<1x128xf32> to vector<128x128xf32>
    %403 = arith.mulf %401, %402 : vector<128x128xf32>
    %cst_95 = arith.constant 3.000000e+00 : f32
    %404 = vector.broadcast %cst_95 : f32 to vector<128x1xf32>
    %405 = arith.cmpf oeq, %376, %404 : vector<128x1xf32>
    %cst_96 = arith.constant 1.000000e+00 : f32
    %cst_97 = arith.constant 0.000000e+00 : f32
    %406 = vector.broadcast %cst_96 : f32 to vector<128x1xf32>
    %407 = vector.broadcast %cst_97 : f32 to vector<128x1xf32>
    %408 = arith.select %405, %406, %407 : vector<128x1xi1>, vector<128x1xf32>
    %409 = vector.extract_strided_slice %34 {offsets = [3, 0], sizes = [1, 128], strides = [1, 1]} : vector<4x128xf32> to vector<1x128xf32>
    %410 = vector.broadcast %408 : vector<128x1xf32> to vector<128x128xf32>
    %411 = vector.broadcast %409 : vector<1x128xf32> to vector<128x128xf32>
    %412 = arith.mulf %410, %411 : vector<128x128xf32>
    %413 = arith.addf %385, %394 : vector<128x128xf32>
    %414 = arith.addf %403, %412 : vector<128x128xf32>
    %415 = arith.addf %413, %414 : vector<128x128xf32>
    %416 = vector.extract_strided_slice %373 {offsets = [0, 0], sizes = [128, 1], strides = [1, 1]} : vector<128x5xf32> to vector<128x1xf32>
    %417 = vector.extract_strided_slice %36 {offsets = [0, 0], sizes = [1, 128], strides = [1, 1]} : vector<5x128xf32> to vector<1x128xf32>
    %418 = vector.broadcast %416 : vector<128x1xf32> to vector<128x128xf32>
    %419 = vector.broadcast %417 : vector<1x128xf32> to vector<128x128xf32>
    %420 = arith.mulf %418, %419 : vector<128x128xf32>
    %421 = vector.extract_strided_slice %373 {offsets = [0, 1], sizes = [128, 1], strides = [1, 1]} : vector<128x5xf32> to vector<128x1xf32>
    %422 = vector.extract_strided_slice %36 {offsets = [1, 0], sizes = [1, 128], strides = [1, 1]} : vector<5x128xf32> to vector<1x128xf32>
    %423 = vector.broadcast %421 : vector<128x1xf32> to vector<128x128xf32>
    %424 = vector.broadcast %422 : vector<1x128xf32> to vector<128x128xf32>
    %425 = arith.mulf %423, %424 : vector<128x128xf32>
    %426 = vector.extract_strided_slice %373 {offsets = [0, 2], sizes = [128, 1], strides = [1, 1]} : vector<128x5xf32> to vector<128x1xf32>
    %427 = vector.extract_strided_slice %36 {offsets = [2, 0], sizes = [1, 128], strides = [1, 1]} : vector<5x128xf32> to vector<1x128xf32>
    %428 = vector.broadcast %426 : vector<128x1xf32> to vector<128x128xf32>
    %429 = vector.broadcast %427 : vector<1x128xf32> to vector<128x128xf32>
    %430 = arith.mulf %428, %429 : vector<128x128xf32>
    %431 = vector.extract_strided_slice %373 {offsets = [0, 3], sizes = [128, 1], strides = [1, 1]} : vector<128x5xf32> to vector<128x1xf32>
    %432 = vector.extract_strided_slice %36 {offsets = [3, 0], sizes = [1, 128], strides = [1, 1]} : vector<5x128xf32> to vector<1x128xf32>
    %433 = vector.broadcast %431 : vector<128x1xf32> to vector<128x128xf32>
    %434 = vector.broadcast %432 : vector<1x128xf32> to vector<128x128xf32>
    %435 = arith.mulf %433, %434 : vector<128x128xf32>
    %436 = vector.extract_strided_slice %373 {offsets = [0, 4], sizes = [128, 1], strides = [1, 1]} : vector<128x5xf32> to vector<128x1xf32>
    %437 = vector.extract_strided_slice %36 {offsets = [4, 0], sizes = [1, 128], strides = [1, 1]} : vector<5x128xf32> to vector<1x128xf32>
    %438 = vector.broadcast %436 : vector<128x1xf32> to vector<128x128xf32>
    %439 = vector.broadcast %437 : vector<1x128xf32> to vector<128x128xf32>
    %440 = arith.mulf %438, %439 : vector<128x128xf32>
    %441 = arith.addf %420, %425 : vector<128x128xf32>
    %442 = arith.addf %430, %435 : vector<128x128xf32>
    %443 = arith.addf %441, %442 : vector<128x128xf32>
    %444 = arith.addf %443, %440 : vector<128x128xf32>
    %445 = vector.extract_strided_slice %373 {offsets = [0, 0], sizes = [128, 1], strides = [1, 1]} : vector<128x5xf32> to vector<128x1xf32>
    %446 = math.absf %445 : vector<128x1xf32>
    %447 = vector.extract_strided_slice %373 {offsets = [0, 1], sizes = [128, 1], strides = [1, 1]} : vector<128x5xf32> to vector<128x1xf32>
    %448 = math.absf %447 : vector<128x1xf32>
    %449 = vector.extract_strided_slice %373 {offsets = [0, 2], sizes = [128, 1], strides = [1, 1]} : vector<128x5xf32> to vector<128x1xf32>
    %450 = math.absf %449 : vector<128x1xf32>
    %451 = vector.extract_strided_slice %373 {offsets = [0, 3], sizes = [128, 1], strides = [1, 1]} : vector<128x5xf32> to vector<128x1xf32>
    %452 = math.absf %451 : vector<128x1xf32>
    %453 = vector.extract_strided_slice %373 {offsets = [0, 4], sizes = [128, 1], strides = [1, 1]} : vector<128x5xf32> to vector<128x1xf32>
    %454 = math.absf %453 : vector<128x1xf32>
    %455 = arith.addf %446, %448 : vector<128x1xf32>
    %456 = arith.addf %450, %452 : vector<128x1xf32>
    %457 = arith.addf %455, %456 : vector<128x1xf32>
    %458 = arith.addf %457, %454 : vector<128x1xf32>
    %cst_98 = arith.constant 0.000000e+00 : f32
    %459 = vector.broadcast %cst_98 : f32 to vector<128x1xf32>
    %460 = arith.cmpf ogt, %458, %459 : vector<128x1xf32>
    %cst_99 = arith.constant -1.000000e+00 : f32
    %461 = vector.broadcast %cst_99 : f32 to vector<128x1xf32>
    %462 = arith.cmpf oeq, %376, %461 : vector<128x1xf32>
    %cst_100 = arith.constant 0.000000e+00 : f32
    %463 = vector.broadcast %cst_100 : f32 to vector<128x1xf32>
    %464 = arith.cmpf oge, %376, %463 : vector<128x1xf32>
    %465 = arith.andi %464, %460 : vector<128x1xi1>
    %466 = arith.ori %462, %465 : vector<128x1xi1>
    %cst_101 = arith.constant dense<true> : vector<128x1xi1>
    %467 = arith.xori %460, %cst_101 : vector<128x1xi1>
    %468 = arith.andi %464, %467 : vector<128x1xi1>
    %469 = arith.addf %47, %415 : vector<128x128xf32>
    %470 = arith.addf %469, %444 : vector<128x128xf32>
    %cst_102 = arith.constant 0.000000e+00 : f32
    %471 = vector.broadcast %cst_102 : f32 to vector<128x128xf32>
    %472 = arith.maximumf %470, %471 : vector<128x128xf32>
    %cst_103 = arith.constant 0.000000e+00 : f32
    %473 = vector.shape_cast %466 : vector<128x1xi1> to vector<128x1xi1>
    %474 = vector.broadcast %473 : vector<128x1xi1> to vector<128x128xi1>
    %475 = vector.broadcast %cst_103 : f32 to vector<128x128xf32>
    %476 = arith.select %474, %472, %475 : vector<128x128xi1>, vector<128x128xf32>
    %477 = vector.extract_strided_slice %36 {offsets = [0, 0], sizes = [1, 128], strides = [1, 1]} : vector<5x128xf32> to vector<1x128xf32>
    %478 = vector.broadcast %477 : vector<1x128xf32> to vector<128x128xf32>
    %479 = arith.addf %469, %478 : vector<128x128xf32>
    %cst_104 = arith.constant 0.000000e+00 : f32
    %480 = vector.broadcast %cst_104 : f32 to vector<128x128xf32>
    %481 = arith.maximumf %479, %480 : vector<128x128xf32>
    %cst_105 = arith.constant 0.000000e+00 : f32
    %482 = vector.shape_cast %468 : vector<128x1xi1> to vector<128x1xi1>
    %483 = vector.broadcast %482 : vector<128x1xi1> to vector<128x128xi1>
    %484 = vector.broadcast %cst_105 : f32 to vector<128x128xf32>
    %485 = arith.select %483, %481, %484 : vector<128x128xi1>, vector<128x128xf32>
    %486 = vector.extract_strided_slice %36 {offsets = [1, 0], sizes = [1, 128], strides = [1, 1]} : vector<5x128xf32> to vector<1x128xf32>
    %487 = vector.broadcast %486 : vector<1x128xf32> to vector<128x128xf32>
    %488 = arith.addf %469, %487 : vector<128x128xf32>
    %cst_106 = arith.constant 0.000000e+00 : f32
    %489 = vector.broadcast %cst_106 : f32 to vector<128x128xf32>
    %490 = arith.maximumf %488, %489 : vector<128x128xf32>
    %cst_107 = arith.constant 0.000000e+00 : f32
    %491 = vector.shape_cast %468 : vector<128x1xi1> to vector<128x1xi1>
    %492 = vector.broadcast %491 : vector<128x1xi1> to vector<128x128xi1>
    %493 = vector.broadcast %cst_107 : f32 to vector<128x128xf32>
    %494 = arith.select %492, %490, %493 : vector<128x128xi1>, vector<128x128xf32>
    %495 = vector.extract_strided_slice %36 {offsets = [2, 0], sizes = [1, 128], strides = [1, 1]} : vector<5x128xf32> to vector<1x128xf32>
    %496 = vector.broadcast %495 : vector<1x128xf32> to vector<128x128xf32>
    %497 = arith.addf %469, %496 : vector<128x128xf32>
    %cst_108 = arith.constant 0.000000e+00 : f32
    %498 = vector.broadcast %cst_108 : f32 to vector<128x128xf32>
    %499 = arith.maximumf %497, %498 : vector<128x128xf32>
    %cst_109 = arith.constant 0.000000e+00 : f32
    %500 = vector.shape_cast %468 : vector<128x1xi1> to vector<128x1xi1>
    %501 = vector.broadcast %500 : vector<128x1xi1> to vector<128x128xi1>
    %502 = vector.broadcast %cst_109 : f32 to vector<128x128xf32>
    %503 = arith.select %501, %499, %502 : vector<128x128xi1>, vector<128x128xf32>
    %504 = vector.extract_strided_slice %36 {offsets = [3, 0], sizes = [1, 128], strides = [1, 1]} : vector<5x128xf32> to vector<1x128xf32>
    %505 = vector.broadcast %504 : vector<1x128xf32> to vector<128x128xf32>
    %506 = arith.addf %469, %505 : vector<128x128xf32>
    %cst_110 = arith.constant 0.000000e+00 : f32
    %507 = vector.broadcast %cst_110 : f32 to vector<128x128xf32>
    %508 = arith.maximumf %506, %507 : vector<128x128xf32>
    %cst_111 = arith.constant 0.000000e+00 : f32
    %509 = vector.shape_cast %468 : vector<128x1xi1> to vector<128x1xi1>
    %510 = vector.broadcast %509 : vector<128x1xi1> to vector<128x128xi1>
    %511 = vector.broadcast %cst_111 : f32 to vector<128x128xf32>
    %512 = arith.select %510, %508, %511 : vector<128x128xi1>, vector<128x128xf32>
    %513 = vector.extract_strided_slice %36 {offsets = [4, 0], sizes = [1, 128], strides = [1, 1]} : vector<5x128xf32> to vector<1x128xf32>
    %514 = vector.broadcast %513 : vector<1x128xf32> to vector<128x128xf32>
    %515 = arith.addf %469, %514 : vector<128x128xf32>
    %cst_112 = arith.constant 0.000000e+00 : f32
    %516 = vector.broadcast %cst_112 : f32 to vector<128x128xf32>
    %517 = arith.maximumf %515, %516 : vector<128x128xf32>
    %cst_113 = arith.constant 0.000000e+00 : f32
    %518 = vector.shape_cast %468 : vector<128x1xi1> to vector<128x1xi1>
    %519 = vector.broadcast %518 : vector<128x1xi1> to vector<128x128xi1>
    %520 = vector.broadcast %cst_113 : f32 to vector<128x128xf32>
    %521 = arith.select %519, %517, %520 : vector<128x128xi1>, vector<128x128xf32>
    %522 = arith.addf %476, %485 : vector<128x128xf32>
    %523 = arith.addf %494, %503 : vector<128x128xf32>
    %524 = arith.addf %512, %521 : vector<128x128xf32>
    %525 = arith.addf %522, %523 : vector<128x128xf32>
    %526 = arith.addf %525, %524 : vector<128x128xf32>
    %527 = arith.extui %466 : vector<128x1xi1> to vector<128x1xi32>
    %528 = arith.sitofp %527 : vector<128x1xi32> to vector<128x1xf32>
    %529 = arith.extui %468 : vector<128x1xi1> to vector<128x1xi32>
    %530 = arith.sitofp %529 : vector<128x1xi32> to vector<128x1xf32>
    %cst_114 = arith.constant 5.000000e+00 : f32
    %531 = vector.broadcast %cst_114 : f32 to vector<128x1xf32>
    %532 = arith.mulf %531, %530 : vector<128x1xf32>
    %533 = arith.addf %528, %532 : vector<128x1xf32>
    %534 = arith.addf %202, %364 : vector<128x128xf32>
    %535 = arith.addf %534, %526 : vector<128x128xf32>
    %536 = arith.addf %209, %371 : vector<128x1xf32>
    %537 = arith.addf %536, %533 : vector<128x1xf32>
    %538 = arith.truncf %535 : vector<128x128xf32> to vector<128x128xbf16>
    %cst_115 = arith.constant dense<0.000000e+00> : vector<128x128xf32>
    %539 = tpu.matmul %538, %39, %cst_115 {dimension_numbers = #tpu.dot_dimension_numbers<[1], [0], [0], [1], [0, 0, 1, 1], [], []>} : vector<128x128xbf16>, vector<128x128xbf16>, vector<128x128xf32> -> vector<128x128xf32>
    %540 = vector.broadcast %537 : vector<128x1xf32> to vector<128x128xf32>
    %541 = vector.broadcast %41 : vector<1x128xf32> to vector<128x128xf32>
    %542 = arith.mulf %540, %541 : vector<128x128xf32>
    %543 = arith.addf %539, %542 : vector<128x128xf32>
    %c0_116 = arith.constant 0 : index
    %c0_117 = arith.constant 0 : index
    %544 = vector.load %arg5[%c0_116, %c0_117] : memref<128x128xf32, #tpu.memory_space<vmem>>, vector<128x128xf32>
    tpu.vector_store %arg5[%c0_116, %c0_117], %543 {strides = array<i32>} : memref<128x128xf32, #tpu.memory_space<vmem>>, vector<128x128xf32>,
    return
  }
  func.func @transform_0(%arg0: i32) -> (i32, i32) {
    %c0_i32 = arith.constant 0 : i32
    %c0_i32_0 = arith.constant 0 : i32
    return %arg0, %c0_i32 : i32, i32
  }
  func.func @transform_1(%arg0: i32) -> (i32, i32) {
    %c0_i32 = arith.constant 0 : i32
    %c0_i32_0 = arith.constant 0 : i32
    %c0_i32_1 = arith.constant 0 : i32
    return %c0_i32, %c0_i32_0 : i32, i32
  }
  func.func @transform_2(%arg0: i32) -> (i32, i32) {
    %c0_i32 = arith.constant 0 : i32
    %c0_i32_0 = arith.constant 0 : i32
    %c0_i32_1 = arith.constant 0 : i32
    return %c0_i32, %c0_i32_0 : i32, i32
  }
  func.func @transform_3(%arg0: i32) -> (i32, i32) {
    %c0_i32 = arith.constant 0 : i32
    %c0_i32_0 = arith.constant 0 : i32
    %c0_i32_1 = arith.constant 0 : i32
    return %c0_i32, %c0_i32_0 : i32, i32
  }
  func.func @transform_4(%arg0: i32) -> (i32, i32) {
    %c0_i32 = arith.constant 0 : i32
    %c0_i32_0 = arith.constant 0 : i32
    return %arg0, %c0_i32 : i32, i32
  }
}

</mosaic_0001>

<llo_original>
// kernel: tpu_custom_call.1
$region0: #{tpu_custom_call.1}
  #allocation0 [shape = 'u32[]', space=smem, size = 0x4, offset = 0x4, fixed_abs, tag = 'smem constant byte address 0x4 - core index']
  #allocation1 [shape = 'u32[144,128]{1,0:T(1,128)}', space=vmem, size = 0x12000, scoped, tag = 'internal scratch']
  %s0 = inlined_call_operand.vmem [shape: bf16[256,384], index: 0, kind: input, shape index: {}]
  %s1 = inlined_call_operand.vmem [shape: bf16[144,640], index: 1, kind: input, shape index: {}]
  %s2 = inlined_call_operand.vmem [shape: bf16[656,192], index: 2, kind: input, shape index: {}]
  %s3 = inlined_call_operand.vmem [shape: bf16[656,128], index: 3, kind: input, shape index: {}]
  %s4 = inlined_call_operand.hbm [shape: f32[256,128], index: 4, kind: output, shape index: {}]
  %s5 = sld [smem:[#allocation0]]
  $region49: #{tpu_custom_call.1} parent=0
    _
  %s7 = ssub.s32 1, %s5
  %s8 = scalar_select 0, %s7, %s5
  $region1: #{tpu_custom_call.1} parent=0
    #allocation2 [shape = 'u8[131072]{0}', space=vmem, size = 0x20000, scoped, tag = 'output window, operand 0']
    #allocation3 [shape = 's32[2]{0}', space=sflag, size = 0x8, scoped, tag = 'scoped memory for tpu_custom_call.1']
    %9 = vsyncpa [#allocation3], 0
    %s10 = scalar_lea.sflag [#allocation3], 1
    %11 = vsyncpa %s10, 0
    loop: start=0, step=1, limit=4
    $region2: #{tpu_custom_call.1} parent=1 // loop_pre_header
      _
    $region3: #{tpu_custom_call.1} parent=1 // loop_header
      %s13 = sphi 0, %s17
      %p14 = scmp.ge.s32.totalorder %s13, 4
      %s23 = sphi 0, %s25
      %s26 = sphi 0, %s23
      %s27 = sphi 0, %s26
      %s43 = sphi 0, %s27
      %s47 = sphi 0, %s47
      %s49 = sphi 0, %s47
      %s50 = sphi 0, %s49
      %s64 = sphi 0, %s50
      %s68 = sphi 0, %s68
      %s70 = sphi 0, %s68
      %s71 = sphi 0, %s70
      %s85 = sphi 0, %s71
      %s89 = sphi 0, %s89
      %s91 = sphi 0, %s89
      %s92 = sphi 0, %s91
      %s106 = sphi 0, %s92
      %s112 = sphi 0, %s114
      %s115 = sphi 0, %s112
      %s116 = sphi 0, %s115
      %s132 = sphi 0, %s116
    $region4: #{tpu_custom_call.1} parent=1 // loop_header_branch
      %16 = sbr.rel (%p14) target = $region8
    $region5: #{tpu_custom_call.1} parent=1 // loop_body
      %s18 = ssub.s32 %s13, 1
      %s19 = ssub.s32 %s13, 2
      %s20 = sadd.s32 %s13, 1
      %s21 = ssub.s32 %s13, %s20
      %p22 = scmp.eq.s32.totalorder %s21, 0
      %s24 = sadd.s32 %s23, 1
      %s25 = scalar_select %p22, %s23, %s24
      %p28 = pneg %p22
      %p29 = scmp.eq.s32.totalorder %s13, 1
      %p30 = por %p28, %p29
      %p31 = scmp.ne.s32.totalorder %s23, %s26
      %p32 = scmp.eq.s32.totalorder %s13, 0
      %p33 = por %p31, %p32
      %p34 = scmp.ne.s32.totalorder %s23, %s26
      %p35 = scmp.eq.s32.totalorder %s18, 1
      %p36 = por %p34, %p35
      %p37 = scmp.ne.s32.totalorder %s26, %s27
      %p38 = scmp.eq.s32.totalorder %s18, 0
      %p39 = por %p37, %p38
      %p40 = scmp.ne.s32.totalorder %s26, %s27
      %p41 = scmp.eq.s32.totalorder %s19, 1
      %p42 = por %p40, %p41
      %p44 = scmp.ne.s32.totalorder %s27, %s43
      %p45 = scmp.eq.s32.totalorder %s19, 0
      %p46 = por %p44, %p45
      %s48 = sadd.s32 %s47, 1
      %p51 = scmp.eq.s32.totalorder %s13, 1
      %p52 = scmp.ne.s32.totalorder %s47, %s49
      %p53 = scmp.eq.s32.totalorder %s13, 0
      %p54 = por %p52, %p53
      %p55 = scmp.ne.s32.totalorder %s47, %s49
      %p56 = scmp.eq.s32.totalorder %s18, 1
      %p57 = por %p55, %p56
      %p58 = scmp.ne.s32.totalorder %s49, %s50
      %p59 = scmp.eq.s32.totalorder %s18, 0
      %p60 = por %p58, %p59
      %p61 = scmp.ne.s32.totalorder %s49, %s50
      %p62 = scmp.eq.s32.totalorder %s19, 1
      %p63 = por %p61, %p62
      %p65 = scmp.ne.s32.totalorder %s50, %s64
      %p66 = scmp.eq.s32.totalorder %s19, 0
      %p67 = por %p65, %p66
      %s69 = sadd.s32 %s68, 1
      %p72 = scmp.eq.s32.totalorder %s13, 1
      %p73 = scmp.ne.s32.totalorder %s68, %s70
      %p74 = scmp.eq.s32.totalorder %s13, 0
      %p75 = por %p73, %p74
      %p76 = scmp.ne.s32.totalorder %s68, %s70
      %p77 = scmp.eq.s32.totalorder %s18, 1
      %p78 = por %p76, %p77
      %p79 = scmp.ne.s32.totalorder %s70, %s71
      %p80 = scmp.eq.s32.totalorder %s18, 0
      %p81 = por %p79, %p80
      %p82 = scmp.ne.s32.totalorder %s70, %s71
      %p83 = scmp.eq.s32.totalorder %s19, 1
      %p84 = por %p82, %p83
      %p86 = scmp.ne.s32.totalorder %s71, %s85
      %p87 = scmp.eq.s32.totalorder %s19, 0
      %p88 = por %p86, %p87
      %s90 = sadd.s32 %s89, 1
      %p93 = scmp.eq.s32.totalorder %s13, 1
      %p94 = scmp.ne.s32.totalorder %s89, %s91
      %p95 = scmp.eq.s32.totalorder %s13, 0
      %p96 = por %p94, %p95
      %p97 = scmp.ne.s32.totalorder %s89, %s91
      %p98 = scmp.eq.s32.totalorder %s18, 1
      %p99 = por %p97, %p98
      %p100 = scmp.ne.s32.totalorder %s91, %s92
      %p101 = scmp.eq.s32.totalorder %s18, 0
      %p102 = por %p100, %p101
      %p103 = scmp.ne.s32.totalorder %s91, %s92
      %p104 = scmp.eq.s32.totalorder %s19, 1
      %p105 = por %p103, %p104
      %p107 = scmp.ne.s32.totalorder %s92, %s106
      %p108 = scmp.eq.s32.totalorder %s19, 0
      %p109 = por %p107, %p108
      %s110 = ssub.s32 %s13, %s20
      %p111 = scmp.eq.s32.totalorder %s110, 0
      %s113 = sadd.s32 %s112, 1
      %s114 = scalar_select %p111, %s112, %s113
      %p117 = pneg %p111
      %p118 = scmp.eq.s32.totalorder %s13, 1
      %p119 = por %p117, %p118
      %p120 = scmp.ne.s32.totalorder %s112, %s115
      %p121 = scmp.eq.s32.totalorder %s13, 0
      %p122 = por %p120, %p121
      %p123 = scmp.ne.s32.totalorder %s112, %s115
      %p124 = scmp.eq.s32.totalorder %s18, 1
      %p125 = por %p123, %p124
      %p126 = scmp.ne.s32.totalorder %s115, %s116
      %p127 = scmp.eq.s32.totalorder %s18, 0
      %p128 = por %p126, %p127
      %p129 = scmp.ne.s32.totalorder %s115, %s116
      %p130 = scmp.eq.s32.totalorder %s19, 1
      %p131 = por %p129, %p130
      %p133 = scmp.ne.s32.totalorder %s116, %s132
      %p134 = scmp.eq.s32.totalorder %s19, 0
      %p135 = por %p133, %p134
      %p136 = scmp.le.s32.totalorder 1, %s13
      %p137 = scmp.lt.s32.totalorder %s13, 3
      %p138 = pnand %p136, %p137
      %p139 = pneg %p138
      // Predicated region
      $region9: #{tpu_custom_call.1} parent=5 // pred_check
        _
      $region10: #{tpu_custom_call.1} parent=5 // pred_check_branch
        %141 = sbr.rel (%p138) target = $region12
      $region11: #{tpu_custom_call.1} parent=5 // pred_region
        %s142 = ssub.s32 %s13, 1
        // Predicated region
        $region13: #{tpu_custom_call.1} parent=11 // pred_check
          %p143 = pneg %p60
        $region14: #{tpu_custom_call.1} parent=11 // pred_check_branch
          %145 = sbr.rel (%p143) target = $region16
        $region15: #{tpu_custom_call.1} parent=11 // pred_region
          _
        $region16: #{tpu_custom_call.1} parent=11 // pred_fallthru
          _
        // Predicated region
        $region17: #{tpu_custom_call.1} parent=11 // pred_check
          %p146 = pneg %p81
        $region18: #{tpu_custom_call.1} parent=11 // pred_check_branch
          %148 = sbr.rel (%p146) target = $region20
        $region19: #{tpu_custom_call.1} parent=11 // pred_region
          _
        $region20: #{tpu_custom_call.1} parent=11 // pred_fallthru
          _
        // Predicated region
        $region21: #{tpu_custom_call.1} parent=11 // pred_check
          %p149 = pneg %p102
        $region22: #{tpu_custom_call.1} parent=11 // pred_check_branch
          %151 = sbr.rel (%p149) target = $region24
        $region23: #{tpu_custom_call.1} parent=11 // pred_region
          _
        $region24: #{tpu_custom_call.1} parent=11 // pred_fallthru
          _
      $region12: #{tpu_custom_call.1} parent=5 // pred_fallthru
        _
      %p152 = scmp.lt.s32.totalorder %s13, 2
      // Predicated region
      $region25: #{tpu_custom_call.1} parent=5 // pred_check
        %p153 = pneg %p152
      $region26: #{tpu_custom_call.1} parent=5 // pred_check_branch
        %155 = sbr.rel (%p153) target = $region28
      $region27: #{tpu_custom_call.1} parent=5 // pred_region
        // Predicated region
        $region29: #{tpu_custom_call.1} parent=27 // pred_check
          %p156 = pneg %p33
        $region30: #{tpu_custom_call.1} parent=27 // pred_check_branch
          %158 = sbr.rel (%p156) target = $region32
        $region31: #{tpu_custom_call.1} parent=27 // pred_region
          %s159 = smul.u32 16, %s13
          %p160 = scmp.lt.s32.totalorder %s159, 31
          %s161 = scalar_select %p160, %s159, 31
          %s162 = smul.addr %s161, 3
          %s163 = smul.addr %s162, 4
          %s164 = scalar_lea.vmem %s0, %s163
          %s165 = smul.u32 16, %s13
        $region32: #{tpu_custom_call.1} parent=27 // pred_fallthru
          _
      $region28: #{tpu_custom_call.1} parent=5 // pred_fallthru
        _
      %p166 = scmp.le.s32.totalorder 1, %s13
      %p167 = scmp.lt.s32.totalorder %s13, 3
      %p168 = pnand %p166, %p167
      %p169 = pneg %p168
      // Predicated region
      $region33: #{tpu_custom_call.1} parent=5 // pred_check
        _
      $region34: #{tpu_custom_call.1} parent=5 // pred_check_branch
        %171 = sbr.rel (%p168) target = $region36
      $region35: #{tpu_custom_call.1} parent=5 // pred_region
        %s172 = ssub.s32 %s13, 1
        %s173 = smul.u32 16, %s18
        %p174 = scmp.lt.s32.totalorder %s173, 31
        %s175 = scalar_select %p174, %s173, 31
        %s176 = smul.addr %s175, 3
        %s177 = smul.addr %s176, 4
        %s178 = scalar_lea.vmem %s0, %s177
        %p179 = pneg %p39
        %p180 = pneg %p36
        %p181 = pneg %p60
        %p182 = pneg %p57
        %p183 = pneg %p81
        %p184 = pneg %p78
        %p185 = pneg %p102
        %p186 = pneg %p99
        %p187 = pneg %p128
        %p188 = pneg %p125
        %s189 = sand.u32 %s115, 1
        %s190 = scalar_lea.sflag [#allocation3], %s189
        %s191 = sand.u32 %s115, 1
        %s192 = smul.addr %s191, 128
        %s193 = scalar_lea.vmem [#allocation2], %s192
        %s194 = smul.u32 16, %s18
        %p195 = scmp.lt.s32.totalorder %s194, 31
        %s196 = scalar_select %p195, %s194, 31
        %s197 = smul.addr %s196, 3
        %s198 = smul.addr %s197, 4
        %s199 = scalar_lea.vmem %s0, %s198
        %s200 = smul.u32 16, %s18
        %s201 = smul.u32 16, %s18
        %v203 = vld [vmem:[%s199] sm:$0xff]
        %v204 = vld [vmem:[%s199 + $0x8] sm:$0xf]
        %v205 = vld [vmem:[%s199 + $0xc] sm:$0xff]
        %v206 = vld [vmem:[%s199 + $0x14] sm:$0xf]
        %v207 = vld [vmem:[%s199 + $0x18] sm:$0xff]
        %v208 = vld [vmem:[%s199 + $0x20] sm:$0xf]
        %v209 = vld [vmem:[%s199 + $0x24] sm:$0xff]
        %v210 = vld [vmem:[%s199 + $0x2c] sm:$0xf]
        %v211 = vld [vmem:[%s199 + $0x30] sm:$0xff]
        %v212 = vld [vmem:[%s199 + $0x38] sm:$0xf]
        %v213 = vld [vmem:[%s199 + $0x3c] sm:$0xff]
        %v214 = vld [vmem:[%s199 + $0x44] sm:$0xf]
        %v215 = vld [vmem:[%s199 + $0x48] sm:$0xff]
        %v216 = vld [vmem:[%s199 + $0x50] sm:$0xf]
        %v217 = vld [vmem:[%s199 + $0x54] sm:$0xff]
        %v218 = vld [vmem:[%s199 + $0x5c] sm:$0xf]
        %v219 = vld [vmem:[%s199 + $0x60] sm:$0xff]
        %v220 = vld [vmem:[%s199 + $0x68] sm:$0xf]
        %v221 = vld [vmem:[%s199 + $0x6c] sm:$0xff]
        %v222 = vld [vmem:[%s199 + $0x74] sm:$0xf]
        %v223 = vld [vmem:[%s199 + $0x78] sm:$0xff]
        %v224 = vld [vmem:[%s199 + $0x80] sm:$0xf]
        %v225 = vld [vmem:[%s199 + $0x84] sm:$0xff]
        %v226 = vld [vmem:[%s199 + $0x8c] sm:$0xf]
        %v227 = vld [vmem:[%s199 + $0x90] sm:$0xff]
        %v228 = vld [vmem:[%s199 + $0x98] sm:$0xf]
        %v229 = vld [vmem:[%s199 + $0x9c] sm:$0xff]
        %v230 = vld [vmem:[%s199 + $0xa4] sm:$0xf]
        %v231 = vld [vmem:[%s199 + $0xa8] sm:$0xff]
        %v232 = vld [vmem:[%s199 + $0xb0] sm:$0xf]
        %v233 = vld [vmem:[%s199 + $0xb4] sm:$0xff]
        %v234 = vld [vmem:[%s199 + $0xbc] sm:$0xf]
        %v235 = vunpack.c.l.bf16 %v204
        %v236 = vunpack.c.l.bf16 %v206
        %v237 = vunpack.c.l.bf16 %v208
        %v238 = vunpack.c.l.bf16 %v210
        %v239 = vunpack.c.l.bf16 %v212
        %v240 = vunpack.c.l.bf16 %v214
        %v241 = vunpack.c.l.bf16 %v216
        %v242 = vunpack.c.l.bf16 %v218
        %v243 = vunpack.c.l.bf16 %v220
        %v244 = vunpack.c.l.bf16 %v222
        %v245 = vunpack.c.l.bf16 %v224
        %v246 = vunpack.c.l.bf16 %v226
        %v247 = vunpack.c.l.bf16 %v228
        %v248 = vunpack.c.l.bf16 %v230
        %v249 = vunpack.c.l.bf16 %v232
        %v250 = vunpack.c.l.bf16 %v234
        %v251 = vld [vmem:[%s1] sm:$0xff]
        %v252 = vld [vmem:[%s1 + $0x8] sm:$0xff]
        %v253 = vld [vmem:[%s1 + $0x10] sm:$0xf]
        %v254 = vld [vmem:[%s1 + $0x14] sm:$0xff]
        %v255 = vld [vmem:[%s1 + $0x1c] sm:$0xff]
        %v256 = vld [vmem:[%s1 + $0x24] sm:$0xf]
        %v257 = vld [vmem:[%s1 + $0x28] sm:$0xff]
        %v258 = vld [vmem:[%s1 + $0x30] sm:$0xff]
        %v259 = vld [vmem:[%s1 + $0x38] sm:$0xf]
        %v260 = vld [vmem:[%s1 + $0x3c] sm:$0xff]
        %v261 = vld [vmem:[%s1 + $0x44] sm:$0xff]
        %v262 = vld [vmem:[%s1 + $0x4c] sm:$0xf]
        %v263 = vld [vmem:[%s1 + $0x50] sm:$0xff]
        %v264 = vld [vmem:[%s1 + $0x58] sm:$0xff]
        %v265 = vld [vmem:[%s1 + $0x60] sm:$0xf]
        %v266 = vld [vmem:[%s1 + $0x64] sm:$0xff]
        %v267 = vld [vmem:[%s1 + $0x6c] sm:$0xff]
        %v268 = vld [vmem:[%s1 + $0x74] sm:$0xf]
        %v269 = vld [vmem:[%s1 + $0x78] sm:$0xff]
        %v270 = vld [vmem:[%s1 + $0x80] sm:$0xff]
        %v271 = vld [vmem:[%s1 + $0x88] sm:$0xf]
        %v272 = vld [vmem:[%s1 + $0x8c] sm:$0xff]
        %v273 = vld [vmem:[%s1 + $0x94] sm:$0xff]
        %v274 = vld [vmem:[%s1 + $0x9c] sm:$0xf]
        %v275 = vld [vmem:[%s1 + $0xa0] sm:$0xff]
        %v276 = vld [vmem:[%s1 + $0xa8] sm:$0xff]
        %v277 = vld [vmem:[%s1 + $0xb0] sm:$0xf]
        %v278 = vld [vmem:[%s1 + $0xb4] sm:$0xff]
        %v279 = vld [vmem:[%s1 + $0xbc] sm:$0xff]
        %v280 = vld [vmem:[%s1 + $0xc4] sm:$0xf]
        %v281 = vld [vmem:[%s1 + $0xc8] sm:$0xff]
        %v282 = vld [vmem:[%s1 + $0xd0] sm:$0xff]
        %v283 = vld [vmem:[%s1 + $0xd8] sm:$0xf]
        %v284 = vld [vmem:[%s1 + $0xdc] sm:$0xff]
        %v285 = vld [vmem:[%s1 + $0xe4] sm:$0xff]
        %v286 = vld [vmem:[%s1 + $0xec] sm:$0xf]
        %v287 = vld [vmem:[%s1 + $0xf0] sm:$0xff]
        %v288 = vld [vmem:[%s1 + $0xf8] sm:$0xff]
        %v289 = vld [vmem:[%s1 + $0x100] sm:$0xf]
        %v290 = vld [vmem:[%s1 + $0x104] sm:$0xff]
        %v291 = vld [vmem:[%s1 + $0x10c] sm:$0xff]
        %v292 = vld [vmem:[%s1 + $0x114] sm:$0xf]
        %v293 = vld [vmem:[%s1 + $0x118] sm:$0xff]
        %v294 = vld [vmem:[%s1 + $0x120] sm:$0xff]
        %v295 = vld [vmem:[%s1 + $0x128] sm:$0xf]
        %v296 = vld [vmem:[%s1 + $0x12c] sm:$0xff]
        %v297 = vld [vmem:[%s1 + $0x134] sm:$0xff]
        %v298 = vld [vmem:[%s1 + $0x13c] sm:$0xf]
        %v299 = vld [vmem:[%s1 + $0x140] sm:$0x11]
        %v300 = vld [vmem:[%s1 + $0x148] sm:$0x11]
        %v301 = vld [vmem:[%s1 + $0x150] sm:$0x1]
        %v302 = vunpack.c.l.bf16 %v299
        %v303 = vunpack.c.h.bf16 %v299
        %v304 = vunpack.c.l.bf16 %v300
        %v305 = vunpack.c.h.bf16 %v300
        %v306 = vunpack.c.l.bf16 %v301
        %v307 = vlaneseq
        %v308 = vshrl.u32 %v307, 7
        %v309 = vsub.s32 0, %v308
        %v310 = vrot.slane %v302, %v309
        %v311 = vlaneseq
        %v312 = vshrl.u32 %v311, 7
        %v313 = vsub.s32 0, %v312
        %v314 = vrot.slane %v303, %v313
        %v315 = vlaneseq
        %v316 = vshrl.u32 %v315, 7
        %v317 = vsub.s32 0, %v316
        %v318 = vrot.slane %v304, %v317
        %v319 = vlaneseq
        %v320 = vshrl.u32 %v319, 7
        %v321 = vsub.s32 0, %v320
        %v322 = vrot.slane %v305, %v321
        %v323 = vlaneseq
        %v324 = vshrl.u32 %v323, 7
        %v325 = vsub.s32 0, %v324
        %v326 = vrot.slane %v306, %v325
        %v343 = vunpack.c.l.b16 %v203
        %v344 = vunpack.c.l.b16 %v205
        %v345 = vunpack.c.l.b16 %v207
        %v346 = vunpack.c.l.b16 %v209
        %v347 = vunpack.c.l.b16 %v211
        %v348 = vunpack.c.l.b16 %v213
        %v349 = vunpack.c.l.b16 %v215
        %v350 = vunpack.c.l.b16 %v217
        %v351 = vunpack.c.l.b16 %v219
        %v352 = vunpack.c.l.b16 %v221
        %v353 = vunpack.c.l.b16 %v223
        %v354 = vunpack.c.l.b16 %v225
        %v355 = vunpack.c.l.b16 %v227
        %v356 = vunpack.c.l.b16 %v229
        %v357 = vunpack.c.l.b16 %v231
        %v358 = vunpack.c.l.b16 %v233
        %v359 = vpack.c.b16 %v344, %v343
        %v360 = vpack.c.b16 %v346, %v345
        %v361 = vpack.c.b16 %v348, %v347
        %v362 = vpack.c.b16 %v350, %v349
        %v363 = vpack.c.b16 %v352, %v351
        %v364 = vpack.c.b16 %v354, %v353
        %v365 = vpack.c.b16 %v356, %v355
        %v366 = vpack.c.b16 %v358, %v357
        %v423 = vunpack.c.l.b16 %v251
        %v424 = vunpack.c.h.b16 %v251
        %v425 = vunpack.c.l.b16 %v252
        %v426 = vunpack.c.h.b16 %v252
        %v427 = vunpack.c.l.b16 %v253
        %v428 = vunpack.c.l.b16 %v254
        %v429 = vunpack.c.h.b16 %v254
        %v430 = vunpack.c.l.b16 %v255
        %v431 = vunpack.c.h.b16 %v255
        %v432 = vunpack.c.l.b16 %v256
        %v433 = vunpack.c.l.b16 %v257
        %v434 = vunpack.c.h.b16 %v257
        %v435 = vunpack.c.l.b16 %v258
        %v436 = vunpack.c.h.b16 %v258
        %v437 = vunpack.c.l.b16 %v259
        %v438 = vunpack.c.l.b16 %v260
        %v439 = vunpack.c.h.b16 %v260
        %v440 = vunpack.c.l.b16 %v261
        %v441 = vunpack.c.h.b16 %v261
        %v442 = vunpack.c.l.b16 %v262
        %v443 = vunpack.c.l.b16 %v263
        %v444 = vunpack.c.h.b16 %v263
        %v445 = vunpack.c.l.b16 %v264
        %v446 = vunpack.c.h.b16 %v264
        %v447 = vunpack.c.l.b16 %v265
        %v448 = vunpack.c.l.b16 %v266
        %v449 = vunpack.c.h.b16 %v266
        %v450 = vunpack.c.l.b16 %v267
        %v451 = vunpack.c.h.b16 %v267
        %v452 = vunpack.c.l.b16 %v268
        %v453 = vunpack.c.l.b16 %v269
        %v454 = vunpack.c.h.b16 %v269
        %v455 = vunpack.c.l.b16 %v270
        %v456 = vunpack.c.h.b16 %v270
        %v457 = vunpack.c.l.b16 %v271
        %v458 = vunpack.c.l.b16 %v272
        %v459 = vunpack.c.h.b16 %v272
        %v460 = vunpack.c.l.b16 %v273
        %v461 = vunpack.c.h.b16 %v273
        %v462 = vunpack.c.l.b16 %v274
        %v463 = vunpack.c.l.b16 %v275
        %v464 = vunpack.c.h.b16 %v275
        %v465 = vunpack.c.l.b16 %v276
        %v466 = vunpack.c.h.b16 %v276
        %v467 = vunpack.c.l.b16 %v277
        %v468 = vunpack.c.l.b16 %v278
        %v469 = vunpack.c.h.b16 %v278
        %v470 = vunpack.c.l.b16 %v279
        %v471 = vunpack.c.h.b16 %v279
        %v472 = vunpack.c.l.b16 %v280
        %v473 = vunpack.c.l.b16 %v281
        %v474 = vunpack.c.h.b16 %v281
        %v475 = vunpack.c.l.b16 %v282
        %v476 = vunpack.c.h.b16 %v282
        %v477 = vunpack.c.l.b16 %v283
        %v478 = vunpack.c.l.b16 %v284
        %v479 = vunpack.c.h.b16 %v284
        %v480 = vunpack.c.l.b16 %v285
        %v481 = vunpack.c.h.b16 %v285
        %v482 = vunpack.c.l.b16 %v286
        %v483 = vunpack.c.l.b16 %v287
        %v484 = vunpack.c.h.b16 %v287
        %v485 = vunpack.c.l.b16 %v288
        %v486 = vunpack.c.h.b16 %v288
        %v487 = vunpack.c.l.b16 %v289
        %v488 = vunpack.c.l.b16 %v290
        %v489 = vunpack.c.h.b16 %v290
        %v490 = vunpack.c.l.b16 %v291
        %v491 = vunpack.c.h.b16 %v291
        %v492 = vunpack.c.l.b16 %v292
        %v493 = vunpack.c.l.b16 %v293
        %v494 = vunpack.c.h.b16 %v293
        %v495 = vunpack.c.l.b16 %v294
        %v496 = vunpack.c.h.b16 %v294
        %v497 = vunpack.c.l.b16 %v295
        %v498 = vunpack.c.l.b16 %v296
        %v499 = vunpack.c.h.b16 %v296
        %v500 = vunpack.c.l.b16 %v297
        %v501 = vunpack.c.h.b16 %v297
        %v502 = vunpack.c.l.b16 %v298
        %v503 = vpack.c.b16 %v428, %v423
        %v504 = vpack.c.b16 %v429, %v424
        %v505 = vpack.c.b16 %v430, %v425
        %v506 = vpack.c.b16 %v431, %v426
        %v507 = vpack.c.b16 %v432, %v427
        %v508 = vpack.c.b16 %v438, %v433
        %v509 = vpack.c.b16 %v439, %v434
        %v510 = vpack.c.b16 %v440, %v435
        %v511 = vpack.c.b16 %v441, %v436
        %v512 = vpack.c.b16 %v442, %v437
        %v513 = vpack.c.b16 %v448, %v443
        %v514 = vpack.c.b16 %v449, %v444
        %v515 = vpack.c.b16 %v450, %v445
        %v516 = vpack.c.b16 %v451, %v446
        %v517 = vpack.c.b16 %v452, %v447
        %v518 = vpack.c.b16 %v458, %v453
        %v519 = vpack.c.b16 %v459, %v454
        %v520 = vpack.c.b16 %v460, %v455
        %v521 = vpack.c.b16 %v461, %v456
        %v522 = vpack.c.b16 %v462, %v457
        %v523 = vpack.c.b16 %v468, %v463
        %v524 = vpack.c.b16 %v469, %v464
        %v525 = vpack.c.b16 %v470, %v465
        %v526 = vpack.c.b16 %v471, %v466
        %v527 = vpack.c.b16 %v472, %v467
        %v528 = vpack.c.b16 %v478, %v473
        %v529 = vpack.c.b16 %v479, %v474
        %v530 = vpack.c.b16 %v480, %v475
        %v531 = vpack.c.b16 %v481, %v476
        %v532 = vpack.c.b16 %v482, %v477
        %v533 = vpack.c.b16 %v488, %v483
        %v534 = vpack.c.b16 %v489, %v484
        %v535 = vpack.c.b16 %v490, %v485
        %v536 = vpack.c.b16 %v491, %v486
        %v537 = vpack.c.b16 %v492, %v487
        %v538 = vpack.c.b16 %v498, %v493
        %v539 = vpack.c.b16 %v499, %v494
        %v540 = vpack.c.b16 %v500, %v495
        %v541 = vpack.c.b16 %v501, %v496
        %v542 = vpack.c.b16 %v502, %v497
        %583 = vmatprep.subr.bf16.mxu0 %v504
        %584 = vmatpush1.bf16.msra.mxu0 %v503
        %585 = vmatprep.subr.bf16.mxu0 %v509
        %586 = vmatpush1.bf16.msra.mxu0 %v508
        %587 = vmatprep.subr.bf16.mxu0 %v514
        %588 = vmatpush1.bf16.msra.mxu0 %v513
        %589 = vmatprep.subr.bf16.mxu0 %v519
        %590 = vmatpush1.bf16.msra.mxu0 %v518
        %591 = vmatprep.subr.bf16.mxu0 %v524
        %592 = vmatpush1.bf16.msra.mxu0 %v523
        %593 = vmatprep.subr.bf16.mxu0 %v529
        %594 = vmatpush1.bf16.msra.mxu0 %v528
        %595 = vmatprep.subr.bf16.mxu0 %v534
        %596 = vmatpush1.bf16.msra.mxu0 %v533
        %597 = vmatprep.subr.bf16.mxu0 %v539
        %598 = vmatpush1.bf16.msra.mxu0 %v538
        %599 = vmatprep.subr.bf16.mxu0 0
        %600 = vmatpush1.bf16.msra.mxu0 0
        %601 = vmatprep.subr.bf16.mxu0 0
        %602 = vmatpush1.bf16.msra.mxu0 0
        %603 = vmatprep.subr.bf16.mxu0 0
        %604 = vmatpush1.bf16.msra.mxu0 0
        %605 = vmatprep.subr.bf16.mxu0 0
        %606 = vmatpush1.bf16.msra.mxu0 0
        %607 = vmatprep.subr.bf16.mxu0 0
        %608 = vmatpush1.bf16.msra.mxu0 0
        %609 = vmatprep.subr.bf16.mxu0 0
        %610 = vmatpush1.bf16.msra.mxu0 0
        %611 = vmatprep.subr.bf16.mxu0 0
        %612 = vmatpush1.bf16.msra.mxu0 0
        %613 = vmatprep.subr.bf16.mxu0 0
        %614 = vmatpush1.bf16.msra.mxu0 0
        %615 = vmatprep.mubr.bf16.mxu0 0
        %616 = vmatmul.mubr.bf16.gmra.mrb[0].mxu0 %v359
        %v617 = vpop.f32.mrb[0].mxu0
        %v618 = vadd.f32 %v310, %v617
        %v619 = vpop.f32.mrb[0].mxu0
        %v620 = vadd.f32 %v314, %v619
        %v621 = vpop.f32.mrb[0].mxu0
        %v622 = vadd.f32 %v310, %v621
        %v623 = vpop.f32.mrb[0].mxu0
        %v624 = vadd.f32 %v314, %v623
        %625 = vmatprep.mubr.bf16.mxu0 0
        %626 = vmatmul.mubr.bf16.gmra.mrb[0].mxu0 %v360
        %v627 = vpop.f32.mrb[0].mxu0
        %v628 = vadd.f32 %v310, %v627
        %v629 = vpop.f32.mrb[0].mxu0
        %v630 = vadd.f32 %v314, %v629
        %v631 = vpop.f32.mrb[0].mxu0
        %v632 = vadd.f32 %v310, %v631
        %v633 = vpop.f32.mrb[0].mxu0
        %v634 = vadd.f32 %v314, %v633
        %635 = vmatprep.mubr.bf16.mxu0 0
        %636 = vmatmul.mubr.bf16.gmra.mrb[0].mxu0 %v361
        %v637 = vpop.f32.mrb[0].mxu0
        %v638 = vadd.f32 %v310, %v637
        %v639 = vpop.f32.mrb[0].mxu0
        %v640 = vadd.f32 %v314, %v639
        %v641 = vpop.f32.mrb[0].mxu0
        %v642 = vadd.f32 %v310, %v641
        %v643 = vpop.f32.mrb[0].mxu0
        %v644 = vadd.f32 %v314, %v643
        %645 = vmatprep.mubr.bf16.mxu0 0
        %646 = vmatmul.mubr.bf16.gmra.mrb[0].mxu0 %v362
        %v647 = vpop.f32.mrb[0].mxu0
        %v648 = vadd.f32 %v310, %v647
        %v649 = vpop.f32.mrb[0].mxu0
        %v650 = vadd.f32 %v314, %v649
        %v651 = vpop.f32.mrb[0].mxu0
        %v652 = vadd.f32 %v310, %v651
        %v653 = vpop.f32.mrb[0].mxu0
        %v654 = vadd.f32 %v314, %v653
        %655 = vmatprep.mubr.bf16.mxu0 0
        %656 = vmatmul.mubr.bf16.gmra.mrb[0].mxu0 %v363
        %v657 = vpop.f32.mrb[0].mxu0
        %v658 = vadd.f32 %v310, %v657
        %v659 = vpop.f32.mrb[0].mxu0
        %v660 = vadd.f32 %v314, %v659
        %v661 = vpop.f32.mrb[0].mxu0
        %v662 = vadd.f32 %v310, %v661
        %v663 = vpop.f32.mrb[0].mxu0
        %v664 = vadd.f32 %v314, %v663
        %665 = vmatprep.mubr.bf16.mxu0 0
        %666 = vmatmul.mubr.bf16.gmra.mrb[0].mxu0 %v364
        %v667 = vpop.f32.mrb[0].mxu0
        %v668 = vadd.f32 %v310, %v667
        %v669 = vpop.f32.mrb[0].mxu0
        %v670 = vadd.f32 %v314, %v669
        %v671 = vpop.f32.mrb[0].mxu0
        %v672 = vadd.f32 %v310, %v671
        %v673 = vpop.f32.mrb[0].mxu0
        %v674 = vadd.f32 %v314, %v673
        %675 = vmatprep.mubr.bf16.mxu0 0
        %676 = vmatmul.mubr.bf16.gmra.mrb[0].mxu0 %v365
        %v677 = vpop.f32.mrb[0].mxu0
        %v678 = vadd.f32 %v310, %v677
        %v679 = vpop.f32.mrb[0].mxu0
        %v680 = vadd.f32 %v314, %v679
        %v681 = vpop.f32.mrb[0].mxu0
        %v682 = vadd.f32 %v310, %v681
        %v683 = vpop.f32.mrb[0].mxu0
        %v684 = vadd.f32 %v314, %v683
        %685 = vmatprep.mubr.bf16.mxu0 0
        %686 = vmatmul.mubr.bf16.gmra.mrb[0].mxu0 %v366
        %v687 = vpop.f32.mrb[0].mxu0
        %v688 = vadd.f32 %v310, %v687
        %v689 = vpop.f32.mrb[0].mxu0
        %v690 = vadd.f32 %v314, %v689
        %v691 = vpop.f32.mrb[0].mxu0
        %v692 = vadd.f32 %v310, %v691
        %v693 = vpop.f32.mrb[0].mxu0
        %v694 = vadd.f32 %v314, %v693
        %695 = vdwg.mxu0
        %696 = vmatprep.subr.bf16.mxu0 %v506
        %697 = vmatpush1.bf16.msra.mxu0 %v505
        %698 = vmatprep.subr.bf16.mxu0 %v511
        %699 = vmatpush1.bf16.msra.mxu0 %v510
        %700 = vmatprep.subr.bf16.mxu0 %v516
        %701 = vmatpush1.bf16.msra.mxu0 %v515
        %702 = vmatprep.subr.bf16.mxu0 %v521
        %703 = vmatpush1.bf16.msra.mxu0 %v520
        %704 = vmatprep.subr.bf16.mxu0 %v526
        %705 = vmatpush1.bf16.msra.mxu0 %v525
        %706 = vmatprep.subr.bf16.mxu0 %v531
        %707 = vmatpush1.bf16.msra.mxu0 %v530
        %708 = vmatprep.subr.bf16.mxu0 %v536
        %709 = vmatpush1.bf16.msra.mxu0 %v535
        %710 = vmatprep.subr.bf16.mxu0 %v541
        %711 = vmatpush1.bf16.msra.mxu0 %v540
        %712 = vmatprep.subr.bf16.mxu0 0
        %713 = vmatpush1.bf16.msra.mxu0 0
        %714 = vmatprep.subr.bf16.mxu0 0
        %715 = vmatpush1.bf16.msra.mxu0 0
        %716 = vmatprep.subr.bf16.mxu0 0
        %717 = vmatpush1.bf16.msra.mxu0 0
        %718 = vmatprep.subr.bf16.mxu0 0
        %719 = vmatpush1.bf16.msra.mxu0 0
        %720 = vmatprep.subr.bf16.mxu0 0
        %721 = vmatpush1.bf16.msra.mxu0 0
        %722 = vmatprep.subr.bf16.mxu0 0
        %723 = vmatpush1.bf16.msra.mxu0 0
        %724 = vmatprep.subr.bf16.mxu0 0
        %725 = vmatpush1.bf16.msra.mxu0 0
        %726 = vmatprep.subr.bf16.mxu0 0
        %727 = vmatpush1.bf16.msra.mxu0 0
        %728 = vmatprep.mubr.bf16.mxu0 0
        %729 = vmatmul.mubr.bf16.gmra.mrb[0].mxu0 %v359
        %v730 = vpop.f32.mrb[0].mxu0
        %v731 = vadd.f32 %v318, %v730
        %v732 = vpop.f32.mrb[0].mxu0
        %v733 = vadd.f32 %v322, %v732
        %v734 = vpop.f32.mrb[0].mxu0
        %v735 = vadd.f32 %v318, %v734
        %v736 = vpop.f32.mrb[0].mxu0
        %v737 = vadd.f32 %v322, %v736
        %738 = vmatprep.mubr.bf16.mxu0 0
        %739 = vmatmul.mubr.bf16.gmra.mrb[0].mxu0 %v360
        %v740 = vpop.f32.mrb[0].mxu0
        %v741 = vadd.f32 %v318, %v740
        %v742 = vpop.f32.mrb[0].mxu0
        %v743 = vadd.f32 %v322, %v742
        %v744 = vpop.f32.mrb[0].mxu0
        %v745 = vadd.f32 %v318, %v744
        %v746 = vpop.f32.mrb[0].mxu0
        %v747 = vadd.f32 %v322, %v746
        %748 = vmatprep.mubr.bf16.mxu0 0
        %749 = vmatmul.mubr.bf16.gmra.mrb[0].mxu0 %v361
        %v750 = vpop.f32.mrb[0].mxu0
        %v751 = vadd.f32 %v318, %v750
        %v752 = vpop.f32.mrb[0].mxu0
        %v753 = vadd.f32 %v322, %v752
        %v754 = vpop.f32.mrb[0].mxu0
        %v755 = vadd.f32 %v318, %v754
        %v756 = vpop.f32.mrb[0].mxu0
        %v757 = vadd.f32 %v322, %v756
        %758 = vmatprep.mubr.bf16.mxu0 0
        %759 = vmatmul.mubr.bf16.gmra.mrb[0].mxu0 %v362
        %v760 = vpop.f32.mrb[0].mxu0
        %v761 = vadd.f32 %v318, %v760
        %v762 = vpop.f32.mrb[0].mxu0
        %v763 = vadd.f32 %v322, %v762
        %v764 = vpop.f32.mrb[0].mxu0
        %v765 = vadd.f32 %v318, %v764
        %v766 = vpop.f32.mrb[0].mxu0
        %v767 = vadd.f32 %v322, %v766
        %768 = vmatprep.mubr.bf16.mxu0 0
        %769 = vmatmul.mubr.bf16.gmra.mrb[0].mxu0 %v363
        %v770 = vpop.f32.mrb[0].mxu0
        %v771 = vadd.f32 %v318, %v770
        %v772 = vpop.f32.mrb[0].mxu0
        %v773 = vadd.f32 %v322, %v772
        %v774 = vpop.f32.mrb[0].mxu0
        %v775 = vadd.f32 %v318, %v774
        %v776 = vpop.f32.mrb[0].mxu0
        %v777 = vadd.f32 %v322, %v776
        %778 = vmatprep.mubr.bf16.mxu0 0
        %779 = vmatmul.mubr.bf16.gmra.mrb[0].mxu0 %v364
        %v780 = vpop.f32.mrb[0].mxu0
        %v781 = vadd.f32 %v318, %v780
        %v782 = vpop.f32.mrb[0].mxu0
        %v783 = vadd.f32 %v322, %v782
        %v784 = vpop.f32.mrb[0].mxu0
        %v785 = vadd.f32 %v318, %v784
        %v786 = vpop.f32.mrb[0].mxu0
        %v787 = vadd.f32 %v322, %v786
        %788 = vmatprep.mubr.bf16.mxu0 0
        %789 = vmatmul.mubr.bf16.gmra.mrb[0].mxu0 %v365
        %v790 = vpop.f32.mrb[0].mxu0
        %v791 = vadd.f32 %v318, %v790
        %v792 = vpop.f32.mrb[0].mxu0
        %v793 = vadd.f32 %v322, %v792
        %v794 = vpop.f32.mrb[0].mxu0
        %v795 = vadd.f32 %v318, %v794
        %v796 = vpop.f32.mrb[0].mxu0
        %v797 = vadd.f32 %v322, %v796
        %798 = vmatprep.mubr.bf16.mxu0 0
        %799 = vmatmul.mubr.bf16.gmra.mrb[0].mxu0 %v366
        %v800 = vpop.f32.mrb[0].mxu0
        %v801 = vadd.f32 %v318, %v800
        %v802 = vpop.f32.mrb[0].mxu0
        %v803 = vadd.f32 %v322, %v802
        %v804 = vpop.f32.mrb[0].mxu0
        %v805 = vadd.f32 %v318, %v804
        %v806 = vpop.f32.mrb[0].mxu0
        %v807 = vadd.f32 %v322, %v806
        %808 = vdwg.mxu0
        %809 = vmatprep.subr.bf16.mxu0 0
        %810 = vmatpush1.bf16.msra.mxu0 %v507
        %811 = vmatprep.subr.bf16.mxu0 0
        %812 = vmatpush1.bf16.msra.mxu0 %v512
        %813 = vmatprep.subr.bf16.mxu0 0
        %814 = vmatpush1.bf16.msra.mxu0 %v517
        %815 = vmatprep.subr.bf16.mxu0 0
        %816 = vmatpush1.bf16.msra.mxu0 %v522
        %817 = vmatprep.subr.bf16.mxu0 0
        %818 = vmatpush1.bf16.msra.mxu0 %v527
        %819 = vmatprep.subr.bf16.mxu0 0
        %820 = vmatpush1.bf16.msra.mxu0 %v532
        %821 = vmatprep.subr.bf16.mxu0 0
        %822 = vmatpush1.bf16.msra.mxu0 %v537
        %823 = vmatprep.subr.bf16.mxu0 0
        %824 = vmatpush1.bf16.msra.mxu0 %v542
        %825 = vmatprep.subr.bf16.mxu0 0
        %826 = vmatpush1.bf16.msra.mxu0 0
        %827 = vmatprep.subr.bf16.mxu0 0
        %828 = vmatpush1.bf16.msra.mxu0 0
        %829 = vmatprep.subr.bf16.mxu0 0
        %830 = vmatpush1.bf16.msra.mxu0 0
        %831 = vmatprep.subr.bf16.mxu0 0
        %832 = vmatpush1.bf16.msra.mxu0 0
        %833 = vmatprep.subr.bf16.mxu0 0
        %834 = vmatpush1.bf16.msra.mxu0 0
        %835 = vmatprep.subr.bf16.mxu0 0
        %836 = vmatpush1.bf16.msra.mxu0 0
        %837 = vmatprep.subr.bf16.mxu0 0
        %838 = vmatpush1.bf16.msra.mxu0 0
        %839 = vmatprep.subr.bf16.mxu0 0
        %840 = vmatpush1.bf16.msra.mxu0 0
        %841 = vmatprep.mubr.bf16.mxu0 0
        %842 = vmatmul.mubr.bf16.gmra.mrb[0].mxu0 %v359
        %v843 = vpop.f32.mrb[0].mxu0
        %v844 = vadd.f32 %v326, %v843
        %v845 = vpop.f32.mrb[0].mxu0
        %v846 = vpop.f32.mrb[0].mxu0
        %v847 = vadd.f32 %v326, %v846
        %v848 = vpop.f32.mrb[0].mxu0
        %849 = vmatprep.mubr.bf16.mxu0 0
        %850 = vmatmul.mubr.bf16.gmra.mrb[0].mxu0 %v360
        %v851 = vpop.f32.mrb[0].mxu0
        %v852 = vadd.f32 %v326, %v851
        %v853 = vpop.f32.mrb[0].mxu0
        %v854 = vpop.f32.mrb[0].mxu0
        %v855 = vadd.f32 %v326, %v854
        %v856 = vpop.f32.mrb[0].mxu0
        %857 = vmatprep.mubr.bf16.mxu0 0
        %858 = vmatmul.mubr.bf16.gmra.mrb[0].mxu0 %v361
        %v859 = vpop.f32.mrb[0].mxu0
        %v860 = vadd.f32 %v326, %v859
        %v861 = vpop.f32.mrb[0].mxu0
        %v862 = vpop.f32.mrb[0].mxu0
        %v863 = vadd.f32 %v326, %v862
        %v864 = vpop.f32.mrb[0].mxu0
        %865 = vmatprep.mubr.bf16.mxu0 0
        %866 = vmatmul.mubr.bf16.gmra.mrb[0].mxu0 %v362
        %v867 = vpop.f32.mrb[0].mxu0
        %v868 = vadd.f32 %v326, %v867
        %v869 = vpop.f32.mrb[0].mxu0
        %v870 = vpop.f32.mrb[0].mxu0
        %v871 = vadd.f32 %v326, %v870
        %v872 = vpop.f32.mrb[0].mxu0
        %873 = vmatprep.mubr.bf16.mxu0 0
        %874 = vmatmul.mubr.bf16.gmra.mrb[0].mxu0 %v363
        %v875 = vpop.f32.mrb[0].mxu0
        %v876 = vadd.f32 %v326, %v875
        %v877 = vpop.f32.mrb[0].mxu0
        %v878 = vpop.f32.mrb[0].mxu0
        %v879 = vadd.f32 %v326, %v878
        %v880 = vpop.f32.mrb[0].mxu0
        %881 = vmatprep.mubr.bf16.mxu0 0
        %882 = vmatmul.mubr.bf16.gmra.mrb[0].mxu0 %v364
        %v883 = vpop.f32.mrb[0].mxu0
        %v884 = vadd.f32 %v326, %v883
        %v885 = vpop.f32.mrb[0].mxu0
        %v886 = vpop.f32.mrb[0].mxu0
        %v887 = vadd.f32 %v326, %v886
        %v888 = vpop.f32.mrb[0].mxu0
        %889 = vmatprep.mubr.bf16.mxu0 0
        %890 = vmatmul.mubr.bf16.gmra.mrb[0].mxu0 %v365
        %v891 = vpop.f32.mrb[0].mxu0
        %v892 = vadd.f32 %v326, %v891
        %v893 = vpop.f32.mrb[0].mxu0
        %v894 = vpop.f32.mrb[0].mxu0
        %v895 = vadd.f32 %v326, %v894
        %v896 = vpop.f32.mrb[0].mxu0
        %897 = vmatprep.mubr.bf16.mxu0 0
        %898 = vmatmul.mubr.bf16.gmra.mrb[0].mxu0 %v366
        %v899 = vpop.f32.mrb[0].mxu0
        %v900 = vadd.f32 %v326, %v899
        %v901 = vpop.f32.mrb[0].mxu0
        %v902 = vpop.f32.mrb[0].mxu0
        %v903 = vadd.f32 %v326, %v902
        %v904 = vpop.f32.mrb[0].mxu0
        %905 = vdwg.mxu0
        %v906 = vmax.f32 %v618, 0.0
        %v907 = vmax.f32 %v620, 0.0
        %v908 = vmax.f32 %v731, 0.0
        %v909 = vmax.f32 %v733, 0.0
        %v910 = vmax.f32 %v844, 0.0
        %v911 = vmax.f32 %v622, 0.0
        %v912 = vmax.f32 %v624, 0.0
        %v913 = vmax.f32 %v735, 0.0
        %v914 = vmax.f32 %v737, 0.0
        %v915 = vmax.f32 %v847, 0.0
        %v916 = vmax.f32 %v628, 0.0
        %v917 = vmax.f32 %v630, 0.0
        %v918 = vmax.f32 %v741, 0.0
        %v919 = vmax.f32 %v743, 0.0
        %v920 = vmax.f32 %v852, 0.0
        %v921 = vmax.f32 %v632, 0.0
        %v922 = vmax.f32 %v634, 0.0
        %v923 = vmax.f32 %v745, 0.0
        %v924 = vmax.f32 %v747, 0.0
        %v925 = vmax.f32 %v855, 0.0
        %v926 = vmax.f32 %v638, 0.0
        %v927 = vmax.f32 %v640, 0.0
        %v928 = vmax.f32 %v751, 0.0
        %v929 = vmax.f32 %v753, 0.0
        %v930 = vmax.f32 %v860, 0.0
        %v931 = vmax.f32 %v642, 0.0
        %v932 = vmax.f32 %v644, 0.0
        %v933 = vmax.f32 %v755, 0.0
        %v934 = vmax.f32 %v757, 0.0
        %v935 = vmax.f32 %v863, 0.0
        %v936 = vmax.f32 %v648, 0.0
        %v937 = vmax.f32 %v650, 0.0
        %v938 = vmax.f32 %v761, 0.0
        %v939 = vmax.f32 %v763, 0.0
        %v940 = vmax.f32 %v868, 0.0
        %v941 = vmax.f32 %v652, 0.0
        %v942 = vmax.f32 %v654, 0.0
        %v943 = vmax.f32 %v765, 0.0
        %v944 = vmax.f32 %v767, 0.0
        %v945 = vmax.f32 %v871, 0.0
        %v946 = vmax.f32 %v658, 0.0
        %v947 = vmax.f32 %v660, 0.0
        %v948 = vmax.f32 %v771, 0.0
        %v949 = vmax.f32 %v773, 0.0
        %v950 = vmax.f32 %v876, 0.0
        %v951 = vmax.f32 %v662, 0.0
        %v952 = vmax.f32 %v664, 0.0
        %v953 = vmax.f32 %v775, 0.0
        %v954 = vmax.f32 %v777, 0.0
        %v955 = vmax.f32 %v879, 0.0
        %v956 = vmax.f32 %v668, 0.0
        %v957 = vmax.f32 %v670, 0.0
        %v958 = vmax.f32 %v781, 0.0
        %v959 = vmax.f32 %v783, 0.0
        %v960 = vmax.f32 %v884, 0.0
        %v961 = vmax.f32 %v672, 0.0
        %v962 = vmax.f32 %v674, 0.0
        %v963 = vmax.f32 %v785, 0.0
        %v964 = vmax.f32 %v787, 0.0
        %v965 = vmax.f32 %v887, 0.0
        %v966 = vmax.f32 %v678, 0.0
        %v967 = vmax.f32 %v680, 0.0
        %v968 = vmax.f32 %v791, 0.0
        %v969 = vmax.f32 %v793, 0.0
        %v970 = vmax.f32 %v892, 0.0
        %v971 = vmax.f32 %v682, 0.0
        %v972 = vmax.f32 %v684, 0.0
        %v973 = vmax.f32 %v795, 0.0
        %v974 = vmax.f32 %v797, 0.0
        %v975 = vmax.f32 %v895, 0.0
        %v976 = vmax.f32 %v688, 0.0
        %v977 = vmax.f32 %v690, 0.0
        %v978 = vmax.f32 %v801, 0.0
        %v979 = vmax.f32 %v803, 0.0
        %v980 = vmax.f32 %v900, 0.0
        %v981 = vmax.f32 %v692, 0.0
        %v982 = vmax.f32 %v694, 0.0
        %v983 = vmax.f32 %v805, 0.0
        %v984 = vmax.f32 %v807, 0.0
        %v985 = vmax.f32 %v903, 0.0
        %v986 = vld [vmem:[%s2] sm:$0xff]
        %v987 = vld [vmem:[%s2 + $0x8] sm:$0xff]
        %v988 = vld [vmem:[%s2 + $0x10] sm:$0xff]
        %v989 = vld [vmem:[%s2 + $0x18] sm:$0xff]
        %v990 = vld [vmem:[%s2 + $0x20] sm:$0xff]
        %v991 = vld [vmem:[%s2 + $0x28] sm:$0xff]
        %v992 = vld [vmem:[%s2 + $0x30] sm:$0xff]
        %v993 = vld [vmem:[%s2 + $0x38] sm:$0xff]
        %v994 = vld [vmem:[%s2 + $0x40] sm:$0xff]
        %v995 = vld [vmem:[%s2 + $0x48] sm:$0xff]
        %v996 = vld [vmem:[%s2 + $0x50] sm:$0xff]
        %v997 = vld [vmem:[%s2 + $0x58] sm:$0xff]
        %v998 = vld [vmem:[%s2 + $0x60] sm:$0xff]
        %v999 = vld [vmem:[%s2 + $0x68] sm:$0xff]
        %v1000 = vld [vmem:[%s2 + $0x70] sm:$0xff]
        %v1001 = vld [vmem:[%s2 + $0x78] sm:$0xff]
        %v1002 = vld [vmem:[%s2 + $0x80] sm:$0xff]
        %v1003 = vld [vmem:[%s2 + $0x88] sm:$0xff]
        %v1004 = vld [vmem:[%s2 + $0x90] sm:$0xff]
        %v1005 = vld [vmem:[%s2 + $0x98] sm:$0xff]
        %v1006 = vld [vmem:[%s2 + $0xa0] sm:$0xff]
        %v1007 = vld [vmem:[%s2 + $0xa8] sm:$0xff]
        %v1008 = vld [vmem:[%s2 + $0xb0] sm:$0xff]
        %v1009 = vld [vmem:[%s2 + $0xb8] sm:$0xff]
        %v1010 = vld [vmem:[%s2 + $0xc0] sm:$0xff]
        %v1011 = vld [vmem:[%s2 + $0xc8] sm:$0xff]
        %v1012 = vld [vmem:[%s2 + $0xd0] sm:$0xff]
        %v1013 = vld [vmem:[%s2 + $0xd8] sm:$0xff]
        %v1014 = vld [vmem:[%s2 + $0xe0] sm:$0xff]
        %v1015 = vld [vmem:[%s2 + $0xe8] sm:$0xff]
        %v1016 = vld [vmem:[%s2 + $0xf0] sm:$0xff]
        %v1017 = vld [vmem:[%s2 + $0xf8] sm:$0xff]
        %v1018 = vld [vmem:[%s2 + $0x100] sm:$0xff]
        %v1019 = vld [vmem:[%s2 + $0x108] sm:$0xff]
        %v1020 = vld [vmem:[%s2 + $0x110] sm:$0xff]
        %v1021 = vld [vmem:[%s2 + $0x118] sm:$0xff]
        %v1022 = vld [vmem:[%s2 + $0x120] sm:$0xff]
        %v1023 = vld [vmem:[%s2 + $0x128] sm:$0xff]
        %v1024 = vld [vmem:[%s2 + $0x130] sm:$0xff]
        %v1025 = vld [vmem:[%s2 + $0x138] sm:$0xff]
        %v1026 = vld [vmem:[%s2 + $0x140] sm:$0xff]
        %v1027 = vld [vmem:[%s2 + $0x148] sm:$0xff]
        %v1028 = vld [vmem:[%s2 + $0x150] sm:$0xff]
        %v1029 = vld [vmem:[%s2 + $0x158] sm:$0xff]
        %v1030 = vld [vmem:[%s2 + $0x160] sm:$0xff]
        %v1031 = vld [vmem:[%s2 + $0x168] sm:$0xff]
        %v1032 = vld [vmem:[%s2 + $0x170] sm:$0xff]
        %v1033 = vld [vmem:[%s2 + $0x178] sm:$0xff]
        %v1034 = vld [vmem:[%s2 + $0x180] sm:$0xff]
        %v1035 = vld [vmem:[%s2 + $0x188] sm:$0xff]
        %v1036 = vld [vmem:[%s2 + $0x190] sm:$0xff]
        %v1037 = vld [vmem:[%s2 + $0x198] sm:$0xff]
        %v1038 = vld [vmem:[%s2 + $0x1a0] sm:$0xff]
        %v1039 = vld [vmem:[%s2 + $0x1a8] sm:$0xff]
        %v1040 = vld [vmem:[%s2 + $0x1b0] sm:$0xff]
        %v1041 = vld [vmem:[%s2 + $0x1b8] sm:$0xff]
        %v1042 = vld [vmem:[%s2 + $0x1c0] sm:$0xff]
        %v1043 = vld [vmem:[%s2 + $0x1c8] sm:$0xff]
        %v1044 = vld [vmem:[%s2 + $0x1d0] sm:$0xff]
        %v1045 = vld [vmem:[%s2 + $0x1d8] sm:$0xff]
        %v1046 = vld [vmem:[%s2 + $0x1e0] sm:$0xff]
        %v1047 = vld [vmem:[%s2 + $0x1e8] sm:$0xff]
        %v1048 = vld [vmem:[%s2 + $0x1f0] sm:$0xff]
        %v1049 = vld [vmem:[%s2 + $0x1f8] sm:$0xff]
        %v1050 = vld [vmem:[%s2 + $0x200] sm:$0xff]
        %v1051 = vld [vmem:[%s2 + $0x208] sm:$0xff]
        %v1052 = vld [vmem:[%s2 + $0x210] sm:$0xff]
        %v1053 = vld [vmem:[%s2 + $0x218] sm:$0xff]
        %v1054 = vld [vmem:[%s2 + $0x220] sm:$0xff]
        %v1055 = vld [vmem:[%s2 + $0x228] sm:$0xff]
        %v1056 = vld [vmem:[%s2 + $0x230] sm:$0xff]
        %v1057 = vld [vmem:[%s2 + $0x238] sm:$0xff]
        %v1058 = vld [vmem:[%s2 + $0x240] sm:$0xff]
        %v1059 = vld [vmem:[%s2 + $0x248] sm:$0xff]
        %v1060 = vld [vmem:[%s2 + $0x250] sm:$0xff]
        %v1061 = vld [vmem:[%s2 + $0x258] sm:$0xff]
        %v1062 = vld [vmem:[%s2 + $0x260] sm:$0xff]
        %v1063 = vld [vmem:[%s2 + $0x268] sm:$0xff]
        %v1064 = vld [vmem:[%s2 + $0x270] sm:$0xff]
        %v1065 = vld [vmem:[%s2 + $0x278] sm:$0xff]
        %v1066 = vld [vmem:[%s2 + $0x280] sm:$0x11]
        %v1067 = vunpack.c.l.bf16 %v1066
        %v1068 = vunpack.c.h.bf16 %v1066
        %v1069 = vpack.c.bf16 %v911, %v906
        %v1070 = vpack.c.bf16 %v912, %v907
        %v1071 = vpack.c.bf16 %v913, %v908
        %v1072 = vpack.c.bf16 %v914, %v909
        %v1073 = vpack.c.bf16 %v915, %v910
        %v1074 = vpack.c.bf16 %v921, %v916
        %v1075 = vpack.c.bf16 %v922, %v917
        %v1076 = vpack.c.bf16 %v923, %v918
        %v1077 = vpack.c.bf16 %v924, %v919
        %v1078 = vpack.c.bf16 %v925, %v920
        %v1079 = vpack.c.bf16 %v931, %v926
        %v1080 = vpack.c.bf16 %v932, %v927
        %v1081 = vpack.c.bf16 %v933, %v928
        %v1082 = vpack.c.bf16 %v934, %v929
        %v1083 = vpack.c.bf16 %v935, %v930
        %v1084 = vpack.c.bf16 %v941, %v936
        %v1085 = vpack.c.bf16 %v942, %v937
        %v1086 = vpack.c.bf16 %v943, %v938
        %v1087 = vpack.c.bf16 %v944, %v939
        %v1088 = vpack.c.bf16 %v945, %v940
        %v1089 = vpack.c.bf16 %v951, %v946
        %v1090 = vpack.c.bf16 %v952, %v947
        %v1091 = vpack.c.bf16 %v953, %v948
        %v1092 = vpack.c.bf16 %v954, %v949
        %v1093 = vpack.c.bf16 %v955, %v950
        %v1094 = vpack.c.bf16 %v961, %v956
        %v1095 = vpack.c.bf16 %v962, %v957
        %v1096 = vpack.c.bf16 %v963, %v958
        %v1097 = vpack.c.bf16 %v964, %v959
        %v1098 = vpack.c.bf16 %v965, %v960
        %v1099 = vpack.c.bf16 %v971, %v966
        %v1100 = vpack.c.bf16 %v972, %v967
        %v1101 = vpack.c.bf16 %v973, %v968
        %v1102 = vpack.c.bf16 %v974, %v969
        %v1103 = vpack.c.bf16 %v975, %v970
        %v1104 = vpack.c.bf16 %v981, %v976
        %v1105 = vpack.c.bf16 %v982, %v977
        %v1106 = vpack.c.bf16 %v983, %v978
        %v1107 = vpack.c.bf16 %v984, %v979
        %v1108 = vpack.c.bf16 %v985, %v980
        %v1109 = vlaneseq
        %v1110 = vshrl.u32 %v1109, 7
        %v1111 = vsub.s32 0, %v1110
        %v1112 = vrot.slane %v1067, %v1111
        %v1113 = vlaneseq
        %v1114 = vshrl.u32 %v1113, 7
        %v1115 = vsub.s32 0, %v1114
        %v1116 = vrot.slane %v1068, %v1115
        %v1197 = vunpack.c.l.b16 %v986
        %v1198 = vunpack.c.h.b16 %v986
        %v1199 = vunpack.c.l.b16 %v987
        %v1200 = vunpack.c.h.b16 %v987
        %v1201 = vunpack.c.l.b16 %v988
        %v1202 = vunpack.c.h.b16 %v988
        %v1203 = vunpack.c.l.b16 %v989
        %v1204 = vunpack.c.h.b16 %v989
        %v1205 = vunpack.c.l.b16 %v990
        %v1206 = vunpack.c.h.b16 %v990
        %v1207 = vunpack.c.l.b16 %v991
        %v1208 = vunpack.c.h.b16 %v991
        %v1209 = vunpack.c.l.b16 %v992
        %v1210 = vunpack.c.h.b16 %v992
        %v1211 = vunpack.c.l.b16 %v993
        %v1212 = vunpack.c.h.b16 %v993
        %v1213 = vunpack.c.l.b16 %v994
        %v1214 = vunpack.c.h.b16 %v994
        %v1215 = vunpack.c.l.b16 %v995
        %v1216 = vunpack.c.h.b16 %v995
        %v1217 = vunpack.c.l.b16 %v996
        %v1218 = vunpack.c.h.b16 %v996
        %v1219 = vunpack.c.l.b16 %v997
        %v1220 = vunpack.c.h.b16 %v997
        %v1221 = vunpack.c.l.b16 %v998
        %v1222 = vunpack.c.h.b16 %v998
        %v1223 = vunpack.c.l.b16 %v999
        %v1224 = vunpack.c.h.b16 %v999
        %v1225 = vunpack.c.l.b16 %v1000
        %v1226 = vunpack.c.h.b16 %v1000
        %v1227 = vunpack.c.l.b16 %v1001
        %v1228 = vunpack.c.h.b16 %v1001
        %v1229 = vunpack.c.l.b16 %v1002
        %v1230 = vunpack.c.h.b16 %v1002
        %v1231 = vunpack.c.l.b16 %v1003
        %v1232 = vunpack.c.h.b16 %v1003
        %v1233 = vunpack.c.l.b16 %v1004
        %v1234 = vunpack.c.h.b16 %v1004
        %v1235 = vunpack.c.l.b16 %v1005
        %v1236 = vunpack.c.h.b16 %v1005
        %v1237 = vunpack.c.l.b16 %v1006
        %v1238 = vunpack.c.h.b16 %v1006
        %v1239 = vunpack.c.l.b16 %v1007
        %v1240 = vunpack.c.h.b16 %v1007
        %v1241 = vunpack.c.l.b16 %v1008
        %v1242 = vunpack.c.h.b16 %v1008
        %v1243 = vunpack.c.l.b16 %v1009
        %v1244 = vunpack.c.h.b16 %v1009
        %v1245 = vunpack.c.l.b16 %v1010
        %v1246 = vunpack.c.h.b16 %v1010
        %v1247 = vunpack.c.l.b16 %v1011
        %v1248 = vunpack.c.h.b16 %v1011
        %v1249 = vunpack.c.l.b16 %v1012
        %v1250 = vunpack.c.h.b16 %v1012
        %v1251 = vunpack.c.l.b16 %v1013
        %v1252 = vunpack.c.h.b16 %v1013
        %v1253 = vunpack.c.l.b16 %v1014
        %v1254 = vunpack.c.h.b16 %v1014
        %v1255 = vunpack.c.l.b16 %v1015
        %v1256 = vunpack.c.h.b16 %v1015
        %v1257 = vunpack.c.l.b16 %v1016
        %v1258 = vunpack.c.h.b16 %v1016
        %v1259 = vunpack.c.l.b16 %v1017
        %v1260 = vunpack.c.h.b16 %v1017
        %v1261 = vunpack.c.l.b16 %v1018
        %v1262 = vunpack.c.h.b16 %v1018
        %v1263 = vunpack.c.l.b16 %v1019
        %v1264 = vunpack.c.h.b16 %v1019
        %v1265 = vunpack.c.l.b16 %v1020
        %v1266 = vunpack.c.h.b16 %v1020
        %v1267 = vunpack.c.l.b16 %v1021
        %v1268 = vunpack.c.h.b16 %v1021
        %v1269 = vunpack.c.l.b16 %v1022
        %v1270 = vunpack.c.h.b16 %v1022
        %v1271 = vunpack.c.l.b16 %v1023
        %v1272 = vunpack.c.h.b16 %v1023
        %v1273 = vunpack.c.l.b16 %v1024
        %v1274 = vunpack.c.h.b16 %v1024
        %v1275 = vunpack.c.l.b16 %v1025
        %v1276 = vunpack.c.h.b16 %v1025
        %v1277 = vunpack.c.l.b16 %v1026
        %v1278 = vunpack.c.h.b16 %v1026
        %v1279 = vunpack.c.l.b16 %v1027
        %v1280 = vunpack.c.h.b16 %v1027
        %v1281 = vunpack.c.l.b16 %v1028
        %v1282 = vunpack.c.h.b16 %v1028
        %v1283 = vunpack.c.l.b16 %v1029
        %v1284 = vunpack.c.h.b16 %v1029
        %v1285 = vunpack.c.l.b16 %v1030
        %v1286 = vunpack.c.h.b16 %v1030
        %v1287 = vunpack.c.l.b16 %v1031
        %v1288 = vunpack.c.h.b16 %v1031
        %v1289 = vunpack.c.l.b16 %v1032
        %v1290 = vunpack.c.h.b16 %v1032
        %v1291 = vunpack.c.l.b16 %v1033
        %v1292 = vunpack.c.h.b16 %v1033
        %v1293 = vunpack.c.l.b16 %v1034
        %v1294 = vunpack.c.h.b16 %v1034
        %v1295 = vunpack.c.l.b16 %v1035
        %v1296 = vunpack.c.h.b16 %v1035
        %v1297 = vunpack.c.l.b16 %v1036
        %v1298 = vunpack.c.h.b16 %v1036
        %v1299 = vunpack.c.l.b16 %v1037
        %v1300 = vunpack.c.h.b16 %v1037
        %v1301 = vunpack.c.l.b16 %v1038
        %v1302 = vunpack.c.h.b16 %v1038
        %v1303 = vunpack.c.l.b16 %v1039
        %v1304 = vunpack.c.h.b16 %v1039
        %v1305 = vunpack.c.l.b16 %v1040
        %v1306 = vunpack.c.h.b16 %v1040
        %v1307 = vunpack.c.l.b16 %v1041
        %v1308 = vunpack.c.h.b16 %v1041
        %v1309 = vunpack.c.l.b16 %v1042
        %v1310 = vunpack.c.h.b16 %v1042
        %v1311 = vunpack.c.l.b16 %v1043
        %v1312 = vunpack.c.h.b16 %v1043
        %v1313 = vunpack.c.l.b16 %v1044
        %v1314 = vunpack.c.h.b16 %v1044
        %v1315 = vunpack.c.l.b16 %v1045
        %v1316 = vunpack.c.h.b16 %v1045
        %v1317 = vunpack.c.l.b16 %v1046
        %v1318 = vunpack.c.h.b16 %v1046
        %v1319 = vunpack.c.l.b16 %v1047
        %v1320 = vunpack.c.h.b16 %v1047
        %v1321 = vunpack.c.l.b16 %v1048
        %v1322 = vunpack.c.h.b16 %v1048
        %v1323 = vunpack.c.l.b16 %v1049
        %v1324 = vunpack.c.h.b16 %v1049
        %v1325 = vunpack.c.l.b16 %v1050
        %v1326 = vunpack.c.h.b16 %v1050
        %v1327 = vunpack.c.l.b16 %v1051
        %v1328 = vunpack.c.h.b16 %v1051
        %v1329 = vunpack.c.l.b16 %v1052
        %v1330 = vunpack.c.h.b16 %v1052
        %v1331 = vunpack.c.l.b16 %v1053
        %v1332 = vunpack.c.h.b16 %v1053
        %v1333 = vunpack.c.l.b16 %v1054
        %v1334 = vunpack.c.h.b16 %v1054
        %v1335 = vunpack.c.l.b16 %v1055
        %v1336 = vunpack.c.h.b16 %v1055
        %v1337 = vunpack.c.l.b16 %v1056
        %v1338 = vunpack.c.h.b16 %v1056
        %v1339 = vunpack.c.l.b16 %v1057
        %v1340 = vunpack.c.h.b16 %v1057
        %v1341 = vunpack.c.l.b16 %v1058
        %v1342 = vunpack.c.h.b16 %v1058
        %v1343 = vunpack.c.l.b16 %v1059
        %v1344 = vunpack.c.h.b16 %v1059
        %v1345 = vunpack.c.l.b16 %v1060
        %v1346 = vunpack.c.h.b16 %v1060
        %v1347 = vunpack.c.l.b16 %v1061
        %v1348 = vunpack.c.h.b16 %v1061
        %v1349 = vunpack.c.l.b16 %v1062
        %v1350 = vunpack.c.h.b16 %v1062
        %v1351 = vunpack.c.l.b16 %v1063
        %v1352 = vunpack.c.h.b16 %v1063
        %v1353 = vunpack.c.l.b16 %v1064
        %v1354 = vunpack.c.h.b16 %v1064
        %v1355 = vunpack.c.l.b16 %v1065
        %v1356 = vunpack.c.h.b16 %v1065
        %v1357 = vpack.c.b16 %v1199, %v1197
        %v1358 = vpack.c.b16 %v1200, %v1198
        %v1359 = vpack.c.b16 %v1203, %v1201
        %v1360 = vpack.c.b16 %v1204, %v1202
        %v1361 = vpack.c.b16 %v1207, %v1205
        %v1362 = vpack.c.b16 %v1208, %v1206
        %v1363 = vpack.c.b16 %v1211, %v1209
        %v1364 = vpack.c.b16 %v1212, %v1210
        %v1365 = vpack.c.b16 %v1215, %v1213
        %v1366 = vpack.c.b16 %v1216, %v1214
        %v1367 = vpack.c.b16 %v1219, %v1217
        %v1368 = vpack.c.b16 %v1220, %v1218
        %v1369 = vpack.c.b16 %v1223, %v1221
        %v1370 = vpack.c.b16 %v1224, %v1222
        %v1371 = vpack.c.b16 %v1227, %v1225
        %v1372 = vpack.c.b16 %v1228, %v1226
        %v1373 = vpack.c.b16 %v1231, %v1229
        %v1374 = vpack.c.b16 %v1232, %v1230
        %v1375 = vpack.c.b16 %v1235, %v1233
        %v1376 = vpack.c.b16 %v1236, %v1234
        %v1377 = vpack.c.b16 %v1239, %v1237
        %v1378 = vpack.c.b16 %v1240, %v1238
        %v1379 = vpack.c.b16 %v1243, %v1241
        %v1380 = vpack.c.b16 %v1244, %v1242
        %v1381 = vpack.c.b16 %v1247, %v1245
        %v1382 = vpack.c.b16 %v1248, %v1246
        %v1383 = vpack.c.b16 %v1251, %v1249
        %v1384 = vpack.c.b16 %v1252, %v1250
        %v1385 = vpack.c.b16 %v1255, %v1253
        %v1386 = vpack.c.b16 %v1256, %v1254
        %v1387 = vpack.c.b16 %v1259, %v1257
        %v1388 = vpack.c.b16 %v1260, %v1258
        %v1389 = vpack.c.b16 %v1263, %v1261
        %v1390 = vpack.c.b16 %v1264, %v1262
        %v1391 = vpack.c.b16 %v1267, %v1265
        %v1392 = vpack.c.b16 %v1268, %v1266
        %v1393 = vpack.c.b16 %v1271, %v1269
        %v1394 = vpack.c.b16 %v1272, %v1270
        %v1395 = vpack.c.b16 %v1275, %v1273
        %v1396 = vpack.c.b16 %v1276, %v1274
        %v1397 = vpack.c.b16 %v1279, %v1277
        %v1398 = vpack.c.b16 %v1280, %v1278
        %v1399 = vpack.c.b16 %v1283, %v1281
        %v1400 = vpack.c.b16 %v1284, %v1282
        %v1401 = vpack.c.b16 %v1287, %v1285
        %v1402 = vpack.c.b16 %v1288, %v1286
        %v1403 = vpack.c.b16 %v1291, %v1289
        %v1404 = vpack.c.b16 %v1292, %v1290
        %v1405 = vpack.c.b16 %v1295, %v1293
        %v1406 = vpack.c.b16 %v1296, %v1294
        %v1407 = vpack.c.b16 %v1299, %v1297
        %v1408 = vpack.c.b16 %v1300, %v1298
        %v1409 = vpack.c.b16 %v1303, %v1301
        %v1410 = vpack.c.b16 %v1304, %v1302
        %v1411 = vpack.c.b16 %v1307, %v1305
        %v1412 = vpack.c.b16 %v1308, %v1306
        %v1413 = vpack.c.b16 %v1311, %v1309
        %v1414 = vpack.c.b16 %v1312, %v1310
        %v1415 = vpack.c.b16 %v1315, %v1313
        %v1416 = vpack.c.b16 %v1316, %v1314
        %v1417 = vpack.c.b16 %v1319, %v1317
        %v1418 = vpack.c.b16 %v1320, %v1318
        %v1419 = vpack.c.b16 %v1323, %v1321
        %v1420 = vpack.c.b16 %v1324, %v1322
        %v1421 = vpack.c.b16 %v1327, %v1325
        %v1422 = vpack.c.b16 %v1328, %v1326
        %v1423 = vpack.c.b16 %v1331, %v1329
        %v1424 = vpack.c.b16 %v1332, %v1330
        %v1425 = vpack.c.b16 %v1335, %v1333
        %v1426 = vpack.c.b16 %v1336, %v1334
        %v1427 = vpack.c.b16 %v1339, %v1337
        %v1428 = vpack.c.b16 %v1340, %v1338
        %v1429 = vpack.c.b16 %v1343, %v1341
        %v1430 = vpack.c.b16 %v1344, %v1342
        %v1431 = vpack.c.b16 %v1347, %v1345
        %v1432 = vpack.c.b16 %v1348, %v1346
        %v1433 = vpack.c.b16 %v1351, %v1349
        %v1434 = vpack.c.b16 %v1352, %v1350
        %v1435 = vpack.c.b16 %v1355, %v1353
        %v1436 = vpack.c.b16 %v1356, %v1354
        %1517 = vmatprep.subr.bf16.mxu0 %v1358
        %1518 = vmatpush1.bf16.msra.mxu0 %v1357
        %1519 = vmatprep.subr.bf16.mxu0 %v1360
        %1520 = vmatpush1.bf16.msra.mxu0 %v1359
        %1521 = vmatprep.subr.bf16.mxu0 %v1362
        %1522 = vmatpush1.bf16.msra.mxu0 %v1361
        %1523 = vmatprep.subr.bf16.mxu0 %v1364
        %1524 = vmatpush1.bf16.msra.mxu0 %v1363
        %1525 = vmatprep.subr.bf16.mxu0 %v1366
        %1526 = vmatpush1.bf16.msra.mxu0 %v1365
        %1527 = vmatprep.subr.bf16.mxu0 %v1368
        %1528 = vmatpush1.bf16.msra.mxu0 %v1367
        %1529 = vmatprep.subr.bf16.mxu0 %v1370
        %1530 = vmatpush1.bf16.msra.mxu0 %v1369
        %1531 = vmatprep.subr.bf16.mxu0 %v1372
        %1532 = vmatpush1.bf16.msra.mxu0 %v1371
        %1533 = vmatprep.subr.bf16.mxu0 %v1374
        %1534 = vmatpush1.bf16.msra.mxu0 %v1373
        %1535 = vmatprep.subr.bf16.mxu0 %v1376
        %1536 = vmatpush1.bf16.msra.mxu0 %v1375
        %1537 = vmatprep.subr.bf16.mxu0 %v1378
        %1538 = vmatpush1.bf16.msra.mxu0 %v1377
        %1539 = vmatprep.subr.bf16.mxu0 %v1380
        %1540 = vmatpush1.bf16.msra.mxu0 %v1379
        %1541 = vmatprep.subr.bf16.mxu0 %v1382
        %1542 = vmatpush1.bf16.msra.mxu0 %v1381
        %1543 = vmatprep.subr.bf16.mxu0 %v1384
        %1544 = vmatpush1.bf16.msra.mxu0 %v1383
        %1545 = vmatprep.subr.bf16.mxu0 %v1386
        %1546 = vmatpush1.bf16.msra.mxu0 %v1385
        %1547 = vmatprep.subr.bf16.mxu0 %v1388
        %1548 = vmatpush1.bf16.msra.mxu0 %v1387
        %1549 = vmatprep.mubr.bf16.mxu0 %v1070
        %1550 = vmatmul.mubr.bf16.gmra.mrb[0].mxu0 %v1069
        %v1551 = vpop.f32.mrb[0].mxu0
        %v1552 = vadd.f32 %v1112, %v1551
        %v1553 = vpop.f32.mrb[0].mxu0
        %v1554 = vadd.f32 %v1116, %v1553
        %v1555 = vpop.f32.mrb[0].mxu0
        %v1556 = vadd.f32 %v1112, %v1555
        %v1557 = vpop.f32.mrb[0].mxu0
        %v1558 = vadd.f32 %v1116, %v1557
        %1559 = vmatprep.mubr.bf16.mxu0 %v1075
        %1560 = vmatmul.mubr.bf16.gmra.mrb[0].mxu0 %v1074
        %v1561 = vpop.f32.mrb[0].mxu0
        %v1562 = vadd.f32 %v1112, %v1561
        %v1563 = vpop.f32.mrb[0].mxu0
        %v1564 = vadd.f32 %v1116, %v1563
        %v1565 = vpop.f32.mrb[0].mxu0
        %v1566 = vadd.f32 %v1112, %v1565
        %v1567 = vpop.f32.mrb[0].mxu0
        %v1568 = vadd.f32 %v1116, %v1567
        %1569 = vmatprep.mubr.bf16.mxu0 %v1080
        %1570 = vmatmul.mubr.bf16.gmra.mrb[0].mxu0 %v1079
        %v1571 = vpop.f32.mrb[0].mxu0
        %v1572 = vadd.f32 %v1112, %v1571
        %v1573 = vpop.f32.mrb[0].mxu0
        %v1574 = vadd.f32 %v1116, %v1573
        %v1575 = vpop.f32.mrb[0].mxu0
        %v1576 = vadd.f32 %v1112, %v1575
        %v1577 = vpop.f32.mrb[0].mxu0
        %v1578 = vadd.f32 %v1116, %v1577
        %1579 = vmatprep.mubr.bf16.mxu0 %v1085
        %1580 = vmatmul.mubr.bf16.gmra.mrb[0].mxu0 %v1084
        %v1581 = vpop.f32.mrb[0].mxu0
        %v1582 = vadd.f32 %v1112, %v1581
        %v1583 = vpop.f32.mrb[0].mxu0
        %v1584 = vadd.f32 %v1116, %v1583
        %v1585 = vpop.f32.mrb[0].mxu0
        %v1586 = vadd.f32 %v1112, %v1585
        %v1587 = vpop.f32.mrb[0].mxu0
        %v1588 = vadd.f32 %v1116, %v1587
        %1589 = vmatprep.mubr.bf16.mxu0 %v1090
        %1590 = vmatmul.mubr.bf16.gmra.mrb[0].mxu0 %v1089
        %v1591 = vpop.f32.mrb[0].mxu0
        %v1592 = vadd.f32 %v1112, %v1591
        %v1593 = vpop.f32.mrb[0].mxu0
        %v1594 = vadd.f32 %v1116, %v1593
        %v1595 = vpop.f32.mrb[0].mxu0
        %v1596 = vadd.f32 %v1112, %v1595
        %v1597 = vpop.f32.mrb[0].mxu0
        %v1598 = vadd.f32 %v1116, %v1597
        %1599 = vmatprep.mubr.bf16.mxu0 %v1095
        %1600 = vmatmul.mubr.bf16.gmra.mrb[0].mxu0 %v1094
        %v1601 = vpop.f32.mrb[0].mxu0
        %v1602 = vadd.f32 %v1112, %v1601
        %v1603 = vpop.f32.mrb[0].mxu0
        %v1604 = vadd.f32 %v1116, %v1603
        %v1605 = vpop.f32.mrb[0].mxu0
        %v1606 = vadd.f32 %v1112, %v1605
        %v1607 = vpop.f32.mrb[0].mxu0
        %v1608 = vadd.f32 %v1116, %v1607
        %1609 = vmatprep.mubr.bf16.mxu0 %v1100
        %1610 = vmatmul.mubr.bf16.gmra.mrb[0].mxu0 %v1099
        %v1611 = vpop.f32.mrb[0].mxu0
        %v1612 = vadd.f32 %v1112, %v1611
        %v1613 = vpop.f32.mrb[0].mxu0
        %v1614 = vadd.f32 %v1116, %v1613
        %v1615 = vpop.f32.mrb[0].mxu0
        %v1616 = vadd.f32 %v1112, %v1615
        %v1617 = vpop.f32.mrb[0].mxu0
        %v1618 = vadd.f32 %v1116, %v1617
        %1619 = vmatprep.mubr.bf16.mxu0 %v1105
        %1620 = vmatmul.mubr.bf16.gmra.mrb[0].mxu0 %v1104
        %v1621 = vpop.f32.mrb[0].mxu0
        %v1622 = vadd.f32 %v1112, %v1621
        %v1623 = vpop.f32.mrb[0].mxu0
        %v1624 = vadd.f32 %v1116, %v1623
        %v1625 = vpop.f32.mrb[0].mxu0
        %v1626 = vadd.f32 %v1112, %v1625
        %v1627 = vpop.f32.mrb[0].mxu0
        %v1628 = vadd.f32 %v1116, %v1627
        %1629 = vdwg.mxu0
        %1630 = vmatprep.subr.bf16.mxu0 %v1390
        %1631 = vmatpush1.bf16.msra.mxu0 %v1389
        %1632 = vmatprep.subr.bf16.mxu0 %v1392
        %1633 = vmatpush1.bf16.msra.mxu0 %v1391
        %1634 = vmatprep.subr.bf16.mxu0 %v1394
        %1635 = vmatpush1.bf16.msra.mxu0 %v1393
        %1636 = vmatprep.subr.bf16.mxu0 %v1396
        %1637 = vmatpush1.bf16.msra.mxu0 %v1395
        %1638 = vmatprep.subr.bf16.mxu0 %v1398
        %1639 = vmatpush1.bf16.msra.mxu0 %v1397
        %1640 = vmatprep.subr.bf16.mxu0 %v1400
        %1641 = vmatpush1.bf16.msra.mxu0 %v1399
        %1642 = vmatprep.subr.bf16.mxu0 %v1402
        %1643 = vmatpush1.bf16.msra.mxu0 %v1401
        %1644 = vmatprep.subr.bf16.mxu0 %v1404
        %1645 = vmatpush1.bf16.msra.mxu0 %v1403
        %1646 = vmatprep.subr.bf16.mxu0 %v1406
        %1647 = vmatpush1.bf16.msra.mxu0 %v1405
        %1648 = vmatprep.subr.bf16.mxu0 %v1408
        %1649 = vmatpush1.bf16.msra.mxu0 %v1407
        %1650 = vmatprep.subr.bf16.mxu0 %v1410
        %1651 = vmatpush1.bf16.msra.mxu0 %v1409
        %1652 = vmatprep.subr.bf16.mxu0 %v1412
        %1653 = vmatpush1.bf16.msra.mxu0 %v1411
        %1654 = vmatprep.subr.bf16.mxu0 %v1414
        %1655 = vmatpush1.bf16.msra.mxu0 %v1413
        %1656 = vmatprep.subr.bf16.mxu0 %v1416
        %1657 = vmatpush1.bf16.msra.mxu0 %v1415
        %1658 = vmatprep.subr.bf16.mxu0 %v1418
        %1659 = vmatpush1.bf16.msra.mxu0 %v1417
        %1660 = vmatprep.subr.bf16.mxu0 %v1420
        %1661 = vmatpush1.bf16.msra.mxu0 %v1419
        %1662 = vmatprep.mubr.bf16.mxu0 %v1072
        %1663 = vmatmul.mubr.bf16.gmra.mrb[0].mxu0 %v1071
        %v1664 = vpop.f32.mrb[0].mxu0
        %v1665 = vadd.f32 %v1552, %v1664
        %v1666 = vpop.f32.mrb[0].mxu0
        %v1667 = vadd.f32 %v1554, %v1666
        %v1668 = vpop.f32.mrb[0].mxu0
        %v1669 = vadd.f32 %v1556, %v1668
        %v1670 = vpop.f32.mrb[0].mxu0
        %v1671 = vadd.f32 %v1558, %v1670
        %1672 = vmatprep.mubr.bf16.mxu0 %v1077
        %1673 = vmatmul.mubr.bf16.gmra.mrb[0].mxu0 %v1076
        %v1674 = vpop.f32.mrb[0].mxu0
        %v1675 = vadd.f32 %v1562, %v1674
        %v1676 = vpop.f32.mrb[0].mxu0
        %v1677 = vadd.f32 %v1564, %v1676
        %v1678 = vpop.f32.mrb[0].mxu0
        %v1679 = vadd.f32 %v1566, %v1678
        %v1680 = vpop.f32.mrb[0].mxu0
        %v1681 = vadd.f32 %v1568, %v1680
        %1682 = vmatprep.mubr.bf16.mxu0 %v1082
        %1683 = vmatmul.mubr.bf16.gmra.mrb[0].mxu0 %v1081
        %v1684 = vpop.f32.mrb[0].mxu0
        %v1685 = vadd.f32 %v1572, %v1684
        %v1686 = vpop.f32.mrb[0].mxu0
        %v1687 = vadd.f32 %v1574, %v1686
        %v1688 = vpop.f32.mrb[0].mxu0
        %v1689 = vadd.f32 %v1576, %v1688
        %v1690 = vpop.f32.mrb[0].mxu0
        %v1691 = vadd.f32 %v1578, %v1690
        %1692 = vmatprep.mubr.bf16.mxu0 %v1087
        %1693 = vmatmul.mubr.bf16.gmra.mrb[0].mxu0 %v1086
        %v1694 = vpop.f32.mrb[0].mxu0
        %v1695 = vadd.f32 %v1582, %v1694
        %v1696 = vpop.f32.mrb[0].mxu0
        %v1697 = vadd.f32 %v1584, %v1696
        %v1698 = vpop.f32.mrb[0].mxu0
        %v1699 = vadd.f32 %v1586, %v1698
        %v1700 = vpop.f32.mrb[0].mxu0
        %v1701 = vadd.f32 %v1588, %v1700
        %1702 = vmatprep.mubr.bf16.mxu0 %v1092
        %1703 = vmatmul.mubr.bf16.gmra.mrb[0].mxu0 %v1091
        %v1704 = vpop.f32.mrb[0].mxu0
        %v1705 = vadd.f32 %v1592, %v1704
        %v1706 = vpop.f32.mrb[0].mxu0
        %v1707 = vadd.f32 %v1594, %v1706
        %v1708 = vpop.f32.mrb[0].mxu0
        %v1709 = vadd.f32 %v1596, %v1708
        %v1710 = vpop.f32.mrb[0].mxu0
        %v1711 = vadd.f32 %v1598, %v1710
        %1712 = vmatprep.mubr.bf16.mxu0 %v1097
        %1713 = vmatmul.mubr.bf16.gmra.mrb[0].mxu0 %v1096
        %v1714 = vpop.f32.mrb[0].mxu0
        %v1715 = vadd.f32 %v1602, %v1714
        %v1716 = vpop.f32.mrb[0].mxu0
        %v1717 = vadd.f32 %v1604, %v1716
        %v1718 = vpop.f32.mrb[0].mxu0
        %v1719 = vadd.f32 %v1606, %v1718
        %v1720 = vpop.f32.mrb[0].mxu0
        %v1721 = vadd.f32 %v1608, %v1720
        %1722 = vmatprep.mubr.bf16.mxu0 %v1102
        %1723 = vmatmul.mubr.bf16.gmra.mrb[0].mxu0 %v1101
        %v1724 = vpop.f32.mrb[0].mxu0
        %v1725 = vadd.f32 %v1612, %v1724
        %v1726 = vpop.f32.mrb[0].mxu0
        %v1727 = vadd.f32 %v1614, %v1726
        %v1728 = vpop.f32.mrb[0].mxu0
        %v1729 = vadd.f32 %v1616, %v1728
        %v1730 = vpop.f32.mrb[0].mxu0
        %v1731 = vadd.f32 %v1618, %v1730
        %1732 = vmatprep.mubr.bf16.mxu0 %v1107
        %1733 = vmatmul.mubr.bf16.gmra.mrb[0].mxu0 %v1106
        %v1734 = vpop.f32.mrb[0].mxu0
        %v1735 = vadd.f32 %v1622, %v1734
        %v1736 = vpop.f32.mrb[0].mxu0
        %v1737 = vadd.f32 %v1624, %v1736
        %v1738 = vpop.f32.mrb[0].mxu0
        %v1739 = vadd.f32 %v1626, %v1738
        %v1740 = vpop.f32.mrb[0].mxu0
        %v1741 = vadd.f32 %v1628, %v1740
        %1742 = vdwg.mxu0
        %1743 = vmatprep.subr.bf16.mxu0 %v1422
        %1744 = vmatpush1.bf16.msra.mxu0 %v1421
        %1745 = vmatprep.subr.bf16.mxu0 %v1424
        %1746 = vmatpush1.bf16.msra.mxu0 %v1423
        %1747 = vmatprep.subr.bf16.mxu0 %v1426
        %1748 = vmatpush1.bf16.msra.mxu0 %v1425
        %1749 = vmatprep.subr.bf16.mxu0 %v1428
        %1750 = vmatpush1.bf16.msra.mxu0 %v1427
        %1751 = vmatprep.subr.bf16.mxu0 %v1430
        %1752 = vmatpush1.bf16.msra.mxu0 %v1429
        %1753 = vmatprep.subr.bf16.mxu0 %v1432
        %1754 = vmatpush1.bf16.msra.mxu0 %v1431
        %1755 = vmatprep.subr.bf16.mxu0 %v1434
        %1756 = vmatpush1.bf16.msra.mxu0 %v1433
        %1757 = vmatprep.subr.bf16.mxu0 %v1436
        %1758 = vmatpush1.bf16.msra.mxu0 %v1435
        %1759 = vmatprep.subr.bf16.mxu0 0
        %1760 = vmatpush1.bf16.msra.mxu0 0
        %1761 = vmatprep.subr.bf16.mxu0 0
        %1762 = vmatpush1.bf16.msra.mxu0 0
        %1763 = vmatprep.subr.bf16.mxu0 0
        %1764 = vmatpush1.bf16.msra.mxu0 0
        %1765 = vmatprep.subr.bf16.mxu0 0
        %1766 = vmatpush1.bf16.msra.mxu0 0
        %1767 = vmatprep.subr.bf16.mxu0 0
        %1768 = vmatpush1.bf16.msra.mxu0 0
        %1769 = vmatprep.subr.bf16.mxu0 0
        %1770 = vmatpush1.bf16.msra.mxu0 0
        %1771 = vmatprep.subr.bf16.mxu0 0
        %1772 = vmatpush1.bf16.msra.mxu0 0
        %1773 = vmatprep.subr.bf16.mxu0 0
        %1774 = vmatpush1.bf16.msra.mxu0 0
        %1775 = vmatprep.mubr.bf16.mxu0 0
        %1776 = vmatmul.mubr.bf16.gmra.mrb[0].mxu0 %v1073
        %v1777 = vpop.f32.mrb[0].mxu0
        %v1778 = vadd.f32 %v1665, %v1777
        %v1779 = vpop.f32.mrb[0].mxu0
        %v1780 = vadd.f32 %v1667, %v1779
        %v1781 = vpop.f32.mrb[0].mxu0
        %v1782 = vadd.f32 %v1669, %v1781
        %v1783 = vpop.f32.mrb[0].mxu0
        %v1784 = vadd.f32 %v1671, %v1783
        %1785 = vmatprep.mubr.bf16.mxu0 0
        %1786 = vmatmul.mubr.bf16.gmra.mrb[0].mxu0 %v1078
        %v1787 = vpop.f32.mrb[0].mxu0
        %v1788 = vadd.f32 %v1675, %v1787
        %v1789 = vpop.f32.mrb[0].mxu0
        %v1790 = vadd.f32 %v1677, %v1789
        %v1791 = vpop.f32.mrb[0].mxu0
        %v1792 = vadd.f32 %v1679, %v1791
        %v1793 = vpop.f32.mrb[0].mxu0
        %v1794 = vadd.f32 %v1681, %v1793
        %1795 = vmatprep.mubr.bf16.mxu0 0
        %1796 = vmatmul.mubr.bf16.gmra.mrb[0].mxu0 %v1083
        %v1797 = vpop.f32.mrb[0].mxu0
        %v1798 = vadd.f32 %v1685, %v1797
        %v1799 = vpop.f32.mrb[0].mxu0
        %v1800 = vadd.f32 %v1687, %v1799
        %v1801 = vpop.f32.mrb[0].mxu0
        %v1802 = vadd.f32 %v1689, %v1801
        %v1803 = vpop.f32.mrb[0].mxu0
        %v1804 = vadd.f32 %v1691, %v1803
        %1805 = vmatprep.mubr.bf16.mxu0 0
        %1806 = vmatmul.mubr.bf16.gmra.mrb[0].mxu0 %v1088
        %v1807 = vpop.f32.mrb[0].mxu0
        %v1808 = vadd.f32 %v1695, %v1807
        %v1809 = vpop.f32.mrb[0].mxu0
        %v1810 = vadd.f32 %v1697, %v1809
        %v1811 = vpop.f32.mrb[0].mxu0
        %v1812 = vadd.f32 %v1699, %v1811
        %v1813 = vpop.f32.mrb[0].mxu0
        %v1814 = vadd.f32 %v1701, %v1813
        %1815 = vmatprep.mubr.bf16.mxu0 0
        %1816 = vmatmul.mubr.bf16.gmra.mrb[0].mxu0 %v1093
        %v1817 = vpop.f32.mrb[0].mxu0
        %v1818 = vadd.f32 %v1705, %v1817
        %v1819 = vpop.f32.mrb[0].mxu0
        %v1820 = vadd.f32 %v1707, %v1819
        %v1821 = vpop.f32.mrb[0].mxu0
        %v1822 = vadd.f32 %v1709, %v1821
        %v1823 = vpop.f32.mrb[0].mxu0
        %v1824 = vadd.f32 %v1711, %v1823
        %1825 = vmatprep.mubr.bf16.mxu0 0
        %1826 = vmatmul.mubr.bf16.gmra.mrb[0].mxu0 %v1098
        %v1827 = vpop.f32.mrb[0].mxu0
        %v1828 = vadd.f32 %v1715, %v1827
        %v1829 = vpop.f32.mrb[0].mxu0
        %v1830 = vadd.f32 %v1717, %v1829
        %v1831 = vpop.f32.mrb[0].mxu0
        %v1832 = vadd.f32 %v1719, %v1831
        %v1833 = vpop.f32.mrb[0].mxu0
        %v1834 = vadd.f32 %v1721, %v1833
        %1835 = vmatprep.mubr.bf16.mxu0 0
        %1836 = vmatmul.mubr.bf16.gmra.mrb[0].mxu0 %v1103
        %v1837 = vpop.f32.mrb[0].mxu0
        %v1838 = vadd.f32 %v1725, %v1837
        %v1839 = vpop.f32.mrb[0].mxu0
        %v1840 = vadd.f32 %v1727, %v1839
        %v1841 = vpop.f32.mrb[0].mxu0
        %v1842 = vadd.f32 %v1729, %v1841
        %v1843 = vpop.f32.mrb[0].mxu0
        %v1844 = vadd.f32 %v1731, %v1843
        %1845 = vmatprep.mubr.bf16.mxu0 0
        %1846 = vmatmul.mubr.bf16.gmra.mrb[0].mxu0 %v1108
        %v1847 = vpop.f32.mrb[0].mxu0
        %v1848 = vadd.f32 %v1735, %v1847
        %v1849 = vpop.f32.mrb[0].mxu0
        %v1850 = vadd.f32 %v1737, %v1849
        %v1851 = vpop.f32.mrb[0].mxu0
        %v1852 = vadd.f32 %v1739, %v1851
        %v1853 = vpop.f32.mrb[0].mxu0
        %v1854 = vadd.f32 %v1741, %v1853
        %1855 = vdwg.mxu0
        %v1856 = vmax.f32 %v1778, 0.0
        %v1857 = vmax.f32 %v1780, 0.0
        %v1858 = vmax.f32 %v1782, 0.0
        %v1859 = vmax.f32 %v1784, 0.0
        %v1860 = vmax.f32 %v1788, 0.0
        %v1861 = vmax.f32 %v1790, 0.0
        %v1862 = vmax.f32 %v1792, 0.0
        %v1863 = vmax.f32 %v1794, 0.0
        %v1864 = vmax.f32 %v1798, 0.0
        %v1865 = vmax.f32 %v1800, 0.0
        %v1866 = vmax.f32 %v1802, 0.0
        %v1867 = vmax.f32 %v1804, 0.0
        %v1868 = vmax.f32 %v1808, 0.0
        %v1869 = vmax.f32 %v1810, 0.0
        %v1870 = vmax.f32 %v1812, 0.0
        %v1871 = vmax.f32 %v1814, 0.0
        %v1872 = vmax.f32 %v1818, 0.0
        %v1873 = vmax.f32 %v1820, 0.0
        %v1874 = vmax.f32 %v1822, 0.0
        %v1875 = vmax.f32 %v1824, 0.0
        %v1876 = vmax.f32 %v1828, 0.0
        %v1877 = vmax.f32 %v1830, 0.0
        %v1878 = vmax.f32 %v1832, 0.0
        %v1879 = vmax.f32 %v1834, 0.0
        %v1880 = vmax.f32 %v1838, 0.0
        %v1881 = vmax.f32 %v1840, 0.0
        %v1882 = vmax.f32 %v1842, 0.0
        %v1883 = vmax.f32 %v1844, 0.0
        %v1884 = vmax.f32 %v1848, 0.0
        %v1885 = vmax.f32 %v1850, 0.0
        %v1886 = vmax.f32 %v1852, 0.0
        %v1887 = vmax.f32 %v1854, 0.0
        %v1888 = vld [vmem:[%s3] sm:$0xf]
        %v1889 = vld [vmem:[%s3 + $0x4] sm:$0xf]
        %v1890 = vld [vmem:[%s3 + $0x8] sm:$0xf]
        %v1891 = vld [vmem:[%s3 + $0xc] sm:$0xf]
        %v1892 = vld [vmem:[%s3 + $0x10] sm:$0xf]
        %v1893 = vld [vmem:[%s3 + $0x14] sm:$0xf]
        %v1894 = vld [vmem:[%s3 + $0x18] sm:$0xf]
        %v1895 = vld [vmem:[%s3 + $0x1c] sm:$0xf]
        %v1896 = vld [vmem:[%s3 + $0x20] sm:$0xf]
        %v1897 = vld [vmem:[%s3 + $0x24] sm:$0xf]
        %v1898 = vld [vmem:[%s3 + $0x28] sm:$0xf]
        %v1899 = vld [vmem:[%s3 + $0x2c] sm:$0xf]
        %v1900 = vld [vmem:[%s3 + $0x30] sm:$0xf]
        %v1901 = vld [vmem:[%s3 + $0x34] sm:$0xf]
        %v1902 = vld [vmem:[%s3 + $0x38] sm:$0xf]
        %v1903 = vld [vmem:[%s3 + $0x3c] sm:$0xf]
        %v1904 = vld [vmem:[%s3 + $0x40] sm:$0xf]
        %v1905 = vld [vmem:[%s3 + $0x44] sm:$0xf]
        %v1906 = vld [vmem:[%s3 + $0x48] sm:$0xf]
        %v1907 = vld [vmem:[%s3 + $0x4c] sm:$0xf]
        %v1908 = vld [vmem:[%s3 + $0x50] sm:$0xf]
        %v1909 = vld [vmem:[%s3 + $0x54] sm:$0xf]
        %v1910 = vld [vmem:[%s3 + $0x58] sm:$0xf]
        %v1911 = vld [vmem:[%s3 + $0x5c] sm:$0xf]
        %v1912 = vld [vmem:[%s3 + $0x60] sm:$0x1]
        %v1913 = vunpack.c.l.bf16 %v1912
        %v1914 = vpack.c.bf16 %v1858, %v1856
        %v1915 = vpack.c.bf16 %v1859, %v1857
        %v1916 = vpack.c.bf16 %v1862, %v1860
        %v1917 = vpack.c.bf16 %v1863, %v1861
        %v1918 = vpack.c.bf16 %v1866, %v1864
        %v1919 = vpack.c.bf16 %v1867, %v1865
        %v1920 = vpack.c.bf16 %v1870, %v1868
        %v1921 = vpack.c.bf16 %v1871, %v1869
        %v1922 = vpack.c.bf16 %v1874, %v1872
        %v1923 = vpack.c.bf16 %v1875, %v1873
        %v1924 = vpack.c.bf16 %v1878, %v1876
        %v1925 = vpack.c.bf16 %v1879, %v1877
        %v1926 = vpack.c.bf16 %v1882, %v1880
        %v1927 = vpack.c.bf16 %v1883, %v1881
        %v1928 = vpack.c.bf16 %v1886, %v1884
        %v1929 = vpack.c.bf16 %v1887, %v1885
        %v1930 = vlaneseq
        %v1931 = vshrl.u32 %v1930, 7
        %v1932 = vsub.s32 0, %v1931
        %v1933 = vrot.slane %v1913, %v1932
        %v1958 = vunpack.c.l.b16 %v1888
        %v1959 = vunpack.c.l.b16 %v1889
        %v1960 = vunpack.c.l.b16 %v1890
        %v1961 = vunpack.c.l.b16 %v1891
        %v1962 = vunpack.c.l.b16 %v1892
        %v1963 = vunpack.c.l.b16 %v1893
        %v1964 = vunpack.c.l.b16 %v1894
        %v1965 = vunpack.c.l.b16 %v1895
        %v1966 = vunpack.c.l.b16 %v1896
        %v1967 = vunpack.c.l.b16 %v1897
        %v1968 = vunpack.c.l.b16 %v1898
        %v1969 = vunpack.c.l.b16 %v1899
        %v1970 = vunpack.c.l.b16 %v1900
        %v1971 = vunpack.c.l.b16 %v1901
        %v1972 = vunpack.c.l.b16 %v1902
        %v1973 = vunpack.c.l.b16 %v1903
        %v1974 = vunpack.c.l.b16 %v1904
        %v1975 = vunpack.c.l.b16 %v1905
        %v1976 = vunpack.c.l.b16 %v1906
        %v1977 = vunpack.c.l.b16 %v1907
        %v1978 = vunpack.c.l.b16 %v1908
        %v1979 = vunpack.c.l.b16 %v1909
        %v1980 = vunpack.c.l.b16 %v1910
        %v1981 = vunpack.c.l.b16 %v1911
        %v1982 = vpack.c.b16 %v1959, %v1958
        %v1983 = vpack.c.b16 %v1961, %v1960
        %v1984 = vpack.c.b16 %v1963, %v1962
        %v1985 = vpack.c.b16 %v1965, %v1964
        %v1986 = vpack.c.b16 %v1967, %v1966
        %v1987 = vpack.c.b16 %v1969, %v1968
        %v1988 = vpack.c.b16 %v1971, %v1970
        %v1989 = vpack.c.b16 %v1973, %v1972
        %v1990 = vpack.c.b16 %v1975, %v1974
        %v1991 = vpack.c.b16 %v1977, %v1976
        %v1992 = vpack.c.b16 %v1979, %v1978
        %v1993 = vpack.c.b16 %v1981, %v1980
        %vm2006 = vcmask 523264
        %v2008 = vsel %vm2006, %v1915, 0
        %v2011 = vsel %vm2006, %v1917, 0
        %v2014 = vsel %vm2006, %v1919, 0
        %v2017 = vsel %vm2006, %v1921, 0
        %v2020 = vsel %vm2006, %v1923, 0
        %v2023 = vsel %vm2006, %v1925, 0
        %v2026 = vsel %vm2006, %v1927, 0
        %v2029 = vsel %vm2006, %v1929, 0
        %2031 = vmatprep.subr.bf16.mxu0 0
        %2032 = vmatpush1.bf16.msra.mxu0 %v1982
        %2033 = vmatprep.subr.bf16.mxu0 0
        %2034 = vmatpush1.bf16.msra.mxu0 %v1983
        %2035 = vmatprep.subr.bf16.mxu0 0
        %2036 = vmatpush1.bf16.msra.mxu0 %v1984
        %2037 = vmatprep.subr.bf16.mxu0 0
        %2038 = vmatpush1.bf16.msra.mxu0 %v1985
        %2039 = vmatprep.subr.bf16.mxu0 0
        %2040 = vmatpush1.bf16.msra.mxu0 %v1986
        %2041 = vmatprep.subr.bf16.mxu0 0
        %2042 = vmatpush1.bf16.msra.mxu0 %v1987
        %2043 = vmatprep.subr.bf16.mxu0 0
        %2044 = vmatpush1.bf16.msra.mxu0 %v1988
        %2045 = vmatprep.subr.bf16.mxu0 0
        %2046 = vmatpush1.bf16.msra.mxu0 %v1989
        %2047 = vmatprep.subr.bf16.mxu0 0
        %2048 = vmatpush1.bf16.msra.mxu0 %v1990
        %2049 = vmatprep.subr.bf16.mxu0 0
        %2050 = vmatpush1.bf16.msra.mxu0 %v1991
        %2051 = vmatprep.subr.bf16.mxu0 0
        %2052 = vmatpush1.bf16.msra.mxu0 %v1992
        %2053 = vmatprep.subr.bf16.mxu0 0
        %2054 = vmatpush1.bf16.msra.mxu0 %v1993
        %2055 = vmatprep.subr.bf16.mxu0 0
        %2056 = vmatpush1.bf16.msra.mxu0 0
        %2057 = vmatprep.subr.bf16.mxu0 0
        %2058 = vmatpush1.bf16.msra.mxu0 0
        %2059 = vmatprep.subr.bf16.mxu0 0
        %2060 = vmatpush1.bf16.msra.mxu0 0
        %2061 = vmatprep.subr.bf16.mxu0 0
        %2062 = vmatpush1.bf16.msra.mxu0 0
        %2063 = vmatprep.mubr.bf16.mxu0 %v2008
        %2064 = vmatmul.mubr.bf16.gmra.mrb[0].mxu0 %v1914
        %v2065 = vpop.f32.mrb[0].mxu0
        %v2066 = vadd.f32 %v1933, %v2065
        %v2067 = vpop.f32.mrb[0].mxu0
        %v2068 = vpop.f32.mrb[0].mxu0
        %v2069 = vadd.f32 %v1933, %v2068
        %v2070 = vpop.f32.mrb[0].mxu0
        %2071 = vmatprep.mubr.bf16.mxu0 %v2011
        %2072 = vmatmul.mubr.bf16.gmra.mrb[0].mxu0 %v1916
        %v2073 = vpop.f32.mrb[0].mxu0
        %v2074 = vadd.f32 %v1933, %v2073
        %v2075 = vpop.f32.mrb[0].mxu0
        %v2076 = vpop.f32.mrb[0].mxu0
        %v2077 = vadd.f32 %v1933, %v2076
        %v2078 = vpop.f32.mrb[0].mxu0
        %2079 = vmatprep.mubr.bf16.mxu0 %v2014
        %2080 = vmatmul.mubr.bf16.gmra.mrb[0].mxu0 %v1918
        %v2081 = vpop.f32.mrb[0].mxu0
        %v2082 = vadd.f32 %v1933, %v2081
        %v2083 = vpop.f32.mrb[0].mxu0
        %v2084 = vpop.f32.mrb[0].mxu0
        %v2085 = vadd.f32 %v1933, %v2084
        %v2086 = vpop.f32.mrb[0].mxu0
        %2087 = vmatprep.mubr.bf16.mxu0 %v2017
        %2088 = vmatmul.mubr.bf16.gmra.mrb[0].mxu0 %v1920
        %v2089 = vpop.f32.mrb[0].mxu0
        %v2090 = vadd.f32 %v1933, %v2089
        %v2091 = vpop.f32.mrb[0].mxu0
        %v2092 = vpop.f32.mrb[0].mxu0
        %v2093 = vadd.f32 %v1933, %v2092
        %v2094 = vpop.f32.mrb[0].mxu0
        %2095 = vmatprep.mubr.bf16.mxu0 %v2020
        %2096 = vmatmul.mubr.bf16.gmra.mrb[0].mxu0 %v1922
        %v2097 = vpop.f32.mrb[0].mxu0
        %v2098 = vadd.f32 %v1933, %v2097
        %v2099 = vpop.f32.mrb[0].mxu0
        %v2100 = vpop.f32.mrb[0].mxu0
        %v2101 = vadd.f32 %v1933, %v2100
        %v2102 = vpop.f32.mrb[0].mxu0
        %2103 = vmatprep.mubr.bf16.mxu0 %v2023
        %2104 = vmatmul.mubr.bf16.gmra.mrb[0].mxu0 %v1924
        %v2105 = vpop.f32.mrb[0].mxu0
        %v2106 = vadd.f32 %v1933, %v2105
        %v2107 = vpop.f32.mrb[0].mxu0
        %v2108 = vpop.f32.mrb[0].mxu0
        %v2109 = vadd.f32 %v1933, %v2108
        %v2110 = vpop.f32.mrb[0].mxu0
        %2111 = vmatprep.mubr.bf16.mxu0 %v2026
        %2112 = vmatmul.mubr.bf16.gmra.mrb[0].mxu0 %v1926
        %v2113 = vpop.f32.mrb[0].mxu0
        %v2114 = vadd.f32 %v1933, %v2113
        %v2115 = vpop.f32.mrb[0].mxu0
        %v2116 = vpop.f32.mrb[0].mxu0
        %v2117 = vadd.f32 %v1933, %v2116
        %v2118 = vpop.f32.mrb[0].mxu0
        %2119 = vmatprep.mubr.bf16.mxu0 %v2029
        %2120 = vmatmul.mubr.bf16.gmra.mrb[0].mxu0 %v1928
        %v2121 = vpop.f32.mrb[0].mxu0
        %v2122 = vadd.f32 %v1933, %v2121
        %v2123 = vpop.f32.mrb[0].mxu0
        %v2124 = vpop.f32.mrb[0].mxu0
        %v2125 = vadd.f32 %v1933, %v2124
        %v2126 = vpop.f32.mrb[0].mxu0
        %2127 = vdwg.mxu0
        %v2128 = vmax.f32 %v2066, 0.0
        %v2129 = vmax.f32 %v2069, 0.0
        %v2130 = vmax.f32 %v2074, 0.0
        %v2131 = vmax.f32 %v2077, 0.0
        %v2132 = vmax.f32 %v2082, 0.0
        %v2133 = vmax.f32 %v2085, 0.0
        %v2134 = vmax.f32 %v2090, 0.0
        %v2135 = vmax.f32 %v2093, 0.0
        %v2136 = vmax.f32 %v2098, 0.0
        %v2137 = vmax.f32 %v2101, 0.0
        %v2138 = vmax.f32 %v2106, 0.0
        %v2139 = vmax.f32 %v2109, 0.0
        %v2140 = vmax.f32 %v2114, 0.0
        %v2141 = vmax.f32 %v2117, 0.0
        %v2142 = vmax.f32 %v2122, 0.0
        %v2143 = vmax.f32 %v2125, 0.0
        %v2144 = vld [vmem:[%s3 + $0x68] sm:$0xf]
        %v2145 = vld [vmem:[%s3 + $0x6c] sm:$0xf]
        %v2146 = vld [vmem:[%s3 + $0x70] sm:$0xf]
        %v2147 = vld [vmem:[%s3 + $0x74] sm:$0xf]
        %v2148 = vld [vmem:[%s3 + $0x78] sm:$0xf]
        %v2149 = vld [vmem:[%s3 + $0x7c] sm:$0xf]
        %v2150 = vld [vmem:[%s3 + $0x80] sm:$0xf]
        %v2151 = vld [vmem:[%s3 + $0x84] sm:$0xf]
        %v2152 = vld [vmem:[%s3 + $0x88] sm:$0xf]
        %v2153 = vld [vmem:[%s3 + $0x8c] sm:$0xf]
        %v2154 = vld [vmem:[%s3 + $0x90] sm:$0xf]
        %v2155 = vld [vmem:[%s3 + $0x94] sm:$0xf]
        %v2156 = vld [vmem:[%s3 + $0x98] sm:$0xf]
        %v2157 = vld [vmem:[%s3 + $0x9c] sm:$0xf]
        %v2158 = vld [vmem:[%s3 + $0xa0] sm:$0xf]
        %v2159 = vld [vmem:[%s3 + $0xa4] sm:$0xf]
        %v2160 = vld [vmem:[%s3 + $0xa8] sm:$0xf]
        %v2161 = vld [vmem:[%s3 + $0xac] sm:$0xf]
        %v2162 = vld [vmem:[%s3 + $0xb0] sm:$0xf]
        %v2163 = vld [vmem:[%s3 + $0xb4] sm:$0xf]
        %v2164 = vld [vmem:[%s3 + $0xb8] sm:$0xf]
        %v2165 = vld [vmem:[%s3 + $0xbc] sm:$0xf]
        %v2166 = vld [vmem:[%s3 + $0xc0] sm:$0xf]
        %v2167 = vld [vmem:[%s3 + $0xc4] sm:$0xf]
        %v2168 = vld [vmem:[%s3 + $0xc8] sm:$0xf]
        %v2169 = vld [vmem:[%s3 + $0xcc] sm:$0xf]
        %v2170 = vld [vmem:[%s3 + $0xd0] sm:$0xf]
        %v2171 = vld [vmem:[%s3 + $0xd4] sm:$0xf]
        %v2172 = vld [vmem:[%s3 + $0xd8] sm:$0xf]
        %v2173 = vld [vmem:[%s3 + $0xdc] sm:$0xf]
        %v2174 = vld [vmem:[%s3 + $0xe0] sm:$0xf]
        %v2175 = vld [vmem:[%s3 + $0xe4] sm:$0xf]
        %v2176 = vld [vmem:[%s3 + $0xe8] sm:$0x3]
        %v2177 = vunpack.c.l.bf16 %v2176
        %v2178 = vld [vmem:[%s3 + $0xf0] sm:$0x7]
        %v2179 = vunpack.c.l.bf16 %v2178
        %v2180 = vld [vmem:[%s3 + $0xf8] sm:$0x1]
        %v2181 = vunpack.c.l.bf16 %v2180
        %v2182 = vld [vmem:[%s3 + $0x100] sm:$0xf]
        %v2183 = vld [vmem:[%s3 + $0x104] sm:$0xf]
        %v2184 = vld [vmem:[%s3 + $0x108] sm:$0xf]
        %v2185 = vld [vmem:[%s3 + $0x10c] sm:$0xf]
        %v2186 = vld [vmem:[%s3 + $0x110] sm:$0xf]
        %v2187 = vld [vmem:[%s3 + $0x114] sm:$0xf]
        %v2188 = vld [vmem:[%s3 + $0x118] sm:$0xf]
        %v2189 = vld [vmem:[%s3 + $0x11c] sm:$0xf]
        %v2190 = vld [vmem:[%s3 + $0x120] sm:$0xf]
        %v2191 = vld [vmem:[%s3 + $0x124] sm:$0xf]
        %v2192 = vld [vmem:[%s3 + $0x128] sm:$0xf]
        %v2193 = vld [vmem:[%s3 + $0x12c] sm:$0xf]
        %v2194 = vld [vmem:[%s3 + $0x130] sm:$0xf]
        %v2195 = vld [vmem:[%s3 + $0x134] sm:$0xf]
        %v2196 = vld [vmem:[%s3 + $0x138] sm:$0xf]
        %v2197 = vld [vmem:[%s3 + $0x13c] sm:$0xf]
        %v2198 = vld [vmem:[%s3 + $0x140] sm:$0x1]
        %v2199 = vunpack.c.l.bf16 %v2198
        %v2200 = vpack.c.bf16 %v2129, %v2128
        %v2201 = vpack.c.bf16 %v2131, %v2130
        %v2202 = vpack.c.bf16 %v2133, %v2132
        %v2203 = vpack.c.bf16 %v2135, %v2134
        %v2204 = vpack.c.bf16 %v2137, %v2136
        %v2205 = vpack.c.bf16 %v2139, %v2138
        %v2206 = vpack.c.bf16 %v2141, %v2140
        %v2207 = vpack.c.bf16 %v2143, %v2142
        %v2208 = vunpack.c.h.b16 %v203
        %v2209 = vunpack.c.h.b16 %v205
        %v2210 = vunpack.c.h.b16 %v207
        %v2211 = vunpack.c.h.b16 %v209
        %v2212 = vunpack.c.h.b16 %v211
        %v2213 = vunpack.c.h.b16 %v213
        %v2214 = vunpack.c.h.b16 %v215
        %v2215 = vunpack.c.h.b16 %v217
        %v2216 = vunpack.c.h.b16 %v219
        %v2217 = vunpack.c.h.b16 %v221
        %v2218 = vunpack.c.h.b16 %v223
        %v2219 = vunpack.c.h.b16 %v225
        %v2220 = vunpack.c.h.b16 %v227
        %v2221 = vunpack.c.h.b16 %v229
        %v2222 = vunpack.c.h.b16 %v231
        %v2223 = vunpack.c.h.b16 %v233
        %v2224 = vpack.c.b16 %v2209, %v2208
        %v2225 = vpack.c.b16 %v2211, %v2210
        %v2226 = vpack.c.b16 %v2213, %v2212
        %v2227 = vpack.c.b16 %v2215, %v2214
        %v2228 = vpack.c.b16 %v2217, %v2216
        %v2229 = vpack.c.b16 %v2219, %v2218
        %v2230 = vpack.c.b16 %v2221, %v2220
        %v2231 = vpack.c.b16 %v2223, %v2222
        %v2256 = vunpack.c.l.b16 %v2160
        %v2257 = vunpack.c.l.b16 %v2161
        %v2258 = vunpack.c.l.b16 %v2162
        %v2259 = vunpack.c.l.b16 %v2163
        %v2260 = vunpack.c.l.b16 %v2164
        %v2261 = vunpack.c.l.b16 %v2165
        %v2262 = vunpack.c.l.b16 %v2166
        %v2263 = vunpack.c.l.b16 %v2167
        %v2264 = vunpack.c.l.b16 %v2168
        %v2265 = vunpack.c.l.b16 %v2169
        %v2266 = vunpack.c.l.b16 %v2170
        %v2267 = vunpack.c.l.b16 %v2171
        %v2268 = vunpack.c.l.b16 %v2172
        %v2269 = vunpack.c.l.b16 %v2173
        %v2270 = vunpack.c.l.b16 %v2174
        %v2271 = vunpack.c.l.b16 %v2175
        %v2272 = vpack.c.b16 %v2257, %v2256
        %v2273 = vpack.c.b16 %v2259, %v2258
        %v2274 = vpack.c.b16 %v2261, %v2260
        %v2275 = vpack.c.b16 %v2263, %v2262
        %v2276 = vpack.c.b16 %v2265, %v2264
        %v2277 = vpack.c.b16 %v2267, %v2266
        %v2278 = vpack.c.b16 %v2269, %v2268
        %v2279 = vpack.c.b16 %v2271, %v2270
        %2288 = vmatprep.subr.bf16.mxu0 0
        %2289 = vmatpush1.bf16.msra.mxu0 %v2272
        %2290 = vmatprep.subr.bf16.mxu0 0
        %2291 = vmatpush1.bf16.msra.mxu0 %v2273
        %2292 = vmatprep.subr.bf16.mxu0 0
        %2293 = vmatpush1.bf16.msra.mxu0 %v2274
        %2294 = vmatprep.subr.bf16.mxu0 0
        %2295 = vmatpush1.bf16.msra.mxu0 %v2275
        %2296 = vmatprep.subr.bf16.mxu0 0
        %2297 = vmatpush1.bf16.msra.mxu0 %v2276
        %2298 = vmatprep.subr.bf16.mxu0 0
        %2299 = vmatpush1.bf16.msra.mxu0 %v2277
        %2300 = vmatprep.subr.bf16.mxu0 0
        %2301 = vmatpush1.bf16.msra.mxu0 %v2278
        %2302 = vmatprep.subr.bf16.mxu0 0
        %2303 = vmatpush1.bf16.msra.mxu0 %v2279
        %2304 = vmatprep.subr.bf16.mxu0 0
        %2305 = vmatpush1.bf16.msra.mxu0 0
        %2306 = vmatprep.subr.bf16.mxu0 0
        %2307 = vmatpush1.bf16.msra.mxu0 0
        %2308 = vmatprep.subr.bf16.mxu0 0
        %2309 = vmatpush1.bf16.msra.mxu0 0
        %2310 = vmatprep.subr.bf16.mxu0 0
        %2311 = vmatpush1.bf16.msra.mxu0 0
        %2312 = vmatprep.subr.bf16.mxu0 0
        %2313 = vmatpush1.bf16.msra.mxu0 0
        %2314 = vmatprep.subr.bf16.mxu0 0
        %2315 = vmatpush1.bf16.msra.mxu0 0
        %2316 = vmatprep.subr.bf16.mxu0 0
        %2317 = vmatpush1.bf16.msra.mxu0 0
        %2318 = vmatprep.subr.bf16.mxu0 0
        %2319 = vmatpush1.bf16.msra.mxu0 0
        %2320 = vmatprep.mubr.bf16.mxu0 0
        %2321 = vmatmul.mubr.bf16.gmra.mrb[0].mxu0 %v2224
        %v2322 = vpop.f32.mrb[0].mxu0
        %v2323 = vadd.f32 0.0, %v2322
        %v2324 = vpop.f32.mrb[0].mxu0
        %v2325 = vpop.f32.mrb[0].mxu0
        %v2326 = vadd.f32 0.0, %v2325
        %v2327 = vpop.f32.mrb[0].mxu0
        %2328 = vmatprep.mubr.bf16.mxu0 0
        %2329 = vmatmul.mubr.bf16.gmra.mrb[0].mxu0 %v2225
        %v2330 = vpop.f32.mrb[0].mxu0
        %v2331 = vadd.f32 0.0, %v2330
        %v2332 = vpop.f32.mrb[0].mxu0
        %v2333 = vpop.f32.mrb[0].mxu0
        %v2334 = vadd.f32 0.0, %v2333
        %v2335 = vpop.f32.mrb[0].mxu0
        %2336 = vmatprep.mubr.bf16.mxu0 0
        %2337 = vmatmul.mubr.bf16.gmra.mrb[0].mxu0 %v2226
        %v2338 = vpop.f32.mrb[0].mxu0
        %v2339 = vadd.f32 0.0, %v2338
        %v2340 = vpop.f32.mrb[0].mxu0
        %v2341 = vpop.f32.mrb[0].mxu0
        %v2342 = vadd.f32 0.0, %v2341
        %v2343 = vpop.f32.mrb[0].mxu0
        %2344 = vmatprep.mubr.bf16.mxu0 0
        %2345 = vmatmul.mubr.bf16.gmra.mrb[0].mxu0 %v2227
        %v2346 = vpop.f32.mrb[0].mxu0
        %v2347 = vadd.f32 0.0, %v2346
        %v2348 = vpop.f32.mrb[0].mxu0
        %v2349 = vpop.f32.mrb[0].mxu0
        %v2350 = vadd.f32 0.0, %v2349
        %v2351 = vpop.f32.mrb[0].mxu0
        %2352 = vmatprep.mubr.bf16.mxu0 0
        %2353 = vmatmul.mubr.bf16.gmra.mrb[0].mxu0 %v2228
        %v2354 = vpop.f32.mrb[0].mxu0
        %v2355 = vadd.f32 0.0, %v2354
        %v2356 = vpop.f32.mrb[0].mxu0
        %v2357 = vpop.f32.mrb[0].mxu0
        %v2358 = vadd.f32 0.0, %v2357
        %v2359 = vpop.f32.mrb[0].mxu0
        %2360 = vmatprep.mubr.bf16.mxu0 0
        %2361 = vmatmul.mubr.bf16.gmra.mrb[0].mxu0 %v2229
        %v2362 = vpop.f32.mrb[0].mxu0
        %v2363 = vadd.f32 0.0, %v2362
        %v2364 = vpop.f32.mrb[0].mxu0
        %v2365 = vpop.f32.mrb[0].mxu0
        %v2366 = vadd.f32 0.0, %v2365
        %v2367 = vpop.f32.mrb[0].mxu0
        %2368 = vmatprep.mubr.bf16.mxu0 0
        %2369 = vmatmul.mubr.bf16.gmra.mrb[0].mxu0 %v2230
        %v2370 = vpop.f32.mrb[0].mxu0
        %v2371 = vadd.f32 0.0, %v2370
        %v2372 = vpop.f32.mrb[0].mxu0
        %v2373 = vpop.f32.mrb[0].mxu0
        %v2374 = vadd.f32 0.0, %v2373
        %v2375 = vpop.f32.mrb[0].mxu0
        %2376 = vmatprep.mubr.bf16.mxu0 0
        %2377 = vmatmul.mubr.bf16.gmra.mrb[0].mxu0 %v2231
        %v2378 = vpop.f32.mrb[0].mxu0
        %v2379 = vadd.f32 0.0, %v2378
        %v2380 = vpop.f32.mrb[0].mxu0
        %v2381 = vpop.f32.mrb[0].mxu0
        %v2382 = vadd.f32 0.0, %v2381
        %v2383 = vpop.f32.mrb[0].mxu0
        %2384 = vdwg.mxu0
        %v2401 = vunpack.c.l.b16 %v2144
        %v2402 = vunpack.c.l.b16 %v2145
        %v2403 = vunpack.c.l.b16 %v2146
        %v2404 = vunpack.c.l.b16 %v2147
        %v2405 = vunpack.c.l.b16 %v2148
        %v2406 = vunpack.c.l.b16 %v2149
        %v2407 = vunpack.c.l.b16 %v2150
        %v2408 = vunpack.c.l.b16 %v2151
        %v2409 = vunpack.c.l.b16 %v2152
        %v2410 = vunpack.c.l.b16 %v2153
        %v2411 = vunpack.c.l.b16 %v2154
        %v2412 = vunpack.c.l.b16 %v2155
        %v2413 = vunpack.c.l.b16 %v2156
        %v2414 = vunpack.c.l.b16 %v2157
        %v2415 = vunpack.c.l.b16 %v2158
        %v2416 = vunpack.c.l.b16 %v2159
        %v2417 = vpack.c.b16 %v2402, %v2401
        %v2418 = vpack.c.b16 %v2404, %v2403
        %v2419 = vpack.c.b16 %v2406, %v2405
        %v2420 = vpack.c.b16 %v2408, %v2407
        %v2421 = vpack.c.b16 %v2410, %v2409
        %v2422 = vpack.c.b16 %v2412, %v2411
        %v2423 = vpack.c.b16 %v2414, %v2413
        %v2424 = vpack.c.b16 %v2416, %v2415
        %2433 = vmatprep.subr.bf16.mxu0 0
        %2434 = vmatpush1.bf16.msra.mxu0 %v2417
        %2435 = vmatprep.subr.bf16.mxu0 0
        %2436 = vmatpush1.bf16.msra.mxu0 %v2418
        %2437 = vmatprep.subr.bf16.mxu0 0
        %2438 = vmatpush1.bf16.msra.mxu0 %v2419
        %2439 = vmatprep.subr.bf16.mxu0 0
        %2440 = vmatpush1.bf16.msra.mxu0 %v2420
        %2441 = vmatprep.subr.bf16.mxu0 0
        %2442 = vmatpush1.bf16.msra.mxu0 %v2421
        %2443 = vmatprep.subr.bf16.mxu0 0
        %2444 = vmatpush1.bf16.msra.mxu0 %v2422
        %2445 = vmatprep.subr.bf16.mxu0 0
        %2446 = vmatpush1.bf16.msra.mxu0 %v2423
        %2447 = vmatprep.subr.bf16.mxu0 0
        %2448 = vmatpush1.bf16.msra.mxu0 %v2424
        %2449 = vmatprep.subr.bf16.mxu0 0
        %2450 = vmatpush1.bf16.msra.mxu0 0
        %2451 = vmatprep.subr.bf16.mxu0 0
        %2452 = vmatpush1.bf16.msra.mxu0 0
        %2453 = vmatprep.subr.bf16.mxu0 0
        %2454 = vmatpush1.bf16.msra.mxu0 0
        %2455 = vmatprep.subr.bf16.mxu0 0
        %2456 = vmatpush1.bf16.msra.mxu0 0
        %2457 = vmatprep.subr.bf16.mxu0 0
        %2458 = vmatpush1.bf16.msra.mxu0 0
        %2459 = vmatprep.subr.bf16.mxu0 0
        %2460 = vmatpush1.bf16.msra.mxu0 0
        %2461 = vmatprep.subr.bf16.mxu0 0
        %2462 = vmatpush1.bf16.msra.mxu0 0
        %2463 = vmatprep.subr.bf16.mxu0 0
        %2464 = vmatpush1.bf16.msra.mxu0 0
        %2465 = vmatprep.mubr.bf16.mxu0 0
        %2466 = vmatmul.mubr.bf16.gmra.mrb[0].mxu0 %v2200
        %v2467 = vpop.f32.mrb[0].mxu0
        %v2468 = vadd.f32 %v2323, %v2467
        %v2469 = vpop.f32.mrb[0].mxu0
        %v2470 = vpop.f32.mrb[0].mxu0
        %v2471 = vadd.f32 %v2326, %v2470
        %v2472 = vpop.f32.mrb[0].mxu0
        %2473 = vmatprep.mubr.bf16.mxu0 0
        %2474 = vmatmul.mubr.bf16.gmra.mrb[0].mxu0 %v2201
        %v2475 = vpop.f32.mrb[0].mxu0
        %v2476 = vadd.f32 %v2331, %v2475
        %v2477 = vpop.f32.mrb[0].mxu0
        %v2478 = vpop.f32.mrb[0].mxu0
        %v2479 = vadd.f32 %v2334, %v2478
        %v2480 = vpop.f32.mrb[0].mxu0
        %2481 = vmatprep.mubr.bf16.mxu0 0
        %2482 = vmatmul.mubr.bf16.gmra.mrb[0].mxu0 %v2202
        %v2483 = vpop.f32.mrb[0].mxu0
        %v2484 = vadd.f32 %v2339, %v2483
        %v2485 = vpop.f32.mrb[0].mxu0
        %v2486 = vpop.f32.mrb[0].mxu0
        %v2487 = vadd.f32 %v2342, %v2486
        %v2488 = vpop.f32.mrb[0].mxu0
        %2489 = vmatprep.mubr.bf16.mxu0 0
        %2490 = vmatmul.mubr.bf16.gmra.mrb[0].mxu0 %v2203
        %v2491 = vpop.f32.mrb[0].mxu0
        %v2492 = vadd.f32 %v2347, %v2491
        %v2493 = vpop.f32.mrb[0].mxu0
        %v2494 = vpop.f32.mrb[0].mxu0
        %v2495 = vadd.f32 %v2350, %v2494
        %v2496 = vpop.f32.mrb[0].mxu0
        %2497 = vmatprep.mubr.bf16.mxu0 0
        %2498 = vmatmul.mubr.bf16.gmra.mrb[0].mxu0 %v2204
        %v2499 = vpop.f32.mrb[0].mxu0
        %v2500 = vadd.f32 %v2355, %v2499
        %v2501 = vpop.f32.mrb[0].mxu0
        %v2502 = vpop.f32.mrb[0].mxu0
        %v2503 = vadd.f32 %v2358, %v2502
        %v2504 = vpop.f32.mrb[0].mxu0
        %2505 = vmatprep.mubr.bf16.mxu0 0
        %2506 = vmatmul.mubr.bf16.gmra.mrb[0].mxu0 %v2205
        %v2507 = vpop.f32.mrb[0].mxu0
        %v2508 = vadd.f32 %v2363, %v2507
        %v2509 = vpop.f32.mrb[0].mxu0
        %v2510 = vpop.f32.mrb[0].mxu0
        %v2511 = vadd.f32 %v2366, %v2510
        %v2512 = vpop.f32.mrb[0].mxu0
        %2513 = vmatprep.mubr.bf16.mxu0 0
        %2514 = vmatmul.mubr.bf16.gmra.mrb[0].mxu0 %v2206
        %v2515 = vpop.f32.mrb[0].mxu0
        %v2516 = vadd.f32 %v2371, %v2515
        %v2517 = vpop.f32.mrb[0].mxu0
        %v2518 = vpop.f32.mrb[0].mxu0
        %v2519 = vadd.f32 %v2374, %v2518
        %v2520 = vpop.f32.mrb[0].mxu0
        %2521 = vmatprep.mubr.bf16.mxu0 0
        %2522 = vmatmul.mubr.bf16.gmra.mrb[0].mxu0 %v2207
        %v2523 = vpop.f32.mrb[0].mxu0
        %v2524 = vadd.f32 %v2379, %v2523
        %v2525 = vpop.f32.mrb[0].mxu0
        %v2526 = vpop.f32.mrb[0].mxu0
        %v2527 = vadd.f32 %v2382, %v2526
        %v2528 = vpop.f32.mrb[0].mxu0
        %2529 = vdwg.mxu0
        %v2530 = vlaneseq
        %v2531 = vshrl.u32 %v2530, 7
        %v2532 = vsub.s32 0, %v2531
        %v2533 = vrot.slane %v2181, %v2532
        %v2534 = vadd.f32 %v2468, %v2533
        %v2535 = vadd.f32 %v2471, %v2533
        %v2536 = vadd.f32 %v2476, %v2533
        %v2537 = vadd.f32 %v2479, %v2533
        %v2538 = vadd.f32 %v2484, %v2533
        %v2539 = vadd.f32 %v2487, %v2533
        %v2540 = vadd.f32 %v2492, %v2533
        %v2541 = vadd.f32 %v2495, %v2533
        %v2542 = vadd.f32 %v2500, %v2533
        %v2543 = vadd.f32 %v2503, %v2533
        %v2544 = vadd.f32 %v2508, %v2533
        %v2545 = vadd.f32 %v2511, %v2533
        %v2546 = vadd.f32 %v2516, %v2533
        %v2547 = vadd.f32 %v2519, %v2533
        %v2548 = vadd.f32 %v2524, %v2533
        %v2549 = vadd.f32 %v2527, %v2533
        %v2550 = vadd.f32 %v235, 0.5
        %v2551 = vadd.f32 %v236, 0.5
        %v2552 = vadd.f32 %v237, 0.5
        %v2553 = vadd.f32 %v238, 0.5
        %v2554 = vadd.f32 %v239, 0.5
        %v2555 = vadd.f32 %v240, 0.5
        %v2556 = vadd.f32 %v241, 0.5
        %v2557 = vadd.f32 %v242, 0.5
        %v2558 = vadd.f32 %v243, 0.5
        %v2559 = vadd.f32 %v244, 0.5
        %v2560 = vadd.f32 %v245, 0.5
        %v2561 = vadd.f32 %v246, 0.5
        %v2562 = vadd.f32 %v247, 0.5
        %v2563 = vadd.f32 %v248, 0.5
        %v2564 = vadd.f32 %v249, 0.5
        %v2565 = vadd.f32 %v250, 0.5
        %v2566 = vfloor.f32 %v2550
        %v2567 = vfloor.f32 %v2551
        %v2568 = vfloor.f32 %v2552
        %v2569 = vfloor.f32 %v2553
        %v2570 = vfloor.f32 %v2554
        %v2571 = vfloor.f32 %v2555
        %v2572 = vfloor.f32 %v2556
        %v2573 = vfloor.f32 %v2557
        %v2574 = vfloor.f32 %v2558
        %v2575 = vfloor.f32 %v2559
        %v2576 = vfloor.f32 %v2560
        %v2577 = vfloor.f32 %v2561
        %v2578 = vfloor.f32 %v2562
        %v2579 = vfloor.f32 %v2563
        %v2580 = vfloor.f32 %v2564
        %v2581 = vfloor.f32 %v2565
        %vm2582 = vcmp.eq.f32.partialorder %v2566, 0.0
        %vm2583 = vcmp.eq.f32.partialorder %v2567, 0.0
        %vm2584 = vcmp.eq.f32.partialorder %v2568, 0.0
        %vm2585 = vcmp.eq.f32.partialorder %v2569, 0.0
        %vm2586 = vcmp.eq.f32.partialorder %v2570, 0.0
        %vm2587 = vcmp.eq.f32.partialorder %v2571, 0.0
        %vm2588 = vcmp.eq.f32.partialorder %v2572, 0.0
        %vm2589 = vcmp.eq.f32.partialorder %v2573, 0.0
        %vm2590 = vcmp.eq.f32.partialorder %v2574, 0.0
        %vm2591 = vcmp.eq.f32.partialorder %v2575, 0.0
        %vm2592 = vcmp.eq.f32.partialorder %v2576, 0.0
        %vm2593 = vcmp.eq.f32.partialorder %v2577, 0.0
        %vm2594 = vcmp.eq.f32.partialorder %v2578, 0.0
        %vm2595 = vcmp.eq.f32.partialorder %v2579, 0.0
        %vm2596 = vcmp.eq.f32.partialorder %v2580, 0.0
        %vm2597 = vcmp.eq.f32.partialorder %v2581, 0.0
        %v2598 = vsel %vm2582, 1.0, 0.0
        %v2599 = vsel %vm2583, 1.0, 0.0
        %v2600 = vsel %vm2584, 1.0, 0.0
        %v2601 = vsel %vm2585, 1.0, 0.0
        %v2602 = vsel %vm2586, 1.0, 0.0
        %v2603 = vsel %vm2587, 1.0, 0.0
        %v2604 = vsel %vm2588, 1.0, 0.0
        %v2605 = vsel %vm2589, 1.0, 0.0
        %v2606 = vsel %vm2590, 1.0, 0.0
        %v2607 = vsel %vm2591, 1.0, 0.0
        %v2608 = vsel %vm2592, 1.0, 0.0
        %v2609 = vsel %vm2593, 1.0, 0.0
        %v2610 = vsel %vm2594, 1.0, 0.0
        %v2611 = vsel %vm2595, 1.0, 0.0
        %v2612 = vsel %vm2596, 1.0, 0.0
        %v2613 = vsel %vm2597, 1.0, 0.0
        %2615 = vset.pattern.permute.xlu0 0
        %2616 = vperm.xlu0 %2615, %v2598
        %v2617 = vpop.permute.xlu0 %2616
        %2620 = vset.pattern.permute.xlu0 0
        %2621 = vperm.xlu0 %2620, %v2599
        %v2622 = vpop.permute.xlu0 %2621
        %2625 = vset.pattern.permute.xlu0 0
        %2626 = vperm.xlu0 %2625, %v2600
        %v2627 = vpop.permute.xlu0 %2626
        %2630 = vset.pattern.permute.xlu0 0
        %2631 = vperm.xlu0 %2630, %v2601
        %v2632 = vpop.permute.xlu0 %2631
        %2635 = vset.pattern.permute.xlu0 0
        %2636 = vperm.xlu0 %2635, %v2602
        %v2637 = vpop.permute.xlu0 %2636
        %2640 = vset.pattern.permute.xlu0 0
        %2641 = vperm.xlu0 %2640, %v2603
        %v2642 = vpop.permute.xlu0 %2641
        %2645 = vset.pattern.permute.xlu0 0
        %2646 = vperm.xlu0 %2645, %v2604
        %v2647 = vpop.permute.xlu0 %2646
        %2650 = vset.pattern.permute.xlu0 0
        %2651 = vperm.xlu0 %2650, %v2605
        %v2652 = vpop.permute.xlu0 %2651
        %2655 = vset.pattern.permute.xlu0 0
        %2656 = vperm.xlu0 %2655, %v2606
        %v2657 = vpop.permute.xlu0 %2656
        %2660 = vset.pattern.permute.xlu0 0
        %2661 = vperm.xlu0 %2660, %v2607
        %v2662 = vpop.permute.xlu0 %2661
        %2665 = vset.pattern.permute.xlu0 0
        %2666 = vperm.xlu0 %2665, %v2608
        %v2667 = vpop.permute.xlu0 %2666
        %2670 = vset.pattern.permute.xlu0 0
        %2671 = vperm.xlu0 %2670, %v2609
        %v2672 = vpop.permute.xlu0 %2671
        %2675 = vset.pattern.permute.xlu0 0
        %2676 = vperm.xlu0 %2675, %v2610
        %v2677 = vpop.permute.xlu0 %2676
        %2680 = vset.pattern.permute.xlu0 0
        %2681 = vperm.xlu0 %2680, %v2611
        %v2682 = vpop.permute.xlu0 %2681
        %2685 = vset.pattern.permute.xlu0 0
        %2686 = vperm.xlu0 %2685, %v2612
        %v2687 = vpop.permute.xlu0 %2686
        %2690 = vset.pattern.permute.xlu0 0
        %2691 = vperm.xlu0 %2690, %v2613
        %v2692 = vpop.permute.xlu0 %2691
        %v2694 = vlaneseq
        %v2695 = vshrl.u32 %v2694, 7
        %v2696 = vsub.s32 0, %v2695
        %v2697 = vrot.slane %v2177, %v2696
        %v2698 = vmul.f32 %v2617, %v2697
        %v2699 = vmul.f32 %v2622, %v2697
        %v2700 = vmul.f32 %v2627, %v2697
        %v2701 = vmul.f32 %v2632, %v2697
        %v2702 = vmul.f32 %v2637, %v2697
        %v2703 = vmul.f32 %v2642, %v2697
        %v2704 = vmul.f32 %v2647, %v2697
        %v2705 = vmul.f32 %v2652, %v2697
        %v2706 = vmul.f32 %v2657, %v2697
        %v2707 = vmul.f32 %v2662, %v2697
        %v2708 = vmul.f32 %v2667, %v2697
        %v2709 = vmul.f32 %v2672, %v2697
        %v2710 = vmul.f32 %v2677, %v2697
        %v2711 = vmul.f32 %v2682, %v2697
        %v2712 = vmul.f32 %v2687, %v2697
        %v2713 = vmul.f32 %v2692, %v2697
        %vm2714 = vcmp.eq.f32.partialorder %v2566, 1.0
        %vm2715 = vcmp.eq.f32.partialorder %v2567, 1.0
        %vm2716 = vcmp.eq.f32.partialorder %v2568, 1.0
        %vm2717 = vcmp.eq.f32.partialorder %v2569, 1.0
        %vm2718 = vcmp.eq.f32.partialorder %v2570, 1.0
        %vm2719 = vcmp.eq.f32.partialorder %v2571, 1.0
        %vm2720 = vcmp.eq.f32.partialorder %v2572, 1.0
        %vm2721 = vcmp.eq.f32.partialorder %v2573, 1.0
        %vm2722 = vcmp.eq.f32.partialorder %v2574, 1.0
        %vm2723 = vcmp.eq.f32.partialorder %v2575, 1.0
        %vm2724 = vcmp.eq.f32.partialorder %v2576, 1.0
        %vm2725 = vcmp.eq.f32.partialorder %v2577, 1.0
        %vm2726 = vcmp.eq.f32.partialorder %v2578, 1.0
        %vm2727 = vcmp.eq.f32.partialorder %v2579, 1.0
        %vm2728 = vcmp.eq.f32.partialorder %v2580, 1.0
        %vm2729 = vcmp.eq.f32.partialorder %v2581, 1.0
        %v2730 = vsel %vm2714, 1.0, 0.0
        %v2731 = vsel %vm2715, 1.0, 0.0
        %v2732 = vsel %vm2716, 1.0, 0.0
        %v2733 = vsel %vm2717, 1.0, 0.0
        %v2734 = vsel %vm2718, 1.0, 0.0
        %v2735 = vsel %vm2719, 1.0, 0.0
        %v2736 = vsel %vm2720, 1.0, 0.0
        %v2737 = vsel %vm2721, 1.0, 0.0
        %v2738 = vsel %vm2722, 1.0, 0.0
        %v2739 = vsel %vm2723, 1.0, 0.0
        %v2740 = vsel %vm2724, 1.0, 0.0
        %v2741 = vsel %vm2725, 1.0, 0.0
        %v2742 = vsel %vm2726, 1.0, 0.0
        %v2743 = vsel %vm2727, 1.0, 0.0
        %v2744 = vsel %vm2728, 1.0, 0.0
        %v2745 = vsel %vm2729, 1.0, 0.0
        %2747 = vset.pattern.permute.xlu0 0
        %2748 = vperm.xlu0 %2747, %v2730
        %v2749 = vpop.permute.xlu0 %2748
        %2752 = vset.pattern.permute.xlu0 0
        %2753 = vperm.xlu0 %2752, %v2731
        %v2754 = vpop.permute.xlu0 %2753
        %2757 = vset.pattern.permute.xlu0 0
        %2758 = vperm.xlu0 %2757, %v2732
        %v2759 = vpop.permute.xlu0 %2758
        %2762 = vset.pattern.permute.xlu0 0
        %2763 = vperm.xlu0 %2762, %v2733
        %v2764 = vpop.permute.xlu0 %2763
        %2767 = vset.pattern.permute.xlu0 0
        %2768 = vperm.xlu0 %2767, %v2734
        %v2769 = vpop.permute.xlu0 %2768
        %2772 = vset.pattern.permute.xlu0 0
        %2773 = vperm.xlu0 %2772, %v2735
        %v2774 = vpop.permute.xlu0 %2773
        %2777 = vset.pattern.permute.xlu0 0
        %2778 = vperm.xlu0 %2777, %v2736
        %v2779 = vpop.permute.xlu0 %2778
        %2782 = vset.pattern.permute.xlu0 0
        %2783 = vperm.xlu0 %2782, %v2737
        %v2784 = vpop.permute.xlu0 %2783
        %2787 = vset.pattern.permute.xlu0 0
        %2788 = vperm.xlu0 %2787, %v2738
        %v2789 = vpop.permute.xlu0 %2788
        %2792 = vset.pattern.permute.xlu0 0
        %2793 = vperm.xlu0 %2792, %v2739
        %v2794 = vpop.permute.xlu0 %2793
        %2797 = vset.pattern.permute.xlu0 0
        %2798 = vperm.xlu0 %2797, %v2740
        %v2799 = vpop.permute.xlu0 %2798
        %2802 = vset.pattern.permute.xlu0 0
        %2803 = vperm.xlu0 %2802, %v2741
        %v2804 = vpop.permute.xlu0 %2803
        %2807 = vset.pattern.permute.xlu0 0
        %2808 = vperm.xlu0 %2807, %v2742
        %v2809 = vpop.permute.xlu0 %2808
        %2812 = vset.pattern.permute.xlu0 0
        %2813 = vperm.xlu0 %2812, %v2743
        %v2814 = vpop.permute.xlu0 %2813
        %2817 = vset.pattern.permute.xlu0 0
        %2818 = vperm.xlu0 %2817, %v2744
        %v2819 = vpop.permute.xlu0 %2818
        %2822 = vset.pattern.permute.xlu0 0
        %2823 = vperm.xlu0 %2822, %v2745
        %v2824 = vpop.permute.xlu0 %2823
        %v2826 = vlaneseq
        %v2827 = vshrl.u32 %v2826, 7
        %v2828 = vsub.s32 1, %v2827
        %v2829 = vrot.slane %v2177, %v2828
        %v2830 = vmul.f32 %v2749, %v2829
        %v2831 = vmul.f32 %v2754, %v2829
        %v2832 = vmul.f32 %v2759, %v2829
        %v2833 = vmul.f32 %v2764, %v2829
        %v2834 = vmul.f32 %v2769, %v2829
        %v2835 = vmul.f32 %v2774, %v2829
        %v2836 = vmul.f32 %v2779, %v2829
        %v2837 = vmul.f32 %v2784, %v2829
        %v2838 = vmul.f32 %v2789, %v2829
        %v2839 = vmul.f32 %v2794, %v2829
        %v2840 = vmul.f32 %v2799, %v2829
        %v2841 = vmul.f32 %v2804, %v2829
        %v2842 = vmul.f32 %v2809, %v2829
        %v2843 = vmul.f32 %v2814, %v2829
        %v2844 = vmul.f32 %v2819, %v2829
        %v2845 = vmul.f32 %v2824, %v2829
        %vm2846 = vcmp.eq.f32.partialorder %v2566, 2.0
        %vm2847 = vcmp.eq.f32.partialorder %v2567, 2.0
        %vm2848 = vcmp.eq.f32.partialorder %v2568, 2.0
        %vm2849 = vcmp.eq.f32.partialorder %v2569, 2.0
        %vm2850 = vcmp.eq.f32.partialorder %v2570, 2.0
        %vm2851 = vcmp.eq.f32.partialorder %v2571, 2.0
        %vm2852 = vcmp.eq.f32.partialorder %v2572, 2.0
        %vm2853 = vcmp.eq.f32.partialorder %v2573, 2.0
        %vm2854 = vcmp.eq.f32.partialorder %v2574, 2.0
        %vm2855 = vcmp.eq.f32.partialorder %v2575, 2.0
        %vm2856 = vcmp.eq.f32.partialorder %v2576, 2.0
        %vm2857 = vcmp.eq.f32.partialorder %v2577, 2.0
        %vm2858 = vcmp.eq.f32.partialorder %v2578, 2.0
        %vm2859 = vcmp.eq.f32.partialorder %v2579, 2.0
        %vm2860 = vcmp.eq.f32.partialorder %v2580, 2.0
        %vm2861 = vcmp.eq.f32.partialorder %v2581, 2.0
        %v2862 = vsel %vm2846, 1.0, 0.0
        %v2863 = vsel %vm2847, 1.0, 0.0
        %v2864 = vsel %vm2848, 1.0, 0.0
        %v2865 = vsel %vm2849, 1.0, 0.0
        %v2866 = vsel %vm2850, 1.0, 0.0
        %v2867 = vsel %vm2851, 1.0, 0.0
        %v2868 = vsel %vm2852, 1.0, 0.0
        %v2869 = vsel %vm2853, 1.0, 0.0
        %v2870 = vsel %vm2854, 1.0, 0.0
        %v2871 = vsel %vm2855, 1.0, 0.0
        %v2872 = vsel %vm2856, 1.0, 0.0
        %v2873 = vsel %vm2857, 1.0, 0.0
        %v2874 = vsel %vm2858, 1.0, 0.0
        %v2875 = vsel %vm2859, 1.0, 0.0
        %v2876 = vsel %vm2860, 1.0, 0.0
        %v2877 = vsel %vm2861, 1.0, 0.0
        %2879 = vset.pattern.permute.xlu0 0
        %2880 = vperm.xlu0 %2879, %v2862
        %v2881 = vpop.permute.xlu0 %2880
        %2884 = vset.pattern.permute.xlu0 0
        %2885 = vperm.xlu0 %2884, %v2863
        %v2886 = vpop.permute.xlu0 %2885
        %2889 = vset.pattern.permute.xlu0 0
        %2890 = vperm.xlu0 %2889, %v2864
        %v2891 = vpop.permute.xlu0 %2890
        %2894 = vset.pattern.permute.xlu0 0
        %2895 = vperm.xlu0 %2894, %v2865
        %v2896 = vpop.permute.xlu0 %2895
        %2899 = vset.pattern.permute.xlu0 0
        %2900 = vperm.xlu0 %2899, %v2866
        %v2901 = vpop.permute.xlu0 %2900
        %2904 = vset.pattern.permute.xlu0 0
        %2905 = vperm.xlu0 %2904, %v2867
        %v2906 = vpop.permute.xlu0 %2905
        %2909 = vset.pattern.permute.xlu0 0
        %2910 = vperm.xlu0 %2909, %v2868
        %v2911 = vpop.permute.xlu0 %2910
        %2914 = vset.pattern.permute.xlu0 0
        %2915 = vperm.xlu0 %2914, %v2869
        %v2916 = vpop.permute.xlu0 %2915
        %2919 = vset.pattern.permute.xlu0 0
        %2920 = vperm.xlu0 %2919, %v2870
        %v2921 = vpop.permute.xlu0 %2920
        %2924 = vset.pattern.permute.xlu0 0
        %2925 = vperm.xlu0 %2924, %v2871
        %v2926 = vpop.permute.xlu0 %2925
        %2929 = vset.pattern.permute.xlu0 0
        %2930 = vperm.xlu0 %2929, %v2872
        %v2931 = vpop.permute.xlu0 %2930
        %2934 = vset.pattern.permute.xlu0 0
        %2935 = vperm.xlu0 %2934, %v2873
        %v2936 = vpop.permute.xlu0 %2935
        %2939 = vset.pattern.permute.xlu0 0
        %2940 = vperm.xlu0 %2939, %v2874
        %v2941 = vpop.permute.xlu0 %2940
        %2944 = vset.pattern.permute.xlu0 0
        %2945 = vperm.xlu0 %2944, %v2875
        %v2946 = vpop.permute.xlu0 %2945
        %2949 = vset.pattern.permute.xlu0 0
        %2950 = vperm.xlu0 %2949, %v2876
        %v2951 = vpop.permute.xlu0 %2950
        %2954 = vset.pattern.permute.xlu0 0
        %2955 = vperm.xlu0 %2954, %v2877
        %v2956 = vpop.permute.xlu0 %2955
        %v2958 = vlaneseq
        %v2959 = vshrl.u32 %v2958, 7
        %v2960 = vsub.s32 2, %v2959
        %v2961 = vrot.slane %v2177, %v2960
        %v2962 = vmul.f32 %v2881, %v2961
        %v2963 = vmul.f32 %v2886, %v2961
        %v2964 = vmul.f32 %v2891, %v2961
        %v2965 = vmul.f32 %v2896, %v2961
        %v2966 = vmul.f32 %v2901, %v2961
        %v2967 = vmul.f32 %v2906, %v2961
        %v2968 = vmul.f32 %v2911, %v2961
        %v2969 = vmul.f32 %v2916, %v2961
        %v2970 = vmul.f32 %v2921, %v2961
        %v2971 = vmul.f32 %v2926, %v2961
        %v2972 = vmul.f32 %v2931, %v2961
        %v2973 = vmul.f32 %v2936, %v2961
        %v2974 = vmul.f32 %v2941, %v2961
        %v2975 = vmul.f32 %v2946, %v2961
        %v2976 = vmul.f32 %v2951, %v2961
        %v2977 = vmul.f32 %v2956, %v2961
        %vm2978 = vcmp.eq.f32.partialorder %v2566, 3.0
        %vm2979 = vcmp.eq.f32.partialorder %v2567, 3.0
        %vm2980 = vcmp.eq.f32.partialorder %v2568, 3.0
        %vm2981 = vcmp.eq.f32.partialorder %v2569, 3.0
        %vm2982 = vcmp.eq.f32.partialorder %v2570, 3.0
        %vm2983 = vcmp.eq.f32.partialorder %v2571, 3.0
        %vm2984 = vcmp.eq.f32.partialorder %v2572, 3.0
        %vm2985 = vcmp.eq.f32.partialorder %v2573, 3.0
        %vm2986 = vcmp.eq.f32.partialorder %v2574, 3.0
        %vm2987 = vcmp.eq.f32.partialorder %v2575, 3.0
        %vm2988 = vcmp.eq.f32.partialorder %v2576, 3.0
        %vm2989 = vcmp.eq.f32.partialorder %v2577, 3.0
        %vm2990 = vcmp.eq.f32.partialorder %v2578, 3.0
        %vm2991 = vcmp.eq.f32.partialorder %v2579, 3.0
        %vm2992 = vcmp.eq.f32.partialorder %v2580, 3.0
        %vm2993 = vcmp.eq.f32.partialorder %v2581, 3.0
        %v2994 = vsel %vm2978, 1.0, 0.0
        %v2995 = vsel %vm2979, 1.0, 0.0
        %v2996 = vsel %vm2980, 1.0, 0.0
        %v2997 = vsel %vm2981, 1.0, 0.0
        %v2998 = vsel %vm2982, 1.0, 0.0
        %v2999 = vsel %vm2983, 1.0, 0.0
        %v3000 = vsel %vm2984, 1.0, 0.0
        %v3001 = vsel %vm2985, 1.0, 0.0
        %v3002 = vsel %vm2986, 1.0, 0.0
        %v3003 = vsel %vm2987, 1.0, 0.0
        %v3004 = vsel %vm2988, 1.0, 0.0
        %v3005 = vsel %vm2989, 1.0, 0.0
        %v3006 = vsel %vm2990, 1.0, 0.0
        %v3007 = vsel %vm2991, 1.0, 0.0
        %v3008 = vsel %vm2992, 1.0, 0.0
        %v3009 = vsel %vm2993, 1.0, 0.0
        %3011 = vset.pattern.permute.xlu0 0
        %3012 = vperm.xlu0 %3011, %v2994
        %v3013 = vpop.permute.xlu0 %3012
        %3016 = vset.pattern.permute.xlu0 0
        %3017 = vperm.xlu0 %3016, %v2995
        %v3018 = vpop.permute.xlu0 %3017
        %3021 = vset.pattern.permute.xlu0 0
        %3022 = vperm.xlu0 %3021, %v2996
        %v3023 = vpop.permute.xlu0 %3022
        %3026 = vset.pattern.permute.xlu0 0
        %3027 = vperm.xlu0 %3026, %v2997
        %v3028 = vpop.permute.xlu0 %3027
        %3031 = vset.pattern.permute.xlu0 0
        %3032 = vperm.xlu0 %3031, %v2998
        %v3033 = vpop.permute.xlu0 %3032
        %3036 = vset.pattern.permute.xlu0 0
        %3037 = vperm.xlu0 %3036, %v2999
        %v3038 = vpop.permute.xlu0 %3037
        %3041 = vset.pattern.permute.xlu0 0
        %3042 = vperm.xlu0 %3041, %v3000
        %v3043 = vpop.permute.xlu0 %3042
        %3046 = vset.pattern.permute.xlu0 0
        %3047 = vperm.xlu0 %3046, %v3001
        %v3048 = vpop.permute.xlu0 %3047
        %3051 = vset.pattern.permute.xlu0 0
        %3052 = vperm.xlu0 %3051, %v3002
        %v3053 = vpop.permute.xlu0 %3052
        %3056 = vset.pattern.permute.xlu0 0
        %3057 = vperm.xlu0 %3056, %v3003
        %v3058 = vpop.permute.xlu0 %3057
        %3061 = vset.pattern.permute.xlu0 0
        %3062 = vperm.xlu0 %3061, %v3004
        %v3063 = vpop.permute.xlu0 %3062
        %3066 = vset.pattern.permute.xlu0 0
        %3067 = vperm.xlu0 %3066, %v3005
        %v3068 = vpop.permute.xlu0 %3067
        %3071 = vset.pattern.permute.xlu0 0
        %3072 = vperm.xlu0 %3071, %v3006
        %v3073 = vpop.permute.xlu0 %3072
        %3076 = vset.pattern.permute.xlu0 0
        %3077 = vperm.xlu0 %3076, %v3007
        %v3078 = vpop.permute.xlu0 %3077
        %3081 = vset.pattern.permute.xlu0 0
        %3082 = vperm.xlu0 %3081, %v3008
        %v3083 = vpop.permute.xlu0 %3082
        %3086 = vset.pattern.permute.xlu0 0
        %3087 = vperm.xlu0 %3086, %v3009
        %v3088 = vpop.permute.xlu0 %3087
        %v3090 = vlaneseq
        %v3091 = vshrl.u32 %v3090, 7
        %v3092 = vsub.s32 3, %v3091
        %v3093 = vrot.slane %v2177, %v3092
        %v3094 = vmul.f32 %v3013, %v3093
        %v3095 = vmul.f32 %v3018, %v3093
        %v3096 = vmul.f32 %v3023, %v3093
        %v3097 = vmul.f32 %v3028, %v3093
        %v3098 = vmul.f32 %v3033, %v3093
        %v3099 = vmul.f32 %v3038, %v3093
        %v3100 = vmul.f32 %v3043, %v3093
        %v3101 = vmul.f32 %v3048, %v3093
        %v3102 = vmul.f32 %v3053, %v3093
        %v3103 = vmul.f32 %v3058, %v3093
        %v3104 = vmul.f32 %v3063, %v3093
        %v3105 = vmul.f32 %v3068, %v3093
        %v3106 = vmul.f32 %v3073, %v3093
        %v3107 = vmul.f32 %v3078, %v3093
        %v3108 = vmul.f32 %v3083, %v3093
        %v3109 = vmul.f32 %v3088, %v3093
        %v3110 = vadd.f32 %v2698, %v2830
        %v3111 = vadd.f32 %v2699, %v2831
        %v3112 = vadd.f32 %v2700, %v2832
        %v3113 = vadd.f32 %v2701, %v2833
        %v3114 = vadd.f32 %v2702, %v2834
        %v3115 = vadd.f32 %v2703, %v2835
        %v3116 = vadd.f32 %v2704, %v2836
        %v3117 = vadd.f32 %v2705, %v2837
        %v3118 = vadd.f32 %v2706, %v2838
        %v3119 = vadd.f32 %v2707, %v2839
        %v3120 = vadd.f32 %v2708, %v2840
        %v3121 = vadd.f32 %v2709, %v2841
        %v3122 = vadd.f32 %v2710, %v2842
        %v3123 = vadd.f32 %v2711, %v2843
        %v3124 = vadd.f32 %v2712, %v2844
        %v3125 = vadd.f32 %v2713, %v2845
        %v3126 = vadd.f32 %v2962, %v3094
        %v3127 = vadd.f32 %v2963, %v3095
        %v3128 = vadd.f32 %v2964, %v3096
        %v3129 = vadd.f32 %v2965, %v3097
        %v3130 = vadd.f32 %v2966, %v3098
        %v3131 = vadd.f32 %v2967, %v3099
        %v3132 = vadd.f32 %v2968, %v3100
        %v3133 = vadd.f32 %v2969, %v3101
        %v3134 = vadd.f32 %v2970, %v3102
        %v3135 = vadd.f32 %v2971, %v3103
        %v3136 = vadd.f32 %v2972, %v3104
        %v3137 = vadd.f32 %v2973, %v3105
        %v3138 = vadd.f32 %v2974, %v3106
        %v3139 = vadd.f32 %v2975, %v3107
        %v3140 = vadd.f32 %v2976, %v3108
        %v3141 = vadd.f32 %v2977, %v3109
        %v3142 = vadd.f32 %v3110, %v3126
        %v3143 = vadd.f32 %v3111, %v3127
        %v3144 = vadd.f32 %v3112, %v3128
        %v3145 = vadd.f32 %v3113, %v3129
        %v3146 = vadd.f32 %v3114, %v3130
        %v3147 = vadd.f32 %v3115, %v3131
        %v3148 = vadd.f32 %v3116, %v3132
        %v3149 = vadd.f32 %v3117, %v3133
        %v3150 = vadd.f32 %v3118, %v3134
        %v3151 = vadd.f32 %v3119, %v3135
        %v3152 = vadd.f32 %v3120, %v3136
        %v3153 = vadd.f32 %v3121, %v3137
        %v3154 = vadd.f32 %v3122, %v3138
        %v3155 = vadd.f32 %v3123, %v3139
        %v3156 = vadd.f32 %v3124, %v3140
        %v3157 = vadd.f32 %v3125, %v3141
        %3159 = vset.pattern.permute.xlu0 1
        %3160 = vperm.xlu0 %3159, %v235
        %v3161 = vpop.permute.xlu0 %3160
        %3164 = vset.pattern.permute.xlu0 1
        %3165 = vperm.xlu0 %3164, %v236
        %v3166 = vpop.permute.xlu0 %3165
        %3169 = vset.pattern.permute.xlu0 1
        %3170 = vperm.xlu0 %3169, %v237
        %v3171 = vpop.permute.xlu0 %3170
        %3174 = vset.pattern.permute.xlu0 1
        %3175 = vperm.xlu0 %3174, %v238
        %v3176 = vpop.permute.xlu0 %3175
        %3179 = vset.pattern.permute.xlu0 1
        %3180 = vperm.xlu0 %3179, %v239
        %v3181 = vpop.permute.xlu0 %3180
        %3184 = vset.pattern.permute.xlu0 1
        %3185 = vperm.xlu0 %3184, %v240
        %v3186 = vpop.permute.xlu0 %3185
        %3189 = vset.pattern.permute.xlu0 1
        %3190 = vperm.xlu0 %3189, %v241
        %v3191 = vpop.permute.xlu0 %3190
        %3194 = vset.pattern.permute.xlu0 1
        %3195 = vperm.xlu0 %3194, %v242
        %v3196 = vpop.permute.xlu0 %3195
        %3199 = vset.pattern.permute.xlu0 1
        %3200 = vperm.xlu0 %3199, %v243
        %v3201 = vpop.permute.xlu0 %3200
        %3204 = vset.pattern.permute.xlu0 1
        %3205 = vperm.xlu0 %3204, %v244
        %v3206 = vpop.permute.xlu0 %3205
        %3209 = vset.pattern.permute.xlu0 1
        %3210 = vperm.xlu0 %3209, %v245
        %v3211 = vpop.permute.xlu0 %3210
        %3214 = vset.pattern.permute.xlu0 1
        %3215 = vperm.xlu0 %3214, %v246
        %v3216 = vpop.permute.xlu0 %3215
        %3219 = vset.pattern.permute.xlu0 1
        %3220 = vperm.xlu0 %3219, %v247
        %v3221 = vpop.permute.xlu0 %3220
        %3224 = vset.pattern.permute.xlu0 1
        %3225 = vperm.xlu0 %3224, %v248
        %v3226 = vpop.permute.xlu0 %3225
        %3229 = vset.pattern.permute.xlu0 1
        %3230 = vperm.xlu0 %3229, %v249
        %v3231 = vpop.permute.xlu0 %3230
        %3234 = vset.pattern.permute.xlu0 1
        %3235 = vperm.xlu0 %3234, %v250
        %v3236 = vpop.permute.xlu0 %3235
        %v3238 = vlaneseq
        %v3239 = vshrl.u32 %v3238, 7
        %v3240 = vsub.s32 0, %v3239
        %v3241 = vrot.slane %v2179, %v3240
        %v3242 = vmul.f32 %v3161, %v3241
        %v3243 = vmul.f32 %v3166, %v3241
        %v3244 = vmul.f32 %v3171, %v3241
        %v3245 = vmul.f32 %v3176, %v3241
        %v3246 = vmul.f32 %v3181, %v3241
        %v3247 = vmul.f32 %v3186, %v3241
        %v3248 = vmul.f32 %v3191, %v3241
        %v3249 = vmul.f32 %v3196, %v3241
        %v3250 = vmul.f32 %v3201, %v3241
        %v3251 = vmul.f32 %v3206, %v3241
        %v3252 = vmul.f32 %v3211, %v3241
        %v3253 = vmul.f32 %v3216, %v3241
        %v3254 = vmul.f32 %v3221, %v3241
        %v3255 = vmul.f32 %v3226, %v3241
        %v3256 = vmul.f32 %v3231, %v3241
        %v3257 = vmul.f32 %v3236, %v3241
        %3258 = vset.pattern.permute.xlu0 2
        %3259 = vperm.xlu0 %3258, %v235
        %v3260 = vpop.permute.xlu0 %3259
        %3262 = vset.pattern.permute.xlu0 2
        %3263 = vperm.xlu0 %3262, %v236
        %v3264 = vpop.permute.xlu0 %3263
        %3266 = vset.pattern.permute.xlu0 2
        %3267 = vperm.xlu0 %3266, %v237
        %v3268 = vpop.permute.xlu0 %3267
        %3270 = vset.pattern.permute.xlu0 2
        %3271 = vperm.xlu0 %3270, %v238
        %v3272 = vpop.permute.xlu0 %3271
        %3274 = vset.pattern.permute.xlu0 2
        %3275 = vperm.xlu0 %3274, %v239
        %v3276 = vpop.permute.xlu0 %3275
        %3278 = vset.pattern.permute.xlu0 2
        %3279 = vperm.xlu0 %3278, %v240
        %v3280 = vpop.permute.xlu0 %3279
        %3282 = vset.pattern.permute.xlu0 2
        %3283 = vperm.xlu0 %3282, %v241
        %v3284 = vpop.permute.xlu0 %3283
        %3286 = vset.pattern.permute.xlu0 2
        %3287 = vperm.xlu0 %3286, %v242
        %v3288 = vpop.permute.xlu0 %3287
        %3290 = vset.pattern.permute.xlu0 2
        %3291 = vperm.xlu0 %3290, %v243
        %v3292 = vpop.permute.xlu0 %3291
        %3294 = vset.pattern.permute.xlu0 2
        %3295 = vperm.xlu0 %3294, %v244
        %v3296 = vpop.permute.xlu0 %3295
        %3298 = vset.pattern.permute.xlu0 2
        %3299 = vperm.xlu0 %3298, %v245
        %v3300 = vpop.permute.xlu0 %3299
        %3302 = vset.pattern.permute.xlu0 2
        %3303 = vperm.xlu0 %3302, %v246
        %v3304 = vpop.permute.xlu0 %3303
        %3306 = vset.pattern.permute.xlu0 2
        %3307 = vperm.xlu0 %3306, %v247
        %v3308 = vpop.permute.xlu0 %3307
        %3310 = vset.pattern.permute.xlu0 2
        %3311 = vperm.xlu0 %3310, %v248
        %v3312 = vpop.permute.xlu0 %3311
        %3314 = vset.pattern.permute.xlu0 2
        %3315 = vperm.xlu0 %3314, %v249
        %v3316 = vpop.permute.xlu0 %3315
        %3318 = vset.pattern.permute.xlu0 2
        %3319 = vperm.xlu0 %3318, %v250
        %v3320 = vpop.permute.xlu0 %3319
        %v3322 = vlaneseq
        %v3323 = vshrl.u32 %v3322, 7
        %v3324 = vsub.s32 1, %v3323
        %v3325 = vrot.slane %v2179, %v3324
        %v3326 = vmul.f32 %v3260, %v3325
        %v3327 = vmul.f32 %v3264, %v3325
        %v3328 = vmul.f32 %v3268, %v3325
        %v3329 = vmul.f32 %v3272, %v3325
        %v3330 = vmul.f32 %v3276, %v3325
        %v3331 = vmul.f32 %v3280, %v3325
        %v3332 = vmul.f32 %v3284, %v3325
        %v3333 = vmul.f32 %v3288, %v3325
        %v3334 = vmul.f32 %v3292, %v3325
        %v3335 = vmul.f32 %v3296, %v3325
        %v3336 = vmul.f32 %v3300, %v3325
        %v3337 = vmul.f32 %v3304, %v3325
        %v3338 = vmul.f32 %v3308, %v3325
        %v3339 = vmul.f32 %v3312, %v3325
        %v3340 = vmul.f32 %v3316, %v3325
        %v3341 = vmul.f32 %v3320, %v3325
        %3342 = vset.pattern.permute.xlu0 3
        %3343 = vperm.xlu0 %3342, %v235
        %v3344 = vpop.permute.xlu0 %3343
        %3346 = vset.pattern.permute.xlu0 3
        %3347 = vperm.xlu0 %3346, %v236
        %v3348 = vpop.permute.xlu0 %3347
        %3350 = vset.pattern.permute.xlu0 3
        %3351 = vperm.xlu0 %3350, %v237
        %v3352 = vpop.permute.xlu0 %3351
        %3354 = vset.pattern.permute.xlu0 3
        %3355 = vperm.xlu0 %3354, %v238
        %v3356 = vpop.permute.xlu0 %3355
        %3358 = vset.pattern.permute.xlu0 3
        %3359 = vperm.xlu0 %3358, %v239
        %v3360 = vpop.permute.xlu0 %3359
        %3362 = vset.pattern.permute.xlu0 3
        %3363 = vperm.xlu0 %3362, %v240
        %v3364 = vpop.permute.xlu0 %3363
        %3366 = vset.pattern.permute.xlu0 3
        %3367 = vperm.xlu0 %3366, %v241
        %v3368 = vpop.permute.xlu0 %3367
        %3370 = vset.pattern.permute.xlu0 3
        %3371 = vperm.xlu0 %3370, %v242
        %v3372 = vpop.permute.xlu0 %3371
        %3374 = vset.pattern.permute.xlu0 3
        %3375 = vperm.xlu0 %3374, %v243
        %v3376 = vpop.permute.xlu0 %3375
        %3378 = vset.pattern.permute.xlu0 3
        %3379 = vperm.xlu0 %3378, %v244
        %v3380 = vpop.permute.xlu0 %3379
        %3382 = vset.pattern.permute.xlu0 3
        %3383 = vperm.xlu0 %3382, %v245
        %v3384 = vpop.permute.xlu0 %3383
        %3386 = vset.pattern.permute.xlu0 3
        %3387 = vperm.xlu0 %3386, %v246
        %v3388 = vpop.permute.xlu0 %3387
        %3390 = vset.pattern.permute.xlu0 3
        %3391 = vperm.xlu0 %3390, %v247
        %v3392 = vpop.permute.xlu0 %3391
        %3394 = vset.pattern.permute.xlu0 3
        %3395 = vperm.xlu0 %3394, %v248
        %v3396 = vpop.permute.xlu0 %3395
        %3398 = vset.pattern.permute.xlu0 3
        %3399 = vperm.xlu0 %3398, %v249
        %v3400 = vpop.permute.xlu0 %3399
        %3402 = vset.pattern.permute.xlu0 3
        %3403 = vperm.xlu0 %3402, %v250
        %v3404 = vpop.permute.xlu0 %3403
        %v3406 = vlaneseq
        %v3407 = vshrl.u32 %v3406, 7
        %v3408 = vsub.s32 2, %v3407
        %v3409 = vrot.slane %v2179, %v3408
        %v3410 = vmul.f32 %v3344, %v3409
        %v3411 = vmul.f32 %v3348, %v3409
        %v3412 = vmul.f32 %v3352, %v3409
        %v3413 = vmul.f32 %v3356, %v3409
        %v3414 = vmul.f32 %v3360, %v3409
        %v3415 = vmul.f32 %v3364, %v3409
        %v3416 = vmul.f32 %v3368, %v3409
        %v3417 = vmul.f32 %v3372, %v3409
        %v3418 = vmul.f32 %v3376, %v3409
        %v3419 = vmul.f32 %v3380, %v3409
        %v3420 = vmul.f32 %v3384, %v3409
        %v3421 = vmul.f32 %v3388, %v3409
        %v3422 = vmul.f32 %v3392, %v3409
        %v3423 = vmul.f32 %v3396, %v3409
        %v3424 = vmul.f32 %v3400, %v3409
        %v3425 = vmul.f32 %v3404, %v3409
        %3426 = vset.pattern.permute.xlu0 4
        %3427 = vperm.xlu0 %3426, %v235
        %v3428 = vpop.permute.xlu0 %3427
        %3430 = vset.pattern.permute.xlu0 4
        %3431 = vperm.xlu0 %3430, %v236
        %v3432 = vpop.permute.xlu0 %3431
        %3434 = vset.pattern.permute.xlu0 4
        %3435 = vperm.xlu0 %3434, %v237
        %v3436 = vpop.permute.xlu0 %3435
        %3438 = vset.pattern.permute.xlu0 4
        %3439 = vperm.xlu0 %3438, %v238
        %v3440 = vpop.permute.xlu0 %3439
        %3442 = vset.pattern.permute.xlu0 4
        %3443 = vperm.xlu0 %3442, %v239
        %v3444 = vpop.permute.xlu0 %3443
        %3446 = vset.pattern.permute.xlu0 4
        %3447 = vperm.xlu0 %3446, %v240
        %v3448 = vpop.permute.xlu0 %3447
        %3450 = vset.pattern.permute.xlu0 4
        %3451 = vperm.xlu0 %3450, %v241
        %v3452 = vpop.permute.xlu0 %3451
        %3454 = vset.pattern.permute.xlu0 4
        %3455 = vperm.xlu0 %3454, %v242
        %v3456 = vpop.permute.xlu0 %3455
        %3458 = vset.pattern.permute.xlu0 4
        %3459 = vperm.xlu0 %3458, %v243
        %v3460 = vpop.permute.xlu0 %3459
        %3462 = vset.pattern.permute.xlu0 4
        %3463 = vperm.xlu0 %3462, %v244
        %v3464 = vpop.permute.xlu0 %3463
        %3466 = vset.pattern.permute.xlu0 4
        %3467 = vperm.xlu0 %3466, %v245
        %v3468 = vpop.permute.xlu0 %3467
        %3470 = vset.pattern.permute.xlu0 4
        %3471 = vperm.xlu0 %3470, %v246
        %v3472 = vpop.permute.xlu0 %3471
        %3474 = vset.pattern.permute.xlu0 4
        %3475 = vperm.xlu0 %3474, %v247
        %v3476 = vpop.permute.xlu0 %3475
        %3478 = vset.pattern.permute.xlu0 4
        %3479 = vperm.xlu0 %3478, %v248
        %v3480 = vpop.permute.xlu0 %3479
        %3482 = vset.pattern.permute.xlu0 4
        %3483 = vperm.xlu0 %3482, %v249
        %v3484 = vpop.permute.xlu0 %3483
        %3486 = vset.pattern.permute.xlu0 4
        %3487 = vperm.xlu0 %3486, %v250
        %v3488 = vpop.permute.xlu0 %3487
        %v3490 = vlaneseq
        %v3491 = vshrl.u32 %v3490, 7
        %v3492 = vsub.s32 3, %v3491
        %v3493 = vrot.slane %v2179, %v3492
        %v3494 = vmul.f32 %v3428, %v3493
        %v3495 = vmul.f32 %v3432, %v3493
        %v3496 = vmul.f32 %v3436, %v3493
        %v3497 = vmul.f32 %v3440, %v3493
        %v3498 = vmul.f32 %v3444, %v3493
        %v3499 = vmul.f32 %v3448, %v3493
        %v3500 = vmul.f32 %v3452, %v3493
        %v3501 = vmul.f32 %v3456, %v3493
        %v3502 = vmul.f32 %v3460, %v3493
        %v3503 = vmul.f32 %v3464, %v3493
        %v3504 = vmul.f32 %v3468, %v3493
        %v3505 = vmul.f32 %v3472, %v3493
        %v3506 = vmul.f32 %v3476, %v3493
        %v3507 = vmul.f32 %v3480, %v3493
        %v3508 = vmul.f32 %v3484, %v3493
        %v3509 = vmul.f32 %v3488, %v3493
        %3510 = vset.pattern.permute.xlu0 5
        %3511 = vperm.xlu0 %3510, %v235
        %v3512 = vpop.permute.xlu0 %3511
        %3514 = vset.pattern.permute.xlu0 5
        %3515 = vperm.xlu0 %3514, %v236
        %v3516 = vpop.permute.xlu0 %3515
        %3518 = vset.pattern.permute.xlu0 5
        %3519 = vperm.xlu0 %3518, %v237
        %v3520 = vpop.permute.xlu0 %3519
        %3522 = vset.pattern.permute.xlu0 5
        %3523 = vperm.xlu0 %3522, %v238
        %v3524 = vpop.permute.xlu0 %3523
        %3526 = vset.pattern.permute.xlu0 5
        %3527 = vperm.xlu0 %3526, %v239
        %v3528 = vpop.permute.xlu0 %3527
        %3530 = vset.pattern.permute.xlu0 5
        %3531 = vperm.xlu0 %3530, %v240
        %v3532 = vpop.permute.xlu0 %3531
        %3534 = vset.pattern.permute.xlu0 5
        %3535 = vperm.xlu0 %3534, %v241
        %v3536 = vpop.permute.xlu0 %3535
        %3538 = vset.pattern.permute.xlu0 5
        %3539 = vperm.xlu0 %3538, %v242
        %v3540 = vpop.permute.xlu0 %3539
        %3542 = vset.pattern.permute.xlu0 5
        %3543 = vperm.xlu0 %3542, %v243
        %v3544 = vpop.permute.xlu0 %3543
        %3546 = vset.pattern.permute.xlu0 5
        %3547 = vperm.xlu0 %3546, %v244
        %v3548 = vpop.permute.xlu0 %3547
        %3550 = vset.pattern.permute.xlu0 5
        %3551 = vperm.xlu0 %3550, %v245
        %v3552 = vpop.permute.xlu0 %3551
        %3554 = vset.pattern.permute.xlu0 5
        %3555 = vperm.xlu0 %3554, %v246
        %v3556 = vpop.permute.xlu0 %3555
        %3558 = vset.pattern.permute.xlu0 5
        %3559 = vperm.xlu0 %3558, %v247
        %v3560 = vpop.permute.xlu0 %3559
        %3562 = vset.pattern.permute.xlu0 5
        %3563 = vperm.xlu0 %3562, %v248
        %v3564 = vpop.permute.xlu0 %3563
        %3566 = vset.pattern.permute.xlu0 5
        %3567 = vperm.xlu0 %3566, %v249
        %v3568 = vpop.permute.xlu0 %3567
        %3570 = vset.pattern.permute.xlu0 5
        %3571 = vperm.xlu0 %3570, %v250
        %v3572 = vpop.permute.xlu0 %3571
        %v3574 = vlaneseq
        %v3575 = vshrl.u32 %v3574, 7
        %v3576 = vsub.s32 4, %v3575
        %v3577 = vrot.slane %v2179, %v3576
        %v3578 = vmul.f32 %v3512, %v3577
        %v3579 = vmul.f32 %v3516, %v3577
        %v3580 = vmul.f32 %v3520, %v3577
        %v3581 = vmul.f32 %v3524, %v3577
        %v3582 = vmul.f32 %v3528, %v3577
        %v3583 = vmul.f32 %v3532, %v3577
        %v3584 = vmul.f32 %v3536, %v3577
        %v3585 = vmul.f32 %v3540, %v3577
        %v3586 = vmul.f32 %v3544, %v3577
        %v3587 = vmul.f32 %v3548, %v3577
        %v3588 = vmul.f32 %v3552, %v3577
        %v3589 = vmul.f32 %v3556, %v3577
        %v3590 = vmul.f32 %v3560, %v3577
        %v3591 = vmul.f32 %v3564, %v3577
        %v3592 = vmul.f32 %v3568, %v3577
        %v3593 = vmul.f32 %v3572, %v3577
        %v3594 = vadd.f32 %v3242, %v3326
        %v3595 = vadd.f32 %v3243, %v3327
        %v3596 = vadd.f32 %v3244, %v3328
        %v3597 = vadd.f32 %v3245, %v3329
        %v3598 = vadd.f32 %v3246, %v3330
        %v3599 = vadd.f32 %v3247, %v3331
        %v3600 = vadd.f32 %v3248, %v3332
        %v3601 = vadd.f32 %v3249, %v3333
        %v3602 = vadd.f32 %v3250, %v3334
        %v3603 = vadd.f32 %v3251, %v3335
        %v3604 = vadd.f32 %v3252, %v3336
        %v3605 = vadd.f32 %v3253, %v3337
        %v3606 = vadd.f32 %v3254, %v3338
        %v3607 = vadd.f32 %v3255, %v3339
        %v3608 = vadd.f32 %v3256, %v3340
        %v3609 = vadd.f32 %v3257, %v3341
        %v3610 = vadd.f32 %v3410, %v3494
        %v3611 = vadd.f32 %v3411, %v3495
        %v3612 = vadd.f32 %v3412, %v3496
        %v3613 = vadd.f32 %v3413, %v3497
        %v3614 = vadd.f32 %v3414, %v3498
        %v3615 = vadd.f32 %v3415, %v3499
        %v3616 = vadd.f32 %v3416, %v3500
        %v3617 = vadd.f32 %v3417, %v3501
        %v3618 = vadd.f32 %v3418, %v3502
        %v3619 = vadd.f32 %v3419, %v3503
        %v3620 = vadd.f32 %v3420, %v3504
        %v3621 = vadd.f32 %v3421, %v3505
        %v3622 = vadd.f32 %v3422, %v3506
        %v3623 = vadd.f32 %v3423, %v3507
        %v3624 = vadd.f32 %v3424, %v3508
        %v3625 = vadd.f32 %v3425, %v3509
        %v3626 = vadd.f32 %v3594, %v3610
        %v3627 = vadd.f32 %v3595, %v3611
        %v3628 = vadd.f32 %v3596, %v3612
        %v3629 = vadd.f32 %v3597, %v3613
        %v3630 = vadd.f32 %v3598, %v3614
        %v3631 = vadd.f32 %v3599, %v3615
        %v3632 = vadd.f32 %v3600, %v3616
        %v3633 = vadd.f32 %v3601, %v3617
        %v3634 = vadd.f32 %v3602, %v3618
        %v3635 = vadd.f32 %v3603, %v3619
        %v3636 = vadd.f32 %v3604, %v3620
        %v3637 = vadd.f32 %v3605, %v3621
        %v3638 = vadd.f32 %v3606, %v3622
        %v3639 = vadd.f32 %v3607, %v3623
        %v3640 = vadd.f32 %v3608, %v3624
        %v3641 = vadd.f32 %v3609, %v3625
        %v3642 = vadd.f32 %v3626, %v3578
        %v3643 = vadd.f32 %v3627, %v3579
        %v3644 = vadd.f32 %v3628, %v3580
        %v3645 = vadd.f32 %v3629, %v3581
        %v3646 = vadd.f32 %v3630, %v3582
        %v3647 = vadd.f32 %v3631, %v3583
        %v3648 = vadd.f32 %v3632, %v3584
        %v3649 = vadd.f32 %v3633, %v3585
        %v3650 = vadd.f32 %v3634, %v3586
        %v3651 = vadd.f32 %v3635, %v3587
        %v3652 = vadd.f32 %v3636, %v3588
        %v3653 = vadd.f32 %v3637, %v3589
        %v3654 = vadd.f32 %v3638, %v3590
        %v3655 = vadd.f32 %v3639, %v3591
        %v3656 = vadd.f32 %v3640, %v3592
        %v3657 = vadd.f32 %v3641, %v3593
        %v3658 = vand.u32 2147483647, %v235
        %v3659 = vand.u32 2147483647, %v236
        %v3660 = vand.u32 2147483647, %v237
        %v3661 = vand.u32 2147483647, %v238
        %v3662 = vand.u32 2147483647, %v239
        %v3663 = vand.u32 2147483647, %v240
        %v3664 = vand.u32 2147483647, %v241
        %v3665 = vand.u32 2147483647, %v242
        %v3666 = vand.u32 2147483647, %v243
        %v3667 = vand.u32 2147483647, %v244
        %v3668 = vand.u32 2147483647, %v245
        %v3669 = vand.u32 2147483647, %v246
        %v3670 = vand.u32 2147483647, %v247
        %v3671 = vand.u32 2147483647, %v248
        %v3672 = vand.u32 2147483647, %v249
        %v3673 = vand.u32 2147483647, %v250
        %3690 = vrot.lane.b32.xlu0 %v3658, 127
        %v3691 = vpop.permute.xlu0 %3690
        %3692 = vrot.lane.b32.xlu0 %v3659, 127
        %v3693 = vpop.permute.xlu0 %3692
        %3694 = vrot.lane.b32.xlu0 %v3660, 127
        %v3695 = vpop.permute.xlu0 %3694
        %3696 = vrot.lane.b32.xlu0 %v3661, 127
        %v3697 = vpop.permute.xlu0 %3696
        %3698 = vrot.lane.b32.xlu0 %v3662, 127
        %v3699 = vpop.permute.xlu0 %3698
        %3700 = vrot.lane.b32.xlu0 %v3663, 127
        %v3701 = vpop.permute.xlu0 %3700
        %3702 = vrot.lane.b32.xlu0 %v3664, 127
        %v3703 = vpop.permute.xlu0 %3702
        %3704 = vrot.lane.b32.xlu0 %v3665, 127
        %v3705 = vpop.permute.xlu0 %3704
        %3706 = vrot.lane.b32.xlu0 %v3666, 127
        %v3707 = vpop.permute.xlu0 %3706
        %3708 = vrot.lane.b32.xlu0 %v3667, 127
        %v3709 = vpop.permute.xlu0 %3708
        %3710 = vrot.lane.b32.xlu0 %v3668, 127
        %v3711 = vpop.permute.xlu0 %3710
        %3712 = vrot.lane.b32.xlu0 %v3669, 127
        %v3713 = vpop.permute.xlu0 %3712
        %3714 = vrot.lane.b32.xlu0 %v3670, 127
        %v3715 = vpop.permute.xlu0 %3714
        %3716 = vrot.lane.b32.xlu0 %v3671, 127
        %v3717 = vpop.permute.xlu0 %3716
        %3718 = vrot.lane.b32.xlu0 %v3672, 127
        %v3719 = vpop.permute.xlu0 %3718
        %3720 = vrot.lane.b32.xlu0 %v3673, 127
        %v3721 = vpop.permute.xlu0 %3720
        %v3738 = vadd.f32 %v3658, %v3691
        %v3739 = vadd.f32 %v3659, %v3693
        %v3740 = vadd.f32 %v3660, %v3695
        %v3741 = vadd.f32 %v3661, %v3697
        %v3742 = vadd.f32 %v3662, %v3699
        %v3743 = vadd.f32 %v3663, %v3701
        %v3744 = vadd.f32 %v3664, %v3703
        %v3745 = vadd.f32 %v3665, %v3705
        %v3746 = vadd.f32 %v3666, %v3707
        %v3747 = vadd.f32 %v3667, %v3709
        %v3748 = vadd.f32 %v3668, %v3711
        %v3749 = vadd.f32 %v3669, %v3713
        %v3750 = vadd.f32 %v3670, %v3715
        %v3751 = vadd.f32 %v3671, %v3717
        %v3752 = vadd.f32 %v3672, %v3719
        %v3753 = vadd.f32 %v3673, %v3721
        %3770 = vrot.lane.b32.xlu0 %v3738, 126
        %v3771 = vpop.permute.xlu0 %3770
        %3772 = vrot.lane.b32.xlu0 %v3739, 126
        %v3773 = vpop.permute.xlu0 %3772
        %3774 = vrot.lane.b32.xlu0 %v3740, 126
        %v3775 = vpop.permute.xlu0 %3774
        %3776 = vrot.lane.b32.xlu0 %v3741, 126
        %v3777 = vpop.permute.xlu0 %3776
        %3778 = vrot.lane.b32.xlu0 %v3742, 126
        %v3779 = vpop.permute.xlu0 %3778
        %3780 = vrot.lane.b32.xlu0 %v3743, 126
        %v3781 = vpop.permute.xlu0 %3780
        %3782 = vrot.lane.b32.xlu0 %v3744, 126
        %v3783 = vpop.permute.xlu0 %3782
        %3784 = vrot.lane.b32.xlu0 %v3745, 126
        %v3785 = vpop.permute.xlu0 %3784
        %3786 = vrot.lane.b32.xlu0 %v3746, 126
        %v3787 = vpop.permute.xlu0 %3786
        %3788 = vrot.lane.b32.xlu0 %v3747, 126
        %v3789 = vpop.permute.xlu0 %3788
        %3790 = vrot.lane.b32.xlu0 %v3748, 126
        %v3791 = vpop.permute.xlu0 %3790
        %3792 = vrot.lane.b32.xlu0 %v3749, 126
        %v3793 = vpop.permute.xlu0 %3792
        %3794 = vrot.lane.b32.xlu0 %v3750, 126
        %v3795 = vpop.permute.xlu0 %3794
        %3796 = vrot.lane.b32.xlu0 %v3751, 126
        %v3797 = vpop.permute.xlu0 %3796
        %3798 = vrot.lane.b32.xlu0 %v3752, 126
        %v3799 = vpop.permute.xlu0 %3798
        %3800 = vrot.lane.b32.xlu0 %v3753, 126
        %v3801 = vpop.permute.xlu0 %3800
        %v3818 = vadd.f32 %v3738, %v3771
        %v3819 = vadd.f32 %v3739, %v3773
        %v3820 = vadd.f32 %v3740, %v3775
        %v3821 = vadd.f32 %v3741, %v3777
        %v3822 = vadd.f32 %v3742, %v3779
        %v3823 = vadd.f32 %v3743, %v3781
        %v3824 = vadd.f32 %v3744, %v3783
        %v3825 = vadd.f32 %v3745, %v3785
        %v3826 = vadd.f32 %v3746, %v3787
        %v3827 = vadd.f32 %v3747, %v3789
        %v3828 = vadd.f32 %v3748, %v3791
        %v3829 = vadd.f32 %v3749, %v3793
        %v3830 = vadd.f32 %v3750, %v3795
        %v3831 = vadd.f32 %v3751, %v3797
        %v3832 = vadd.f32 %v3752, %v3799
        %v3833 = vadd.f32 %v3753, %v3801
        %3834 = vrot.lane.b32.xlu0 %v3658, 124
        %v3835 = vpop.permute.xlu0 %3834
        %3836 = vrot.lane.b32.xlu0 %v3659, 124
        %v3837 = vpop.permute.xlu0 %3836
        %3838 = vrot.lane.b32.xlu0 %v3660, 124
        %v3839 = vpop.permute.xlu0 %3838
        %3840 = vrot.lane.b32.xlu0 %v3661, 124
        %v3841 = vpop.permute.xlu0 %3840
        %3842 = vrot.lane.b32.xlu0 %v3662, 124
        %v3843 = vpop.permute.xlu0 %3842
        %3844 = vrot.lane.b32.xlu0 %v3663, 124
        %v3845 = vpop.permute.xlu0 %3844
        %3846 = vrot.lane.b32.xlu0 %v3664, 124
        %v3847 = vpop.permute.xlu0 %3846
        %3848 = vrot.lane.b32.xlu0 %v3665, 124
        %v3849 = vpop.permute.xlu0 %3848
        %3850 = vrot.lane.b32.xlu0 %v3666, 124
        %v3851 = vpop.permute.xlu0 %3850
        %3852 = vrot.lane.b32.xlu0 %v3667, 124
        %v3853 = vpop.permute.xlu0 %3852
        %3854 = vrot.lane.b32.xlu0 %v3668, 124
        %v3855 = vpop.permute.xlu0 %3854
        %3856 = vrot.lane.b32.xlu0 %v3669, 124
        %v3857 = vpop.permute.xlu0 %3856
        %3858 = vrot.lane.b32.xlu0 %v3670, 124
        %v3859 = vpop.permute.xlu0 %3858
        %3860 = vrot.lane.b32.xlu0 %v3671, 124
        %v3861 = vpop.permute.xlu0 %3860
        %3862 = vrot.lane.b32.xlu0 %v3672, 124
        %v3863 = vpop.permute.xlu0 %3862
        %3864 = vrot.lane.b32.xlu0 %v3673, 124
        %v3865 = vpop.permute.xlu0 %3864
        %v3882 = vadd.f32 %v3818, %v3835
        %v3883 = vadd.f32 %v3819, %v3837
        %v3884 = vadd.f32 %v3820, %v3839
        %v3885 = vadd.f32 %v3821, %v3841
        %v3886 = vadd.f32 %v3822, %v3843
        %v3887 = vadd.f32 %v3823, %v3845
        %v3888 = vadd.f32 %v3824, %v3847
        %v3889 = vadd.f32 %v3825, %v3849
        %v3890 = vadd.f32 %v3826, %v3851
        %v3891 = vadd.f32 %v3827, %v3853
        %v3892 = vadd.f32 %v3828, %v3855
        %v3893 = vadd.f32 %v3829, %v3857
        %v3894 = vadd.f32 %v3830, %v3859
        %v3895 = vadd.f32 %v3831, %v3861
        %v3896 = vadd.f32 %v3832, %v3863
        %v3897 = vadd.f32 %v3833, %v3865
        %vm3898 = vcmp.gt.f32.partialorder %v3882, 0.0
        %vm3899 = vcmp.gt.f32.partialorder %v3883, 0.0
        %vm3900 = vcmp.gt.f32.partialorder %v3884, 0.0
        %vm3901 = vcmp.gt.f32.partialorder %v3885, 0.0
        %vm3902 = vcmp.gt.f32.partialorder %v3886, 0.0
        %vm3903 = vcmp.gt.f32.partialorder %v3887, 0.0
        %vm3904 = vcmp.gt.f32.partialorder %v3888, 0.0
        %vm3905 = vcmp.gt.f32.partialorder %v3889, 0.0
        %vm3906 = vcmp.gt.f32.partialorder %v3890, 0.0
        %vm3907 = vcmp.gt.f32.partialorder %v3891, 0.0
        %vm3908 = vcmp.gt.f32.partialorder %v3892, 0.0
        %vm3909 = vcmp.gt.f32.partialorder %v3893, 0.0
        %vm3910 = vcmp.gt.f32.partialorder %v3894, 0.0
        %vm3911 = vcmp.gt.f32.partialorder %v3895, 0.0
        %vm3912 = vcmp.gt.f32.partialorder %v3896, 0.0
        %vm3913 = vcmp.gt.f32.partialorder %v3897, 0.0
        %vm3914 = vcmp.eq.f32.partialorder %v2566, -1.0
        %vm3915 = vcmp.eq.f32.partialorder %v2567, -1.0
        %vm3916 = vcmp.eq.f32.partialorder %v2568, -1.0
        %vm3917 = vcmp.eq.f32.partialorder %v2569, -1.0
        %vm3918 = vcmp.eq.f32.partialorder %v2570, -1.0
        %vm3919 = vcmp.eq.f32.partialorder %v2571, -1.0
        %vm3920 = vcmp.eq.f32.partialorder %v2572, -1.0
        %vm3921 = vcmp.eq.f32.partialorder %v2573, -1.0
        %vm3922 = vcmp.eq.f32.partialorder %v2574, -1.0
        %vm3923 = vcmp.eq.f32.partialorder %v2575, -1.0
        %vm3924 = vcmp.eq.f32.partialorder %v2576, -1.0
        %vm3925 = vcmp.eq.f32.partialorder %v2577, -1.0
        %vm3926 = vcmp.eq.f32.partialorder %v2578, -1.0
        %vm3927 = vcmp.eq.f32.partialorder %v2579, -1.0
        %vm3928 = vcmp.eq.f32.partialorder %v2580, -1.0
        %vm3929 = vcmp.eq.f32.partialorder %v2581, -1.0
        %vm3930 = vcmp.ge.f32.partialorder %v2566, 0.0
        %vm3931 = vcmp.ge.f32.partialorder %v2567, 0.0
        %vm3932 = vcmp.ge.f32.partialorder %v2568, 0.0
        %vm3933 = vcmp.ge.f32.partialorder %v2569, 0.0
        %vm3934 = vcmp.ge.f32.partialorder %v2570, 0.0
        %vm3935 = vcmp.ge.f32.partialorder %v2571, 0.0
        %vm3936 = vcmp.ge.f32.partialorder %v2572, 0.0
        %vm3937 = vcmp.ge.f32.partialorder %v2573, 0.0
        %vm3938 = vcmp.ge.f32.partialorder %v2574, 0.0
        %vm3939 = vcmp.ge.f32.partialorder %v2575, 0.0
        %vm3940 = vcmp.ge.f32.partialorder %v2576, 0.0
        %vm3941 = vcmp.ge.f32.partialorder %v2577, 0.0
        %vm3942 = vcmp.ge.f32.partialorder %v2578, 0.0
        %vm3943 = vcmp.ge.f32.partialorder %v2579, 0.0
        %vm3944 = vcmp.ge.f32.partialorder %v2580, 0.0
        %vm3945 = vcmp.ge.f32.partialorder %v2581, 0.0
        %v3946 = vsel %vm3898, 1, 0
        %v3947 = vsel %vm3899, 1, 0
        %v3948 = vsel %vm3900, 1, 0
        %v3949 = vsel %vm3901, 1, 0
        %v3950 = vsel %vm3902, 1, 0
        %v3951 = vsel %vm3903, 1, 0
        %v3952 = vsel %vm3904, 1, 0
        %v3953 = vsel %vm3905, 1, 0
        %v3954 = vsel %vm3906, 1, 0
        %v3955 = vsel %vm3907, 1, 0
        %v3956 = vsel %vm3908, 1, 0
        %v3957 = vsel %vm3909, 1, 0
        %v3958 = vsel %vm3910, 1, 0
        %v3959 = vsel %vm3911, 1, 0
        %v3960 = vsel %vm3912, 1, 0
        %v3961 = vsel %vm3913, 1, 0
        %3962 = vrot.lane.b32.xlu0 %v3946, 127
        %v3963 = vpop.permute.xlu0 %3962
        %3964 = vrot.lane.b32.xlu0 %v3947, 127
        %v3965 = vpop.permute.xlu0 %3964
        %3966 = vrot.lane.b32.xlu0 %v3948, 127
        %v3967 = vpop.permute.xlu0 %3966
        %3968 = vrot.lane.b32.xlu0 %v3949, 127
        %v3969 = vpop.permute.xlu0 %3968
        %3970 = vrot.lane.b32.xlu0 %v3950, 127
        %v3971 = vpop.permute.xlu0 %3970
        %3972 = vrot.lane.b32.xlu0 %v3951, 127
        %v3973 = vpop.permute.xlu0 %3972
        %3974 = vrot.lane.b32.xlu0 %v3952, 127
        %v3975 = vpop.permute.xlu0 %3974
        %3976 = vrot.lane.b32.xlu0 %v3953, 127
        %v3977 = vpop.permute.xlu0 %3976
        %3978 = vrot.lane.b32.xlu0 %v3954, 127
        %v3979 = vpop.permute.xlu0 %3978
        %3980 = vrot.lane.b32.xlu0 %v3955, 127
        %v3981 = vpop.permute.xlu0 %3980
        %3982 = vrot.lane.b32.xlu0 %v3956, 127
        %v3983 = vpop.permute.xlu0 %3982
        %3984 = vrot.lane.b32.xlu0 %v3957, 127
        %v3985 = vpop.permute.xlu0 %3984
        %3986 = vrot.lane.b32.xlu0 %v3958, 127
        %v3987 = vpop.permute.xlu0 %3986
        %3988 = vrot.lane.b32.xlu0 %v3959, 127
        %v3989 = vpop.permute.xlu0 %3988
        %3990 = vrot.lane.b32.xlu0 %v3960, 127
        %v3991 = vpop.permute.xlu0 %3990
        %3992 = vrot.lane.b32.xlu0 %v3961, 127
        %v3993 = vpop.permute.xlu0 %3992
        %vm3994 = vcmp.ne.s32.totalorder %v3963, 0
        %vm3995 = vcmp.ne.s32.totalorder %v3965, 0
        %vm3996 = vcmp.ne.s32.totalorder %v3967, 0
        %vm3997 = vcmp.ne.s32.totalorder %v3969, 0
        %vm3998 = vcmp.ne.s32.totalorder %v3971, 0
        %vm3999 = vcmp.ne.s32.totalorder %v3973, 0
        %vm4000 = vcmp.ne.s32.totalorder %v3975, 0
        %vm4001 = vcmp.ne.s32.totalorder %v3977, 0
        %vm4002 = vcmp.ne.s32.totalorder %v3979, 0
        %vm4003 = vcmp.ne.s32.totalorder %v3981, 0
        %vm4004 = vcmp.ne.s32.totalorder %v3983, 0
        %vm4005 = vcmp.ne.s32.totalorder %v3985, 0
        %vm4006 = vcmp.ne.s32.totalorder %v3987, 0
        %vm4007 = vcmp.ne.s32.totalorder %v3989, 0
        %vm4008 = vcmp.ne.s32.totalorder %v3991, 0
        %vm4009 = vcmp.ne.s32.totalorder %v3993, 0
        %vm4010 = vmand %vm3930, %vm3994
        %vm4011 = vmand %vm3931, %vm3995
        %vm4012 = vmand %vm3932, %vm3996
        %vm4013 = vmand %vm3933, %vm3997
        %vm4014 = vmand %vm3934, %vm3998
        %vm4015 = vmand %vm3935, %vm3999
        %vm4016 = vmand %vm3936, %vm4000
        %vm4017 = vmand %vm3937, %vm4001
        %vm4018 = vmand %vm3938, %vm4002
        %vm4019 = vmand %vm3939, %vm4003
        %vm4020 = vmand %vm3940, %vm4004
        %vm4021 = vmand %vm3941, %vm4005
        %vm4022 = vmand %vm3942, %vm4006
        %vm4023 = vmand %vm3943, %vm4007
        %vm4024 = vmand %vm3944, %vm4008
        %vm4025 = vmand %vm3945, %vm4009
        %vm4026 = vmor %vm3914, %vm4010
        %vm4027 = vmor %vm3915, %vm4011
        %vm4028 = vmor %vm3916, %vm4012
        %vm4029 = vmor %vm3917, %vm4013
        %vm4030 = vmor %vm3918, %vm4014
        %vm4031 = vmor %vm3919, %vm4015
        %vm4032 = vmor %vm3920, %vm4016
        %vm4033 = vmor %vm3921, %vm4017
        %vm4034 = vmor %vm3922, %vm4018
        %vm4035 = vmor %vm3923, %vm4019
        %vm4036 = vmor %vm3924, %vm4020
        %vm4037 = vmor %vm3925, %vm4021
        %vm4038 = vmor %vm3926, %vm4022
        %vm4039 = vmor %vm3927, %vm4023
        %vm4040 = vmor %vm3928, %vm4024
        %vm4041 = vmor %vm3929, %vm4025
        %vm4042 = vmxor %vm3898, 1
        %vm4043 = vmxor %vm3899, 1
        %vm4044 = vmxor %vm3900, 1
        %vm4045 = vmxor %vm3901, 1
        %vm4046 = vmxor %vm3902, 1
        %vm4047 = vmxor %vm3903, 1
        %vm4048 = vmxor %vm3904, 1
        %vm4049 = vmxor %vm3905, 1
        %vm4050 = vmxor %vm3906, 1
        %vm4051 = vmxor %vm3907, 1
        %vm4052 = vmxor %vm3908, 1
        %vm4053 = vmxor %vm3909, 1
        %vm4054 = vmxor %vm3910, 1
        %vm4055 = vmxor %vm3911, 1
        %vm4056 = vmxor %vm3912, 1
        %vm4057 = vmxor %vm3913, 1
        %v4058 = vsel %vm4042, 1, 0
        %v4059 = vsel %vm4043, 1, 0
        %v4060 = vsel %vm4044, 1, 0
        %v4061 = vsel %vm4045, 1, 0
        %v4062 = vsel %vm4046, 1, 0
        %v4063 = vsel %vm4047, 1, 0
        %v4064 = vsel %vm4048, 1, 0
        %v4065 = vsel %vm4049, 1, 0
        %v4066 = vsel %vm4050, 1, 0
        %v4067 = vsel %vm4051, 1, 0
        %v4068 = vsel %vm4052, 1, 0
        %v4069 = vsel %vm4053, 1, 0
        %v4070 = vsel %vm4054, 1, 0
        %v4071 = vsel %vm4055, 1, 0
        %v4072 = vsel %vm4056, 1, 0
        %v4073 = vsel %vm4057, 1, 0
        %4074 = vrot.lane.b32.xlu0 %v4058, 127
        %v4075 = vpop.permute.xlu0 %4074
        %4076 = vrot.lane.b32.xlu0 %v4059, 127
        %v4077 = vpop.permute.xlu0 %4076
        %4078 = vrot.lane.b32.xlu0 %v4060, 127
        %v4079 = vpop.permute.xlu0 %4078
        %4080 = vrot.lane.b32.xlu0 %v4061, 127
        %v4081 = vpop.permute.xlu0 %4080
        %4082 = vrot.lane.b32.xlu0 %v4062, 127
        %v4083 = vpop.permute.xlu0 %4082
        %4084 = vrot.lane.b32.xlu0 %v4063, 127
        %v4085 = vpop.permute.xlu0 %4084
        %4086 = vrot.lane.b32.xlu0 %v4064, 127
        %v4087 = vpop.permute.xlu0 %4086
        %4088 = vrot.lane.b32.xlu0 %v4065, 127
        %v4089 = vpop.permute.xlu0 %4088
        %4090 = vrot.lane.b32.xlu0 %v4066, 127
        %v4091 = vpop.permute.xlu0 %4090
        %4092 = vrot.lane.b32.xlu0 %v4067, 127
        %v4093 = vpop.permute.xlu0 %4092
        %4094 = vrot.lane.b32.xlu0 %v4068, 127
        %v4095 = vpop.permute.xlu0 %4094
        %4096 = vrot.lane.b32.xlu0 %v4069, 127
        %v4097 = vpop.permute.xlu0 %4096
        %4098 = vrot.lane.b32.xlu0 %v4070, 127
        %v4099 = vpop.permute.xlu0 %4098
        %4100 = vrot.lane.b32.xlu0 %v4071, 127
        %v4101 = vpop.permute.xlu0 %4100
        %4102 = vrot.lane.b32.xlu0 %v4072, 127
        %v4103 = vpop.permute.xlu0 %4102
        %4104 = vrot.lane.b32.xlu0 %v4073, 127
        %v4105 = vpop.permute.xlu0 %4104
        %vm4106 = vcmp.ne.s32.totalorder %v4075, 0
        %vm4107 = vcmp.ne.s32.totalorder %v4077, 0
        %vm4108 = vcmp.ne.s32.totalorder %v4079, 0
        %vm4109 = vcmp.ne.s32.totalorder %v4081, 0
        %vm4110 = vcmp.ne.s32.totalorder %v4083, 0
        %vm4111 = vcmp.ne.s32.totalorder %v4085, 0
        %vm4112 = vcmp.ne.s32.totalorder %v4087, 0
        %vm4113 = vcmp.ne.s32.totalorder %v4089, 0
        %vm4114 = vcmp.ne.s32.totalorder %v4091, 0
        %vm4115 = vcmp.ne.s32.totalorder %v4093, 0
        %vm4116 = vcmp.ne.s32.totalorder %v4095, 0
        %vm4117 = vcmp.ne.s32.totalorder %v4097, 0
        %vm4118 = vcmp.ne.s32.totalorder %v4099, 0
        %vm4119 = vcmp.ne.s32.totalorder %v4101, 0
        %vm4120 = vcmp.ne.s32.totalorder %v4103, 0
        %vm4121 = vcmp.ne.s32.totalorder %v4105, 0
        %vm4122 = vmand %vm3930, %vm4106
        %vm4123 = vmand %vm3931, %vm4107
        %vm4124 = vmand %vm3932, %vm4108
        %vm4125 = vmand %vm3933, %vm4109
        %vm4126 = vmand %vm3934, %vm4110
        %vm4127 = vmand %vm3935, %vm4111
        %vm4128 = vmand %vm3936, %vm4112
        %vm4129 = vmand %vm3937, %vm4113
        %vm4130 = vmand %vm3938, %vm4114
        %vm4131 = vmand %vm3939, %vm4115
        %vm4132 = vmand %vm3940, %vm4116
        %vm4133 = vmand %vm3941, %vm4117
        %vm4134 = vmand %vm3942, %vm4118
        %vm4135 = vmand %vm3943, %vm4119
        %vm4136 = vmand %vm3944, %vm4120
        %vm4137 = vmand %vm3945, %vm4121
        %v4138 = vadd.f32 %v2534, %v3142
        %v4139 = vadd.f32 %v2535, %v3143
        %v4140 = vadd.f32 %v2536, %v3144
        %v4141 = vadd.f32 %v2537, %v3145
        %v4142 = vadd.f32 %v2538, %v3146
        %v4143 = vadd.f32 %v2539, %v3147
        %v4144 = vadd.f32 %v2540, %v3148
        %v4145 = vadd.f32 %v2541, %v3149
        %v4146 = vadd.f32 %v2542, %v3150
        %v4147 = vadd.f32 %v2543, %v3151
        %v4148 = vadd.f32 %v2544, %v3152
        %v4149 = vadd.f32 %v2545, %v3153
        %v4150 = vadd.f32 %v2546, %v3154
        %v4151 = vadd.f32 %v2547, %v3155
        %v4152 = vadd.f32 %v2548, %v3156
        %v4153 = vadd.f32 %v2549, %v3157
        %v4154 = vadd.f32 %v4138, %v3642
        %v4155 = vadd.f32 %v4139, %v3643
        %v4156 = vadd.f32 %v4140, %v3644
        %v4157 = vadd.f32 %v4141, %v3645
        %v4158 = vadd.f32 %v4142, %v3646
        %v4159 = vadd.f32 %v4143, %v3647
        %v4160 = vadd.f32 %v4144, %v3648
        %v4161 = vadd.f32 %v4145, %v3649
        %v4162 = vadd.f32 %v4146, %v3650
        %v4163 = vadd.f32 %v4147, %v3651
        %v4164 = vadd.f32 %v4148, %v3652
        %v4165 = vadd.f32 %v4149, %v3653
        %v4166 = vadd.f32 %v4150, %v3654
        %v4167 = vadd.f32 %v4151, %v3655
        %v4168 = vadd.f32 %v4152, %v3656
        %v4169 = vadd.f32 %v4153, %v3657
        %v4170 = vmax.f32 %v4154, 0.0
        %v4171 = vmax.f32 %v4155, 0.0
        %v4172 = vmax.f32 %v4156, 0.0
        %v4173 = vmax.f32 %v4157, 0.0
        %v4174 = vmax.f32 %v4158, 0.0
        %v4175 = vmax.f32 %v4159, 0.0
        %v4176 = vmax.f32 %v4160, 0.0
        %v4177 = vmax.f32 %v4161, 0.0
        %v4178 = vmax.f32 %v4162, 0.0
        %v4179 = vmax.f32 %v4163, 0.0
        %v4180 = vmax.f32 %v4164, 0.0
        %v4181 = vmax.f32 %v4165, 0.0
        %v4182 = vmax.f32 %v4166, 0.0
        %v4183 = vmax.f32 %v4167, 0.0
        %v4184 = vmax.f32 %v4168, 0.0
        %v4185 = vmax.f32 %v4169, 0.0
        %v4186 = vsel %vm4026, 1, 0
        %v4187 = vsel %vm4027, 1, 0
        %v4188 = vsel %vm4028, 1, 0
        %v4189 = vsel %vm4029, 1, 0
        %v4190 = vsel %vm4030, 1, 0
        %v4191 = vsel %vm4031, 1, 0
        %v4192 = vsel %vm4032, 1, 0
        %v4193 = vsel %vm4033, 1, 0
        %v4194 = vsel %vm4034, 1, 0
        %v4195 = vsel %vm4035, 1, 0
        %v4196 = vsel %vm4036, 1, 0
        %v4197 = vsel %vm4037, 1, 0
        %v4198 = vsel %vm4038, 1, 0
        %v4199 = vsel %vm4039, 1, 0
        %v4200 = vsel %vm4040, 1, 0
        %v4201 = vsel %vm4041, 1, 0
        %4202 = vset.pattern.permute.xlu0 0
        %4203 = vperm.xlu0 %4202, %v4186
        %v4204 = vpop.permute.xlu0 %4203
        %4205 = vset.pattern.permute.xlu0 0
        %4206 = vperm.xlu0 %4205, %v4187
        %v4207 = vpop.permute.xlu0 %4206
        %4208 = vset.pattern.permute.xlu0 0
        %4209 = vperm.xlu0 %4208, %v4188
        %v4210 = vpop.permute.xlu0 %4209
        %4211 = vset.pattern.permute.xlu0 0
        %4212 = vperm.xlu0 %4211, %v4189
        %v4213 = vpop.permute.xlu0 %4212
        %4214 = vset.pattern.permute.xlu0 0
        %4215 = vperm.xlu0 %4214, %v4190
        %v4216 = vpop.permute.xlu0 %4215
        %4217 = vset.pattern.permute.xlu0 0
        %4218 = vperm.xlu0 %4217, %v4191
        %v4219 = vpop.permute.xlu0 %4218
        %4220 = vset.pattern.permute.xlu0 0
        %4221 = vperm.xlu0 %4220, %v4192
        %v4222 = vpop.permute.xlu0 %4221
        %4223 = vset.pattern.permute.xlu0 0
        %4224 = vperm.xlu0 %4223, %v4193
        %v4225 = vpop.permute.xlu0 %4224
        %4226 = vset.pattern.permute.xlu0 0
        %4227 = vperm.xlu0 %4226, %v4194
        %v4228 = vpop.permute.xlu0 %4227
        %4229 = vset.pattern.permute.xlu0 0
        %4230 = vperm.xlu0 %4229, %v4195
        %v4231 = vpop.permute.xlu0 %4230
        %4232 = vset.pattern.permute.xlu0 0
        %4233 = vperm.xlu0 %4232, %v4196
        %v4234 = vpop.permute.xlu0 %4233
        %4235 = vset.pattern.permute.xlu0 0
        %4236 = vperm.xlu0 %4235, %v4197
        %v4237 = vpop.permute.xlu0 %4236
        %4238 = vset.pattern.permute.xlu0 0
        %4239 = vperm.xlu0 %4238, %v4198
        %v4240 = vpop.permute.xlu0 %4239
        %4241 = vset.pattern.permute.xlu0 0
        %4242 = vperm.xlu0 %4241, %v4199
        %v4243 = vpop.permute.xlu0 %4242
        %4244 = vset.pattern.permute.xlu0 0
        %4245 = vperm.xlu0 %4244, %v4200
        %v4246 = vpop.permute.xlu0 %4245
        %4247 = vset.pattern.permute.xlu0 0
        %4248 = vperm.xlu0 %4247, %v4201
        %v4249 = vpop.permute.xlu0 %4248
        %vm4250 = vcmp.eq.s32.totalorder %v4204, 1
        %vm4251 = vcmp.eq.s32.totalorder %v4207, 1
        %vm4252 = vcmp.eq.s32.totalorder %v4210, 1
        %vm4253 = vcmp.eq.s32.totalorder %v4213, 1
        %vm4254 = vcmp.eq.s32.totalorder %v4216, 1
        %vm4255 = vcmp.eq.s32.totalorder %v4219, 1
        %vm4256 = vcmp.eq.s32.totalorder %v4222, 1
        %vm4257 = vcmp.eq.s32.totalorder %v4225, 1
        %vm4258 = vcmp.eq.s32.totalorder %v4228, 1
        %vm4259 = vcmp.eq.s32.totalorder %v4231, 1
        %vm4260 = vcmp.eq.s32.totalorder %v4234, 1
        %vm4261 = vcmp.eq.s32.totalorder %v4237, 1
        %vm4262 = vcmp.eq.s32.totalorder %v4240, 1
        %vm4263 = vcmp.eq.s32.totalorder %v4243, 1
        %vm4264 = vcmp.eq.s32.totalorder %v4246, 1
        %vm4265 = vcmp.eq.s32.totalorder %v4249, 1
        %v4266 = vsel %vm4250, %v4170, 0.0
        %v4267 = vsel %vm4251, %v4171, 0.0
        %v4268 = vsel %vm4252, %v4172, 0.0
        %v4269 = vsel %vm4253, %v4173, 0.0
        %v4270 = vsel %vm4254, %v4174, 0.0
        %v4271 = vsel %vm4255, %v4175, 0.0
        %v4272 = vsel %vm4256, %v4176, 0.0
        %v4273 = vsel %vm4257, %v4177, 0.0
        %v4274 = vsel %vm4258, %v4178, 0.0
        %v4275 = vsel %vm4259, %v4179, 0.0
        %v4276 = vsel %vm4260, %v4180, 0.0
        %v4277 = vsel %vm4261, %v4181, 0.0
        %v4278 = vsel %vm4262, %v4182, 0.0
        %v4279 = vsel %vm4263, %v4183, 0.0
        %v4280 = vsel %vm4264, %v4184, 0.0
        %v4281 = vsel %vm4265, %v4185, 0.0
        %v4282 = vadd.f32 %v4138, %v3241
        %v4283 = vadd.f32 %v4139, %v3241
        %v4284 = vadd.f32 %v4140, %v3241
        %v4285 = vadd.f32 %v4141, %v3241
        %v4286 = vadd.f32 %v4142, %v3241
        %v4287 = vadd.f32 %v4143, %v3241
        %v4288 = vadd.f32 %v4144, %v3241
        %v4289 = vadd.f32 %v4145, %v3241
        %v4290 = vadd.f32 %v4146, %v3241
        %v4291 = vadd.f32 %v4147, %v3241
        %v4292 = vadd.f32 %v4148, %v3241
        %v4293 = vadd.f32 %v4149, %v3241
        %v4294 = vadd.f32 %v4150, %v3241
        %v4295 = vadd.f32 %v4151, %v3241
        %v4296 = vadd.f32 %v4152, %v3241
        %v4297 = vadd.f32 %v4153, %v3241
        %v4298 = vmax.f32 %v4282, 0.0
        %v4299 = vmax.f32 %v4283, 0.0
        %v4300 = vmax.f32 %v4284, 0.0
        %v4301 = vmax.f32 %v4285, 0.0
        %v4302 = vmax.f32 %v4286, 0.0
        %v4303 = vmax.f32 %v4287, 0.0
        %v4304 = vmax.f32 %v4288, 0.0
        %v4305 = vmax.f32 %v4289, 0.0
        %v4306 = vmax.f32 %v4290, 0.0
        %v4307 = vmax.f32 %v4291, 0.0
        %v4308 = vmax.f32 %v4292, 0.0
        %v4309 = vmax.f32 %v4293, 0.0
        %v4310 = vmax.f32 %v4294, 0.0
        %v4311 = vmax.f32 %v4295, 0.0
        %v4312 = vmax.f32 %v4296, 0.0
        %v4313 = vmax.f32 %v4297, 0.0
        %v4314 = vsel %vm4122, 1, 0
        %v4315 = vsel %vm4123, 1, 0
        %v4316 = vsel %vm4124, 1, 0
        %v4317 = vsel %vm4125, 1, 0
        %v4318 = vsel %vm4126, 1, 0
        %v4319 = vsel %vm4127, 1, 0
        %v4320 = vsel %vm4128, 1, 0
        %v4321 = vsel %vm4129, 1, 0
        %v4322 = vsel %vm4130, 1, 0
        %v4323 = vsel %vm4131, 1, 0
        %v4324 = vsel %vm4132, 1, 0
        %v4325 = vsel %vm4133, 1, 0
        %v4326 = vsel %vm4134, 1, 0
        %v4327 = vsel %vm4135, 1, 0
        %v4328 = vsel %vm4136, 1, 0
        %v4329 = vsel %vm4137, 1, 0
        %4330 = vset.pattern.permute.xlu0 0
        %4331 = vperm.xlu0 %4330, %v4314
        %v4332 = vpop.permute.xlu0 %4331
        %4333 = vset.pattern.permute.xlu0 0
        %4334 = vperm.xlu0 %4333, %v4315
        %v4335 = vpop.permute.xlu0 %4334
        %4336 = vset.pattern.permute.xlu0 0
        %4337 = vperm.xlu0 %4336, %v4316
        %v4338 = vpop.permute.xlu0 %4337
        %4339 = vset.pattern.permute.xlu0 0
        %4340 = vperm.xlu0 %4339, %v4317
        %v4341 = vpop.permute.xlu0 %4340
        %4342 = vset.pattern.permute.xlu0 0
        %4343 = vperm.xlu0 %4342, %v4318
        %v4344 = vpop.permute.xlu0 %4343
        %4345 = vset.pattern.permute.xlu0 0
        %4346 = vperm.xlu0 %4345, %v4319
        %v4347 = vpop.permute.xlu0 %4346
        %4348 = vset.pattern.permute.xlu0 0
        %4349 = vperm.xlu0 %4348, %v4320
        %v4350 = vpop.permute.xlu0 %4349
        %4351 = vset.pattern.permute.xlu0 0
        %4352 = vperm.xlu0 %4351, %v4321
        %v4353 = vpop.permute.xlu0 %4352
        %4354 = vset.pattern.permute.xlu0 0
        %4355 = vperm.xlu0 %4354, %v4322
        %v4356 = vpop.permute.xlu0 %4355
        %4357 = vset.pattern.permute.xlu0 0
        %4358 = vperm.xlu0 %4357, %v4323
        %v4359 = vpop.permute.xlu0 %4358
        %4360 = vset.pattern.permute.xlu0 0
        %4361 = vperm.xlu0 %4360, %v4324
        %v4362 = vpop.permute.xlu0 %4361
        %4363 = vset.pattern.permute.xlu0 0
        %4364 = vperm.xlu0 %4363, %v4325
        %v4365 = vpop.permute.xlu0 %4364
        %4366 = vset.pattern.permute.xlu0 0
        %4367 = vperm.xlu0 %4366, %v4326
        %v4368 = vpop.permute.xlu0 %4367
        %4369 = vset.pattern.permute.xlu0 0
        %4370 = vperm.xlu0 %4369, %v4327
        %v4371 = vpop.permute.xlu0 %4370
        %4372 = vset.pattern.permute.xlu0 0
        %4373 = vperm.xlu0 %4372, %v4328
        %v4374 = vpop.permute.xlu0 %4373
        %4375 = vset.pattern.permute.xlu0 0
        %4376 = vperm.xlu0 %4375, %v4329
        %v4377 = vpop.permute.xlu0 %4376
        %vm4378 = vcmp.eq.s32.totalorder %v4332, 1
        %vm4379 = vcmp.eq.s32.totalorder %v4335, 1
        %vm4380 = vcmp.eq.s32.totalorder %v4338, 1
        %vm4381 = vcmp.eq.s32.totalorder %v4341, 1
        %vm4382 = vcmp.eq.s32.totalorder %v4344, 1
        %vm4383 = vcmp.eq.s32.totalorder %v4347, 1
        %vm4384 = vcmp.eq.s32.totalorder %v4350, 1
        %vm4385 = vcmp.eq.s32.totalorder %v4353, 1
        %vm4386 = vcmp.eq.s32.totalorder %v4356, 1
        %vm4387 = vcmp.eq.s32.totalorder %v4359, 1
        %vm4388 = vcmp.eq.s32.totalorder %v4362, 1
        %vm4389 = vcmp.eq.s32.totalorder %v4365, 1
        %vm4390 = vcmp.eq.s32.totalorder %v4368, 1
        %vm4391 = vcmp.eq.s32.totalorder %v4371, 1
        %vm4392 = vcmp.eq.s32.totalorder %v4374, 1
        %vm4393 = vcmp.eq.s32.totalorder %v4377, 1
        %v4394 = vsel %vm4378, %v4298, 0.0
        %v4395 = vsel %vm4379, %v4299, 0.0
        %v4396 = vsel %vm4380, %v4300, 0.0
        %v4397 = vsel %vm4381, %v4301, 0.0
        %v4398 = vsel %vm4382, %v4302, 0.0
        %v4399 = vsel %vm4383, %v4303, 0.0
        %v4400 = vsel %vm4384, %v4304, 0.0
        %v4401 = vsel %vm4385, %v4305, 0.0
        %v4402 = vsel %vm4386, %v4306, 0.0
        %v4403 = vsel %vm4387, %v4307, 0.0
        %v4404 = vsel %vm4388, %v4308, 0.0
        %v4405 = vsel %vm4389, %v4309, 0.0
        %v4406 = vsel %vm4390, %v4310, 0.0
        %v4407 = vsel %vm4391, %v4311, 0.0
        %v4408 = vsel %vm4392, %v4312, 0.0
        %v4409 = vsel %vm4393, %v4313, 0.0
        %v4410 = vadd.f32 %v4138, %v3325
        %v4411 = vadd.f32 %v4139, %v3325
        %v4412 = vadd.f32 %v4140, %v3325
        %v4413 = vadd.f32 %v4141, %v3325
        %v4414 = vadd.f32 %v4142, %v3325
        %v4415 = vadd.f32 %v4143, %v3325
        %v4416 = vadd.f32 %v4144, %v3325
        %v4417 = vadd.f32 %v4145, %v3325
        %v4418 = vadd.f32 %v4146, %v3325
        %v4419 = vadd.f32 %v4147, %v3325
        %v4420 = vadd.f32 %v4148, %v3325
        %v4421 = vadd.f32 %v4149, %v3325
        %v4422 = vadd.f32 %v4150, %v3325
        %v4423 = vadd.f32 %v4151, %v3325
        %v4424 = vadd.f32 %v4152, %v3325
        %v4425 = vadd.f32 %v4153, %v3325
        %v4426 = vmax.f32 %v4410, 0.0
        %v4427 = vmax.f32 %v4411, 0.0
        %v4428 = vmax.f32 %v4412, 0.0
        %v4429 = vmax.f32 %v4413, 0.0
        %v4430 = vmax.f32 %v4414, 0.0
        %v4431 = vmax.f32 %v4415, 0.0
        %v4432 = vmax.f32 %v4416, 0.0
        %v4433 = vmax.f32 %v4417, 0.0
        %v4434 = vmax.f32 %v4418, 0.0
        %v4435 = vmax.f32 %v4419, 0.0
        %v4436 = vmax.f32 %v4420, 0.0
        %v4437 = vmax.f32 %v4421, 0.0
        %v4438 = vmax.f32 %v4422, 0.0
        %v4439 = vmax.f32 %v4423, 0.0
        %v4440 = vmax.f32 %v4424, 0.0
        %v4441 = vmax.f32 %v4425, 0.0
        %v4442 = vsel %vm4378, %v4426, 0.0
        %v4443 = vsel %vm4379, %v4427, 0.0
        %v4444 = vsel %vm4380, %v4428, 0.0
        %v4445 = vsel %vm4381, %v4429, 0.0
        %v4446 = vsel %vm4382, %v4430, 0.0
        %v4447 = vsel %vm4383, %v4431, 0.0
        %v4448 = vsel %vm4384, %v4432, 0.0
        %v4449 = vsel %vm4385, %v4433, 0.0
        %v4450 = vsel %vm4386, %v4434, 0.0
        %v4451 = vsel %vm4387, %v4435, 0.0
        %v4452 = vsel %vm4388, %v4436, 0.0
        %v4453 = vsel %vm4389, %v4437, 0.0
        %v4454 = vsel %vm4390, %v4438, 0.0
        %v4455 = vsel %vm4391, %v4439, 0.0
        %v4456 = vsel %vm4392, %v4440, 0.0
        %v4457 = vsel %vm4393, %v4441, 0.0
        %v4458 = vadd.f32 %v4138, %v3409
        %v4459 = vadd.f32 %v4139, %v3409
        %v4460 = vadd.f32 %v4140, %v3409
        %v4461 = vadd.f32 %v4141, %v3409
        %v4462 = vadd.f32 %v4142, %v3409
        %v4463 = vadd.f32 %v4143, %v3409
        %v4464 = vadd.f32 %v4144, %v3409
        %v4465 = vadd.f32 %v4145, %v3409
        %v4466 = vadd.f32 %v4146, %v3409
        %v4467 = vadd.f32 %v4147, %v3409
        %v4468 = vadd.f32 %v4148, %v3409
        %v4469 = vadd.f32 %v4149, %v3409
        %v4470 = vadd.f32 %v4150, %v3409
        %v4471 = vadd.f32 %v4151, %v3409
        %v4472 = vadd.f32 %v4152, %v3409
        %v4473 = vadd.f32 %v4153, %v3409
        %v4474 = vmax.f32 %v4458, 0.0
        %v4475 = vmax.f32 %v4459, 0.0
        %v4476 = vmax.f32 %v4460, 0.0
        %v4477 = vmax.f32 %v4461, 0.0
        %v4478 = vmax.f32 %v4462, 0.0
        %v4479 = vmax.f32 %v4463, 0.0
        %v4480 = vmax.f32 %v4464, 0.0
        %v4481 = vmax.f32 %v4465, 0.0
        %v4482 = vmax.f32 %v4466, 0.0
        %v4483 = vmax.f32 %v4467, 0.0
        %v4484 = vmax.f32 %v4468, 0.0
        %v4485 = vmax.f32 %v4469, 0.0
        %v4486 = vmax.f32 %v4470, 0.0
        %v4487 = vmax.f32 %v4471, 0.0
        %v4488 = vmax.f32 %v4472, 0.0
        %v4489 = vmax.f32 %v4473, 0.0
        %v4490 = vsel %vm4378, %v4474, 0.0
        %v4491 = vsel %vm4379, %v4475, 0.0
        %v4492 = vsel %vm4380, %v4476, 0.0
        %v4493 = vsel %vm4381, %v4477, 0.0
        %v4494 = vsel %vm4382, %v4478, 0.0
        %v4495 = vsel %vm4383, %v4479, 0.0
        %v4496 = vsel %vm4384, %v4480, 0.0
        %v4497 = vsel %vm4385, %v4481, 0.0
        %v4498 = vsel %vm4386, %v4482, 0.0
        %v4499 = vsel %vm4387, %v4483, 0.0
        %v4500 = vsel %vm4388, %v4484, 0.0
        %v4501 = vsel %vm4389, %v4485, 0.0
        %v4502 = vsel %vm4390, %v4486, 0.0
        %v4503 = vsel %vm4391, %v4487, 0.0
        %v4504 = vsel %vm4392, %v4488, 0.0
        %v4505 = vsel %vm4393, %v4489, 0.0
        %v4506 = vadd.f32 %v4138, %v3493
        %v4507 = vadd.f32 %v4139, %v3493
        %v4508 = vadd.f32 %v4140, %v3493
        %v4509 = vadd.f32 %v4141, %v3493
        %v4510 = vadd.f32 %v4142, %v3493
        %v4511 = vadd.f32 %v4143, %v3493
        %v4512 = vadd.f32 %v4144, %v3493
        %v4513 = vadd.f32 %v4145, %v3493
        %v4514 = vadd.f32 %v4146, %v3493
        %v4515 = vadd.f32 %v4147, %v3493
        %v4516 = vadd.f32 %v4148, %v3493
        %v4517 = vadd.f32 %v4149, %v3493
        %v4518 = vadd.f32 %v4150, %v3493
        %v4519 = vadd.f32 %v4151, %v3493
        %v4520 = vadd.f32 %v4152, %v3493
        %v4521 = vadd.f32 %v4153, %v3493
        %v4522 = vmax.f32 %v4506, 0.0
        %v4523 = vmax.f32 %v4507, 0.0
        %v4524 = vmax.f32 %v4508, 0.0
        %v4525 = vmax.f32 %v4509, 0.0
        %v4526 = vmax.f32 %v4510, 0.0
        %v4527 = vmax.f32 %v4511, 0.0
        %v4528 = vmax.f32 %v4512, 0.0
        %v4529 = vmax.f32 %v4513, 0.0
        %v4530 = vmax.f32 %v4514, 0.0
        %v4531 = vmax.f32 %v4515, 0.0
        %v4532 = vmax.f32 %v4516, 0.0
        %v4533 = vmax.f32 %v4517, 0.0
        %v4534 = vmax.f32 %v4518, 0.0
        %v4535 = vmax.f32 %v4519, 0.0
        %v4536 = vmax.f32 %v4520, 0.0
        %v4537 = vmax.f32 %v4521, 0.0
        %v4538 = vsel %vm4378, %v4522, 0.0
        %v4539 = vsel %vm4379, %v4523, 0.0
        %v4540 = vsel %vm4380, %v4524, 0.0
        %v4541 = vsel %vm4381, %v4525, 0.0
        %v4542 = vsel %vm4382, %v4526, 0.0
        %v4543 = vsel %vm4383, %v4527, 0.0
        %v4544 = vsel %vm4384, %v4528, 0.0
        %v4545 = vsel %vm4385, %v4529, 0.0
        %v4546 = vsel %vm4386, %v4530, 0.0
        %v4547 = vsel %vm4387, %v4531, 0.0
        %v4548 = vsel %vm4388, %v4532, 0.0
        %v4549 = vsel %vm4389, %v4533, 0.0
        %v4550 = vsel %vm4390, %v4534, 0.0
        %v4551 = vsel %vm4391, %v4535, 0.0
        %v4552 = vsel %vm4392, %v4536, 0.0
        %v4553 = vsel %vm4393, %v4537, 0.0
        %v4554 = vadd.f32 %v4138, %v3577
        %v4555 = vadd.f32 %v4139, %v3577
        %v4556 = vadd.f32 %v4140, %v3577
        %v4557 = vadd.f32 %v4141, %v3577
        %v4558 = vadd.f32 %v4142, %v3577
        %v4559 = vadd.f32 %v4143, %v3577
        %v4560 = vadd.f32 %v4144, %v3577
        %v4561 = vadd.f32 %v4145, %v3577
        %v4562 = vadd.f32 %v4146, %v3577
        %v4563 = vadd.f32 %v4147, %v3577
        %v4564 = vadd.f32 %v4148, %v3577
        %v4565 = vadd.f32 %v4149, %v3577
        %v4566 = vadd.f32 %v4150, %v3577
        %v4567 = vadd.f32 %v4151, %v3577
        %v4568 = vadd.f32 %v4152, %v3577
        %v4569 = vadd.f32 %v4153, %v3577
        %v4570 = vmax.f32 %v4554, 0.0
        %v4571 = vmax.f32 %v4555, 0.0
        %v4572 = vmax.f32 %v4556, 0.0
        %v4573 = vmax.f32 %v4557, 0.0
        %v4574 = vmax.f32 %v4558, 0.0
        %v4575 = vmax.f32 %v4559, 0.0
        %v4576 = vmax.f32 %v4560, 0.0
        %v4577 = vmax.f32 %v4561, 0.0
        %v4578 = vmax.f32 %v4562, 0.0
        %v4579 = vmax.f32 %v4563, 0.0
        %v4580 = vmax.f32 %v4564, 0.0
        %v4581 = vmax.f32 %v4565, 0.0
        %v4582 = vmax.f32 %v4566, 0.0
        %v4583 = vmax.f32 %v4567, 0.0
        %v4584 = vmax.f32 %v4568, 0.0
        %v4585 = vmax.f32 %v4569, 0.0
        %v4586 = vsel %vm4378, %v4570, 0.0
        %v4587 = vsel %vm4379, %v4571, 0.0
        %v4588 = vsel %vm4380, %v4572, 0.0
        %v4589 = vsel %vm4381, %v4573, 0.0
        %v4590 = vsel %vm4382, %v4574, 0.0
        %v4591 = vsel %vm4383, %v4575, 0.0
        %v4592 = vsel %vm4384, %v4576, 0.0
        %v4593 = vsel %vm4385, %v4577, 0.0
        %v4594 = vsel %vm4386, %v4578, 0.0
        %v4595 = vsel %vm4387, %v4579, 0.0
        %v4596 = vsel %vm4388, %v4580, 0.0
        %v4597 = vsel %vm4389, %v4581, 0.0
        %v4598 = vsel %vm4390, %v4582, 0.0
        %v4599 = vsel %vm4391, %v4583, 0.0
        %v4600 = vsel %vm4392, %v4584, 0.0
        %v4601 = vsel %vm4393, %v4585, 0.0
        %v4602 = vadd.f32 %v4266, %v4394
        %v4603 = vadd.f32 %v4267, %v4395
        %v4604 = vadd.f32 %v4268, %v4396
        %v4605 = vadd.f32 %v4269, %v4397
        %v4606 = vadd.f32 %v4270, %v4398
        %v4607 = vadd.f32 %v4271, %v4399
        %v4608 = vadd.f32 %v4272, %v4400
        %v4609 = vadd.f32 %v4273, %v4401
        %v4610 = vadd.f32 %v4274, %v4402
        %v4611 = vadd.f32 %v4275, %v4403
        %v4612 = vadd.f32 %v4276, %v4404
        %v4613 = vadd.f32 %v4277, %v4405
        %v4614 = vadd.f32 %v4278, %v4406
        %v4615 = vadd.f32 %v4279, %v4407
        %v4616 = vadd.f32 %v4280, %v4408
        %v4617 = vadd.f32 %v4281, %v4409
        %v4618 = vadd.f32 %v4442, %v4490
        %v4619 = vadd.f32 %v4443, %v4491
        %v4620 = vadd.f32 %v4444, %v4492
        %v4621 = vadd.f32 %v4445, %v4493
        %v4622 = vadd.f32 %v4446, %v4494
        %v4623 = vadd.f32 %v4447, %v4495
        %v4624 = vadd.f32 %v4448, %v4496
        %v4625 = vadd.f32 %v4449, %v4497
        %v4626 = vadd.f32 %v4450, %v4498
        %v4627 = vadd.f32 %v4451, %v4499
        %v4628 = vadd.f32 %v4452, %v4500
        %v4629 = vadd.f32 %v4453, %v4501
        %v4630 = vadd.f32 %v4454, %v4502
        %v4631 = vadd.f32 %v4455, %v4503
        %v4632 = vadd.f32 %v4456, %v4504
        %v4633 = vadd.f32 %v4457, %v4505
        %v4634 = vadd.f32 %v4538, %v4586
        %v4635 = vadd.f32 %v4539, %v4587
        %v4636 = vadd.f32 %v4540, %v4588
        %v4637 = vadd.f32 %v4541, %v4589
        %v4638 = vadd.f32 %v4542, %v4590
        %v4639 = vadd.f32 %v4543, %v4591
        %v4640 = vadd.f32 %v4544, %v4592
        %v4641 = vadd.f32 %v4545, %v4593
        %v4642 = vadd.f32 %v4546, %v4594
        %v4643 = vadd.f32 %v4547, %v4595
        %v4644 = vadd.f32 %v4548, %v4596
        %v4645 = vadd.f32 %v4549, %v4597
        %v4646 = vadd.f32 %v4550, %v4598
        %v4647 = vadd.f32 %v4551, %v4599
        %v4648 = vadd.f32 %v4552, %v4600
        %v4649 = vadd.f32 %v4553, %v4601
        %v4650 = vadd.f32 %v4602, %v4618
        %v4651 = vadd.f32 %v4603, %v4619
        %v4652 = vadd.f32 %v4604, %v4620
        %v4653 = vadd.f32 %v4605, %v4621
        %v4654 = vadd.f32 %v4606, %v4622
        %v4655 = vadd.f32 %v4607, %v4623
        %v4656 = vadd.f32 %v4608, %v4624
        %v4657 = vadd.f32 %v4609, %v4625
        %v4658 = vadd.f32 %v4610, %v4626
        %v4659 = vadd.f32 %v4611, %v4627
        %v4660 = vadd.f32 %v4612, %v4628
        %v4661 = vadd.f32 %v4613, %v4629
        %v4662 = vadd.f32 %v4614, %v4630
        %v4663 = vadd.f32 %v4615, %v4631
        %v4664 = vadd.f32 %v4616, %v4632
        %v4665 = vadd.f32 %v4617, %v4633
        %v4666 = vadd.f32 %v4650, %v4634
        %v4667 = vadd.f32 %v4651, %v4635
        %v4668 = vadd.f32 %v4652, %v4636
        %v4669 = vadd.f32 %v4653, %v4637
        %v4670 = vadd.f32 %v4654, %v4638
        %v4671 = vadd.f32 %v4655, %v4639
        %v4672 = vadd.f32 %v4656, %v4640
        %v4673 = vadd.f32 %v4657, %v4641
        %v4674 = vadd.f32 %v4658, %v4642
        %v4675 = vadd.f32 %v4659, %v4643
        %v4676 = vadd.f32 %v4660, %v4644
        %v4677 = vadd.f32 %v4661, %v4645
        %v4678 = vadd.f32 %v4662, %v4646
        %v4679 = vadd.f32 %v4663, %v4647
        %v4680 = vadd.f32 %v4664, %v4648
        %v4681 = vadd.f32 %v4665, %v4649
        %v4682 = vcvt.s32.f32 %v4186
        %v4683 = vcvt.s32.f32 %v4187
        %v4684 = vcvt.s32.f32 %v4188
        %v4685 = vcvt.s32.f32 %v4189
        %v4686 = vcvt.s32.f32 %v4190
        %v4687 = vcvt.s32.f32 %v4191
        %v4688 = vcvt.s32.f32 %v4192
        %v4689 = vcvt.s32.f32 %v4193
        %v4690 = vcvt.s32.f32 %v4194
        %v4691 = vcvt.s32.f32 %v4195
        %v4692 = vcvt.s32.f32 %v4196
        %v4693 = vcvt.s32.f32 %v4197
        %v4694 = vcvt.s32.f32 %v4198
        %v4695 = vcvt.s32.f32 %v4199
        %v4696 = vcvt.s32.f32 %v4200
        %v4697 = vcvt.s32.f32 %v4201
        %v4698 = vcvt.s32.f32 %v4314
        %v4699 = vcvt.s32.f32 %v4315
        %v4700 = vcvt.s32.f32 %v4316
        %v4701 = vcvt.s32.f32 %v4317
        %v4702 = vcvt.s32.f32 %v4318
        %v4703 = vcvt.s32.f32 %v4319
        %v4704 = vcvt.s32.f32 %v4320
        %v4705 = vcvt.s32.f32 %v4321
        %v4706 = vcvt.s32.f32 %v4322
        %v4707 = vcvt.s32.f32 %v4323
        %v4708 = vcvt.s32.f32 %v4324
        %v4709 = vcvt.s32.f32 %v4325
        %v4710 = vcvt.s32.f32 %v4326
        %v4711 = vcvt.s32.f32 %v4327
        %v4712 = vcvt.s32.f32 %v4328
        %v4713 = vcvt.s32.f32 %v4329
        %v4714 = vmul.f32 %v4698, 5.0
        %v4715 = vmul.f32 %v4699, 5.0
        %v4716 = vmul.f32 %v4700, 5.0
        %v4717 = vmul.f32 %v4701, 5.0
        %v4718 = vmul.f32 %v4702, 5.0
        %v4719 = vmul.f32 %v4703, 5.0
        %v4720 = vmul.f32 %v4704, 5.0
        %v4721 = vmul.f32 %v4705, 5.0
        %v4722 = vmul.f32 %v4706, 5.0
        %v4723 = vmul.f32 %v4707, 5.0
        %v4724 = vmul.f32 %v4708, 5.0
        %v4725 = vmul.f32 %v4709, 5.0
        %v4726 = vmul.f32 %v4710, 5.0
        %v4727 = vmul.f32 %v4711, 5.0
        %v4728 = vmul.f32 %v4712, 5.0
        %v4729 = vmul.f32 %v4713, 5.0
        %v4730 = vadd.f32 %v4682, %v4714
        %v4731 = vadd.f32 %v4683, %v4715
        %v4732 = vadd.f32 %v4684, %v4716
        %v4733 = vadd.f32 %v4685, %v4717
        %v4734 = vadd.f32 %v4686, %v4718
        %v4735 = vadd.f32 %v4687, %v4719
        %v4736 = vadd.f32 %v4688, %v4720
        %v4737 = vadd.f32 %v4689, %v4721
        %v4738 = vadd.f32 %v4690, %v4722
        %v4739 = vadd.f32 %v4691, %v4723
        %v4740 = vadd.f32 %v4692, %v4724
        %v4741 = vadd.f32 %v4693, %v4725
        %v4742 = vadd.f32 %v4694, %v4726
        %v4743 = vadd.f32 %v4695, %v4727
        %v4744 = vadd.f32 %v4696, %v4728
        %v4745 = vadd.f32 %v4697, %v4729
        %4746 = vset.pattern.permute.xlu0 8
        %4747 = vperm.xlu0 %4746, %v2598
        %v4748 = vpop.permute.xlu0 %4747
        %4750 = vset.pattern.permute.xlu0 8
        %4751 = vperm.xlu0 %4750, %v2599
        %v4752 = vpop.permute.xlu0 %4751
        %4754 = vset.pattern.permute.xlu0 8
        %4755 = vperm.xlu0 %4754, %v2600
        %v4756 = vpop.permute.xlu0 %4755
        %4758 = vset.pattern.permute.xlu0 8
        %4759 = vperm.xlu0 %4758, %v2601
        %v4760 = vpop.permute.xlu0 %4759
        %4762 = vset.pattern.permute.xlu0 8
        %4763 = vperm.xlu0 %4762, %v2602
        %v4764 = vpop.permute.xlu0 %4763
        %4766 = vset.pattern.permute.xlu0 8
        %4767 = vperm.xlu0 %4766, %v2603
        %v4768 = vpop.permute.xlu0 %4767
        %4770 = vset.pattern.permute.xlu0 8
        %4771 = vperm.xlu0 %4770, %v2604
        %v4772 = vpop.permute.xlu0 %4771
        %4774 = vset.pattern.permute.xlu0 8
        %4775 = vperm.xlu0 %4774, %v2605
        %v4776 = vpop.permute.xlu0 %4775
        %4778 = vset.pattern.permute.xlu0 8
        %4779 = vperm.xlu0 %4778, %v2606
        %v4780 = vpop.permute.xlu0 %4779
        %4782 = vset.pattern.permute.xlu0 8
        %4783 = vperm.xlu0 %4782, %v2607
        %v4784 = vpop.permute.xlu0 %4783
        %4786 = vset.pattern.permute.xlu0 8
        %4787 = vperm.xlu0 %4786, %v2608
        %v4788 = vpop.permute.xlu0 %4787
        %4790 = vset.pattern.permute.xlu0 8
        %4791 = vperm.xlu0 %4790, %v2609
        %v4792 = vpop.permute.xlu0 %4791
        %4794 = vset.pattern.permute.xlu0 8
        %4795 = vperm.xlu0 %4794, %v2610
        %v4796 = vpop.permute.xlu0 %4795
        %4798 = vset.pattern.permute.xlu0 8
        %4799 = vperm.xlu0 %4798, %v2611
        %v4800 = vpop.permute.xlu0 %4799
        %4802 = vset.pattern.permute.xlu0 8
        %4803 = vperm.xlu0 %4802, %v2612
        %v4804 = vpop.permute.xlu0 %4803
        %4806 = vset.pattern.permute.xlu0 8
        %4807 = vperm.xlu0 %4806, %v2613
        %v4808 = vpop.permute.xlu0 %4807
        %v4810 = vmul.f32 %v4748, %v2697
        %v4811 = vmul.f32 %v4752, %v2697
        %v4812 = vmul.f32 %v4756, %v2697
        %v4813 = vmul.f32 %v4760, %v2697
        %v4814 = vmul.f32 %v4764, %v2697
        %v4815 = vmul.f32 %v4768, %v2697
        %v4816 = vmul.f32 %v4772, %v2697
        %v4817 = vmul.f32 %v4776, %v2697
        %v4818 = vmul.f32 %v4780, %v2697
        %v4819 = vmul.f32 %v4784, %v2697
        %v4820 = vmul.f32 %v4788, %v2697
        %v4821 = vmul.f32 %v4792, %v2697
        %v4822 = vmul.f32 %v4796, %v2697
        %v4823 = vmul.f32 %v4800, %v2697
        %v4824 = vmul.f32 %v4804, %v2697
        %v4825 = vmul.f32 %v4808, %v2697
        %4826 = vset.pattern.permute.xlu0 8
        %4827 = vperm.xlu0 %4826, %v2730
        %v4828 = vpop.permute.xlu0 %4827
        %4830 = vset.pattern.permute.xlu0 8
        %4831 = vperm.xlu0 %4830, %v2731
        %v4832 = vpop.permute.xlu0 %4831
        %4834 = vset.pattern.permute.xlu0 8
        %4835 = vperm.xlu0 %4834, %v2732
        %v4836 = vpop.permute.xlu0 %4835
        %4838 = vset.pattern.permute.xlu0 8
        %4839 = vperm.xlu0 %4838, %v2733
        %v4840 = vpop.permute.xlu0 %4839
        %4842 = vset.pattern.permute.xlu0 8
        %4843 = vperm.xlu0 %4842, %v2734
        %v4844 = vpop.permute.xlu0 %4843
        %4846 = vset.pattern.permute.xlu0 8
        %4847 = vperm.xlu0 %4846, %v2735
        %v4848 = vpop.permute.xlu0 %4847
        %4850 = vset.pattern.permute.xlu0 8
        %4851 = vperm.xlu0 %4850, %v2736
        %v4852 = vpop.permute.xlu0 %4851
        %4854 = vset.pattern.permute.xlu0 8
        %4855 = vperm.xlu0 %4854, %v2737
        %v4856 = vpop.permute.xlu0 %4855
        %4858 = vset.pattern.permute.xlu0 8
        %4859 = vperm.xlu0 %4858, %v2738
        %v4860 = vpop.permute.xlu0 %4859
        %4862 = vset.pattern.permute.xlu0 8
        %4863 = vperm.xlu0 %4862, %v2739
        %v4864 = vpop.permute.xlu0 %4863
        %4866 = vset.pattern.permute.xlu0 8
        %4867 = vperm.xlu0 %4866, %v2740
        %v4868 = vpop.permute.xlu0 %4867
        %4870 = vset.pattern.permute.xlu0 8
        %4871 = vperm.xlu0 %4870, %v2741
        %v4872 = vpop.permute.xlu0 %4871
        %4874 = vset.pattern.permute.xlu0 8
        %4875 = vperm.xlu0 %4874, %v2742
        %v4876 = vpop.permute.xlu0 %4875
        %4878 = vset.pattern.permute.xlu0 8
        %4879 = vperm.xlu0 %4878, %v2743
        %v4880 = vpop.permute.xlu0 %4879
        %4882 = vset.pattern.permute.xlu0 8
        %4883 = vperm.xlu0 %4882, %v2744
        %v4884 = vpop.permute.xlu0 %4883
        %4886 = vset.pattern.permute.xlu0 8
        %4887 = vperm.xlu0 %4886, %v2745
        %v4888 = vpop.permute.xlu0 %4887
        %v4890 = vmul.f32 %v4828, %v2829
        %v4891 = vmul.f32 %v4832, %v2829
        %v4892 = vmul.f32 %v4836, %v2829
        %v4893 = vmul.f32 %v4840, %v2829
        %v4894 = vmul.f32 %v4844, %v2829
        %v4895 = vmul.f32 %v4848, %v2829
        %v4896 = vmul.f32 %v4852, %v2829
        %v4897 = vmul.f32 %v4856, %v2829
        %v4898 = vmul.f32 %v4860, %v2829
        %v4899 = vmul.f32 %v4864, %v2829
        %v4900 = vmul.f32 %v4868, %v2829
        %v4901 = vmul.f32 %v4872, %v2829
        %v4902 = vmul.f32 %v4876, %v2829
        %v4903 = vmul.f32 %v4880, %v2829
        %v4904 = vmul.f32 %v4884, %v2829
        %v4905 = vmul.f32 %v4888, %v2829
        %4906 = vset.pattern.permute.xlu0 8
        %4907 = vperm.xlu0 %4906, %v2862
        %v4908 = vpop.permute.xlu0 %4907
        %4910 = vset.pattern.permute.xlu0 8
        %4911 = vperm.xlu0 %4910, %v2863
        %v4912 = vpop.permute.xlu0 %4911
        %4914 = vset.pattern.permute.xlu0 8
        %4915 = vperm.xlu0 %4914, %v2864
        %v4916 = vpop.permute.xlu0 %4915
        %4918 = vset.pattern.permute.xlu0 8
        %4919 = vperm.xlu0 %4918, %v2865
        %v4920 = vpop.permute.xlu0 %4919
        %4922 = vset.pattern.permute.xlu0 8
        %4923 = vperm.xlu0 %4922, %v2866
        %v4924 = vpop.permute.xlu0 %4923
        %4926 = vset.pattern.permute.xlu0 8
        %4927 = vperm.xlu0 %4926, %v2867
        %v4928 = vpop.permute.xlu0 %4927
        %4930 = vset.pattern.permute.xlu0 8
        %4931 = vperm.xlu0 %4930, %v2868
        %v4932 = vpop.permute.xlu0 %4931
        %4934 = vset.pattern.permute.xlu0 8
        %4935 = vperm.xlu0 %4934, %v2869
        %v4936 = vpop.permute.xlu0 %4935
        %4938 = vset.pattern.permute.xlu0 8
        %4939 = vperm.xlu0 %4938, %v2870
        %v4940 = vpop.permute.xlu0 %4939
        %4942 = vset.pattern.permute.xlu0 8
        %4943 = vperm.xlu0 %4942, %v2871
        %v4944 = vpop.permute.xlu0 %4943
        %4946 = vset.pattern.permute.xlu0 8
        %4947 = vperm.xlu0 %4946, %v2872
        %v4948 = vpop.permute.xlu0 %4947
        %4950 = vset.pattern.permute.xlu0 8
        %4951 = vperm.xlu0 %4950, %v2873
        %v4952 = vpop.permute.xlu0 %4951
        %4954 = vset.pattern.permute.xlu0 8
        %4955 = vperm.xlu0 %4954, %v2874
        %v4956 = vpop.permute.xlu0 %4955
        %4958 = vset.pattern.permute.xlu0 8
        %4959 = vperm.xlu0 %4958, %v2875
        %v4960 = vpop.permute.xlu0 %4959
        %4962 = vset.pattern.permute.xlu0 8
        %4963 = vperm.xlu0 %4962, %v2876
        %v4964 = vpop.permute.xlu0 %4963
        %4966 = vset.pattern.permute.xlu0 8
        %4967 = vperm.xlu0 %4966, %v2877
        %v4968 = vpop.permute.xlu0 %4967
        %v4970 = vmul.f32 %v4908, %v2961
        %v4971 = vmul.f32 %v4912, %v2961
        %v4972 = vmul.f32 %v4916, %v2961
        %v4973 = vmul.f32 %v4920, %v2961
        %v4974 = vmul.f32 %v4924, %v2961
        %v4975 = vmul.f32 %v4928, %v2961
        %v4976 = vmul.f32 %v4932, %v2961
        %v4977 = vmul.f32 %v4936, %v2961
        %v4978 = vmul.f32 %v4940, %v2961
        %v4979 = vmul.f32 %v4944, %v2961
        %v4980 = vmul.f32 %v4948, %v2961
        %v4981 = vmul.f32 %v4952, %v2961
        %v4982 = vmul.f32 %v4956, %v2961
        %v4983 = vmul.f32 %v4960, %v2961
        %v4984 = vmul.f32 %v4964, %v2961
        %v4985 = vmul.f32 %v4968, %v2961
        %4986 = vset.pattern.permute.xlu0 8
        %4987 = vperm.xlu0 %4986, %v2994
        %v4988 = vpop.permute.xlu0 %4987
        %4990 = vset.pattern.permute.xlu0 8
        %4991 = vperm.xlu0 %4990, %v2995
        %v4992 = vpop.permute.xlu0 %4991
        %4994 = vset.pattern.permute.xlu0 8
        %4995 = vperm.xlu0 %4994, %v2996
        %v4996 = vpop.permute.xlu0 %4995
        %4998 = vset.pattern.permute.xlu0 8
        %4999 = vperm.xlu0 %4998, %v2997
        %v5000 = vpop.permute.xlu0 %4999
        %5002 = vset.pattern.permute.xlu0 8
        %5003 = vperm.xlu0 %5002, %v2998
        %v5004 = vpop.permute.xlu0 %5003
        %5006 = vset.pattern.permute.xlu0 8
        %5007 = vperm.xlu0 %5006, %v2999
        %v5008 = vpop.permute.xlu0 %5007
        %5010 = vset.pattern.permute.xlu0 8
        %5011 = vperm.xlu0 %5010, %v3000
        %v5012 = vpop.permute.xlu0 %5011
        %5014 = vset.pattern.permute.xlu0 8
        %5015 = vperm.xlu0 %5014, %v3001
        %v5016 = vpop.permute.xlu0 %5015
        %5018 = vset.pattern.permute.xlu0 8
        %5019 = vperm.xlu0 %5018, %v3002
        %v5020 = vpop.permute.xlu0 %5019
        %5022 = vset.pattern.permute.xlu0 8
        %5023 = vperm.xlu0 %5022, %v3003
        %v5024 = vpop.permute.xlu0 %5023
        %5026 = vset.pattern.permute.xlu0 8
        %5027 = vperm.xlu0 %5026, %v3004
        %v5028 = vpop.permute.xlu0 %5027
        %5030 = vset.pattern.permute.xlu0 8
        %5031 = vperm.xlu0 %5030, %v3005
        %v5032 = vpop.permute.xlu0 %5031
        %5034 = vset.pattern.permute.xlu0 8
        %5035 = vperm.xlu0 %5034, %v3006
        %v5036 = vpop.permute.xlu0 %5035
        %5038 = vset.pattern.permute.xlu0 8
        %5039 = vperm.xlu0 %5038, %v3007
        %v5040 = vpop.permute.xlu0 %5039
        %5042 = vset.pattern.permute.xlu0 8
        %5043 = vperm.xlu0 %5042, %v3008
        %v5044 = vpop.permute.xlu0 %5043
        %5046 = vset.pattern.permute.xlu0 8
        %5047 = vperm.xlu0 %5046, %v3009
        %v5048 = vpop.permute.xlu0 %5047
        %v5050 = vmul.f32 %v4988, %v3093
        %v5051 = vmul.f32 %v4992, %v3093
        %v5052 = vmul.f32 %v4996, %v3093
        %v5053 = vmul.f32 %v5000, %v3093
        %v5054 = vmul.f32 %v5004, %v3093
        %v5055 = vmul.f32 %v5008, %v3093
        %v5056 = vmul.f32 %v5012, %v3093
        %v5057 = vmul.f32 %v5016, %v3093
        %v5058 = vmul.f32 %v5020, %v3093
        %v5059 = vmul.f32 %v5024, %v3093
        %v5060 = vmul.f32 %v5028, %v3093
        %v5061 = vmul.f32 %v5032, %v3093
        %v5062 = vmul.f32 %v5036, %v3093
        %v5063 = vmul.f32 %v5040, %v3093
        %v5064 = vmul.f32 %v5044, %v3093
        %v5065 = vmul.f32 %v5048, %v3093
        %v5066 = vadd.f32 %v4810, %v4890
        %v5067 = vadd.f32 %v4811, %v4891
        %v5068 = vadd.f32 %v4812, %v4892
        %v5069 = vadd.f32 %v4813, %v4893
        %v5070 = vadd.f32 %v4814, %v4894
        %v5071 = vadd.f32 %v4815, %v4895
        %v5072 = vadd.f32 %v4816, %v4896
        %v5073 = vadd.f32 %v4817, %v4897
        %v5074 = vadd.f32 %v4818, %v4898
        %v5075 = vadd.f32 %v4819, %v4899
        %v5076 = vadd.f32 %v4820, %v4900
        %v5077 = vadd.f32 %v4821, %v4901
        %v5078 = vadd.f32 %v4822, %v4902
        %v5079 = vadd.f32 %v4823, %v4903
        %v5080 = vadd.f32 %v4824, %v4904
        %v5081 = vadd.f32 %v4825, %v4905
        %v5082 = vadd.f32 %v4970, %v5050
        %v5083 = vadd.f32 %v4971, %v5051
        %v5084 = vadd.f32 %v4972, %v5052
        %v5085 = vadd.f32 %v4973, %v5053
        %v5086 = vadd.f32 %v4974, %v5054
        %v5087 = vadd.f32 %v4975, %v5055
        %v5088 = vadd.f32 %v4976, %v5056
        %v5089 = vadd.f32 %v4977, %v5057
        %v5090 = vadd.f32 %v4978, %v5058
        %v5091 = vadd.f32 %v4979, %v5059
        %v5092 = vadd.f32 %v4980, %v5060
        %v5093 = vadd.f32 %v4981, %v5061
        %v5094 = vadd.f32 %v4982, %v5062
        %v5095 = vadd.f32 %v4983, %v5063
        %v5096 = vadd.f32 %v4984, %v5064
        %v5097 = vadd.f32 %v4985, %v5065
        %v5098 = vadd.f32 %v5066, %v5082
        %v5099 = vadd.f32 %v5067, %v5083
        %v5100 = vadd.f32 %v5068, %v5084
        %v5101 = vadd.f32 %v5069, %v5085
        %v5102 = vadd.f32 %v5070, %v5086
        %v5103 = vadd.f32 %v5071, %v5087
        %v5104 = vadd.f32 %v5072, %v5088
        %v5105 = vadd.f32 %v5073, %v5089
        %v5106 = vadd.f32 %v5074, %v5090
        %v5107 = vadd.f32 %v5075, %v5091
        %v5108 = vadd.f32 %v5076, %v5092
        %v5109 = vadd.f32 %v5077, %v5093
        %v5110 = vadd.f32 %v5078, %v5094
        %v5111 = vadd.f32 %v5079, %v5095
        %v5112 = vadd.f32 %v5080, %v5096
        %v5113 = vadd.f32 %v5081, %v5097
        %5114 = vset.pattern.permute.xlu0 9
        %5115 = vperm.xlu0 %5114, %v235
        %v5116 = vpop.permute.xlu0 %5115
        %5118 = vset.pattern.permute.xlu0 9
        %5119 = vperm.xlu0 %5118, %v236
        %v5120 = vpop.permute.xlu0 %5119
        %5122 = vset.pattern.permute.xlu0 9
        %5123 = vperm.xlu0 %5122, %v237
        %v5124 = vpop.permute.xlu0 %5123
        %5126 = vset.pattern.permute.xlu0 9
        %5127 = vperm.xlu0 %5126, %v238
        %v5128 = vpop.permute.xlu0 %5127
        %5130 = vset.pattern.permute.xlu0 9
        %5131 = vperm.xlu0 %5130, %v239
        %v5132 = vpop.permute.xlu0 %5131
        %5134 = vset.pattern.permute.xlu0 9
        %5135 = vperm.xlu0 %5134, %v240
        %v5136 = vpop.permute.xlu0 %5135
        %5138 = vset.pattern.permute.xlu0 9
        %5139 = vperm.xlu0 %5138, %v241
        %v5140 = vpop.permute.xlu0 %5139
        %5142 = vset.pattern.permute.xlu0 9
        %5143 = vperm.xlu0 %5142, %v242
        %v5144 = vpop.permute.xlu0 %5143
        %5146 = vset.pattern.permute.xlu0 9
        %5147 = vperm.xlu0 %5146, %v243
        %v5148 = vpop.permute.xlu0 %5147
        %5150 = vset.pattern.permute.xlu0 9
        %5151 = vperm.xlu0 %5150, %v244
        %v5152 = vpop.permute.xlu0 %5151
        %5154 = vset.pattern.permute.xlu0 9
        %5155 = vperm.xlu0 %5154, %v245
        %v5156 = vpop.permute.xlu0 %5155
        %5158 = vset.pattern.permute.xlu0 9
        %5159 = vperm.xlu0 %5158, %v246
        %v5160 = vpop.permute.xlu0 %5159
        %5162 = vset.pattern.permute.xlu0 9
        %5163 = vperm.xlu0 %5162, %v247
        %v5164 = vpop.permute.xlu0 %5163
        %5166 = vset.pattern.permute.xlu0 9
        %5167 = vperm.xlu0 %5166, %v248
        %v5168 = vpop.permute.xlu0 %5167
        %5170 = vset.pattern.permute.xlu0 9
        %5171 = vperm.xlu0 %5170, %v249
        %v5172 = vpop.permute.xlu0 %5171
        %5174 = vset.pattern.permute.xlu0 9
        %5175 = vperm.xlu0 %5174, %v250
        %v5176 = vpop.permute.xlu0 %5175
        %v5178 = vmul.f32 %v5116, %v3241
        %v5179 = vmul.f32 %v5120, %v3241
        %v5180 = vmul.f32 %v5124, %v3241
        %v5181 = vmul.f32 %v5128, %v3241
        %v5182 = vmul.f32 %v5132, %v3241
        %v5183 = vmul.f32 %v5136, %v3241
        %v5184 = vmul.f32 %v5140, %v3241
        %v5185 = vmul.f32 %v5144, %v3241
        %v5186 = vmul.f32 %v5148, %v3241
        %v5187 = vmul.f32 %v5152, %v3241
        %v5188 = vmul.f32 %v5156, %v3241
        %v5189 = vmul.f32 %v5160, %v3241
        %v5190 = vmul.f32 %v5164, %v3241
        %v5191 = vmul.f32 %v5168, %v3241
        %v5192 = vmul.f32 %v5172, %v3241
        %v5193 = vmul.f32 %v5176, %v3241
        %5194 = vset.pattern.permute.xlu0 10
        %5195 = vperm.xlu0 %5194, %v235
        %v5196 = vpop.permute.xlu0 %5195
        %5198 = vset.pattern.permute.xlu0 10
        %5199 = vperm.xlu0 %5198, %v236
        %v5200 = vpop.permute.xlu0 %5199
        %5202 = vset.pattern.permute.xlu0 10
        %5203 = vperm.xlu0 %5202, %v237
        %v5204 = vpop.permute.xlu0 %5203
        %5206 = vset.pattern.permute.xlu0 10
        %5207 = vperm.xlu0 %5206, %v238
        %v5208 = vpop.permute.xlu0 %5207
        %5210 = vset.pattern.permute.xlu0 10
        %5211 = vperm.xlu0 %5210, %v239
        %v5212 = vpop.permute.xlu0 %5211
        %5214 = vset.pattern.permute.xlu0 10
        %5215 = vperm.xlu0 %5214, %v240
        %v5216 = vpop.permute.xlu0 %5215
        %5218 = vset.pattern.permute.xlu0 10
        %5219 = vperm.xlu0 %5218, %v241
        %v5220 = vpop.permute.xlu0 %5219
        %5222 = vset.pattern.permute.xlu0 10
        %5223 = vperm.xlu0 %5222, %v242
        %v5224 = vpop.permute.xlu0 %5223
        %5226 = vset.pattern.permute.xlu0 10
        %5227 = vperm.xlu0 %5226, %v243
        %v5228 = vpop.permute.xlu0 %5227
        %5230 = vset.pattern.permute.xlu0 10
        %5231 = vperm.xlu0 %5230, %v244
        %v5232 = vpop.permute.xlu0 %5231
        %5234 = vset.pattern.permute.xlu0 10
        %5235 = vperm.xlu0 %5234, %v245
        %v5236 = vpop.permute.xlu0 %5235
        %5238 = vset.pattern.permute.xlu0 10
        %5239 = vperm.xlu0 %5238, %v246
        %v5240 = vpop.permute.xlu0 %5239
        %5242 = vset.pattern.permute.xlu0 10
        %5243 = vperm.xlu0 %5242, %v247
        %v5244 = vpop.permute.xlu0 %5243
        %5246 = vset.pattern.permute.xlu0 10
        %5247 = vperm.xlu0 %5246, %v248
        %v5248 = vpop.permute.xlu0 %5247
        %5250 = vset.pattern.permute.xlu0 10
        %5251 = vperm.xlu0 %5250, %v249
        %v5252 = vpop.permute.xlu0 %5251
        %5254 = vset.pattern.permute.xlu0 10
        %5255 = vperm.xlu0 %5254, %v250
        %v5256 = vpop.permute.xlu0 %5255
        %v5258 = vmul.f32 %v5196, %v3325
        %v5259 = vmul.f32 %v5200, %v3325
        %v5260 = vmul.f32 %v5204, %v3325
        %v5261 = vmul.f32 %v5208, %v3325
        %v5262 = vmul.f32 %v5212, %v3325
        %v5263 = vmul.f32 %v5216, %v3325
        %v5264 = vmul.f32 %v5220, %v3325
        %v5265 = vmul.f32 %v5224, %v3325
        %v5266 = vmul.f32 %v5228, %v3325
        %v5267 = vmul.f32 %v5232, %v3325
        %v5268 = vmul.f32 %v5236, %v3325
        %v5269 = vmul.f32 %v5240, %v3325
        %v5270 = vmul.f32 %v5244, %v3325
        %v5271 = vmul.f32 %v5248, %v3325
        %v5272 = vmul.f32 %v5252, %v3325
        %v5273 = vmul.f32 %v5256, %v3325
        %5274 = vset.pattern.permute.xlu0 11
        %5275 = vperm.xlu0 %5274, %v235
        %v5276 = vpop.permute.xlu0 %5275
        %5278 = vset.pattern.permute.xlu0 11
        %5279 = vperm.xlu0 %5278, %v236
        %v5280 = vpop.permute.xlu0 %5279
        %5282 = vset.pattern.permute.xlu0 11
        %5283 = vperm.xlu0 %5282, %v237
        %v5284 = vpop.permute.xlu0 %5283
        %5286 = vset.pattern.permute.xlu0 11
        %5287 = vperm.xlu0 %5286, %v238
        %v5288 = vpop.permute.xlu0 %5287
        %5290 = vset.pattern.permute.xlu0 11
        %5291 = vperm.xlu0 %5290, %v239
        %v5292 = vpop.permute.xlu0 %5291
        %5294 = vset.pattern.permute.xlu0 11
        %5295 = vperm.xlu0 %5294, %v240
        %v5296 = vpop.permute.xlu0 %5295
        %5298 = vset.pattern.permute.xlu0 11
        %5299 = vperm.xlu0 %5298, %v241
        %v5300 = vpop.permute.xlu0 %5299
        %5302 = vset.pattern.permute.xlu0 11
        %5303 = vperm.xlu0 %5302, %v242
        %v5304 = vpop.permute.xlu0 %5303
        %5306 = vset.pattern.permute.xlu0 11
        %5307 = vperm.xlu0 %5306, %v243
        %v5308 = vpop.permute.xlu0 %5307
        %5310 = vset.pattern.permute.xlu0 11
        %5311 = vperm.xlu0 %5310, %v244
        %v5312 = vpop.permute.xlu0 %5311
        %5314 = vset.pattern.permute.xlu0 11
        %5315 = vperm.xlu0 %5314, %v245
        %v5316 = vpop.permute.xlu0 %5315
        %5318 = vset.pattern.permute.xlu0 11
        %5319 = vperm.xlu0 %5318, %v246
        %v5320 = vpop.permute.xlu0 %5319
        %5322 = vset.pattern.permute.xlu0 11
        %5323 = vperm.xlu0 %5322, %v247
        %v5324 = vpop.permute.xlu0 %5323
        %5326 = vset.pattern.permute.xlu0 11
        %5327 = vperm.xlu0 %5326, %v248
        %v5328 = vpop.permute.xlu0 %5327
        %5330 = vset.pattern.permute.xlu0 11
        %5331 = vperm.xlu0 %5330, %v249
        %v5332 = vpop.permute.xlu0 %5331
        %5334 = vset.pattern.permute.xlu0 11
        %5335 = vperm.xlu0 %5334, %v250
        %v5336 = vpop.permute.xlu0 %5335
        %v5338 = vmul.f32 %v5276, %v3409
        %v5339 = vmul.f32 %v5280, %v3409
        %v5340 = vmul.f32 %v5284, %v3409
        %v5341 = vmul.f32 %v5288, %v3409
        %v5342 = vmul.f32 %v5292, %v3409
        %v5343 = vmul.f32 %v5296, %v3409
        %v5344 = vmul.f32 %v5300, %v3409
        %v5345 = vmul.f32 %v5304, %v3409
        %v5346 = vmul.f32 %v5308, %v3409
        %v5347 = vmul.f32 %v5312, %v3409
        %v5348 = vmul.f32 %v5316, %v3409
        %v5349 = vmul.f32 %v5320, %v3409
        %v5350 = vmul.f32 %v5324, %v3409
        %v5351 = vmul.f32 %v5328, %v3409
        %v5352 = vmul.f32 %v5332, %v3409
        %v5353 = vmul.f32 %v5336, %v3409
        %5354 = vset.pattern.permute.xlu0 12
        %5355 = vperm.xlu0 %5354, %v235
        %v5356 = vpop.permute.xlu0 %5355
        %5358 = vset.pattern.permute.xlu0 12
        %5359 = vperm.xlu0 %5358, %v236
        %v5360 = vpop.permute.xlu0 %5359
        %5362 = vset.pattern.permute.xlu0 12
        %5363 = vperm.xlu0 %5362, %v237
        %v5364 = vpop.permute.xlu0 %5363
        %5366 = vset.pattern.permute.xlu0 12
        %5367 = vperm.xlu0 %5366, %v238
        %v5368 = vpop.permute.xlu0 %5367
        %5370 = vset.pattern.permute.xlu0 12
        %5371 = vperm.xlu0 %5370, %v239
        %v5372 = vpop.permute.xlu0 %5371
        %5374 = vset.pattern.permute.xlu0 12
        %5375 = vperm.xlu0 %5374, %v240
        %v5376 = vpop.permute.xlu0 %5375
        %5378 = vset.pattern.permute.xlu0 12
        %5379 = vperm.xlu0 %5378, %v241
        %v5380 = vpop.permute.xlu0 %5379
        %5382 = vset.pattern.permute.xlu0 12
        %5383 = vperm.xlu0 %5382, %v242
        %v5384 = vpop.permute.xlu0 %5383
        %5386 = vset.pattern.permute.xlu0 12
        %5387 = vperm.xlu0 %5386, %v243
        %v5388 = vpop.permute.xlu0 %5387
        %5390 = vset.pattern.permute.xlu0 12
        %5391 = vperm.xlu0 %5390, %v244
        %v5392 = vpop.permute.xlu0 %5391
        %5394 = vset.pattern.permute.xlu0 12
        %5395 = vperm.xlu0 %5394, %v245
        %v5396 = vpop.permute.xlu0 %5395
        %5398 = vset.pattern.permute.xlu0 12
        %5399 = vperm.xlu0 %5398, %v246
        %v5400 = vpop.permute.xlu0 %5399
        %5402 = vset.pattern.permute.xlu0 12
        %5403 = vperm.xlu0 %5402, %v247
        %v5404 = vpop.permute.xlu0 %5403
        %5406 = vset.pattern.permute.xlu0 12
        %5407 = vperm.xlu0 %5406, %v248
        %v5408 = vpop.permute.xlu0 %5407
        %5410 = vset.pattern.permute.xlu0 12
        %5411 = vperm.xlu0 %5410, %v249
        %v5412 = vpop.permute.xlu0 %5411
        %5414 = vset.pattern.permute.xlu0 12
        %5415 = vperm.xlu0 %5414, %v250
        %v5416 = vpop.permute.xlu0 %5415
        %v5418 = vmul.f32 %v5356, %v3493
        %v5419 = vmul.f32 %v5360, %v3493
        %v5420 = vmul.f32 %v5364, %v3493
        %v5421 = vmul.f32 %v5368, %v3493
        %v5422 = vmul.f32 %v5372, %v3493
        %v5423 = vmul.f32 %v5376, %v3493
        %v5424 = vmul.f32 %v5380, %v3493
        %v5425 = vmul.f32 %v5384, %v3493
        %v5426 = vmul.f32 %v5388, %v3493
        %v5427 = vmul.f32 %v5392, %v3493
        %v5428 = vmul.f32 %v5396, %v3493
        %v5429 = vmul.f32 %v5400, %v3493
        %v5430 = vmul.f32 %v5404, %v3493
        %v5431 = vmul.f32 %v5408, %v3493
        %v5432 = vmul.f32 %v5412, %v3493
        %v5433 = vmul.f32 %v5416, %v3493
        %5434 = vset.pattern.permute.xlu0 13
        %5435 = vperm.xlu0 %5434, %v235
        %v5436 = vpop.permute.xlu0 %5435
        %5438 = vset.pattern.permute.xlu0 13
        %5439 = vperm.xlu0 %5438, %v236
        %v5440 = vpop.permute.xlu0 %5439
        %5442 = vset.pattern.permute.xlu0 13
        %5443 = vperm.xlu0 %5442, %v237
        %v5444 = vpop.permute.xlu0 %5443
        %5446 = vset.pattern.permute.xlu0 13
        %5447 = vperm.xlu0 %5446, %v238
        %v5448 = vpop.permute.xlu0 %5447
        %5450 = vset.pattern.permute.xlu0 13
        %5451 = vperm.xlu0 %5450, %v239
        %v5452 = vpop.permute.xlu0 %5451
        %5454 = vset.pattern.permute.xlu0 13
        %5455 = vperm.xlu0 %5454, %v240
        %v5456 = vpop.permute.xlu0 %5455
        %5458 = vset.pattern.permute.xlu0 13
        %5459 = vperm.xlu0 %5458, %v241
        %v5460 = vpop.permute.xlu0 %5459
        %5462 = vset.pattern.permute.xlu0 13
        %5463 = vperm.xlu0 %5462, %v242
        %v5464 = vpop.permute.xlu0 %5463
        %5466 = vset.pattern.permute.xlu0 13
        %5467 = vperm.xlu0 %5466, %v243
        %v5468 = vpop.permute.xlu0 %5467
        %5470 = vset.pattern.permute.xlu0 13
        %5471 = vperm.xlu0 %5470, %v244
        %v5472 = vpop.permute.xlu0 %5471
        %5474 = vset.pattern.permute.xlu0 13
        %5475 = vperm.xlu0 %5474, %v245
        %v5476 = vpop.permute.xlu0 %5475
        %5478 = vset.pattern.permute.xlu0 13
        %5479 = vperm.xlu0 %5478, %v246
        %v5480 = vpop.permute.xlu0 %5479
        %5482 = vset.pattern.permute.xlu0 13
        %5483 = vperm.xlu0 %5482, %v247
        %v5484 = vpop.permute.xlu0 %5483
        %5486 = vset.pattern.permute.xlu0 13
        %5487 = vperm.xlu0 %5486, %v248
        %v5488 = vpop.permute.xlu0 %5487
        %5490 = vset.pattern.permute.xlu0 13
        %5491 = vperm.xlu0 %5490, %v249
        %v5492 = vpop.permute.xlu0 %5491
        %5494 = vset.pattern.permute.xlu0 13
        %5495 = vperm.xlu0 %5494, %v250
        %v5496 = vpop.permute.xlu0 %5495
        %v5498 = vmul.f32 %v5436, %v3577
        %v5499 = vmul.f32 %v5440, %v3577
        %v5500 = vmul.f32 %v5444, %v3577
        %v5501 = vmul.f32 %v5448, %v3577
        %v5502 = vmul.f32 %v5452, %v3577
        %v5503 = vmul.f32 %v5456, %v3577
        %v5504 = vmul.f32 %v5460, %v3577
        %v5505 = vmul.f32 %v5464, %v3577
        %v5506 = vmul.f32 %v5468, %v3577
        %v5507 = vmul.f32 %v5472, %v3577
        %v5508 = vmul.f32 %v5476, %v3577
        %v5509 = vmul.f32 %v5480, %v3577
        %v5510 = vmul.f32 %v5484, %v3577
        %v5511 = vmul.f32 %v5488, %v3577
        %v5512 = vmul.f32 %v5492, %v3577
        %v5513 = vmul.f32 %v5496, %v3577
        %v5514 = vadd.f32 %v5178, %v5258
        %v5515 = vadd.f32 %v5179, %v5259
        %v5516 = vadd.f32 %v5180, %v5260
        %v5517 = vadd.f32 %v5181, %v5261
        %v5518 = vadd.f32 %v5182, %v5262
        %v5519 = vadd.f32 %v5183, %v5263
        %v5520 = vadd.f32 %v5184, %v5264
        %v5521 = vadd.f32 %v5185, %v5265
        %v5522 = vadd.f32 %v5186, %v5266
        %v5523 = vadd.f32 %v5187, %v5267
        %v5524 = vadd.f32 %v5188, %v5268
        %v5525 = vadd.f32 %v5189, %v5269
        %v5526 = vadd.f32 %v5190, %v5270
        %v5527 = vadd.f32 %v5191, %v5271
        %v5528 = vadd.f32 %v5192, %v5272
        %v5529 = vadd.f32 %v5193, %v5273
        %v5530 = vadd.f32 %v5338, %v5418
        %v5531 = vadd.f32 %v5339, %v5419
        %v5532 = vadd.f32 %v5340, %v5420
        %v5533 = vadd.f32 %v5341, %v5421
        %v5534 = vadd.f32 %v5342, %v5422
        %v5535 = vadd.f32 %v5343, %v5423
        %v5536 = vadd.f32 %v5344, %v5424
        %v5537 = vadd.f32 %v5345, %v5425
        %v5538 = vadd.f32 %v5346, %v5426
        %v5539 = vadd.f32 %v5347, %v5427
        %v5540 = vadd.f32 %v5348, %v5428
        %v5541 = vadd.f32 %v5349, %v5429
        %v5542 = vadd.f32 %v5350, %v5430
        %v5543 = vadd.f32 %v5351, %v5431
        %v5544 = vadd.f32 %v5352, %v5432
        %v5545 = vadd.f32 %v5353, %v5433
        %v5546 = vadd.f32 %v5514, %v5530
        %v5547 = vadd.f32 %v5515, %v5531
        %v5548 = vadd.f32 %v5516, %v5532
        %v5549 = vadd.f32 %v5517, %v5533
        %v5550 = vadd.f32 %v5518, %v5534
        %v5551 = vadd.f32 %v5519, %v5535
        %v5552 = vadd.f32 %v5520, %v5536
        %v5553 = vadd.f32 %v5521, %v5537
        %v5554 = vadd.f32 %v5522, %v5538
        %v5555 = vadd.f32 %v5523, %v5539
        %v5556 = vadd.f32 %v5524, %v5540
        %v5557 = vadd.f32 %v5525, %v5541
        %v5558 = vadd.f32 %v5526, %v5542
        %v5559 = vadd.f32 %v5527, %v5543
        %v5560 = vadd.f32 %v5528, %v5544
        %v5561 = vadd.f32 %v5529, %v5545
        %v5562 = vadd.f32 %v5546, %v5498
        %v5563 = vadd.f32 %v5547, %v5499
        %v5564 = vadd.f32 %v5548, %v5500
        %v5565 = vadd.f32 %v5549, %v5501
        %v5566 = vadd.f32 %v5550, %v5502
        %v5567 = vadd.f32 %v5551, %v5503
        %v5568 = vadd.f32 %v5552, %v5504
        %v5569 = vadd.f32 %v5553, %v5505
        %v5570 = vadd.f32 %v5554, %v5506
        %v5571 = vadd.f32 %v5555, %v5507
        %v5572 = vadd.f32 %v5556, %v5508
        %v5573 = vadd.f32 %v5557, %v5509
        %v5574 = vadd.f32 %v5558, %v5510
        %v5575 = vadd.f32 %v5559, %v5511
        %v5576 = vadd.f32 %v5560, %v5512
        %v5577 = vadd.f32 %v5561, %v5513
        %v5578 = vadd.f32 %v2534, %v5098
        %v5579 = vadd.f32 %v2535, %v5099
        %v5580 = vadd.f32 %v2536, %v5100
        %v5581 = vadd.f32 %v2537, %v5101
        %v5582 = vadd.f32 %v2538, %v5102
        %v5583 = vadd.f32 %v2539, %v5103
        %v5584 = vadd.f32 %v2540, %v5104
        %v5585 = vadd.f32 %v2541, %v5105
        %v5586 = vadd.f32 %v2542, %v5106
        %v5587 = vadd.f32 %v2543, %v5107
        %v5588 = vadd.f32 %v2544, %v5108
        %v5589 = vadd.f32 %v2545, %v5109
        %v5590 = vadd.f32 %v2546, %v5110
        %v5591 = vadd.f32 %v2547, %v5111
        %v5592 = vadd.f32 %v2548, %v5112
        %v5593 = vadd.f32 %v2549, %v5113
        %v5594 = vadd.f32 %v5578, %v5562
        %v5595 = vadd.f32 %v5579, %v5563
        %v5596 = vadd.f32 %v5580, %v5564
        %v5597 = vadd.f32 %v5581, %v5565
        %v5598 = vadd.f32 %v5582, %v5566
        %v5599 = vadd.f32 %v5583, %v5567
        %v5600 = vadd.f32 %v5584, %v5568
        %v5601 = vadd.f32 %v5585, %v5569
        %v5602 = vadd.f32 %v5586, %v5570
        %v5603 = vadd.f32 %v5587, %v5571
        %v5604 = vadd.f32 %v5588, %v5572
        %v5605 = vadd.f32 %v5589, %v5573
        %v5606 = vadd.f32 %v5590, %v5574
        %v5607 = vadd.f32 %v5591, %v5575
        %v5608 = vadd.f32 %v5592, %v5576
        %v5609 = vadd.f32 %v5593, %v5577
        %v5610 = vmax.f32 %v5594, 0.0
        %v5611 = vmax.f32 %v5595, 0.0
        %v5612 = vmax.f32 %v5596, 0.0
        %v5613 = vmax.f32 %v5597, 0.0
        %v5614 = vmax.f32 %v5598, 0.0
        %v5615 = vmax.f32 %v5599, 0.0
        %v5616 = vmax.f32 %v5600, 0.0
        %v5617 = vmax.f32 %v5601, 0.0
        %v5618 = vmax.f32 %v5602, 0.0
        %v5619 = vmax.f32 %v5603, 0.0
        %v5620 = vmax.f32 %v5604, 0.0
        %v5621 = vmax.f32 %v5605, 0.0
        %v5622 = vmax.f32 %v5606, 0.0
        %v5623 = vmax.f32 %v5607, 0.0
        %v5624 = vmax.f32 %v5608, 0.0
        %v5625 = vmax.f32 %v5609, 0.0
        %5626 = vset.pattern.permute.xlu0 8
        %5627 = vperm.xlu0 %5626, %v4186
        %v5628 = vpop.permute.xlu0 %5627
        %5629 = vset.pattern.permute.xlu0 8
        %5630 = vperm.xlu0 %5629, %v4187
        %v5631 = vpop.permute.xlu0 %5630
        %5632 = vset.pattern.permute.xlu0 8
        %5633 = vperm.xlu0 %5632, %v4188
        %v5634 = vpop.permute.xlu0 %5633
        %5635 = vset.pattern.permute.xlu0 8
        %5636 = vperm.xlu0 %5635, %v4189
        %v5637 = vpop.permute.xlu0 %5636
        %5638 = vset.pattern.permute.xlu0 8
        %5639 = vperm.xlu0 %5638, %v4190
        %v5640 = vpop.permute.xlu0 %5639
        %5641 = vset.pattern.permute.xlu0 8
        %5642 = vperm.xlu0 %5641, %v4191
        %v5643 = vpop.permute.xlu0 %5642
        %5644 = vset.pattern.permute.xlu0 8
        %5645 = vperm.xlu0 %5644, %v4192
        %v5646 = vpop.permute.xlu0 %5645
        %5647 = vset.pattern.permute.xlu0 8
        %5648 = vperm.xlu0 %5647, %v4193
        %v5649 = vpop.permute.xlu0 %5648
        %5650 = vset.pattern.permute.xlu0 8
        %5651 = vperm.xlu0 %5650, %v4194
        %v5652 = vpop.permute.xlu0 %5651
        %5653 = vset.pattern.permute.xlu0 8
        %5654 = vperm.xlu0 %5653, %v4195
        %v5655 = vpop.permute.xlu0 %5654
        %5656 = vset.pattern.permute.xlu0 8
        %5657 = vperm.xlu0 %5656, %v4196
        %v5658 = vpop.permute.xlu0 %5657
        %5659 = vset.pattern.permute.xlu0 8
        %5660 = vperm.xlu0 %5659, %v4197
        %v5661 = vpop.permute.xlu0 %5660
        %5662 = vset.pattern.permute.xlu0 8
        %5663 = vperm.xlu0 %5662, %v4198
        %v5664 = vpop.permute.xlu0 %5663
        %5665 = vset.pattern.permute.xlu0 8
        %5666 = vperm.xlu0 %5665, %v4199
        %v5667 = vpop.permute.xlu0 %5666
        %5668 = vset.pattern.permute.xlu0 8
        %5669 = vperm.xlu0 %5668, %v4200
        %v5670 = vpop.permute.xlu0 %5669
        %5671 = vset.pattern.permute.xlu0 8
        %5672 = vperm.xlu0 %5671, %v4201
        %v5673 = vpop.permute.xlu0 %5672
        %vm5674 = vcmp.eq.s32.totalorder %v5628, 1
        %vm5675 = vcmp.eq.s32.totalorder %v5631, 1
        %vm5676 = vcmp.eq.s32.totalorder %v5634, 1
        %vm5677 = vcmp.eq.s32.totalorder %v5637, 1
        %vm5678 = vcmp.eq.s32.totalorder %v5640, 1
        %vm5679 = vcmp.eq.s32.totalorder %v5643, 1
        %vm5680 = vcmp.eq.s32.totalorder %v5646, 1
        %vm5681 = vcmp.eq.s32.totalorder %v5649, 1
        %vm5682 = vcmp.eq.s32.totalorder %v5652, 1
        %vm5683 = vcmp.eq.s32.totalorder %v5655, 1
        %vm5684 = vcmp.eq.s32.totalorder %v5658, 1
        %vm5685 = vcmp.eq.s32.totalorder %v5661, 1
        %vm5686 = vcmp.eq.s32.totalorder %v5664, 1
        %vm5687 = vcmp.eq.s32.totalorder %v5667, 1
        %vm5688 = vcmp.eq.s32.totalorder %v5670, 1
        %vm5689 = vcmp.eq.s32.totalorder %v5673, 1
        %v5690 = vsel %vm5674, %v5610, 0.0
        %v5691 = vsel %vm5675, %v5611, 0.0
        %v5692 = vsel %vm5676, %v5612, 0.0
        %v5693 = vsel %vm5677, %v5613, 0.0
        %v5694 = vsel %vm5678, %v5614, 0.0
        %v5695 = vsel %vm5679, %v5615, 0.0
        %v5696 = vsel %vm5680, %v5616, 0.0
        %v5697 = vsel %vm5681, %v5617, 0.0
        %v5698 = vsel %vm5682, %v5618, 0.0
        %v5699 = vsel %vm5683, %v5619, 0.0
        %v5700 = vsel %vm5684, %v5620, 0.0
        %v5701 = vsel %vm5685, %v5621, 0.0
        %v5702 = vsel %vm5686, %v5622, 0.0
        %v5703 = vsel %vm5687, %v5623, 0.0
        %v5704 = vsel %vm5688, %v5624, 0.0
        %v5705 = vsel %vm5689, %v5625, 0.0
        %v5706 = vadd.f32 %v5578, %v3241
        %v5707 = vadd.f32 %v5579, %v3241
        %v5708 = vadd.f32 %v5580, %v3241
        %v5709 = vadd.f32 %v5581, %v3241
        %v5710 = vadd.f32 %v5582, %v3241
        %v5711 = vadd.f32 %v5583, %v3241
        %v5712 = vadd.f32 %v5584, %v3241
        %v5713 = vadd.f32 %v5585, %v3241
        %v5714 = vadd.f32 %v5586, %v3241
        %v5715 = vadd.f32 %v5587, %v3241
        %v5716 = vadd.f32 %v5588, %v3241
        %v5717 = vadd.f32 %v5589, %v3241
        %v5718 = vadd.f32 %v5590, %v3241
        %v5719 = vadd.f32 %v5591, %v3241
        %v5720 = vadd.f32 %v5592, %v3241
        %v5721 = vadd.f32 %v5593, %v3241
        %v5722 = vmax.f32 %v5706, 0.0
        %v5723 = vmax.f32 %v5707, 0.0
        %v5724 = vmax.f32 %v5708, 0.0
        %v5725 = vmax.f32 %v5709, 0.0
        %v5726 = vmax.f32 %v5710, 0.0
        %v5727 = vmax.f32 %v5711, 0.0
        %v5728 = vmax.f32 %v5712, 0.0
        %v5729 = vmax.f32 %v5713, 0.0
        %v5730 = vmax.f32 %v5714, 0.0
        %v5731 = vmax.f32 %v5715, 0.0
        %v5732 = vmax.f32 %v5716, 0.0
        %v5733 = vmax.f32 %v5717, 0.0
        %v5734 = vmax.f32 %v5718, 0.0
        %v5735 = vmax.f32 %v5719, 0.0
        %v5736 = vmax.f32 %v5720, 0.0
        %v5737 = vmax.f32 %v5721, 0.0
        %5738 = vset.pattern.permute.xlu0 8
        %5739 = vperm.xlu0 %5738, %v4314
        %v5740 = vpop.permute.xlu0 %5739
        %5741 = vset.pattern.permute.xlu0 8
        %5742 = vperm.xlu0 %5741, %v4315
        %v5743 = vpop.permute.xlu0 %5742
        %5744 = vset.pattern.permute.xlu0 8
        %5745 = vperm.xlu0 %5744, %v4316
        %v5746 = vpop.permute.xlu0 %5745
        %5747 = vset.pattern.permute.xlu0 8
        %5748 = vperm.xlu0 %5747, %v4317
        %v5749 = vpop.permute.xlu0 %5748
        %5750 = vset.pattern.permute.xlu0 8
        %5751 = vperm.xlu0 %5750, %v4318
        %v5752 = vpop.permute.xlu0 %5751
        %5753 = vset.pattern.permute.xlu0 8
        %5754 = vperm.xlu0 %5753, %v4319
        %v5755 = vpop.permute.xlu0 %5754
        %5756 = vset.pattern.permute.xlu0 8
        %5757 = vperm.xlu0 %5756, %v4320
        %v5758 = vpop.permute.xlu0 %5757
        %5759 = vset.pattern.permute.xlu0 8
        %5760 = vperm.xlu0 %5759, %v4321
        %v5761 = vpop.permute.xlu0 %5760
        %5762 = vset.pattern.permute.xlu0 8
        %5763 = vperm.xlu0 %5762, %v4322
        %v5764 = vpop.permute.xlu0 %5763
        %5765 = vset.pattern.permute.xlu0 8
        %5766 = vperm.xlu0 %5765, %v4323
        %v5767 = vpop.permute.xlu0 %5766
        %5768 = vset.pattern.permute.xlu0 8
        %5769 = vperm.xlu0 %5768, %v4324
        %v5770 = vpop.permute.xlu0 %5769
        %5771 = vset.pattern.permute.xlu0 8
        %5772 = vperm.xlu0 %5771, %v4325
        %v5773 = vpop.permute.xlu0 %5772
        %5774 = vset.pattern.permute.xlu0 8
        %5775 = vperm.xlu0 %5774, %v4326
        %v5776 = vpop.permute.xlu0 %5775
        %5777 = vset.pattern.permute.xlu0 8
        %5778 = vperm.xlu0 %5777, %v4327
        %v5779 = vpop.permute.xlu0 %5778
        %5780 = vset.pattern.permute.xlu0 8
        %5781 = vperm.xlu0 %5780, %v4328
        %v5782 = vpop.permute.xlu0 %5781
        %5783 = vset.pattern.permute.xlu0 8
        %5784 = vperm.xlu0 %5783, %v4329
        %v5785 = vpop.permute.xlu0 %5784
        %vm5786 = vcmp.eq.s32.totalorder %v5740, 1
        %vm5787 = vcmp.eq.s32.totalorder %v5743, 1
        %vm5788 = vcmp.eq.s32.totalorder %v5746, 1
        %vm5789 = vcmp.eq.s32.totalorder %v5749, 1
        %vm5790 = vcmp.eq.s32.totalorder %v5752, 1
        %vm5791 = vcmp.eq.s32.totalorder %v5755, 1
        %vm5792 = vcmp.eq.s32.totalorder %v5758, 1
        %vm5793 = vcmp.eq.s32.totalorder %v5761, 1
        %vm5794 = vcmp.eq.s32.totalorder %v5764, 1
        %vm5795 = vcmp.eq.s32.totalorder %v5767, 1
        %vm5796 = vcmp.eq.s32.totalorder %v5770, 1
        %vm5797 = vcmp.eq.s32.totalorder %v5773, 1
        %vm5798 = vcmp.eq.s32.totalorder %v5776, 1
        %vm5799 = vcmp.eq.s32.totalorder %v5779, 1
        %vm5800 = vcmp.eq.s32.totalorder %v5782, 1
        %vm5801 = vcmp.eq.s32.totalorder %v5785, 1
        %v5802 = vsel %vm5786, %v5722, 0.0
        %v5803 = vsel %vm5787, %v5723, 0.0
        %v5804 = vsel %vm5788, %v5724, 0.0
        %v5805 = vsel %vm5789, %v5725, 0.0
        %v5806 = vsel %vm5790, %v5726, 0.0
        %v5807 = vsel %vm5791, %v5727, 0.0
        %v5808 = vsel %vm5792, %v5728, 0.0
        %v5809 = vsel %vm5793, %v5729, 0.0
        %v5810 = vsel %vm5794, %v5730, 0.0
        %v5811 = vsel %vm5795, %v5731, 0.0
        %v5812 = vsel %vm5796, %v5732, 0.0
        %v5813 = vsel %vm5797, %v5733, 0.0
        %v5814 = vsel %vm5798, %v5734, 0.0
        %v5815 = vsel %vm5799, %v5735, 0.0
        %v5816 = vsel %vm5800, %v5736, 0.0
        %v5817 = vsel %vm5801, %v5737, 0.0
        %v5818 = vadd.f32 %v5578, %v3325
        %v5819 = vadd.f32 %v5579, %v3325
        %v5820 = vadd.f32 %v5580, %v3325
        %v5821 = vadd.f32 %v5581, %v3325
        %v5822 = vadd.f32 %v5582, %v3325
        %v5823 = vadd.f32 %v5583, %v3325
        %v5824 = vadd.f32 %v5584, %v3325
        %v5825 = vadd.f32 %v5585, %v3325
        %v5826 = vadd.f32 %v5586, %v3325
        %v5827 = vadd.f32 %v5587, %v3325
        %v5828 = vadd.f32 %v5588, %v3325
        %v5829 = vadd.f32 %v5589, %v3325
        %v5830 = vadd.f32 %v5590, %v3325
        %v5831 = vadd.f32 %v5591, %v3325
        %v5832 = vadd.f32 %v5592, %v3325
        %v5833 = vadd.f32 %v5593, %v3325
        %v5834 = vmax.f32 %v5818, 0.0
        %v5835 = vmax.f32 %v5819, 0.0
        %v5836 = vmax.f32 %v5820, 0.0
        %v5837 = vmax.f32 %v5821, 0.0
        %v5838 = vmax.f32 %v5822, 0.0
        %v5839 = vmax.f32 %v5823, 0.0
        %v5840 = vmax.f32 %v5824, 0.0
        %v5841 = vmax.f32 %v5825, 0.0
        %v5842 = vmax.f32 %v5826, 0.0
        %v5843 = vmax.f32 %v5827, 0.0
        %v5844 = vmax.f32 %v5828, 0.0
        %v5845 = vmax.f32 %v5829, 0.0
        %v5846 = vmax.f32 %v5830, 0.0
        %v5847 = vmax.f32 %v5831, 0.0
        %v5848 = vmax.f32 %v5832, 0.0
        %v5849 = vmax.f32 %v5833, 0.0
        %v5850 = vsel %vm5786, %v5834, 0.0
        %v5851 = vsel %vm5787, %v5835, 0.0
        %v5852 = vsel %vm5788, %v5836, 0.0
        %v5853 = vsel %vm5789, %v5837, 0.0
        %v5854 = vsel %vm5790, %v5838, 0.0
        %v5855 = vsel %vm5791, %v5839, 0.0
        %v5856 = vsel %vm5792, %v5840, 0.0
        %v5857 = vsel %vm5793, %v5841, 0.0
        %v5858 = vsel %vm5794, %v5842, 0.0
        %v5859 = vsel %vm5795, %v5843, 0.0
        %v5860 = vsel %vm5796, %v5844, 0.0
        %v5861 = vsel %vm5797, %v5845, 0.0
        %v5862 = vsel %vm5798, %v5846, 0.0
        %v5863 = vsel %vm5799, %v5847, 0.0
        %v5864 = vsel %vm5800, %v5848, 0.0
        %v5865 = vsel %vm5801, %v5849, 0.0
        %v5866 = vadd.f32 %v5578, %v3409
        %v5867 = vadd.f32 %v5579, %v3409
        %v5868 = vadd.f32 %v5580, %v3409
        %v5869 = vadd.f32 %v5581, %v3409
        %v5870 = vadd.f32 %v5582, %v3409
        %v5871 = vadd.f32 %v5583, %v3409
        %v5872 = vadd.f32 %v5584, %v3409
        %v5873 = vadd.f32 %v5585, %v3409
        %v5874 = vadd.f32 %v5586, %v3409
        %v5875 = vadd.f32 %v5587, %v3409
        %v5876 = vadd.f32 %v5588, %v3409
        %v5877 = vadd.f32 %v5589, %v3409
        %v5878 = vadd.f32 %v5590, %v3409
        %v5879 = vadd.f32 %v5591, %v3409
        %v5880 = vadd.f32 %v5592, %v3409
        %v5881 = vadd.f32 %v5593, %v3409
        %v5882 = vmax.f32 %v5866, 0.0
        %v5883 = vmax.f32 %v5867, 0.0
        %v5884 = vmax.f32 %v5868, 0.0
        %v5885 = vmax.f32 %v5869, 0.0
        %v5886 = vmax.f32 %v5870, 0.0
        %v5887 = vmax.f32 %v5871, 0.0
        %v5888 = vmax.f32 %v5872, 0.0
        %v5889 = vmax.f32 %v5873, 0.0
        %v5890 = vmax.f32 %v5874, 0.0
        %v5891 = vmax.f32 %v5875, 0.0
        %v5892 = vmax.f32 %v5876, 0.0
        %v5893 = vmax.f32 %v5877, 0.0
        %v5894 = vmax.f32 %v5878, 0.0
        %v5895 = vmax.f32 %v5879, 0.0
        %v5896 = vmax.f32 %v5880, 0.0
        %v5897 = vmax.f32 %v5881, 0.0
        %v5898 = vsel %vm5786, %v5882, 0.0
        %v5899 = vsel %vm5787, %v5883, 0.0
        %v5900 = vsel %vm5788, %v5884, 0.0
        %v5901 = vsel %vm5789, %v5885, 0.0
        %v5902 = vsel %vm5790, %v5886, 0.0
        %v5903 = vsel %vm5791, %v5887, 0.0
        %v5904 = vsel %vm5792, %v5888, 0.0
        %v5905 = vsel %vm5793, %v5889, 0.0
        %v5906 = vsel %vm5794, %v5890, 0.0
        %v5907 = vsel %vm5795, %v5891, 0.0
        %v5908 = vsel %vm5796, %v5892, 0.0
        %v5909 = vsel %vm5797, %v5893, 0.0
        %v5910 = vsel %vm5798, %v5894, 0.0
        %v5911 = vsel %vm5799, %v5895, 0.0
        %v5912 = vsel %vm5800, %v5896, 0.0
        %v5913 = vsel %vm5801, %v5897, 0.0
        %v5914 = vadd.f32 %v5578, %v3493
        %v5915 = vadd.f32 %v5579, %v3493
        %v5916 = vadd.f32 %v5580, %v3493
        %v5917 = vadd.f32 %v5581, %v3493
        %v5918 = vadd.f32 %v5582, %v3493
        %v5919 = vadd.f32 %v5583, %v3493
        %v5920 = vadd.f32 %v5584, %v3493
        %v5921 = vadd.f32 %v5585, %v3493
        %v5922 = vadd.f32 %v5586, %v3493
        %v5923 = vadd.f32 %v5587, %v3493
        %v5924 = vadd.f32 %v5588, %v3493
        %v5925 = vadd.f32 %v5589, %v3493
        %v5926 = vadd.f32 %v5590, %v3493
        %v5927 = vadd.f32 %v5591, %v3493
        %v5928 = vadd.f32 %v5592, %v3493
        %v5929 = vadd.f32 %v5593, %v3493
        %v5930 = vmax.f32 %v5914, 0.0
        %v5931 = vmax.f32 %v5915, 0.0
        %v5932 = vmax.f32 %v5916, 0.0
        %v5933 = vmax.f32 %v5917, 0.0
        %v5934 = vmax.f32 %v5918, 0.0
        %v5935 = vmax.f32 %v5919, 0.0
        %v5936 = vmax.f32 %v5920, 0.0
        %v5937 = vmax.f32 %v5921, 0.0
        %v5938 = vmax.f32 %v5922, 0.0
        %v5939 = vmax.f32 %v5923, 0.0
        %v5940 = vmax.f32 %v5924, 0.0
        %v5941 = vmax.f32 %v5925, 0.0
        %v5942 = vmax.f32 %v5926, 0.0
        %v5943 = vmax.f32 %v5927, 0.0
        %v5944 = vmax.f32 %v5928, 0.0
        %v5945 = vmax.f32 %v5929, 0.0
        %v5946 = vsel %vm5786, %v5930, 0.0
        %v5947 = vsel %vm5787, %v5931, 0.0
        %v5948 = vsel %vm5788, %v5932, 0.0
        %v5949 = vsel %vm5789, %v5933, 0.0
        %v5950 = vsel %vm5790, %v5934, 0.0
        %v5951 = vsel %vm5791, %v5935, 0.0
        %v5952 = vsel %vm5792, %v5936, 0.0
        %v5953 = vsel %vm5793, %v5937, 0.0
        %v5954 = vsel %vm5794, %v5938, 0.0
        %v5955 = vsel %vm5795, %v5939, 0.0
        %v5956 = vsel %vm5796, %v5940, 0.0
        %v5957 = vsel %vm5797, %v5941, 0.0
        %v5958 = vsel %vm5798, %v5942, 0.0
        %v5959 = vsel %vm5799, %v5943, 0.0
        %v5960 = vsel %vm5800, %v5944, 0.0
        %v5961 = vsel %vm5801, %v5945, 0.0
        %v5962 = vadd.f32 %v5578, %v3577
        %v5963 = vadd.f32 %v5579, %v3577
        %v5964 = vadd.f32 %v5580, %v3577
        %v5965 = vadd.f32 %v5581, %v3577
        %v5966 = vadd.f32 %v5582, %v3577
        %v5967 = vadd.f32 %v5583, %v3577
        %v5968 = vadd.f32 %v5584, %v3577
        %v5969 = vadd.f32 %v5585, %v3577
        %v5970 = vadd.f32 %v5586, %v3577
        %v5971 = vadd.f32 %v5587, %v3577
        %v5972 = vadd.f32 %v5588, %v3577
        %v5973 = vadd.f32 %v5589, %v3577
        %v5974 = vadd.f32 %v5590, %v3577
        %v5975 = vadd.f32 %v5591, %v3577
        %v5976 = vadd.f32 %v5592, %v3577
        %v5977 = vadd.f32 %v5593, %v3577
        %v5978 = vmax.f32 %v5962, 0.0
        %v5979 = vmax.f32 %v5963, 0.0
        %v5980 = vmax.f32 %v5964, 0.0
        %v5981 = vmax.f32 %v5965, 0.0
        %v5982 = vmax.f32 %v5966, 0.0
        %v5983 = vmax.f32 %v5967, 0.0
        %v5984 = vmax.f32 %v5968, 0.0
        %v5985 = vmax.f32 %v5969, 0.0
        %v5986 = vmax.f32 %v5970, 0.0
        %v5987 = vmax.f32 %v5971, 0.0
        %v5988 = vmax.f32 %v5972, 0.0
        %v5989 = vmax.f32 %v5973, 0.0
        %v5990 = vmax.f32 %v5974, 0.0
        %v5991 = vmax.f32 %v5975, 0.0
        %v5992 = vmax.f32 %v5976, 0.0
        %v5993 = vmax.f32 %v5977, 0.0
        %v5994 = vsel %vm5786, %v5978, 0.0
        %v5995 = vsel %vm5787, %v5979, 0.0
        %v5996 = vsel %vm5788, %v5980, 0.0
        %v5997 = vsel %vm5789, %v5981, 0.0
        %v5998 = vsel %vm5790, %v5982, 0.0
        %v5999 = vsel %vm5791, %v5983, 0.0
        %v6000 = vsel %vm5792, %v5984, 0.0
        %v6001 = vsel %vm5793, %v5985, 0.0
        %v6002 = vsel %vm5794, %v5986, 0.0
        %v6003 = vsel %vm5795, %v5987, 0.0
        %v6004 = vsel %vm5796, %v5988, 0.0
        %v6005 = vsel %vm5797, %v5989, 0.0
        %v6006 = vsel %vm5798, %v5990, 0.0
        %v6007 = vsel %vm5799, %v5991, 0.0
        %v6008 = vsel %vm5800, %v5992, 0.0
        %v6009 = vsel %vm5801, %v5993, 0.0
        %v6010 = vadd.f32 %v5690, %v5802
        %v6011 = vadd.f32 %v5691, %v5803
        %v6012 = vadd.f32 %v5692, %v5804
        %v6013 = vadd.f32 %v5693, %v5805
        %v6014 = vadd.f32 %v5694, %v5806
        %v6015 = vadd.f32 %v5695, %v5807
        %v6016 = vadd.f32 %v5696, %v5808
        %v6017 = vadd.f32 %v5697, %v5809
        %v6018 = vadd.f32 %v5698, %v5810
        %v6019 = vadd.f32 %v5699, %v5811
        %v6020 = vadd.f32 %v5700, %v5812
        %v6021 = vadd.f32 %v5701, %v5813
        %v6022 = vadd.f32 %v5702, %v5814
        %v6023 = vadd.f32 %v5703, %v5815
        %v6024 = vadd.f32 %v5704, %v5816
        %v6025 = vadd.f32 %v5705, %v5817
        %v6026 = vadd.f32 %v5850, %v5898
        %v6027 = vadd.f32 %v5851, %v5899
        %v6028 = vadd.f32 %v5852, %v5900
        %v6029 = vadd.f32 %v5853, %v5901
        %v6030 = vadd.f32 %v5854, %v5902
        %v6031 = vadd.f32 %v5855, %v5903
        %v6032 = vadd.f32 %v5856, %v5904
        %v6033 = vadd.f32 %v5857, %v5905
        %v6034 = vadd.f32 %v5858, %v5906
        %v6035 = vadd.f32 %v5859, %v5907
        %v6036 = vadd.f32 %v5860, %v5908
        %v6037 = vadd.f32 %v5861, %v5909
        %v6038 = vadd.f32 %v5862, %v5910
        %v6039 = vadd.f32 %v5863, %v5911
        %v6040 = vadd.f32 %v5864, %v5912
        %v6041 = vadd.f32 %v5865, %v5913
        %v6042 = vadd.f32 %v5946, %v5994
        %v6043 = vadd.f32 %v5947, %v5995
        %v6044 = vadd.f32 %v5948, %v5996
        %v6045 = vadd.f32 %v5949, %v5997
        %v6046 = vadd.f32 %v5950, %v5998
        %v6047 = vadd.f32 %v5951, %v5999
        %v6048 = vadd.f32 %v5952, %v6000
        %v6049 = vadd.f32 %v5953, %v6001
        %v6050 = vadd.f32 %v5954, %v6002
        %v6051 = vadd.f32 %v5955, %v6003
        %v6052 = vadd.f32 %v5956, %v6004
        %v6053 = vadd.f32 %v5957, %v6005
        %v6054 = vadd.f32 %v5958, %v6006
        %v6055 = vadd.f32 %v5959, %v6007
        %v6056 = vadd.f32 %v5960, %v6008
        %v6057 = vadd.f32 %v5961, %v6009
        %v6058 = vadd.f32 %v6010, %v6026
        %v6059 = vadd.f32 %v6011, %v6027
        %v6060 = vadd.f32 %v6012, %v6028
        %v6061 = vadd.f32 %v6013, %v6029
        %v6062 = vadd.f32 %v6014, %v6030
        %v6063 = vadd.f32 %v6015, %v6031
        %v6064 = vadd.f32 %v6016, %v6032
        %v6065 = vadd.f32 %v6017, %v6033
        %v6066 = vadd.f32 %v6018, %v6034
        %v6067 = vadd.f32 %v6019, %v6035
        %v6068 = vadd.f32 %v6020, %v6036
        %v6069 = vadd.f32 %v6021, %v6037
        %v6070 = vadd.f32 %v6022, %v6038
        %v6071 = vadd.f32 %v6023, %v6039
        %v6072 = vadd.f32 %v6024, %v6040
        %v6073 = vadd.f32 %v6025, %v6041
        %v6074 = vadd.f32 %v6058, %v6042
        %v6075 = vadd.f32 %v6059, %v6043
        %v6076 = vadd.f32 %v6060, %v6044
        %v6077 = vadd.f32 %v6061, %v6045
        %v6078 = vadd.f32 %v6062, %v6046
        %v6079 = vadd.f32 %v6063, %v6047
        %v6080 = vadd.f32 %v6064, %v6048
        %v6081 = vadd.f32 %v6065, %v6049
        %v6082 = vadd.f32 %v6066, %v6050
        %v6083 = vadd.f32 %v6067, %v6051
        %v6084 = vadd.f32 %v6068, %v6052
        %v6085 = vadd.f32 %v6069, %v6053
        %v6086 = vadd.f32 %v6070, %v6054
        %v6087 = vadd.f32 %v6071, %v6055
        %v6088 = vadd.f32 %v6072, %v6056
        %v6089 = vadd.f32 %v6073, %v6057
        %6090 = vset.pattern.permute.xlu0 16
        %6091 = vperm.xlu0 %6090, %v2598
        %v6092 = vpop.permute.xlu0 %6091
        %6094 = vset.pattern.permute.xlu0 16
        %6095 = vperm.xlu0 %6094, %v2599
        %v6096 = vpop.permute.xlu0 %6095
        %6098 = vset.pattern.permute.xlu0 16
        %6099 = vperm.xlu0 %6098, %v2600
        %v6100 = vpop.permute.xlu0 %6099
        %6102 = vset.pattern.permute.xlu0 16
        %6103 = vperm.xlu0 %6102, %v2601
        %v6104 = vpop.permute.xlu0 %6103
        %6106 = vset.pattern.permute.xlu0 16
        %6107 = vperm.xlu0 %6106, %v2602
        %v6108 = vpop.permute.xlu0 %6107
        %6110 = vset.pattern.permute.xlu0 16
        %6111 = vperm.xlu0 %6110, %v2603
        %v6112 = vpop.permute.xlu0 %6111
        %6114 = vset.pattern.permute.xlu0 16
        %6115 = vperm.xlu0 %6114, %v2604
        %v6116 = vpop.permute.xlu0 %6115
        %6118 = vset.pattern.permute.xlu0 16
        %6119 = vperm.xlu0 %6118, %v2605
        %v6120 = vpop.permute.xlu0 %6119
        %6122 = vset.pattern.permute.xlu0 16
        %6123 = vperm.xlu0 %6122, %v2606
        %v6124 = vpop.permute.xlu0 %6123
        %6126 = vset.pattern.permute.xlu0 16
        %6127 = vperm.xlu0 %6126, %v2607
        %v6128 = vpop.permute.xlu0 %6127
        %6130 = vset.pattern.permute.xlu0 16
        %6131 = vperm.xlu0 %6130, %v2608
        %v6132 = vpop.permute.xlu0 %6131
        %6134 = vset.pattern.permute.xlu0 16
        %6135 = vperm.xlu0 %6134, %v2609
        %v6136 = vpop.permute.xlu0 %6135
        %6138 = vset.pattern.permute.xlu0 16
        %6139 = vperm.xlu0 %6138, %v2610
        %v6140 = vpop.permute.xlu0 %6139
        %6142 = vset.pattern.permute.xlu0 16
        %6143 = vperm.xlu0 %6142, %v2611
        %v6144 = vpop.permute.xlu0 %6143
        %6146 = vset.pattern.permute.xlu0 16
        %6147 = vperm.xlu0 %6146, %v2612
        %v6148 = vpop.permute.xlu0 %6147
        %6150 = vset.pattern.permute.xlu0 16
        %6151 = vperm.xlu0 %6150, %v2613
        %v6152 = vpop.permute.xlu0 %6151
        %v6154 = vmul.f32 %v6092, %v2697
        %v6155 = vmul.f32 %v6096, %v2697
        %v6156 = vmul.f32 %v6100, %v2697
        %v6157 = vmul.f32 %v6104, %v2697
        %v6158 = vmul.f32 %v6108, %v2697
        %v6159 = vmul.f32 %v6112, %v2697
        %v6160 = vmul.f32 %v6116, %v2697
        %v6161 = vmul.f32 %v6120, %v2697
        %v6162 = vmul.f32 %v6124, %v2697
        %v6163 = vmul.f32 %v6128, %v2697
        %v6164 = vmul.f32 %v6132, %v2697
        %v6165 = vmul.f32 %v6136, %v2697
        %v6166 = vmul.f32 %v6140, %v2697
        %v6167 = vmul.f32 %v6144, %v2697
        %v6168 = vmul.f32 %v6148, %v2697
        %v6169 = vmul.f32 %v6152, %v2697
        %6170 = vset.pattern.permute.xlu0 16
        %6171 = vperm.xlu0 %6170, %v2730
        %v6172 = vpop.permute.xlu0 %6171
        %6174 = vset.pattern.permute.xlu0 16
        %6175 = vperm.xlu0 %6174, %v2731
        %v6176 = vpop.permute.xlu0 %6175
        %6178 = vset.pattern.permute.xlu0 16
        %6179 = vperm.xlu0 %6178, %v2732
        %v6180 = vpop.permute.xlu0 %6179
        %6182 = vset.pattern.permute.xlu0 16
        %6183 = vperm.xlu0 %6182, %v2733
        %v6184 = vpop.permute.xlu0 %6183
        %6186 = vset.pattern.permute.xlu0 16
        %6187 = vperm.xlu0 %6186, %v2734
        %v6188 = vpop.permute.xlu0 %6187
        %6190 = vset.pattern.permute.xlu0 16
        %6191 = vperm.xlu0 %6190, %v2735
        %v6192 = vpop.permute.xlu0 %6191
        %6194 = vset.pattern.permute.xlu0 16
        %6195 = vperm.xlu0 %6194, %v2736
        %v6196 = vpop.permute.xlu0 %6195
        %6198 = vset.pattern.permute.xlu0 16
        %6199 = vperm.xlu0 %6198, %v2737
        %v6200 = vpop.permute.xlu0 %6199
        %6202 = vset.pattern.permute.xlu0 16
        %6203 = vperm.xlu0 %6202, %v2738
        %v6204 = vpop.permute.xlu0 %6203
        %6206 = vset.pattern.permute.xlu0 16
        %6207 = vperm.xlu0 %6206, %v2739
        %v6208 = vpop.permute.xlu0 %6207
        %6210 = vset.pattern.permute.xlu0 16
        %6211 = vperm.xlu0 %6210, %v2740
        %v6212 = vpop.permute.xlu0 %6211
        %6214 = vset.pattern.permute.xlu0 16
        %6215 = vperm.xlu0 %6214, %v2741
        %v6216 = vpop.permute.xlu0 %6215
        %6218 = vset.pattern.permute.xlu0 16
        %6219 = vperm.xlu0 %6218, %v2742
        %v6220 = vpop.permute.xlu0 %6219
        %6222 = vset.pattern.permute.xlu0 16
        %6223 = vperm.xlu0 %6222, %v2743
        %v6224 = vpop.permute.xlu0 %6223
        %6226 = vset.pattern.permute.xlu0 16
        %6227 = vperm.xlu0 %6226, %v2744
        %v6228 = vpop.permute.xlu0 %6227
        %6230 = vset.pattern.permute.xlu0 16
        %6231 = vperm.xlu0 %6230, %v2745
        %v6232 = vpop.permute.xlu0 %6231
        %v6234 = vmul.f32 %v6172, %v2829
        %v6235 = vmul.f32 %v6176, %v2829
        %v6236 = vmul.f32 %v6180, %v2829
        %v6237 = vmul.f32 %v6184, %v2829
        %v6238 = vmul.f32 %v6188, %v2829
        %v6239 = vmul.f32 %v6192, %v2829
        %v6240 = vmul.f32 %v6196, %v2829
        %v6241 = vmul.f32 %v6200, %v2829
        %v6242 = vmul.f32 %v6204, %v2829
        %v6243 = vmul.f32 %v6208, %v2829
        %v6244 = vmul.f32 %v6212, %v2829
        %v6245 = vmul.f32 %v6216, %v2829
        %v6246 = vmul.f32 %v6220, %v2829
        %v6247 = vmul.f32 %v6224, %v2829
        %v6248 = vmul.f32 %v6228, %v2829
        %v6249 = vmul.f32 %v6232, %v2829
        %6250 = vset.pattern.permute.xlu0 16
        %6251 = vperm.xlu0 %6250, %v2862
        %v6252 = vpop.permute.xlu0 %6251
        %6254 = vset.pattern.permute.xlu0 16
        %6255 = vperm.xlu0 %6254, %v2863
        %v6256 = vpop.permute.xlu0 %6255
        %6258 = vset.pattern.permute.xlu0 16
        %6259 = vperm.xlu0 %6258, %v2864
        %v6260 = vpop.permute.xlu0 %6259
        %6262 = vset.pattern.permute.xlu0 16
        %6263 = vperm.xlu0 %6262, %v2865
        %v6264 = vpop.permute.xlu0 %6263
        %6266 = vset.pattern.permute.xlu0 16
        %6267 = vperm.xlu0 %6266, %v2866
        %v6268 = vpop.permute.xlu0 %6267
        %6270 = vset.pattern.permute.xlu0 16
        %6271 = vperm.xlu0 %6270, %v2867
        %v6272 = vpop.permute.xlu0 %6271
        %6274 = vset.pattern.permute.xlu0 16
        %6275 = vperm.xlu0 %6274, %v2868
        %v6276 = vpop.permute.xlu0 %6275
        %6278 = vset.pattern.permute.xlu0 16
        %6279 = vperm.xlu0 %6278, %v2869
        %v6280 = vpop.permute.xlu0 %6279
        %6282 = vset.pattern.permute.xlu0 16
        %6283 = vperm.xlu0 %6282, %v2870
        %v6284 = vpop.permute.xlu0 %6283
        %6286 = vset.pattern.permute.xlu0 16
        %6287 = vperm.xlu0 %6286, %v2871
        %v6288 = vpop.permute.xlu0 %6287
        %6290 = vset.pattern.permute.xlu0 16
        %6291 = vperm.xlu0 %6290, %v2872
        %v6292 = vpop.permute.xlu0 %6291
        %6294 = vset.pattern.permute.xlu0 16
        %6295 = vperm.xlu0 %6294, %v2873
        %v6296 = vpop.permute.xlu0 %6295
        %6298 = vset.pattern.permute.xlu0 16
        %6299 = vperm.xlu0 %6298, %v2874
        %v6300 = vpop.permute.xlu0 %6299
        %6302 = vset.pattern.permute.xlu0 16
        %6303 = vperm.xlu0 %6302, %v2875
        %v6304 = vpop.permute.xlu0 %6303
        %6306 = vset.pattern.permute.xlu0 16
        %6307 = vperm.xlu0 %6306, %v2876
        %v6308 = vpop.permute.xlu0 %6307
        %6310 = vset.pattern.permute.xlu0 16
        %6311 = vperm.xlu0 %6310, %v2877
        %v6312 = vpop.permute.xlu0 %6311
        %v6314 = vmul.f32 %v6252, %v2961
        %v6315 = vmul.f32 %v6256, %v2961
        %v6316 = vmul.f32 %v6260, %v2961
        %v6317 = vmul.f32 %v6264, %v2961
        %v6318 = vmul.f32 %v6268, %v2961
        %v6319 = vmul.f32 %v6272, %v2961
        %v6320 = vmul.f32 %v6276, %v2961
        %v6321 = vmul.f32 %v6280, %v2961
        %v6322 = vmul.f32 %v6284, %v2961
        %v6323 = vmul.f32 %v6288, %v2961
        %v6324 = vmul.f32 %v6292, %v2961
        %v6325 = vmul.f32 %v6296, %v2961
        %v6326 = vmul.f32 %v6300, %v2961
        %v6327 = vmul.f32 %v6304, %v2961
        %v6328 = vmul.f32 %v6308, %v2961
        %v6329 = vmul.f32 %v6312, %v2961
        %6330 = vset.pattern.permute.xlu0 16
        %6331 = vperm.xlu0 %6330, %v2994
        %v6332 = vpop.permute.xlu0 %6331
        %6334 = vset.pattern.permute.xlu0 16
        %6335 = vperm.xlu0 %6334, %v2995
        %v6336 = vpop.permute.xlu0 %6335
        %6338 = vset.pattern.permute.xlu0 16
        %6339 = vperm.xlu0 %6338, %v2996
        %v6340 = vpop.permute.xlu0 %6339
        %6342 = vset.pattern.permute.xlu0 16
        %6343 = vperm.xlu0 %6342, %v2997
        %v6344 = vpop.permute.xlu0 %6343
        %6346 = vset.pattern.permute.xlu0 16
        %6347 = vperm.xlu0 %6346, %v2998
        %v6348 = vpop.permute.xlu0 %6347
        %6350 = vset.pattern.permute.xlu0 16
        %6351 = vperm.xlu0 %6350, %v2999
        %v6352 = vpop.permute.xlu0 %6351
        %6354 = vset.pattern.permute.xlu0 16
        %6355 = vperm.xlu0 %6354, %v3000
        %v6356 = vpop.permute.xlu0 %6355
        %6358 = vset.pattern.permute.xlu0 16
        %6359 = vperm.xlu0 %6358, %v3001
        %v6360 = vpop.permute.xlu0 %6359
        %6362 = vset.pattern.permute.xlu0 16
        %6363 = vperm.xlu0 %6362, %v3002
        %v6364 = vpop.permute.xlu0 %6363
        %6366 = vset.pattern.permute.xlu0 16
        %6367 = vperm.xlu0 %6366, %v3003
        %v6368 = vpop.permute.xlu0 %6367
        %6370 = vset.pattern.permute.xlu0 16
        %6371 = vperm.xlu0 %6370, %v3004
        %v6372 = vpop.permute.xlu0 %6371
        %6374 = vset.pattern.permute.xlu0 16
        %6375 = vperm.xlu0 %6374, %v3005
        %v6376 = vpop.permute.xlu0 %6375
        %6378 = vset.pattern.permute.xlu0 16
        %6379 = vperm.xlu0 %6378, %v3006
        %v6380 = vpop.permute.xlu0 %6379
        %6382 = vset.pattern.permute.xlu0 16
        %6383 = vperm.xlu0 %6382, %v3007
        %v6384 = vpop.permute.xlu0 %6383
        %6386 = vset.pattern.permute.xlu0 16
        %6387 = vperm.xlu0 %6386, %v3008
        %v6388 = vpop.permute.xlu0 %6387
        %6390 = vset.pattern.permute.xlu0 16
        %6391 = vperm.xlu0 %6390, %v3009
        %v6392 = vpop.permute.xlu0 %6391
        %v6394 = vmul.f32 %v6332, %v3093
        %v6395 = vmul.f32 %v6336, %v3093
        %v6396 = vmul.f32 %v6340, %v3093
        %v6397 = vmul.f32 %v6344, %v3093
        %v6398 = vmul.f32 %v6348, %v3093
        %v6399 = vmul.f32 %v6352, %v3093
        %v6400 = vmul.f32 %v6356, %v3093
        %v6401 = vmul.f32 %v6360, %v3093
        %v6402 = vmul.f32 %v6364, %v3093
        %v6403 = vmul.f32 %v6368, %v3093
        %v6404 = vmul.f32 %v6372, %v3093
        %v6405 = vmul.f32 %v6376, %v3093
        %v6406 = vmul.f32 %v6380, %v3093
        %v6407 = vmul.f32 %v6384, %v3093
        %v6408 = vmul.f32 %v6388, %v3093
        %v6409 = vmul.f32 %v6392, %v3093
        %v6410 = vadd.f32 %v6154, %v6234
        %v6411 = vadd.f32 %v6155, %v6235
        %v6412 = vadd.f32 %v6156, %v6236
        %v6413 = vadd.f32 %v6157, %v6237
        %v6414 = vadd.f32 %v6158, %v6238
        %v6415 = vadd.f32 %v6159, %v6239
        %v6416 = vadd.f32 %v6160, %v6240
        %v6417 = vadd.f32 %v6161, %v6241
        %v6418 = vadd.f32 %v6162, %v6242
        %v6419 = vadd.f32 %v6163, %v6243
        %v6420 = vadd.f32 %v6164, %v6244
        %v6421 = vadd.f32 %v6165, %v6245
        %v6422 = vadd.f32 %v6166, %v6246
        %v6423 = vadd.f32 %v6167, %v6247
        %v6424 = vadd.f32 %v6168, %v6248
        %v6425 = vadd.f32 %v6169, %v6249
        %v6426 = vadd.f32 %v6314, %v6394
        %v6427 = vadd.f32 %v6315, %v6395
        %v6428 = vadd.f32 %v6316, %v6396
        %v6429 = vadd.f32 %v6317, %v6397
        %v6430 = vadd.f32 %v6318, %v6398
        %v6431 = vadd.f32 %v6319, %v6399
        %v6432 = vadd.f32 %v6320, %v6400
        %v6433 = vadd.f32 %v6321, %v6401
        %v6434 = vadd.f32 %v6322, %v6402
        %v6435 = vadd.f32 %v6323, %v6403
        %v6436 = vadd.f32 %v6324, %v6404
        %v6437 = vadd.f32 %v6325, %v6405
        %v6438 = vadd.f32 %v6326, %v6406
        %v6439 = vadd.f32 %v6327, %v6407
        %v6440 = vadd.f32 %v6328, %v6408
        %v6441 = vadd.f32 %v6329, %v6409
        %v6442 = vadd.f32 %v6410, %v6426
        %v6443 = vadd.f32 %v6411, %v6427
        %v6444 = vadd.f32 %v6412, %v6428
        %v6445 = vadd.f32 %v6413, %v6429
        %v6446 = vadd.f32 %v6414, %v6430
        %v6447 = vadd.f32 %v6415, %v6431
        %v6448 = vadd.f32 %v6416, %v6432
        %v6449 = vadd.f32 %v6417, %v6433
        %v6450 = vadd.f32 %v6418, %v6434
        %v6451 = vadd.f32 %v6419, %v6435
        %v6452 = vadd.f32 %v6420, %v6436
        %v6453 = vadd.f32 %v6421, %v6437
        %v6454 = vadd.f32 %v6422, %v6438
        %v6455 = vadd.f32 %v6423, %v6439
        %v6456 = vadd.f32 %v6424, %v6440
        %v6457 = vadd.f32 %v6425, %v6441
        %6458 = vset.pattern.permute.xlu0 17
        %6459 = vperm.xlu0 %6458, %v235
        %v6460 = vpop.permute.xlu0 %6459
        %6462 = vset.pattern.permute.xlu0 17
        %6463 = vperm.xlu0 %6462, %v236
        %v6464 = vpop.permute.xlu0 %6463
        %6466 = vset.pattern.permute.xlu0 17
        %6467 = vperm.xlu0 %6466, %v237
        %v6468 = vpop.permute.xlu0 %6467
        %6470 = vset.pattern.permute.xlu0 17
        %6471 = vperm.xlu0 %6470, %v238
        %v6472 = vpop.permute.xlu0 %6471
        %6474 = vset.pattern.permute.xlu0 17
        %6475 = vperm.xlu0 %6474, %v239
        %v6476 = vpop.permute.xlu0 %6475
        %6478 = vset.pattern.permute.xlu0 17
        %6479 = vperm.xlu0 %6478, %v240
        %v6480 = vpop.permute.xlu0 %6479
        %6482 = vset.pattern.permute.xlu0 17
        %6483 = vperm.xlu0 %6482, %v241
        %v6484 = vpop.permute.xlu0 %6483
        %6486 = vset.pattern.permute.xlu0 17
        %6487 = vperm.xlu0 %6486, %v242
        %v6488 = vpop.permute.xlu0 %6487
        %6490 = vset.pattern.permute.xlu0 17
        %6491 = vperm.xlu0 %6490, %v243
        %v6492 = vpop.permute.xlu0 %6491
        %6494 = vset.pattern.permute.xlu0 17
        %6495 = vperm.xlu0 %6494, %v244
        %v6496 = vpop.permute.xlu0 %6495
        %6498 = vset.pattern.permute.xlu0 17
        %6499 = vperm.xlu0 %6498, %v245
        %v6500 = vpop.permute.xlu0 %6499
        %6502 = vset.pattern.permute.xlu0 17
        %6503 = vperm.xlu0 %6502, %v246
        %v6504 = vpop.permute.xlu0 %6503
        %6506 = vset.pattern.permute.xlu0 17
        %6507 = vperm.xlu0 %6506, %v247
        %v6508 = vpop.permute.xlu0 %6507
        %6510 = vset.pattern.permute.xlu0 17
        %6511 = vperm.xlu0 %6510, %v248
        %v6512 = vpop.permute.xlu0 %6511
        %6514 = vset.pattern.permute.xlu0 17
        %6515 = vperm.xlu0 %6514, %v249
        %v6516 = vpop.permute.xlu0 %6515
        %6518 = vset.pattern.permute.xlu0 17
        %6519 = vperm.xlu0 %6518, %v250
        %v6520 = vpop.permute.xlu0 %6519
        %v6522 = vmul.f32 %v6460, %v3241
        %v6523 = vmul.f32 %v6464, %v3241
        %v6524 = vmul.f32 %v6468, %v3241
        %v6525 = vmul.f32 %v6472, %v3241
        %v6526 = vmul.f32 %v6476, %v3241
        %v6527 = vmul.f32 %v6480, %v3241
        %v6528 = vmul.f32 %v6484, %v3241
        %v6529 = vmul.f32 %v6488, %v3241
        %v6530 = vmul.f32 %v6492, %v3241
        %v6531 = vmul.f32 %v6496, %v3241
        %v6532 = vmul.f32 %v6500, %v3241
        %v6533 = vmul.f32 %v6504, %v3241
        %v6534 = vmul.f32 %v6508, %v3241
        %v6535 = vmul.f32 %v6512, %v3241
        %v6536 = vmul.f32 %v6516, %v3241
        %v6537 = vmul.f32 %v6520, %v3241
        %6538 = vset.pattern.permute.xlu0 18
        %6539 = vperm.xlu0 %6538, %v235
        %v6540 = vpop.permute.xlu0 %6539
        %6542 = vset.pattern.permute.xlu0 18
        %6543 = vperm.xlu0 %6542, %v236
        %v6544 = vpop.permute.xlu0 %6543
        %6546 = vset.pattern.permute.xlu0 18
        %6547 = vperm.xlu0 %6546, %v237
        %v6548 = vpop.permute.xlu0 %6547
        %6550 = vset.pattern.permute.xlu0 18
        %6551 = vperm.xlu0 %6550, %v238
        %v6552 = vpop.permute.xlu0 %6551
        %6554 = vset.pattern.permute.xlu0 18
        %6555 = vperm.xlu0 %6554, %v239
        %v6556 = vpop.permute.xlu0 %6555
        %6558 = vset.pattern.permute.xlu0 18
        %6559 = vperm.xlu0 %6558, %v240
        %v6560 = vpop.permute.xlu0 %6559
        %6562 = vset.pattern.permute.xlu0 18
        %6563 = vperm.xlu0 %6562, %v241
        %v6564 = vpop.permute.xlu0 %6563
        %6566 = vset.pattern.permute.xlu0 18
        %6567 = vperm.xlu0 %6566, %v242
        %v6568 = vpop.permute.xlu0 %6567
        %6570 = vset.pattern.permute.xlu0 18
        %6571 = vperm.xlu0 %6570, %v243
        %v6572 = vpop.permute.xlu0 %6571
        %6574 = vset.pattern.permute.xlu0 18
        %6575 = vperm.xlu0 %6574, %v244
        %v6576 = vpop.permute.xlu0 %6575
        %6578 = vset.pattern.permute.xlu0 18
        %6579 = vperm.xlu0 %6578, %v245
        %v6580 = vpop.permute.xlu0 %6579
        %6582 = vset.pattern.permute.xlu0 18
        %6583 = vperm.xlu0 %6582, %v246
        %v6584 = vpop.permute.xlu0 %6583
        %6586 = vset.pattern.permute.xlu0 18
        %6587 = vperm.xlu0 %6586, %v247
        %v6588 = vpop.permute.xlu0 %6587
        %6590 = vset.pattern.permute.xlu0 18
        %6591 = vperm.xlu0 %6590, %v248
        %v6592 = vpop.permute.xlu0 %6591
        %6594 = vset.pattern.permute.xlu0 18
        %6595 = vperm.xlu0 %6594, %v249
        %v6596 = vpop.permute.xlu0 %6595
        %6598 = vset.pattern.permute.xlu0 18
        %6599 = vperm.xlu0 %6598, %v250
        %v6600 = vpop.permute.xlu0 %6599
        %v6602 = vmul.f32 %v6540, %v3325
        %v6603 = vmul.f32 %v6544, %v3325
        %v6604 = vmul.f32 %v6548, %v3325
        %v6605 = vmul.f32 %v6552, %v3325
        %v6606 = vmul.f32 %v6556, %v3325
        %v6607 = vmul.f32 %v6560, %v3325
        %v6608 = vmul.f32 %v6564, %v3325
        %v6609 = vmul.f32 %v6568, %v3325
        %v6610 = vmul.f32 %v6572, %v3325
        %v6611 = vmul.f32 %v6576, %v3325
        %v6612 = vmul.f32 %v6580, %v3325
        %v6613 = vmul.f32 %v6584, %v3325
        %v6614 = vmul.f32 %v6588, %v3325
        %v6615 = vmul.f32 %v6592, %v3325
        %v6616 = vmul.f32 %v6596, %v3325
        %v6617 = vmul.f32 %v6600, %v3325
        %6618 = vset.pattern.permute.xlu0 19
        %6619 = vperm.xlu0 %6618, %v235
        %v6620 = vpop.permute.xlu0 %6619
        %6622 = vset.pattern.permute.xlu0 19
        %6623 = vperm.xlu0 %6622, %v236
        %v6624 = vpop.permute.xlu0 %6623
        %6626 = vset.pattern.permute.xlu0 19
        %6627 = vperm.xlu0 %6626, %v237
        %v6628 = vpop.permute.xlu0 %6627
        %6630 = vset.pattern.permute.xlu0 19
        %6631 = vperm.xlu0 %6630, %v238
        %v6632 = vpop.permute.xlu0 %6631
        %6634 = vset.pattern.permute.xlu0 19
        %6635 = vperm.xlu0 %6634, %v239
        %v6636 = vpop.permute.xlu0 %6635
        %6638 = vset.pattern.permute.xlu0 19
        %6639 = vperm.xlu0 %6638, %v240
        %v6640 = vpop.permute.xlu0 %6639
        %6642 = vset.pattern.permute.xlu0 19
        %6643 = vperm.xlu0 %6642, %v241
        %v6644 = vpop.permute.xlu0 %6643
        %6646 = vset.pattern.permute.xlu0 19
        %6647 = vperm.xlu0 %6646, %v242
        %v6648 = vpop.permute.xlu0 %6647
        %6650 = vset.pattern.permute.xlu0 19
        %6651 = vperm.xlu0 %6650, %v243
        %v6652 = vpop.permute.xlu0 %6651
        %6654 = vset.pattern.permute.xlu0 19
        %6655 = vperm.xlu0 %6654, %v244
        %v6656 = vpop.permute.xlu0 %6655
        %6658 = vset.pattern.permute.xlu0 19
        %6659 = vperm.xlu0 %6658, %v245
        %v6660 = vpop.permute.xlu0 %6659
        %6662 = vset.pattern.permute.xlu0 19
        %6663 = vperm.xlu0 %6662, %v246
        %v6664 = vpop.permute.xlu0 %6663
        %6666 = vset.pattern.permute.xlu0 19
        %6667 = vperm.xlu0 %6666, %v247
        %v6668 = vpop.permute.xlu0 %6667
        %6670 = vset.pattern.permute.xlu0 19
        %6671 = vperm.xlu0 %6670, %v248
        %v6672 = vpop.permute.xlu0 %6671
        %6674 = vset.pattern.permute.xlu0 19
        %6675 = vperm.xlu0 %6674, %v249
        %v6676 = vpop.permute.xlu0 %6675
        %6678 = vset.pattern.permute.xlu0 19
        %6679 = vperm.xlu0 %6678, %v250
        %v6680 = vpop.permute.xlu0 %6679
        %v6682 = vmul.f32 %v6620, %v3409
        %v6683 = vmul.f32 %v6624, %v3409
        %v6684 = vmul.f32 %v6628, %v3409
        %v6685 = vmul.f32 %v6632, %v3409
        %v6686 = vmul.f32 %v6636, %v3409
        %v6687 = vmul.f32 %v6640, %v3409
        %v6688 = vmul.f32 %v6644, %v3409
        %v6689 = vmul.f32 %v6648, %v3409
        %v6690 = vmul.f32 %v6652, %v3409
        %v6691 = vmul.f32 %v6656, %v3409
        %v6692 = vmul.f32 %v6660, %v3409
        %v6693 = vmul.f32 %v6664, %v3409
        %v6694 = vmul.f32 %v6668, %v3409
        %v6695 = vmul.f32 %v6672, %v3409
        %v6696 = vmul.f32 %v6676, %v3409
        %v6697 = vmul.f32 %v6680, %v3409
        %6698 = vset.pattern.permute.xlu0 20
        %6699 = vperm.xlu0 %6698, %v235
        %v6700 = vpop.permute.xlu0 %6699
        %6702 = vset.pattern.permute.xlu0 20
        %6703 = vperm.xlu0 %6702, %v236
        %v6704 = vpop.permute.xlu0 %6703
        %6706 = vset.pattern.permute.xlu0 20
        %6707 = vperm.xlu0 %6706, %v237
        %v6708 = vpop.permute.xlu0 %6707
        %6710 = vset.pattern.permute.xlu0 20
        %6711 = vperm.xlu0 %6710, %v238
        %v6712 = vpop.permute.xlu0 %6711
        %6714 = vset.pattern.permute.xlu0 20
        %6715 = vperm.xlu0 %6714, %v239
        %v6716 = vpop.permute.xlu0 %6715
        %6718 = vset.pattern.permute.xlu0 20
        %6719 = vperm.xlu0 %6718, %v240
        %v6720 = vpop.permute.xlu0 %6719
        %6722 = vset.pattern.permute.xlu0 20
        %6723 = vperm.xlu0 %6722, %v241
        %v6724 = vpop.permute.xlu0 %6723
        %6726 = vset.pattern.permute.xlu0 20
        %6727 = vperm.xlu0 %6726, %v242
        %v6728 = vpop.permute.xlu0 %6727
        %6730 = vset.pattern.permute.xlu0 20
        %6731 = vperm.xlu0 %6730, %v243
        %v6732 = vpop.permute.xlu0 %6731
        %6734 = vset.pattern.permute.xlu0 20
        %6735 = vperm.xlu0 %6734, %v244
        %v6736 = vpop.permute.xlu0 %6735
        %6738 = vset.pattern.permute.xlu0 20
        %6739 = vperm.xlu0 %6738, %v245
        %v6740 = vpop.permute.xlu0 %6739
        %6742 = vset.pattern.permute.xlu0 20
        %6743 = vperm.xlu0 %6742, %v246
        %v6744 = vpop.permute.xlu0 %6743
        %6746 = vset.pattern.permute.xlu0 20
        %6747 = vperm.xlu0 %6746, %v247
        %v6748 = vpop.permute.xlu0 %6747
        %6750 = vset.pattern.permute.xlu0 20
        %6751 = vperm.xlu0 %6750, %v248
        %v6752 = vpop.permute.xlu0 %6751
        %6754 = vset.pattern.permute.xlu0 20
        %6755 = vperm.xlu0 %6754, %v249
        %v6756 = vpop.permute.xlu0 %6755
        %6758 = vset.pattern.permute.xlu0 20
        %6759 = vperm.xlu0 %6758, %v250
        %v6760 = vpop.permute.xlu0 %6759
        %v6762 = vmul.f32 %v6700, %v3493
        %v6763 = vmul.f32 %v6704, %v3493
        %v6764 = vmul.f32 %v6708, %v3493
        %v6765 = vmul.f32 %v6712, %v3493
        %v6766 = vmul.f32 %v6716, %v3493
        %v6767 = vmul.f32 %v6720, %v3493
        %v6768 = vmul.f32 %v6724, %v3493
        %v6769 = vmul.f32 %v6728, %v3493
        %v6770 = vmul.f32 %v6732, %v3493
        %v6771 = vmul.f32 %v6736, %v3493
        %v6772 = vmul.f32 %v6740, %v3493
        %v6773 = vmul.f32 %v6744, %v3493
        %v6774 = vmul.f32 %v6748, %v3493
        %v6775 = vmul.f32 %v6752, %v3493
        %v6776 = vmul.f32 %v6756, %v3493
        %v6777 = vmul.f32 %v6760, %v3493
        %6778 = vset.pattern.permute.xlu0 21
        %6779 = vperm.xlu0 %6778, %v235
        %v6780 = vpop.permute.xlu0 %6779
        %6782 = vset.pattern.permute.xlu0 21
        %6783 = vperm.xlu0 %6782, %v236
        %v6784 = vpop.permute.xlu0 %6783
        %6786 = vset.pattern.permute.xlu0 21
        %6787 = vperm.xlu0 %6786, %v237
        %v6788 = vpop.permute.xlu0 %6787
        %6790 = vset.pattern.permute.xlu0 21
        %6791 = vperm.xlu0 %6790, %v238
        %v6792 = vpop.permute.xlu0 %6791
        %6794 = vset.pattern.permute.xlu0 21
        %6795 = vperm.xlu0 %6794, %v239
        %v6796 = vpop.permute.xlu0 %6795
        %6798 = vset.pattern.permute.xlu0 21
        %6799 = vperm.xlu0 %6798, %v240
        %v6800 = vpop.permute.xlu0 %6799
        %6802 = vset.pattern.permute.xlu0 21
        %6803 = vperm.xlu0 %6802, %v241
        %v6804 = vpop.permute.xlu0 %6803
        %6806 = vset.pattern.permute.xlu0 21
        %6807 = vperm.xlu0 %6806, %v242
        %v6808 = vpop.permute.xlu0 %6807
        %6810 = vset.pattern.permute.xlu0 21
        %6811 = vperm.xlu0 %6810, %v243
        %v6812 = vpop.permute.xlu0 %6811
        %6814 = vset.pattern.permute.xlu0 21
        %6815 = vperm.xlu0 %6814, %v244
        %v6816 = vpop.permute.xlu0 %6815
        %6818 = vset.pattern.permute.xlu0 21
        %6819 = vperm.xlu0 %6818, %v245
        %v6820 = vpop.permute.xlu0 %6819
        %6822 = vset.pattern.permute.xlu0 21
        %6823 = vperm.xlu0 %6822, %v246
        %v6824 = vpop.permute.xlu0 %6823
        %6826 = vset.pattern.permute.xlu0 21
        %6827 = vperm.xlu0 %6826, %v247
        %v6828 = vpop.permute.xlu0 %6827
        %6830 = vset.pattern.permute.xlu0 21
        %6831 = vperm.xlu0 %6830, %v248
        %v6832 = vpop.permute.xlu0 %6831
        %6834 = vset.pattern.permute.xlu0 21
        %6835 = vperm.xlu0 %6834, %v249
        %v6836 = vpop.permute.xlu0 %6835
        %6838 = vset.pattern.permute.xlu0 21
        %6839 = vperm.xlu0 %6838, %v250
        %v6840 = vpop.permute.xlu0 %6839
        %v6842 = vmul.f32 %v6780, %v3577
        %v6843 = vmul.f32 %v6784, %v3577
        %v6844 = vmul.f32 %v6788, %v3577
        %v6845 = vmul.f32 %v6792, %v3577
        %v6846 = vmul.f32 %v6796, %v3577
        %v6847 = vmul.f32 %v6800, %v3577
        %v6848 = vmul.f32 %v6804, %v3577
        %v6849 = vmul.f32 %v6808, %v3577
        %v6850 = vmul.f32 %v6812, %v3577
        %v6851 = vmul.f32 %v6816, %v3577
        %v6852 = vmul.f32 %v6820, %v3577
        %v6853 = vmul.f32 %v6824, %v3577
        %v6854 = vmul.f32 %v6828, %v3577
        %v6855 = vmul.f32 %v6832, %v3577
        %v6856 = vmul.f32 %v6836, %v3577
        %v6857 = vmul.f32 %v6840, %v3577
        %v6858 = vadd.f32 %v6522, %v6602
        %v6859 = vadd.f32 %v6523, %v6603
        %v6860 = vadd.f32 %v6524, %v6604
        %v6861 = vadd.f32 %v6525, %v6605
        %v6862 = vadd.f32 %v6526, %v6606
        %v6863 = vadd.f32 %v6527, %v6607
        %v6864 = vadd.f32 %v6528, %v6608
        %v6865 = vadd.f32 %v6529, %v6609
        %v6866 = vadd.f32 %v6530, %v6610
        %v6867 = vadd.f32 %v6531, %v6611
        %v6868 = vadd.f32 %v6532, %v6612
        %v6869 = vadd.f32 %v6533, %v6613
        %v6870 = vadd.f32 %v6534, %v6614
        %v6871 = vadd.f32 %v6535, %v6615
        %v6872 = vadd.f32 %v6536, %v6616
        %v6873 = vadd.f32 %v6537, %v6617
        %v6874 = vadd.f32 %v6682, %v6762
        %v6875 = vadd.f32 %v6683, %v6763
        %v6876 = vadd.f32 %v6684, %v6764
        %v6877 = vadd.f32 %v6685, %v6765
        %v6878 = vadd.f32 %v6686, %v6766
        %v6879 = vadd.f32 %v6687, %v6767
        %v6880 = vadd.f32 %v6688, %v6768
        %v6881 = vadd.f32 %v6689, %v6769
        %v6882 = vadd.f32 %v6690, %v6770
        %v6883 = vadd.f32 %v6691, %v6771
        %v6884 = vadd.f32 %v6692, %v6772
        %v6885 = vadd.f32 %v6693, %v6773
        %v6886 = vadd.f32 %v6694, %v6774
        %v6887 = vadd.f32 %v6695, %v6775
        %v6888 = vadd.f32 %v6696, %v6776
        %v6889 = vadd.f32 %v6697, %v6777
        %v6890 = vadd.f32 %v6858, %v6874
        %v6891 = vadd.f32 %v6859, %v6875
        %v6892 = vadd.f32 %v6860, %v6876
        %v6893 = vadd.f32 %v6861, %v6877
        %v6894 = vadd.f32 %v6862, %v6878
        %v6895 = vadd.f32 %v6863, %v6879
        %v6896 = vadd.f32 %v6864, %v6880
        %v6897 = vadd.f32 %v6865, %v6881
        %v6898 = vadd.f32 %v6866, %v6882
        %v6899 = vadd.f32 %v6867, %v6883
        %v6900 = vadd.f32 %v6868, %v6884
        %v6901 = vadd.f32 %v6869, %v6885
        %v6902 = vadd.f32 %v6870, %v6886
        %v6903 = vadd.f32 %v6871, %v6887
        %v6904 = vadd.f32 %v6872, %v6888
        %v6905 = vadd.f32 %v6873, %v6889
        %v6906 = vadd.f32 %v6890, %v6842
        %v6907 = vadd.f32 %v6891, %v6843
        %v6908 = vadd.f32 %v6892, %v6844
        %v6909 = vadd.f32 %v6893, %v6845
        %v6910 = vadd.f32 %v6894, %v6846
        %v6911 = vadd.f32 %v6895, %v6847
        %v6912 = vadd.f32 %v6896, %v6848
        %v6913 = vadd.f32 %v6897, %v6849
        %v6914 = vadd.f32 %v6898, %v6850
        %v6915 = vadd.f32 %v6899, %v6851
        %v6916 = vadd.f32 %v6900, %v6852
        %v6917 = vadd.f32 %v6901, %v6853
        %v6918 = vadd.f32 %v6902, %v6854
        %v6919 = vadd.f32 %v6903, %v6855
        %v6920 = vadd.f32 %v6904, %v6856
        %v6921 = vadd.f32 %v6905, %v6857
        %v6922 = vadd.f32 %v2534, %v6442
        %v6923 = vadd.f32 %v2535, %v6443
        %v6924 = vadd.f32 %v2536, %v6444
        %v6925 = vadd.f32 %v2537, %v6445
        %v6926 = vadd.f32 %v2538, %v6446
        %v6927 = vadd.f32 %v2539, %v6447
        %v6928 = vadd.f32 %v2540, %v6448
        %v6929 = vadd.f32 %v2541, %v6449
        %v6930 = vadd.f32 %v2542, %v6450
        %v6931 = vadd.f32 %v2543, %v6451
        %v6932 = vadd.f32 %v2544, %v6452
        %v6933 = vadd.f32 %v2545, %v6453
        %v6934 = vadd.f32 %v2546, %v6454
        %v6935 = vadd.f32 %v2547, %v6455
        %v6936 = vadd.f32 %v2548, %v6456
        %v6937 = vadd.f32 %v2549, %v6457
        %v6938 = vadd.f32 %v6922, %v6906
        %v6939 = vadd.f32 %v6923, %v6907
        %v6940 = vadd.f32 %v6924, %v6908
        %v6941 = vadd.f32 %v6925, %v6909
        %v6942 = vadd.f32 %v6926, %v6910
        %v6943 = vadd.f32 %v6927, %v6911
        %v6944 = vadd.f32 %v6928, %v6912
        %v6945 = vadd.f32 %v6929, %v6913
        %v6946 = vadd.f32 %v6930, %v6914
        %v6947 = vadd.f32 %v6931, %v6915
        %v6948 = vadd.f32 %v6932, %v6916
        %v6949 = vadd.f32 %v6933, %v6917
        %v6950 = vadd.f32 %v6934, %v6918
        %v6951 = vadd.f32 %v6935, %v6919
        %v6952 = vadd.f32 %v6936, %v6920
        %v6953 = vadd.f32 %v6937, %v6921
        %v6954 = vmax.f32 %v6938, 0.0
        %v6955 = vmax.f32 %v6939, 0.0
        %v6956 = vmax.f32 %v6940, 0.0
        %v6957 = vmax.f32 %v6941, 0.0
        %v6958 = vmax.f32 %v6942, 0.0
        %v6959 = vmax.f32 %v6943, 0.0
        %v6960 = vmax.f32 %v6944, 0.0
        %v6961 = vmax.f32 %v6945, 0.0
        %v6962 = vmax.f32 %v6946, 0.0
        %v6963 = vmax.f32 %v6947, 0.0
        %v6964 = vmax.f32 %v6948, 0.0
        %v6965 = vmax.f32 %v6949, 0.0
        %v6966 = vmax.f32 %v6950, 0.0
        %v6967 = vmax.f32 %v6951, 0.0
        %v6968 = vmax.f32 %v6952, 0.0
        %v6969 = vmax.f32 %v6953, 0.0
        %6970 = vset.pattern.permute.xlu0 16
        %6971 = vperm.xlu0 %6970, %v4186
        %v6972 = vpop.permute.xlu0 %6971
        %6973 = vset.pattern.permute.xlu0 16
        %6974 = vperm.xlu0 %6973, %v4187
        %v6975 = vpop.permute.xlu0 %6974
        %6976 = vset.pattern.permute.xlu0 16
        %6977 = vperm.xlu0 %6976, %v4188
        %v6978 = vpop.permute.xlu0 %6977
        %6979 = vset.pattern.permute.xlu0 16
        %6980 = vperm.xlu0 %6979, %v4189
        %v6981 = vpop.permute.xlu0 %6980
        %6982 = vset.pattern.permute.xlu0 16
        %6983 = vperm.xlu0 %6982, %v4190
        %v6984 = vpop.permute.xlu0 %6983
        %6985 = vset.pattern.permute.xlu0 16
        %6986 = vperm.xlu0 %6985, %v4191
        %v6987 = vpop.permute.xlu0 %6986
        %6988 = vset.pattern.permute.xlu0 16
        %6989 = vperm.xlu0 %6988, %v4192
        %v6990 = vpop.permute.xlu0 %6989
        %6991 = vset.pattern.permute.xlu0 16
        %6992 = vperm.xlu0 %6991, %v4193
        %v6993 = vpop.permute.xlu0 %6992
        %6994 = vset.pattern.permute.xlu0 16
        %6995 = vperm.xlu0 %6994, %v4194
        %v6996 = vpop.permute.xlu0 %6995
        %6997 = vset.pattern.permute.xlu0 16
        %6998 = vperm.xlu0 %6997, %v4195
        %v6999 = vpop.permute.xlu0 %6998
        %7000 = vset.pattern.permute.xlu0 16
        %7001 = vperm.xlu0 %7000, %v4196
        %v7002 = vpop.permute.xlu0 %7001
        %7003 = vset.pattern.permute.xlu0 16
        %7004 = vperm.xlu0 %7003, %v4197
        %v7005 = vpop.permute.xlu0 %7004
        %7006 = vset.pattern.permute.xlu0 16
        %7007 = vperm.xlu0 %7006, %v4198
        %v7008 = vpop.permute.xlu0 %7007
        %7009 = vset.pattern.permute.xlu0 16
        %7010 = vperm.xlu0 %7009, %v4199
        %v7011 = vpop.permute.xlu0 %7010
        %7012 = vset.pattern.permute.xlu0 16
        %7013 = vperm.xlu0 %7012, %v4200
        %v7014 = vpop.permute.xlu0 %7013
        %7015 = vset.pattern.permute.xlu0 16
        %7016 = vperm.xlu0 %7015, %v4201
        %v7017 = vpop.permute.xlu0 %7016
        %vm7018 = vcmp.eq.s32.totalorder %v6972, 1
        %vm7019 = vcmp.eq.s32.totalorder %v6975, 1
        %vm7020 = vcmp.eq.s32.totalorder %v6978, 1
        %vm7021 = vcmp.eq.s32.totalorder %v6981, 1
        %vm7022 = vcmp.eq.s32.totalorder %v6984, 1
        %vm7023 = vcmp.eq.s32.totalorder %v6987, 1
        %vm7024 = vcmp.eq.s32.totalorder %v6990, 1
        %vm7025 = vcmp.eq.s32.totalorder %v6993, 1
        %vm7026 = vcmp.eq.s32.totalorder %v6996, 1
        %vm7027 = vcmp.eq.s32.totalorder %v6999, 1
        %vm7028 = vcmp.eq.s32.totalorder %v7002, 1
        %vm7029 = vcmp.eq.s32.totalorder %v7005, 1
        %vm7030 = vcmp.eq.s32.totalorder %v7008, 1
        %vm7031 = vcmp.eq.s32.totalorder %v7011, 1
        %vm7032 = vcmp.eq.s32.totalorder %v7014, 1
        %vm7033 = vcmp.eq.s32.totalorder %v7017, 1
        %v7034 = vsel %vm7018, %v6954, 0.0
        %v7035 = vsel %vm7019, %v6955, 0.0
        %v7036 = vsel %vm7020, %v6956, 0.0
        %v7037 = vsel %vm7021, %v6957, 0.0
        %v7038 = vsel %vm7022, %v6958, 0.0
        %v7039 = vsel %vm7023, %v6959, 0.0
        %v7040 = vsel %vm7024, %v6960, 0.0
        %v7041 = vsel %vm7025, %v6961, 0.0
        %v7042 = vsel %vm7026, %v6962, 0.0
        %v7043 = vsel %vm7027, %v6963, 0.0
        %v7044 = vsel %vm7028, %v6964, 0.0
        %v7045 = vsel %vm7029, %v6965, 0.0
        %v7046 = vsel %vm7030, %v6966, 0.0
        %v7047 = vsel %vm7031, %v6967, 0.0
        %v7048 = vsel %vm7032, %v6968, 0.0
        %v7049 = vsel %vm7033, %v6969, 0.0
        %v7050 = vadd.f32 %v6922, %v3241
        %v7051 = vadd.f32 %v6923, %v3241
        %v7052 = vadd.f32 %v6924, %v3241
        %v7053 = vadd.f32 %v6925, %v3241
        %v7054 = vadd.f32 %v6926, %v3241
        %v7055 = vadd.f32 %v6927, %v3241
        %v7056 = vadd.f32 %v6928, %v3241
        %v7057 = vadd.f32 %v6929, %v3241
        %v7058 = vadd.f32 %v6930, %v3241
        %v7059 = vadd.f32 %v6931, %v3241
        %v7060 = vadd.f32 %v6932, %v3241
        %v7061 = vadd.f32 %v6933, %v3241
        %v7062 = vadd.f32 %v6934, %v3241
        %v7063 = vadd.f32 %v6935, %v3241
        %v7064 = vadd.f32 %v6936, %v3241
        %v7065 = vadd.f32 %v6937, %v3241
        %v7066 = vmax.f32 %v7050, 0.0
        %v7067 = vmax.f32 %v7051, 0.0
        %v7068 = vmax.f32 %v7052, 0.0
        %v7069 = vmax.f32 %v7053, 0.0
        %v7070 = vmax.f32 %v7054, 0.0
        %v7071 = vmax.f32 %v7055, 0.0
        %v7072 = vmax.f32 %v7056, 0.0
        %v7073 = vmax.f32 %v7057, 0.0
        %v7074 = vmax.f32 %v7058, 0.0
        %v7075 = vmax.f32 %v7059, 0.0
        %v7076 = vmax.f32 %v7060, 0.0
        %v7077 = vmax.f32 %v7061, 0.0
        %v7078 = vmax.f32 %v7062, 0.0
        %v7079 = vmax.f32 %v7063, 0.0
        %v7080 = vmax.f32 %v7064, 0.0
        %v7081 = vmax.f32 %v7065, 0.0
        %7082 = vset.pattern.permute.xlu0 16
        %7083 = vperm.xlu0 %7082, %v4314
        %v7084 = vpop.permute.xlu0 %7083
        %7085 = vset.pattern.permute.xlu0 16
        %7086 = vperm.xlu0 %7085, %v4315
        %v7087 = vpop.permute.xlu0 %7086
        %7088 = vset.pattern.permute.xlu0 16
        %7089 = vperm.xlu0 %7088, %v4316
        %v7090 = vpop.permute.xlu0 %7089
        %7091 = vset.pattern.permute.xlu0 16
        %7092 = vperm.xlu0 %7091, %v4317
        %v7093 = vpop.permute.xlu0 %7092
        %7094 = vset.pattern.permute.xlu0 16
        %7095 = vperm.xlu0 %7094, %v4318
        %v7096 = vpop.permute.xlu0 %7095
        %7097 = vset.pattern.permute.xlu0 16
        %7098 = vperm.xlu0 %7097, %v4319
        %v7099 = vpop.permute.xlu0 %7098
        %7100 = vset.pattern.permute.xlu0 16
        %7101 = vperm.xlu0 %7100, %v4320
        %v7102 = vpop.permute.xlu0 %7101
        %7103 = vset.pattern.permute.xlu0 16
        %7104 = vperm.xlu0 %7103, %v4321
        %v7105 = vpop.permute.xlu0 %7104
        %7106 = vset.pattern.permute.xlu0 16
        %7107 = vperm.xlu0 %7106, %v4322
        %v7108 = vpop.permute.xlu0 %7107
        %7109 = vset.pattern.permute.xlu0 16
        %7110 = vperm.xlu0 %7109, %v4323
        %v7111 = vpop.permute.xlu0 %7110
        %7112 = vset.pattern.permute.xlu0 16
        %7113 = vperm.xlu0 %7112, %v4324
        %v7114 = vpop.permute.xlu0 %7113
        %7115 = vset.pattern.permute.xlu0 16
        %7116 = vperm.xlu0 %7115, %v4325
        %v7117 = vpop.permute.xlu0 %7116
        %7118 = vset.pattern.permute.xlu0 16
        %7119 = vperm.xlu0 %7118, %v4326
        %v7120 = vpop.permute.xlu0 %7119
        %7121 = vset.pattern.permute.xlu0 16
        %7122 = vperm.xlu0 %7121, %v4327
        %v7123 = vpop.permute.xlu0 %7122
        %7124 = vset.pattern.permute.xlu0 16
        %7125 = vperm.xlu0 %7124, %v4328
        %v7126 = vpop.permute.xlu0 %7125
        %7127 = vset.pattern.permute.xlu0 16
        %7128 = vperm.xlu0 %7127, %v4329
        %v7129 = vpop.permute.xlu0 %7128
        %vm7130 = vcmp.eq.s32.totalorder %v7084, 1
        %vm7131 = vcmp.eq.s32.totalorder %v7087, 1
        %vm7132 = vcmp.eq.s32.totalorder %v7090, 1
        %vm7133 = vcmp.eq.s32.totalorder %v7093, 1
        %vm7134 = vcmp.eq.s32.totalorder %v7096, 1
        %vm7135 = vcmp.eq.s32.totalorder %v7099, 1
        %vm7136 = vcmp.eq.s32.totalorder %v7102, 1
        %vm7137 = vcmp.eq.s32.totalorder %v7105, 1
        %vm7138 = vcmp.eq.s32.totalorder %v7108, 1
        %vm7139 = vcmp.eq.s32.totalorder %v7111, 1
        %vm7140 = vcmp.eq.s32.totalorder %v7114, 1
        %vm7141 = vcmp.eq.s32.totalorder %v7117, 1
        %vm7142 = vcmp.eq.s32.totalorder %v7120, 1
        %vm7143 = vcmp.eq.s32.totalorder %v7123, 1
        %vm7144 = vcmp.eq.s32.totalorder %v7126, 1
        %vm7145 = vcmp.eq.s32.totalorder %v7129, 1
        %v7146 = vsel %vm7130, %v7066, 0.0
        %v7147 = vsel %vm7131, %v7067, 0.0
        %v7148 = vsel %vm7132, %v7068, 0.0
        %v7149 = vsel %vm7133, %v7069, 0.0
        %v7150 = vsel %vm7134, %v7070, 0.0
        %v7151 = vsel %vm7135, %v7071, 0.0
        %v7152 = vsel %vm7136, %v7072, 0.0
        %v7153 = vsel %vm7137, %v7073, 0.0
        %v7154 = vsel %vm7138, %v7074, 0.0
        %v7155 = vsel %vm7139, %v7075, 0.0
        %v7156 = vsel %vm7140, %v7076, 0.0
        %v7157 = vsel %vm7141, %v7077, 0.0
        %v7158 = vsel %vm7142, %v7078, 0.0
        %v7159 = vsel %vm7143, %v7079, 0.0
        %v7160 = vsel %vm7144, %v7080, 0.0
        %v7161 = vsel %vm7145, %v7081, 0.0
        %v7162 = vadd.f32 %v6922, %v3325
        %v7163 = vadd.f32 %v6923, %v3325
        %v7164 = vadd.f32 %v6924, %v3325
        %v7165 = vadd.f32 %v6925, %v3325
        %v7166 = vadd.f32 %v6926, %v3325
        %v7167 = vadd.f32 %v6927, %v3325
        %v7168 = vadd.f32 %v6928, %v3325
        %v7169 = vadd.f32 %v6929, %v3325
        %v7170 = vadd.f32 %v6930, %v3325
        %v7171 = vadd.f32 %v6931, %v3325
        %v7172 = vadd.f32 %v6932, %v3325
        %v7173 = vadd.f32 %v6933, %v3325
        %v7174 = vadd.f32 %v6934, %v3325
        %v7175 = vadd.f32 %v6935, %v3325
        %v7176 = vadd.f32 %v6936, %v3325
        %v7177 = vadd.f32 %v6937, %v3325
        %v7178 = vmax.f32 %v7162, 0.0
        %v7179 = vmax.f32 %v7163, 0.0
        %v7180 = vmax.f32 %v7164, 0.0
        %v7181 = vmax.f32 %v7165, 0.0
        %v7182 = vmax.f32 %v7166, 0.0
        %v7183 = vmax.f32 %v7167, 0.0
        %v7184 = vmax.f32 %v7168, 0.0
        %v7185 = vmax.f32 %v7169, 0.0
        %v7186 = vmax.f32 %v7170, 0.0
        %v7187 = vmax.f32 %v7171, 0.0
        %v7188 = vmax.f32 %v7172, 0.0
        %v7189 = vmax.f32 %v7173, 0.0
        %v7190 = vmax.f32 %v7174, 0.0
        %v7191 = vmax.f32 %v7175, 0.0
        %v7192 = vmax.f32 %v7176, 0.0
        %v7193 = vmax.f32 %v7177, 0.0
        %v7194 = vsel %vm7130, %v7178, 0.0
        %v7195 = vsel %vm7131, %v7179, 0.0
        %v7196 = vsel %vm7132, %v7180, 0.0
        %v7197 = vsel %vm7133, %v7181, 0.0
        %v7198 = vsel %vm7134, %v7182, 0.0
        %v7199 = vsel %vm7135, %v7183, 0.0
        %v7200 = vsel %vm7136, %v7184, 0.0
        %v7201 = vsel %vm7137, %v7185, 0.0
        %v7202 = vsel %vm7138, %v7186, 0.0
        %v7203 = vsel %vm7139, %v7187, 0.0
        %v7204 = vsel %vm7140, %v7188, 0.0
        %v7205 = vsel %vm7141, %v7189, 0.0
        %v7206 = vsel %vm7142, %v7190, 0.0
        %v7207 = vsel %vm7143, %v7191, 0.0
        %v7208 = vsel %vm7144, %v7192, 0.0
        %v7209 = vsel %vm7145, %v7193, 0.0
        %v7210 = vadd.f32 %v6922, %v3409
        %v7211 = vadd.f32 %v6923, %v3409
        %v7212 = vadd.f32 %v6924, %v3409
        %v7213 = vadd.f32 %v6925, %v3409
        %v7214 = vadd.f32 %v6926, %v3409
        %v7215 = vadd.f32 %v6927, %v3409
        %v7216 = vadd.f32 %v6928, %v3409
        %v7217 = vadd.f32 %v6929, %v3409
        %v7218 = vadd.f32 %v6930, %v3409
        %v7219 = vadd.f32 %v6931, %v3409
        %v7220 = vadd.f32 %v6932, %v3409
        %v7221 = vadd.f32 %v6933, %v3409
        %v7222 = vadd.f32 %v6934, %v3409
        %v7223 = vadd.f32 %v6935, %v3409
        %v7224 = vadd.f32 %v6936, %v3409
        %v7225 = vadd.f32 %v6937, %v3409
        %v7226 = vmax.f32 %v7210, 0.0
        %v7227 = vmax.f32 %v7211, 0.0
        %v7228 = vmax.f32 %v7212, 0.0
        %v7229 = vmax.f32 %v7213, 0.0
        %v7230 = vmax.f32 %v7214, 0.0
        %v7231 = vmax.f32 %v7215, 0.0
        %v7232 = vmax.f32 %v7216, 0.0
        %v7233 = vmax.f32 %v7217, 0.0
        %v7234 = vmax.f32 %v7218, 0.0
        %v7235 = vmax.f32 %v7219, 0.0
        %v7236 = vmax.f32 %v7220, 0.0
        %v7237 = vmax.f32 %v7221, 0.0
        %v7238 = vmax.f32 %v7222, 0.0
        %v7239 = vmax.f32 %v7223, 0.0
        %v7240 = vmax.f32 %v7224, 0.0
        %v7241 = vmax.f32 %v7225, 0.0
        %v7242 = vsel %vm7130, %v7226, 0.0
        %v7243 = vsel %vm7131, %v7227, 0.0
        %v7244 = vsel %vm7132, %v7228, 0.0
        %v7245 = vsel %vm7133, %v7229, 0.0
        %v7246 = vsel %vm7134, %v7230, 0.0
        %v7247 = vsel %vm7135, %v7231, 0.0
        %v7248 = vsel %vm7136, %v7232, 0.0
        %v7249 = vsel %vm7137, %v7233, 0.0
        %v7250 = vsel %vm7138, %v7234, 0.0
        %v7251 = vsel %vm7139, %v7235, 0.0
        %v7252 = vsel %vm7140, %v7236, 0.0
        %v7253 = vsel %vm7141, %v7237, 0.0
        %v7254 = vsel %vm7142, %v7238, 0.0
        %v7255 = vsel %vm7143, %v7239, 0.0
        %v7256 = vsel %vm7144, %v7240, 0.0
        %v7257 = vsel %vm7145, %v7241, 0.0
        %v7258 = vadd.f32 %v6922, %v3493
        %v7259 = vadd.f32 %v6923, %v3493
        %v7260 = vadd.f32 %v6924, %v3493
        %v7261 = vadd.f32 %v6925, %v3493
        %v7262 = vadd.f32 %v6926, %v3493
        %v7263 = vadd.f32 %v6927, %v3493
        %v7264 = vadd.f32 %v6928, %v3493
        %v7265 = vadd.f32 %v6929, %v3493
        %v7266 = vadd.f32 %v6930, %v3493
        %v7267 = vadd.f32 %v6931, %v3493
        %v7268 = vadd.f32 %v6932, %v3493
        %v7269 = vadd.f32 %v6933, %v3493
        %v7270 = vadd.f32 %v6934, %v3493
        %v7271 = vadd.f32 %v6935, %v3493
        %v7272 = vadd.f32 %v6936, %v3493
        %v7273 = vadd.f32 %v6937, %v3493
        %v7274 = vmax.f32 %v7258, 0.0
        %v7275 = vmax.f32 %v7259, 0.0
        %v7276 = vmax.f32 %v7260, 0.0
        %v7277 = vmax.f32 %v7261, 0.0
        %v7278 = vmax.f32 %v7262, 0.0
        %v7279 = vmax.f32 %v7263, 0.0
        %v7280 = vmax.f32 %v7264, 0.0
        %v7281 = vmax.f32 %v7265, 0.0
        %v7282 = vmax.f32 %v7266, 0.0
        %v7283 = vmax.f32 %v7267, 0.0
        %v7284 = vmax.f32 %v7268, 0.0
        %v7285 = vmax.f32 %v7269, 0.0
        %v7286 = vmax.f32 %v7270, 0.0
        %v7287 = vmax.f32 %v7271, 0.0
        %v7288 = vmax.f32 %v7272, 0.0
        %v7289 = vmax.f32 %v7273, 0.0
        %v7290 = vsel %vm7130, %v7274, 0.0
        %v7291 = vsel %vm7131, %v7275, 0.0
        %v7292 = vsel %vm7132, %v7276, 0.0
        %v7293 = vsel %vm7133, %v7277, 0.0
        %v7294 = vsel %vm7134, %v7278, 0.0
        %v7295 = vsel %vm7135, %v7279, 0.0
        %v7296 = vsel %vm7136, %v7280, 0.0
        %v7297 = vsel %vm7137, %v7281, 0.0
        %v7298 = vsel %vm7138, %v7282, 0.0
        %v7299 = vsel %vm7139, %v7283, 0.0
        %v7300 = vsel %vm7140, %v7284, 0.0
        %v7301 = vsel %vm7141, %v7285, 0.0
        %v7302 = vsel %vm7142, %v7286, 0.0
        %v7303 = vsel %vm7143, %v7287, 0.0
        %v7304 = vsel %vm7144, %v7288, 0.0
        %v7305 = vsel %vm7145, %v7289, 0.0
        %v7306 = vadd.f32 %v6922, %v3577
        %v7307 = vadd.f32 %v6923, %v3577
        %v7308 = vadd.f32 %v6924, %v3577
        %v7309 = vadd.f32 %v6925, %v3577
        %v7310 = vadd.f32 %v6926, %v3577
        %v7311 = vadd.f32 %v6927, %v3577
        %v7312 = vadd.f32 %v6928, %v3577
        %v7313 = vadd.f32 %v6929, %v3577
        %v7314 = vadd.f32 %v6930, %v3577
        %v7315 = vadd.f32 %v6931, %v3577
        %v7316 = vadd.f32 %v6932, %v3577
        %v7317 = vadd.f32 %v6933, %v3577
        %v7318 = vadd.f32 %v6934, %v3577
        %v7319 = vadd.f32 %v6935, %v3577
        %v7320 = vadd.f32 %v6936, %v3577
        %v7321 = vadd.f32 %v6937, %v3577
        %v7322 = vmax.f32 %v7306, 0.0
        %v7323 = vmax.f32 %v7307, 0.0
        %v7324 = vmax.f32 %v7308, 0.0
        %v7325 = vmax.f32 %v7309, 0.0
        %v7326 = vmax.f32 %v7310, 0.0
        %v7327 = vmax.f32 %v7311, 0.0
        %v7328 = vmax.f32 %v7312, 0.0
        %v7329 = vmax.f32 %v7313, 0.0
        %v7330 = vmax.f32 %v7314, 0.0
        %v7331 = vmax.f32 %v7315, 0.0
        %v7332 = vmax.f32 %v7316, 0.0
        %v7333 = vmax.f32 %v7317, 0.0
        %v7334 = vmax.f32 %v7318, 0.0
        %v7335 = vmax.f32 %v7319, 0.0
        %v7336 = vmax.f32 %v7320, 0.0
        %v7337 = vmax.f32 %v7321, 0.0
        %v7338 = vsel %vm7130, %v7322, 0.0
        %v7339 = vsel %vm7131, %v7323, 0.0
        %v7340 = vsel %vm7132, %v7324, 0.0
        %v7341 = vsel %vm7133, %v7325, 0.0
        %v7342 = vsel %vm7134, %v7326, 0.0
        %v7343 = vsel %vm7135, %v7327, 0.0
        %v7344 = vsel %vm7136, %v7328, 0.0
        %v7345 = vsel %vm7137, %v7329, 0.0
        %v7346 = vsel %vm7138, %v7330, 0.0
        %v7347 = vsel %vm7139, %v7331, 0.0
        %v7348 = vsel %vm7140, %v7332, 0.0
        %v7349 = vsel %vm7141, %v7333, 0.0
        %v7350 = vsel %vm7142, %v7334, 0.0
        %v7351 = vsel %vm7143, %v7335, 0.0
        %v7352 = vsel %vm7144, %v7336, 0.0
        %v7353 = vsel %vm7145, %v7337, 0.0
        %v7354 = vadd.f32 %v7034, %v7146
        %v7355 = vadd.f32 %v7035, %v7147
        %v7356 = vadd.f32 %v7036, %v7148
        %v7357 = vadd.f32 %v7037, %v7149
        %v7358 = vadd.f32 %v7038, %v7150
        %v7359 = vadd.f32 %v7039, %v7151
        %v7360 = vadd.f32 %v7040, %v7152
        %v7361 = vadd.f32 %v7041, %v7153
        %v7362 = vadd.f32 %v7042, %v7154
        %v7363 = vadd.f32 %v7043, %v7155
        %v7364 = vadd.f32 %v7044, %v7156
        %v7365 = vadd.f32 %v7045, %v7157
        %v7366 = vadd.f32 %v7046, %v7158
        %v7367 = vadd.f32 %v7047, %v7159
        %v7368 = vadd.f32 %v7048, %v7160
        %v7369 = vadd.f32 %v7049, %v7161
        %v7370 = vadd.f32 %v7194, %v7242
        %v7371 = vadd.f32 %v7195, %v7243
        %v7372 = vadd.f32 %v7196, %v7244
        %v7373 = vadd.f32 %v7197, %v7245
        %v7374 = vadd.f32 %v7198, %v7246
        %v7375 = vadd.f32 %v7199, %v7247
        %v7376 = vadd.f32 %v7200, %v7248
        %v7377 = vadd.f32 %v7201, %v7249
        %v7378 = vadd.f32 %v7202, %v7250
        %v7379 = vadd.f32 %v7203, %v7251
        %v7380 = vadd.f32 %v7204, %v7252
        %v7381 = vadd.f32 %v7205, %v7253
        %v7382 = vadd.f32 %v7206, %v7254
        %v7383 = vadd.f32 %v7207, %v7255
        %v7384 = vadd.f32 %v7208, %v7256
        %v7385 = vadd.f32 %v7209, %v7257
        %v7386 = vadd.f32 %v7290, %v7338
        %v7387 = vadd.f32 %v7291, %v7339
        %v7388 = vadd.f32 %v7292, %v7340
        %v7389 = vadd.f32 %v7293, %v7341
        %v7390 = vadd.f32 %v7294, %v7342
        %v7391 = vadd.f32 %v7295, %v7343
        %v7392 = vadd.f32 %v7296, %v7344
        %v7393 = vadd.f32 %v7297, %v7345
        %v7394 = vadd.f32 %v7298, %v7346
        %v7395 = vadd.f32 %v7299, %v7347
        %v7396 = vadd.f32 %v7300, %v7348
        %v7397 = vadd.f32 %v7301, %v7349
        %v7398 = vadd.f32 %v7302, %v7350
        %v7399 = vadd.f32 %v7303, %v7351
        %v7400 = vadd.f32 %v7304, %v7352
        %v7401 = vadd.f32 %v7305, %v7353
        %v7402 = vadd.f32 %v7354, %v7370
        %v7403 = vadd.f32 %v7355, %v7371
        %v7404 = vadd.f32 %v7356, %v7372
        %v7405 = vadd.f32 %v7357, %v7373
        %v7406 = vadd.f32 %v7358, %v7374
        %v7407 = vadd.f32 %v7359, %v7375
        %v7408 = vadd.f32 %v7360, %v7376
        %v7409 = vadd.f32 %v7361, %v7377
        %v7410 = vadd.f32 %v7362, %v7378
        %v7411 = vadd.f32 %v7363, %v7379
        %v7412 = vadd.f32 %v7364, %v7380
        %v7413 = vadd.f32 %v7365, %v7381
        %v7414 = vadd.f32 %v7366, %v7382
        %v7415 = vadd.f32 %v7367, %v7383
        %v7416 = vadd.f32 %v7368, %v7384
        %v7417 = vadd.f32 %v7369, %v7385
        %v7418 = vadd.f32 %v7402, %v7386
        %v7419 = vadd.f32 %v7403, %v7387
        %v7420 = vadd.f32 %v7404, %v7388
        %v7421 = vadd.f32 %v7405, %v7389
        %v7422 = vadd.f32 %v7406, %v7390
        %v7423 = vadd.f32 %v7407, %v7391
        %v7424 = vadd.f32 %v7408, %v7392
        %v7425 = vadd.f32 %v7409, %v7393
        %v7426 = vadd.f32 %v7410, %v7394
        %v7427 = vadd.f32 %v7411, %v7395
        %v7428 = vadd.f32 %v7412, %v7396
        %v7429 = vadd.f32 %v7413, %v7397
        %v7430 = vadd.f32 %v7414, %v7398
        %v7431 = vadd.f32 %v7415, %v7399
        %v7432 = vadd.f32 %v7416, %v7400
        %v7433 = vadd.f32 %v7417, %v7401
        %v7434 = vadd.f32 %v4666, %v6074
        %v7435 = vadd.f32 %v4667, %v6075
        %v7436 = vadd.f32 %v4668, %v6076
        %v7437 = vadd.f32 %v4669, %v6077
        %v7438 = vadd.f32 %v4670, %v6078
        %v7439 = vadd.f32 %v4671, %v6079
        %v7440 = vadd.f32 %v4672, %v6080
        %v7441 = vadd.f32 %v4673, %v6081
        %v7442 = vadd.f32 %v4674, %v6082
        %v7443 = vadd.f32 %v4675, %v6083
        %v7444 = vadd.f32 %v4676, %v6084
        %v7445 = vadd.f32 %v4677, %v6085
        %v7446 = vadd.f32 %v4678, %v6086
        %v7447 = vadd.f32 %v4679, %v6087
        %v7448 = vadd.f32 %v4680, %v6088
        %v7449 = vadd.f32 %v4681, %v6089
        %v7450 = vadd.f32 %v7434, %v7418
        %v7451 = vadd.f32 %v7435, %v7419
        %v7452 = vadd.f32 %v7436, %v7420
        %v7453 = vadd.f32 %v7437, %v7421
        %v7454 = vadd.f32 %v7438, %v7422
        %v7455 = vadd.f32 %v7439, %v7423
        %v7456 = vadd.f32 %v7440, %v7424
        %v7457 = vadd.f32 %v7441, %v7425
        %v7458 = vadd.f32 %v7442, %v7426
        %v7459 = vadd.f32 %v7443, %v7427
        %v7460 = vadd.f32 %v7444, %v7428
        %v7461 = vadd.f32 %v7445, %v7429
        %v7462 = vadd.f32 %v7446, %v7430
        %v7463 = vadd.f32 %v7447, %v7431
        %v7464 = vadd.f32 %v7448, %v7432
        %v7465 = vadd.f32 %v7449, %v7433
        %7482 = vrot.lane.b32.xlu0 %v4730, 120
        %v7483 = vpop.permute.xlu0 %7482
        %7484 = vrot.lane.b32.xlu0 %v4731, 120
        %v7485 = vpop.permute.xlu0 %7484
        %7486 = vrot.lane.b32.xlu0 %v4732, 120
        %v7487 = vpop.permute.xlu0 %7486
        %7488 = vrot.lane.b32.xlu0 %v4733, 120
        %v7489 = vpop.permute.xlu0 %7488
        %7490 = vrot.lane.b32.xlu0 %v4734, 120
        %v7491 = vpop.permute.xlu0 %7490
        %7492 = vrot.lane.b32.xlu0 %v4735, 120
        %v7493 = vpop.permute.xlu0 %7492
        %7494 = vrot.lane.b32.xlu0 %v4736, 120
        %v7495 = vpop.permute.xlu0 %7494
        %7496 = vrot.lane.b32.xlu0 %v4737, 120
        %v7497 = vpop.permute.xlu0 %7496
        %7498 = vrot.lane.b32.xlu0 %v4738, 120
        %v7499 = vpop.permute.xlu0 %7498
        %7500 = vrot.lane.b32.xlu0 %v4739, 120
        %v7501 = vpop.permute.xlu0 %7500
        %7502 = vrot.lane.b32.xlu0 %v4740, 120
        %v7503 = vpop.permute.xlu0 %7502
        %7504 = vrot.lane.b32.xlu0 %v4741, 120
        %v7505 = vpop.permute.xlu0 %7504
        %7506 = vrot.lane.b32.xlu0 %v4742, 120
        %v7507 = vpop.permute.xlu0 %7506
        %7508 = vrot.lane.b32.xlu0 %v4743, 120
        %v7509 = vpop.permute.xlu0 %7508
        %7510 = vrot.lane.b32.xlu0 %v4744, 120
        %v7511 = vpop.permute.xlu0 %7510
        %7512 = vrot.lane.b32.xlu0 %v4745, 120
        %v7513 = vpop.permute.xlu0 %7512
        %v7530 = vadd.f32 %v4730, %v7483
        %v7531 = vadd.f32 %v4731, %v7485
        %v7532 = vadd.f32 %v4732, %v7487
        %v7533 = vadd.f32 %v4733, %v7489
        %v7534 = vadd.f32 %v4734, %v7491
        %v7535 = vadd.f32 %v4735, %v7493
        %v7536 = vadd.f32 %v4736, %v7495
        %v7537 = vadd.f32 %v4737, %v7497
        %v7538 = vadd.f32 %v4738, %v7499
        %v7539 = vadd.f32 %v4739, %v7501
        %v7540 = vadd.f32 %v4740, %v7503
        %v7541 = vadd.f32 %v4741, %v7505
        %v7542 = vadd.f32 %v4742, %v7507
        %v7543 = vadd.f32 %v4743, %v7509
        %v7544 = vadd.f32 %v4744, %v7511
        %v7545 = vadd.f32 %v4745, %v7513
        %7546 = vrot.lane.b32.xlu0 %v4730, 112
        %v7547 = vpop.permute.xlu0 %7546
        %7548 = vrot.lane.b32.xlu0 %v4731, 112
        %v7549 = vpop.permute.xlu0 %7548
        %7550 = vrot.lane.b32.xlu0 %v4732, 112
        %v7551 = vpop.permute.xlu0 %7550
        %7552 = vrot.lane.b32.xlu0 %v4733, 112
        %v7553 = vpop.permute.xlu0 %7552
        %7554 = vrot.lane.b32.xlu0 %v4734, 112
        %v7555 = vpop.permute.xlu0 %7554
        %7556 = vrot.lane.b32.xlu0 %v4735, 112
        %v7557 = vpop.permute.xlu0 %7556
        %7558 = vrot.lane.b32.xlu0 %v4736, 112
        %v7559 = vpop.permute.xlu0 %7558
        %7560 = vrot.lane.b32.xlu0 %v4737, 112
        %v7561 = vpop.permute.xlu0 %7560
        %7562 = vrot.lane.b32.xlu0 %v4738, 112
        %v7563 = vpop.permute.xlu0 %7562
        %7564 = vrot.lane.b32.xlu0 %v4739, 112
        %v7565 = vpop.permute.xlu0 %7564
        %7566 = vrot.lane.b32.xlu0 %v4740, 112
        %v7567 = vpop.permute.xlu0 %7566
        %7568 = vrot.lane.b32.xlu0 %v4741, 112
        %v7569 = vpop.permute.xlu0 %7568
        %7570 = vrot.lane.b32.xlu0 %v4742, 112
        %v7571 = vpop.permute.xlu0 %7570
        %7572 = vrot.lane.b32.xlu0 %v4743, 112
        %v7573 = vpop.permute.xlu0 %7572
        %7574 = vrot.lane.b32.xlu0 %v4744, 112
        %v7575 = vpop.permute.xlu0 %7574
        %7576 = vrot.lane.b32.xlu0 %v4745, 112
        %v7577 = vpop.permute.xlu0 %7576
        %v7594 = vadd.f32 %v7530, %v7547
        %v7595 = vadd.f32 %v7531, %v7549
        %v7596 = vadd.f32 %v7532, %v7551
        %v7597 = vadd.f32 %v7533, %v7553
        %v7598 = vadd.f32 %v7534, %v7555
        %v7599 = vadd.f32 %v7535, %v7557
        %v7600 = vadd.f32 %v7536, %v7559
        %v7601 = vadd.f32 %v7537, %v7561
        %v7602 = vadd.f32 %v7538, %v7563
        %v7603 = vadd.f32 %v7539, %v7565
        %v7604 = vadd.f32 %v7540, %v7567
        %v7605 = vadd.f32 %v7541, %v7569
        %v7606 = vadd.f32 %v7542, %v7571
        %v7607 = vadd.f32 %v7543, %v7573
        %v7608 = vadd.f32 %v7544, %v7575
        %v7609 = vadd.f32 %v7545, %v7577
        %v7610 = vpack.c.bf16 %v7451, %v7450
        %v7611 = vpack.c.bf16 %v7453, %v7452
        %v7612 = vpack.c.bf16 %v7455, %v7454
        %v7613 = vpack.c.bf16 %v7457, %v7456
        %v7614 = vpack.c.bf16 %v7459, %v7458
        %v7615 = vpack.c.bf16 %v7461, %v7460
        %v7616 = vpack.c.bf16 %v7463, %v7462
        %v7617 = vpack.c.bf16 %v7465, %v7464
        %7619 = vset.pattern.permute.xlu0 0
        %7620 = vperm.xlu0 %7619, %v7594
        %v7621 = vpop.permute.xlu0 %7620
        %7624 = vset.pattern.permute.xlu0 0
        %7625 = vperm.xlu0 %7624, %v7595
        %v7626 = vpop.permute.xlu0 %7625
        %7629 = vset.pattern.permute.xlu0 0
        %7630 = vperm.xlu0 %7629, %v7596
        %v7631 = vpop.permute.xlu0 %7630
        %7634 = vset.pattern.permute.xlu0 0
        %7635 = vperm.xlu0 %7634, %v7597
        %v7636 = vpop.permute.xlu0 %7635
        %7639 = vset.pattern.permute.xlu0 0
        %7640 = vperm.xlu0 %7639, %v7598
        %v7641 = vpop.permute.xlu0 %7640
        %7644 = vset.pattern.permute.xlu0 0
        %7645 = vperm.xlu0 %7644, %v7599
        %v7646 = vpop.permute.xlu0 %7645
        %7649 = vset.pattern.permute.xlu0 0
        %7650 = vperm.xlu0 %7649, %v7600
        %v7651 = vpop.permute.xlu0 %7650
        %7654 = vset.pattern.permute.xlu0 0
        %7655 = vperm.xlu0 %7654, %v7601
        %v7656 = vpop.permute.xlu0 %7655
        %7659 = vset.pattern.permute.xlu0 0
        %7660 = vperm.xlu0 %7659, %v7602
        %v7661 = vpop.permute.xlu0 %7660
        %7664 = vset.pattern.permute.xlu0 0
        %7665 = vperm.xlu0 %7664, %v7603
        %v7666 = vpop.permute.xlu0 %7665
        %7669 = vset.pattern.permute.xlu0 0
        %7670 = vperm.xlu0 %7669, %v7604
        %v7671 = vpop.permute.xlu0 %7670
        %7674 = vset.pattern.permute.xlu0 0
        %7675 = vperm.xlu0 %7674, %v7605
        %v7676 = vpop.permute.xlu0 %7675
        %7679 = vset.pattern.permute.xlu0 0
        %7680 = vperm.xlu0 %7679, %v7606
        %v7681 = vpop.permute.xlu0 %7680
        %7684 = vset.pattern.permute.xlu0 0
        %7685 = vperm.xlu0 %7684, %v7607
        %v7686 = vpop.permute.xlu0 %7685
        %7689 = vset.pattern.permute.xlu0 0
        %7690 = vperm.xlu0 %7689, %v7608
        %v7691 = vpop.permute.xlu0 %7690
        %7694 = vset.pattern.permute.xlu0 0
        %7695 = vperm.xlu0 %7694, %v7609
        %v7696 = vpop.permute.xlu0 %7695
        %v7698 = vlaneseq
        %v7699 = vshrl.u32 %v7698, 7
        %v7700 = vsub.s32 0, %v7699
        %v7701 = vrot.slane %v2199, %v7700
        %v7702 = vmul.f32 %v7621, %v7701
        %v7703 = vmul.f32 %v7626, %v7701
        %v7704 = vmul.f32 %v7631, %v7701
        %v7705 = vmul.f32 %v7636, %v7701
        %v7706 = vmul.f32 %v7641, %v7701
        %v7707 = vmul.f32 %v7646, %v7701
        %v7708 = vmul.f32 %v7651, %v7701
        %v7709 = vmul.f32 %v7656, %v7701
        %v7710 = vmul.f32 %v7661, %v7701
        %v7711 = vmul.f32 %v7666, %v7701
        %v7712 = vmul.f32 %v7671, %v7701
        %v7713 = vmul.f32 %v7676, %v7701
        %v7714 = vmul.f32 %v7681, %v7701
        %v7715 = vmul.f32 %v7686, %v7701
        %v7716 = vmul.f32 %v7691, %v7701
        %v7717 = vmul.f32 %v7696, %v7701
        %v7734 = vunpack.c.l.b16 %v2182
        %v7735 = vunpack.c.l.b16 %v2183
        %v7736 = vunpack.c.l.b16 %v2184
        %v7737 = vunpack.c.l.b16 %v2185
        %v7738 = vunpack.c.l.b16 %v2186
        %v7739 = vunpack.c.l.b16 %v2187
        %v7740 = vunpack.c.l.b16 %v2188
        %v7741 = vunpack.c.l.b16 %v2189
        %v7742 = vunpack.c.l.b16 %v2190
        %v7743 = vunpack.c.l.b16 %v2191
        %v7744 = vunpack.c.l.b16 %v2192
        %v7745 = vunpack.c.l.b16 %v2193
        %v7746 = vunpack.c.l.b16 %v2194
        %v7747 = vunpack.c.l.b16 %v2195
        %v7748 = vunpack.c.l.b16 %v2196
        %v7749 = vunpack.c.l.b16 %v2197
        %v7750 = vpack.c.b16 %v7735, %v7734
        %v7751 = vpack.c.b16 %v7737, %v7736
        %v7752 = vpack.c.b16 %v7739, %v7738
        %v7753 = vpack.c.b16 %v7741, %v7740
        %v7754 = vpack.c.b16 %v7743, %v7742
        %v7755 = vpack.c.b16 %v7745, %v7744
        %v7756 = vpack.c.b16 %v7747, %v7746
        %v7757 = vpack.c.b16 %v7749, %v7748
        %7766 = vmatprep.subr.bf16.mxu0 0
        %7767 = vmatpush1.bf16.msra.mxu0 %v7750
        %7768 = vmatprep.subr.bf16.mxu0 0
        %7769 = vmatpush1.bf16.msra.mxu0 %v7751
        %7770 = vmatprep.subr.bf16.mxu0 0
        %7771 = vmatpush1.bf16.msra.mxu0 %v7752
        %7772 = vmatprep.subr.bf16.mxu0 0
        %7773 = vmatpush1.bf16.msra.mxu0 %v7753
        %7774 = vmatprep.subr.bf16.mxu0 0
        %7775 = vmatpush1.bf16.msra.mxu0 %v7754
        %7776 = vmatprep.subr.bf16.mxu0 0
        %7777 = vmatpush1.bf16.msra.mxu0 %v7755
        %7778 = vmatprep.subr.bf16.mxu0 0
        %7779 = vmatpush1.bf16.msra.mxu0 %v7756
        %7780 = vmatprep.subr.bf16.mxu0 0
        %7781 = vmatpush1.bf16.msra.mxu0 %v7757
        %7782 = vmatprep.subr.bf16.mxu0 0
        %7783 = vmatpush1.bf16.msra.mxu0 0
        %7784 = vmatprep.subr.bf16.mxu0 0
        %7785 = vmatpush1.bf16.msra.mxu0 0
        %7786 = vmatprep.subr.bf16.mxu0 0
        %7787 = vmatpush1.bf16.msra.mxu0 0
        %7788 = vmatprep.subr.bf16.mxu0 0
        %7789 = vmatpush1.bf16.msra.mxu0 0
        %7790 = vmatprep.subr.bf16.mxu0 0
        %7791 = vmatpush1.bf16.msra.mxu0 0
        %7792 = vmatprep.subr.bf16.mxu0 0
        %7793 = vmatpush1.bf16.msra.mxu0 0
        %7794 = vmatprep.subr.bf16.mxu0 0
        %7795 = vmatpush1.bf16.msra.mxu0 0
        %7796 = vmatprep.subr.bf16.mxu0 0
        %7797 = vmatpush1.bf16.msra.mxu0 0
        %7798 = vmatprep.mubr.bf16.mxu0 0
        %7799 = vmatmul.mubr.bf16.gmra.mrb[0].mxu0 %v7610
        %v7800 = vpop.f32.mrb[0].mxu0
        %v7801 = vadd.f32 %v7702, %v7800
        %v7802 = vpop.f32.mrb[0].mxu0
        %v7803 = vpop.f32.mrb[0].mxu0
        %v7804 = vadd.f32 %v7703, %v7803
        %v7805 = vpop.f32.mrb[0].mxu0
        %7806 = vmatprep.mubr.bf16.mxu0 0
        %7807 = vmatmul.mubr.bf16.gmra.mrb[0].mxu0 %v7611
        %v7808 = vpop.f32.mrb[0].mxu0
        %v7809 = vadd.f32 %v7704, %v7808
        %v7810 = vpop.f32.mrb[0].mxu0
        %v7811 = vpop.f32.mrb[0].mxu0
        %v7812 = vadd.f32 %v7705, %v7811
        %v7813 = vpop.f32.mrb[0].mxu0
        %7814 = vmatprep.mubr.bf16.mxu0 0
        %7815 = vmatmul.mubr.bf16.gmra.mrb[0].mxu0 %v7612
        %v7816 = vpop.f32.mrb[0].mxu0
        %v7817 = vadd.f32 %v7706, %v7816
        %v7818 = vpop.f32.mrb[0].mxu0
        %v7819 = vpop.f32.mrb[0].mxu0
        %v7820 = vadd.f32 %v7707, %v7819
        %v7821 = vpop.f32.mrb[0].mxu0
        %7822 = vmatprep.mubr.bf16.mxu0 0
        %7823 = vmatmul.mubr.bf16.gmra.mrb[0].mxu0 %v7613
        %v7824 = vpop.f32.mrb[0].mxu0
        %v7825 = vadd.f32 %v7708, %v7824
        %v7826 = vpop.f32.mrb[0].mxu0
        %v7827 = vpop.f32.mrb[0].mxu0
        %v7828 = vadd.f32 %v7709, %v7827
        %v7829 = vpop.f32.mrb[0].mxu0
        %7830 = vmatprep.mubr.bf16.mxu0 0
        %7831 = vmatmul.mubr.bf16.gmra.mrb[0].mxu0 %v7614
        %v7832 = vpop.f32.mrb[0].mxu0
        %v7833 = vadd.f32 %v7710, %v7832
        %v7834 = vpop.f32.mrb[0].mxu0
        %v7835 = vpop.f32.mrb[0].mxu0
        %v7836 = vadd.f32 %v7711, %v7835
        %v7837 = vpop.f32.mrb[0].mxu0
        %7838 = vmatprep.mubr.bf16.mxu0 0
        %7839 = vmatmul.mubr.bf16.gmra.mrb[0].mxu0 %v7615
        %v7840 = vpop.f32.mrb[0].mxu0
        %v7841 = vadd.f32 %v7712, %v7840
        %v7842 = vpop.f32.mrb[0].mxu0
        %v7843 = vpop.f32.mrb[0].mxu0
        %v7844 = vadd.f32 %v7713, %v7843
        %v7845 = vpop.f32.mrb[0].mxu0
        %7846 = vmatprep.mubr.bf16.mxu0 0
        %7847 = vmatmul.mubr.bf16.gmra.mrb[0].mxu0 %v7616
        %v7848 = vpop.f32.mrb[0].mxu0
        %v7849 = vadd.f32 %v7714, %v7848
        %v7850 = vpop.f32.mrb[0].mxu0
        %v7851 = vpop.f32.mrb[0].mxu0
        %v7852 = vadd.f32 %v7715, %v7851
        %v7853 = vpop.f32.mrb[0].mxu0
        %7854 = vmatprep.mubr.bf16.mxu0 0
        %7855 = vmatmul.mubr.bf16.gmra.mrb[0].mxu0 %v7617
        %v7856 = vpop.f32.mrb[0].mxu0
        %v7857 = vadd.f32 %v7716, %v7856
        %v7858 = vpop.f32.mrb[0].mxu0
        %v7859 = vpop.f32.mrb[0].mxu0
        %v7860 = vadd.f32 %v7717, %v7859
        %v7861 = vpop.f32.mrb[0].mxu0
        %7862 = vdwg.mxu0
        %7863 = vst [vmem:[%s193] sm:$0xff] %v7801
        %7864 = vst [vmem:[%s193 + $0x8] sm:$0xff] %v7804
        %7865 = vst [vmem:[%s193 + $0x10] sm:$0xff] %v7809
        %7866 = vst [vmem:[%s193 + $0x18] sm:$0xff] %v7812
        %7867 = vst [vmem:[%s193 + $0x20] sm:$0xff] %v7817
        %7868 = vst [vmem:[%s193 + $0x28] sm:$0xff] %v7820
        %7869 = vst [vmem:[%s193 + $0x30] sm:$0xff] %v7825
        %7870 = vst [vmem:[%s193 + $0x38] sm:$0xff] %v7828
        %7871 = vst [vmem:[%s193 + $0x40] sm:$0xff] %v7833
        %7872 = vst [vmem:[%s193 + $0x48] sm:$0xff] %v7836
        %7873 = vst [vmem:[%s193 + $0x50] sm:$0xff] %v7841
        %7874 = vst [vmem:[%s193 + $0x58] sm:$0xff] %v7844
        %7875 = vst [vmem:[%s193 + $0x60] sm:$0xff] %v7849
        %7876 = vst [vmem:[%s193 + $0x68] sm:$0xff] %v7852
        %7877 = vst [vmem:[%s193 + $0x70] sm:$0xff] %v7857
        %7878 = vst [vmem:[%s193 + $0x78] sm:$0xff] %v7860
        %s7879 = sand.u32 %s115, 1
        %s7880 = scalar_lea.sflag [#allocation3], %s7879
        %s7881 = sand.u32 %s115, 1
        %s7882 = smul.addr %s7881, 128
        %s7883 = scalar_lea.vmem [#allocation2], %s7882
        // Predicated region
        $region37: #{tpu_custom_call.1} parent=35 // pred_check
          %p7884 = pneg %p125
        $region38: #{tpu_custom_call.1} parent=35 // pred_check_branch
          %7886 = sbr.rel (%p7884) target = $region40
        $region39: #{tpu_custom_call.1} parent=35 // pred_region
          %s7887 = smul.u32 16, %s18
          %s7889 = ssub.s32 2048, 2048
          %7890 = vsyncadd %s7880, %s7889
          %s7891 = smul.addr %s7887, 128
          %s7892 = scalar_lea.hbm %s4, %s7891
          %s7893 = sshll.u32 %s7883, 4
          %s7894 = int_to_ptr.vmem [resolvable:$true] %s7893
          %7899 = dma.vmem_to_hbm [thread:$0]  %s7894, 2048, %s7892, %s7880, 128, 128, 8
        $region40: #{tpu_custom_call.1} parent=35 // pred_fallthru
          _
      $region36: #{tpu_custom_call.1} parent=5 // pred_fallthru
        _
      %p7900 = scmp.le.s32.totalorder 2, %s13
      // Predicated region
      $region41: #{tpu_custom_call.1} parent=5 // pred_check
        %p7901 = pneg %p7900
      $region42: #{tpu_custom_call.1} parent=5 // pred_check_branch
        %7903 = sbr.rel (%p7901) target = $region44
      $region43: #{tpu_custom_call.1} parent=5 // pred_region
        %s7904 = ssub.s32 %s13, 2
        // Predicated region
        $region45: #{tpu_custom_call.1} parent=43 // pred_check
          %p7905 = pneg %p131
        $region46: #{tpu_custom_call.1} parent=43 // pred_check_branch
          %7907 = sbr.rel (%p7905) target = $region48
        $region47: #{tpu_custom_call.1} parent=43 // pred_region
          %s7908 = sand.u32 %s116, 1
          %s7909 = scalar_lea.sflag [#allocation3], %s7908
          %s7910 = sand.u32 %s116, 1
          %s7911 = smul.addr %s7910, 128
          %s7912 = scalar_lea.vmem [#allocation2], %s7911
          %7913 = dma.done %s7909, 2048
        $region48: #{tpu_custom_call.1} parent=43 // pred_fallthru
          _
      $region44: #{tpu_custom_call.1} parent=5 // pred_fallthru
        _
    $region6: #{tpu_custom_call.1} parent=1 // loop_footer
      %s17 = sadd.s32 1, %s13
    $region7: #{tpu_custom_call.1} parent=1 // loop_footer_branch
      %12 = sbr.rel target = $region3
    $region8: #{tpu_custom_call.1} parent=1 // loop_exit
      _
    %7914 = vsyncpa [#allocation3], 1
    %s7915 = scalar_lea.sflag [#allocation3], 1
    %7916 = vsyncpa %s7915, 1

</llo_original>
